<compile_context>
chip_gen: v5e
topology: v5e:2x2
jax: 0.10.0
libtpu: 0.0.40
codegen_flags: <defaults>
</compile_context>

<pallas_src>
import functools

import numpy as np
import jax
import jax.numpy as jnp
from jax.experimental import pallas as pl
from jax.experimental.pallas import tpu as pltpu


HEAD_PAD = 128          # lane-dense output width of the fused second head layer
HEAD_K_PAD = 3200       # 7*7*64 = 3136 padded to a multiple of 128
CONV3_K_PAD = 640       # 3*3*64 = 576  padded to a multiple of 128
VMEM_LIMIT = 48 * 1024 * 1024   # <= v7x physical 64 MiB, well under v5e/v6e 128 MiB


# ----------------------------------------------------------------------------
# Pallas kernel: fused  out = act(scale * (A @ W) + b)   (conv layers)
# ----------------------------------------------------------------------------
def _linear_kernel(a_ref, w_ref, b_ref, o_ref, *, scale, relu):
    acc = jnp.dot(a_ref[...], w_ref[...], preferred_element_type=jnp.float32)
    if scale != 1.0:
        acc = acc * scale
    acc = acc + b_ref[...]
    if relu:
        acc = jnp.maximum(acc, 0.0)
    o_ref[...] = acc.astype(o_ref.dtype)


def _pick_tm(m, cap=512):
    """M-tile: as fat as possible (<=cap) but always >=2 grid steps so the
    pipeline double-buffers and megacore can shard the parallel axis."""
    if m <= 16:
        return m
    n = max(2, pl.cdiv(m, cap))
    return min(m, ((pl.cdiv(m, n) + 7) // 8) * 8)


def pallas_linear(a, w, b, *, scale=1.0, relu=False, out_dtype=jnp.bfloat16,
                  tm_cap=512):
    """a: (M, K) bf16, w: (K, N) bf16, b: (N,) f32 -> (M, N) out_dtype.

    M axis tiled with a parallel grid; W and b resident across the grid."""
    M, K = a.shape
    K2, N = w.shape
    assert K == K2, (K, K2)
    tm = _pick_tm(M, tm_cap)
    grid_m = pl.cdiv(M, tm)
    kernel = functools.partial(_linear_kernel, scale=float(scale), relu=relu)
    out_itemsize = jnp.dtype(out_dtype).itemsize
    cost = pl.CostEstimate(
        flops=2 * M * K * N,
        transcendentals=0,
        bytes_accessed=(M * K * a.dtype.itemsize
                        + K * N * w.dtype.itemsize
                        + N * b.dtype.itemsize
                        + M * N * out_itemsize),
    )
    return pl.pallas_call(
        kernel,
        out_shape=jax.ShapeDtypeStruct((M, N), out_dtype),
        grid=(grid_m,),
        in_specs=[
            pl.BlockSpec((tm, K), lambda i: (i, 0)),
            pl.BlockSpec((K, N), lambda i: (0, 0)),
            pl.BlockSpec((1, N), lambda i: (0, 0)),
        ],
        out_specs=pl.BlockSpec((tm, N), lambda i: (i, 0)),
        compiler_params=pltpu.CompilerParams(
            dimension_semantics=("parallel",),
            vmem_limit_bytes=VMEM_LIMIT,
        ),
        cost_estimate=cost,
    )(a, w, b.reshape(1, N))


# ----------------------------------------------------------------------------
# Pallas kernel: fused policy/value heads
#   out_j = relu(feat @ wh1[j] + bh1[j]) @ wh2[j] + bh2[j]       j in {0,1}
# The 512-wide hidden layer stays in VMEM/vregs and never touches HBM.
# ----------------------------------------------------------------------------
def _head_kernel(feat_ref, wh1_ref, bh1_ref, wh2_ref, bh2_ref, o_ref):
    h = jnp.dot(feat_ref[...], wh1_ref[...], preferred_element_type=jnp.float32)
    h = jnp.maximum(h + bh1_ref[...], 0.0)
    out = jnp.dot(h.astype(jnp.bfloat16), wh2_ref[...],
                  preferred_element_type=jnp.float32)
    o_ref[...] = (out + bh2_ref[...]).astype(o_ref.dtype)


def pallas_heads(feat, wh1, bh1, wh2, bh2, *, tm_cap=256):
    """feat: (B, HEAD_K_PAD) bf16; wh1: (2, HEAD_K_PAD, 512) bf16;
    wh2: (2, 512, HEAD_PAD) bf16; biases f32.  Returns (2, B, HEAD_PAD) f32
    where [0] holds the action-logits lanes and [1] holds the value lane."""
    B, K = feat.shape
    assert wh1.shape == (2, K, 512) and wh2.shape == (2, 512, HEAD_PAD)
    tm = B if B <= tm_cap else tm_cap
    grid_m = pl.cdiv(B, tm)
    w_bytes = (wh1.size * wh1.dtype.itemsize + wh2.size * wh2.dtype.itemsize)
    cost = pl.CostEstimate(
        flops=2 * B * K * 1024 + 2 * B * 1024 * HEAD_PAD,
        transcendentals=0,
        bytes_accessed=(2 * B * K * feat.dtype.itemsize      # feat read per half
                        + w_bytes
                        + 2 * B * HEAD_PAD * 4),
    )
    # Grid: (head-half, M-tile).  Head-half is the OUTER axis so each half of
    # wh1 is fetched once and stays resident across the inner M loop; on v7x
    # the two halves land on the two TensorCores.
    return pl.pallas_call(
        _head_kernel,
        out_shape=jax.ShapeDtypeStruct((2, B, HEAD_PAD), jnp.float32),
        grid=(2, grid_m),
        in_specs=[
            pl.BlockSpec((tm, K), lambda j, i: (i, 0)),
            pl.BlockSpec((None, K, 512), lambda j, i: (j, 0, 0)),
            pl.BlockSpec((None, 1, 512), lambda j, i: (j, 0, 0)),
            pl.BlockSpec((None, 512, HEAD_PAD), lambda j, i: (j, 0, 0)),
            pl.BlockSpec((None, 1, HEAD_PAD), lambda j, i: (j, 0, 0)),
        ],
        out_specs=pl.BlockSpec((None, tm, HEAD_PAD), lambda j, i: (j, i, 0)),
        compiler_params=pltpu.CompilerParams(
            dimension_semantics=("parallel", "parallel"),
            vmem_limit_bytes=VMEM_LIMIT,
        ),
        cost_estimate=cost,
    )(feat, wh1, bh1, wh2, bh2)


# ----------------------------------------------------------------------------
# Glue: im2col via strided slicing (pure data movement, fused by XLA)
# ----------------------------------------------------------------------------
def im2col(x, k, s, pad_k_to=None):
    """x: (B, H, W, C) -> patches (B*OH*OW, K) [same dtype], plus (B, OH, OW).
    Optionally zero-pads the K axis to `pad_k_to` (lane-dense A operand)."""
    B, H, W, C = x.shape
    oh = (H - k) // s + 1
    ow = (W - k) // s + 1
    cols = []
    for kh in range(k):
        for kw in range(k):
            cols.append(x[:, kh:kh + (oh - 1) * s + 1:s,
                          kw:kw + (ow - 1) * s + 1:s, :])
    patches = jnp.stack(cols, axis=3).reshape(B, oh, ow, k * k * C)
    kk = k * k * C
    if pad_k_to is not None and pad_k_to > kk:
        pad = jnp.zeros((B, oh, ow, pad_k_to - kk), patches.dtype)
        patches = jnp.concatenate([patches, pad], axis=-1)
        kk = pad_k_to
    return patches.reshape(B * oh * ow, kk), (B, oh, ow)


# ----------------------------------------------------------------------------
# Deterministic parameter init (orthogonal with gain sqrt(2), zero bias)
# ----------------------------------------------------------------------------
def orth_init(key, shape, gain):
    rows, cols = shape
    a = jax.random.normal(key, (max(rows, cols), min(rows, cols)), jnp.float32)
    q, r = jnp.linalg.qr(a)
    d = jnp.diagonal(r)
    q = q * jnp.where(d >= 0, 1.0, -1.0)[None, :]   # robust sign fix
    if rows < cols:
        q = q.T
    return (gain * q[:rows, :cols]).astype(jnp.float32)


def init_params(key, num_classes=4):
    assert num_classes <= HEAD_PAD
    ks = jax.random.split(key, 7)
    g = float(np.sqrt(2.0))
    bf16 = jnp.bfloat16
    p = {}
    # conv weights stored as im2col matrices (kh*kw*cin, cout), bf16 for MXU.
    p["w1"] = orth_init(ks[0], (8 * 8 * 4, 32), g).astype(bf16)        # (256, 32)
    p["b1"] = jnp.zeros((32,), jnp.float32)
    p["w2"] = orth_init(ks[1], (4 * 4 * 32, 64), g).astype(bf16)       # (512, 64)
    p["b2"] = jnp.zeros((64,), jnp.float32)
    w3 = orth_init(ks[2], (3 * 3 * 64, 64), g)                         # (576, 64)
    p["w3"] = jnp.pad(w3, ((0, CONV3_K_PAD - 576), (0, 0))).astype(bf16)  # (640, 64)
    p["b3"] = jnp.zeros((64,), jnp.float32)

    # Head first layer: action half | value half stacked on a leading axis.
    # Row order is NHWC flatten order (permute rows if porting PyTorch weights).
    aw1 = orth_init(ks[3], (7 * 7 * 64, 512), g)
    vw1 = orth_init(ks[5], (7 * 7 * 64, 512), g)
    wh1 = jnp.stack([aw1, vw1], axis=0)                                # (2, 3136, 512)
    p["wh1"] = jnp.pad(wh1, ((0, 0), (0, HEAD_K_PAD - 3136), (0, 0))).astype(bf16)
    p["bh1"] = jnp.zeros((2, 1, 512), jnp.float32)

    # Head second layer, zero-padded to 128 lanes:
    #   half 0: cols [0:num_classes] <- action logits
    #   half 1: col  0               <- value
    aw2 = orth_init(ks[4], (512, num_classes), g)
    vw2 = orth_init(ks[6], (512, 1), g)
    wh2 = jnp.zeros((2, 512, HEAD_PAD), jnp.float32)
    wh2 = wh2.at[0, :, :num_classes].set(aw2)
    wh2 = wh2.at[1, :, 0].set(vw2[:, 0])
    p["wh2"] = wh2.astype(bf16)
    p["bh2"] = jnp.zeros((2, 1, HEAD_PAD), jnp.float32)
    return p


# ----------------------------------------------------------------------------
# Forward pass (matches AtariNet.forward semantics)
# ----------------------------------------------------------------------------
def atari_forward(params, x_uint8, sample_key, eval_mode=False, num_classes=4):
    """x_uint8: (B, 4, 84, 84) NCHW uint8.  Returns (action, logp, value)."""
    B = x_uint8.shape[0]
    # NCHW -> NHWC, uint8 -> bf16 (exact for 0..255); /255 fused into conv1's
    # f32 accumulator.  XLA fuses transpose+cast into the im2col fusion below.
    # TODO(synk): read the raw uint8 obs inside the conv1 kernel (in-kernel
    # cast) to halve the conv1 patch-matrix HBM traffic.
    x = jnp.transpose(x_uint8, (0, 2, 3, 1)).astype(jnp.bfloat16)

    # conv1: Conv2d(4, 32, k=8, s=4) + ReLU   (scale 1/255 fused)
    p1, (_, oh1, ow1) = im2col(x, 8, 4)
    h1 = pallas_linear(p1, params["w1"], params["b1"], scale=1.0 / 255.0,
                       relu=True).reshape(B, oh1, ow1, 32)
    # conv2: Conv2d(32, 64, k=4, s=2) + ReLU
    p2, (_, oh2, ow2) = im2col(h1, 4, 2)
    h2 = pallas_linear(p2, params["w2"], params["b2"],
                       relu=True).reshape(B, oh2, ow2, 64)
    # conv3: Conv2d(64, 64, k=3, s=1) + ReLU   (K padded 576 -> 640)
    p3, (_, oh3, ow3) = im2col(h2, 3, 1, pad_k_to=CONV3_K_PAD)
    h3 = pallas_linear(p3, params["w3"], params["b3"],
                       relu=True).reshape(B, oh3, ow3, 64)

    # NHWC flatten (head weights generated in this row order -> no transpose),
    # lane-padded 3136 -> 3200 to match wh1's padded K.
    feat = h3.reshape(B, oh3 * ow3 * 64)
    feat = jnp.concatenate(
        [feat, jnp.zeros((B, HEAD_K_PAD - feat.shape[1]), feat.dtype)], axis=1)

    # fused policy + value heads (single pallas_call; hidden layer stays in VMEM)
    out2 = pallas_heads(feat, params["wh1"], params["bh1"],
                        params["wh2"], params["bh2"])      # (2, B, 128) f32
    logits = out2[0, :, :num_classes]
    value = out2[1, :, 0]

    # Categorical(logits): sample / argmax + log_prob
    # TODO(synk): Categorical sampling uses host-side jax.random (not in-kernel PRNG).
    if eval_mode:
        action = jnp.argmax(logits, axis=1)
    else:
        action = jax.random.categorical(sample_key, logits, axis=1)
    log_probs = jax.nn.log_softmax(logits, axis=1)
    logp = jnp.squeeze(jnp.take_along_axis(log_probs, action[:, None], axis=1), axis=1)
    return action, logp, value


if __name__ == "__main__":
    key = jax.random.PRNGKey(0)
    k_param, k_obs, k_sample = jax.random.split(key, 3)

    num_classes = 4
    params = init_params(k_param, num_classes=num_classes)

    # 84x84 spatial is required by the 7*7*64 flatten in the module; batch kept small.
    B = 2
    obs = jax.random.randint(k_obs, (B, 4, 84, 84), 0, 256, dtype=jnp.int32).astype(jnp.uint8)

    fwd = jax.jit(atari_forward, static_argnames=("eval_mode", "num_classes"))
    action, logp, value = fwd(params, obs, k_sample, eval_mode=False,
                              num_classes=num_classes)
    jax.block_until_ready((action, logp, value))

    assert action.shape == (B,) and logp.shape == (B,) and value.shape == (B,)
    assert jnp.all(jnp.isfinite(logp)) and jnp.all(jnp.isfinite(value))
    print("KERNEL_OK")
</pallas_src>

<mosaic_0001>
module attributes {stable_mosaic.version = 11 : i64} {
  func.func @_linear_kernel(%arg0: i32, %arg1: memref<400x256xbf16, #tpu.memory_space<vmem>>, %arg2: memref<256x32xbf16, #tpu.memory_space<vmem>>, %arg3: memref<1x32xf32, #tpu.memory_space<vmem>>, %arg4: memref<400x32xbf16, #tpu.memory_space<vmem>>) attributes {dimension_semantics = [#tpu.dimension_semantics<parallel>], iteration_bounds = array<i64: 2>, scalar_prefetch = 0 : i64, scratch_operands = 0 : i64, tpu.core_type = #tpu.core_type<tc>, window_params = [{transform_indices = @transform_0, window_bounds = array<i64: 400, 256>}, {pipeline_mode = #tpu.pipeline_mode<synchronous>, transform_indices = @transform_1, window_bounds = array<i64: 256, 32>}, {pipeline_mode = #tpu.pipeline_mode<synchronous>, transform_indices = @transform_2, window_bounds = array<i64: 1, 32>}, {transform_indices = @transform_3, window_bounds = array<i64: 400, 32>}]} {
    %c0 = arith.constant 0 : index
    %c0_0 = arith.constant 0 : index
    %0 = vector.load %arg1[%c0, %c0_0] : memref<400x256xbf16, #tpu.memory_space<vmem>>, vector<400x256xbf16>
    %c0_1 = arith.constant 0 : index
    %c0_2 = arith.constant 0 : index
    %1 = vector.load %arg2[%c0_1, %c0_2] : memref<256x32xbf16, #tpu.memory_space<vmem>>, vector<256x32xbf16>
    %cst = arith.constant dense<0.000000e+00> : vector<400x32xf32>
    %2 = tpu.matmul %0, %1, %cst {dimension_numbers = #tpu.dot_dimension_numbers<[1], [0], [0], [1], [0, 0, 1, 1], [], []>} : vector<400x256xbf16>, vector<256x32xbf16>, vector<400x32xf32> -> vector<400x32xf32>
    %cst_3 = arith.constant 0.00392156886 : f32
    %3 = vector.broadcast %cst_3 : f32 to vector<400x32xf32>
    %4 = arith.mulf %2, %3 : vector<400x32xf32>
    %c0_4 = arith.constant 0 : index
    %c0_5 = arith.constant 0 : index
    %5 = vector.load %arg3[%c0_4, %c0_5] : memref<1x32xf32, #tpu.memory_space<vmem>>, vector<1x32xf32>
    %6 = vector.broadcast %5 : vector<1x32xf32> to vector<400x32xf32>
    %7 = arith.addf %4, %6 : vector<400x32xf32>
    %cst_6 = arith.constant 0.000000e+00 : f32
    %8 = vector.broadcast %cst_6 : f32 to vector<400x32xf32>
    %9 = arith.maximumf %7, %8 : vector<400x32xf32>
    %10 = arith.truncf %9 : vector<400x32xf32> to vector<400x32xbf16>
    %c0_7 = arith.constant 0 : index
    %c0_8 = arith.constant 0 : index
    %11 = vector.load %arg4[%c0_7, %c0_8] : memref<400x32xbf16, #tpu.memory_space<vmem>>, vector<400x32xbf16>
    tpu.vector_store %arg4[%c0_7, %c0_8], %10 {strides = array<i32>} : memref<400x32xbf16, #tpu.memory_space<vmem>>, vector<400x32xbf16>,
    return
  }
  func.func @transform_0(%arg0: i32) -> (i32, i32) {
    %c0_i32 = arith.constant 0 : i32
    %c0_i32_0 = arith.constant 0 : i32
    return %arg0, %c0_i32 : i32, i32
  }
  func.func @transform_1(%arg0: i32) -> (i32, i32) {
    %c0_i32 = arith.constant 0 : i32
    %c0_i32_0 = arith.constant 0 : i32
    %c0_i32_1 = arith.constant 0 : i32
    return %c0_i32, %c0_i32_0 : i32, i32
  }
  func.func @transform_2(%arg0: i32) -> (i32, i32) {
    %c0_i32 = arith.constant 0 : i32
    %c0_i32_0 = arith.constant 0 : i32
    %c0_i32_1 = arith.constant 0 : i32
    return %c0_i32, %c0_i32_0 : i32, i32
  }
  func.func @transform_3(%arg0: i32) -> (i32, i32) {
    %c0_i32 = arith.constant 0 : i32
    %c0_i32_0 = arith.constant 0 : i32
    return %arg0, %c0_i32 : i32, i32
  }
}

module attributes {stable_mosaic.version = 11 : i64} {
  func.func @_linear_kernel(%arg0: i32, %arg1: memref<88x512xbf16, #tpu.memory_space<vmem>>, %arg2: memref<512x64xbf16, #tpu.memory_space<vmem>>, %arg3: memref<1x64xf32, #tpu.memory_space<vmem>>, %arg4: memref<88x64xbf16, #tpu.memory_space<vmem>>) attributes {dimension_semantics = [#tpu.dimension_semantics<parallel>], iteration_bounds = array<i64: 2>, scalar_prefetch = 0 : i64, scratch_operands = 0 : i64, tpu.core_type = #tpu.core_type<tc>, window_params = [{transform_indices = @transform_0, window_bounds = array<i64: 88, 512>}, {pipeline_mode = #tpu.pipeline_mode<synchronous>, transform_indices = @transform_1, window_bounds = array<i64: 512, 64>}, {pipeline_mode = #tpu.pipeline_mode<synchronous>, transform_indices = @transform_2, window_bounds = array<i64: 1, 64>}, {transform_indices = @transform_3, window_bounds = array<i64: 88, 64>}]} {
    %c0 = arith.constant 0 : index
    %c0_0 = arith.constant 0 : index
    %0 = vector.load %arg1[%c0, %c0_0] : memref<88x512xbf16, #tpu.memory_space<vmem>>, vector<88x512xbf16>
    %c0_1 = arith.constant 0 : index
    %c0_2 = arith.constant 0 : index
    %1 = vector.load %arg2[%c0_1, %c0_2] : memref<512x64xbf16, #tpu.memory_space<vmem>>, vector<512x64xbf16>
    %cst = arith.constant dense<0.000000e+00> : vector<88x64xf32>
    %2 = tpu.matmul %0, %1, %cst {dimension_numbers = #tpu.dot_dimension_numbers<[1], [0], [0], [1], [0, 0, 1, 1], [], []>} : vector<88x512xbf16>, vector<512x64xbf16>, vector<88x64xf32> -> vector<88x64xf32>
    %c0_3 = arith.constant 0 : index
    %c0_4 = arith.constant 0 : index
    %3 = vector.load %arg3[%c0_3, %c0_4] : memref<1x64xf32, #tpu.memory_space<vmem>>, vector<1x64xf32>
    %4 = vector.broadcast %3 : vector<1x64xf32> to vector<88x64xf32>
    %5 = arith.addf %2, %4 : vector<88x64xf32>
    %cst_5 = arith.constant 0.000000e+00 : f32
    %6 = vector.broadcast %cst_5 : f32 to vector<88x64xf32>
    %7 = arith.maximumf %5, %6 : vector<88x64xf32>
    %8 = arith.truncf %7 : vector<88x64xf32> to vector<88x64xbf16>
    %c0_6 = arith.constant 0 : index
    %c0_7 = arith.constant 0 : index
    %9 = vector.load %arg4[%c0_6, %c0_7] : memref<88x64xbf16, #tpu.memory_space<vmem>>, vector<88x64xbf16>
    tpu.vector_store %arg4[%c0_6, %c0_7], %8 {strides = array<i32>} : memref<88x64xbf16, #tpu.memory_space<vmem>>, vector<88x64xbf16>,
    return
  }
  func.func @transform_0(%arg0: i32) -> (i32, i32) {
    %c0_i32 = arith.constant 0 : i32
    %c0_i32_0 = arith.constant 0 : i32
    return %arg0, %c0_i32 : i32, i32
  }
  func.func @transform_1(%arg0: i32) -> (i32, i32) {
    %c0_i32 = arith.constant 0 : i32
    %c0_i32_0 = arith.constant 0 : i32
    %c0_i32_1 = arith.constant 0 : i32
    return %c0_i32, %c0_i32_0 : i32, i32
  }
  func.func @transform_2(%arg0: i32) -> (i32, i32) {
    %c0_i32 = arith.constant 0 : i32
    %c0_i32_0 = arith.constant 0 : i32
    %c0_i32_1 = arith.constant 0 : i32
    return %c0_i32, %c0_i32_0 : i32, i32
  }
  func.func @transform_3(%arg0: i32) -> (i32, i32) {
    %c0_i32 = arith.constant 0 : i32
    %c0_i32_0 = arith.constant 0 : i32
    return %arg0, %c0_i32 : i32, i32
  }
}

module attributes {stable_mosaic.version = 11 : i64} {
  func.func @_linear_kernel(%arg0: i32, %arg1: memref<56x640xbf16, #tpu.memory_space<vmem>>, %arg2: memref<640x64xbf16, #tpu.memory_space<vmem>>, %arg3: memref<1x64xf32, #tpu.memory_space<vmem>>, %arg4: memref<56x64xbf16, #tpu.memory_space<vmem>>) attributes {dimension_semantics = [#tpu.dimension_semantics<parallel>], iteration_bounds = array<i64: 2>, scalar_prefetch = 0 : i64, scratch_operands = 0 : i64, tpu.core_type = #tpu.core_type<tc>, window_params = [{transform_indices = @transform_0, window_bounds = array<i64: 56, 640>}, {pipeline_mode = #tpu.pipeline_mode<synchronous>, transform_indices = @transform_1, window_bounds = array<i64: 640, 64>}, {pipeline_mode = #tpu.pipeline_mode<synchronous>, transform_indices = @transform_2, window_bounds = array<i64: 1, 64>}, {transform_indices = @transform_3, window_bounds = array<i64: 56, 64>}]} {
    %c0 = arith.constant 0 : index
    %c0_0 = arith.constant 0 : index
    %0 = vector.load %arg1[%c0, %c0_0] : memref<56x640xbf16, #tpu.memory_space<vmem>>, vector<56x640xbf16>
    %c0_1 = arith.constant 0 : index
    %c0_2 = arith.constant 0 : index
    %1 = vector.load %arg2[%c0_1, %c0_2] : memref<640x64xbf16, #tpu.memory_space<vmem>>, vector<640x64xbf16>
    %cst = arith.constant dense<0.000000e+00> : vector<56x64xf32>
    %2 = tpu.matmul %0, %1, %cst {dimension_numbers = #tpu.dot_dimension_numbers<[1], [0], [0], [1], [0, 0, 1, 1], [], []>} : vector<56x640xbf16>, vector<640x64xbf16>, vector<56x64xf32> -> vector<56x64xf32>
    %c0_3 = arith.constant 0 : index
    %c0_4 = arith.constant 0 : index
    %3 = vector.load %arg3[%c0_3, %c0_4] : memref<1x64xf32, #tpu.memory_space<vmem>>, vector<1x64xf32>
    %4 = vector.broadcast %3 : vector<1x64xf32> to vector<56x64xf32>
    %5 = arith.addf %2, %4 : vector<56x64xf32>
    %cst_5 = arith.constant 0.000000e+00 : f32
    %6 = vector.broadcast %cst_5 : f32 to vector<56x64xf32>
    %7 = arith.maximumf %5, %6 : vector<56x64xf32>
    %8 = arith.truncf %7 : vector<56x64xf32> to vector<56x64xbf16>
    %c0_6 = arith.constant 0 : index
    %c0_7 = arith.constant 0 : index
    %9 = vector.load %arg4[%c0_6, %c0_7] : memref<56x64xbf16, #tpu.memory_space<vmem>>, vector<56x64xbf16>
    tpu.vector_store %arg4[%c0_6, %c0_7], %8 {strides = array<i32>} : memref<56x64xbf16, #tpu.memory_space<vmem>>, vector<56x64xbf16>,
    return
  }
  func.func @transform_0(%arg0: i32) -> (i32, i32) {
    %c0_i32 = arith.constant 0 : i32
    %c0_i32_0 = arith.constant 0 : i32
    return %arg0, %c0_i32 : i32, i32
  }
  func.func @transform_1(%arg0: i32) -> (i32, i32) {
    %c0_i32 = arith.constant 0 : i32
    %c0_i32_0 = arith.constant 0 : i32
    %c0_i32_1 = arith.constant 0 : i32
    return %c0_i32, %c0_i32_0 : i32, i32
  }
  func.func @transform_2(%arg0: i32) -> (i32, i32) {
    %c0_i32 = arith.constant 0 : i32
    %c0_i32_0 = arith.constant 0 : i32
    %c0_i32_1 = arith.constant 0 : i32
    return %c0_i32, %c0_i32_0 : i32, i32
  }
  func.func @transform_3(%arg0: i32) -> (i32, i32) {
    %c0_i32 = arith.constant 0 : i32
    %c0_i32_0 = arith.constant 0 : i32
    return %arg0, %c0_i32 : i32, i32
  }
}

module attributes {stable_mosaic.version = 11 : i64} {
  func.func @_head_kernel(%arg0: i32, %arg1: i32, %arg2: memref<2x3200xbf16, #tpu.memory_space<vmem>>, %arg3: memref<1x3200x512xbf16, #tpu.memory_space<vmem>>, %arg4: memref<1x1x512xf32, #tpu.memory_space<vmem>>, %arg5: memref<1x512x128xbf16, #tpu.memory_space<vmem>>, %arg6: memref<1x1x128xf32, #tpu.memory_space<vmem>>, %arg7: memref<1x2x128xf32, #tpu.memory_space<vmem>>) attributes {dimension_semantics = [#tpu.dimension_semantics<parallel>, #tpu.dimension_semantics<parallel>], iteration_bounds = array<i64: 2, 1>, scalar_prefetch = 0 : i64, scratch_operands = 0 : i64, tpu.core_type = #tpu.core_type<tc>, window_params = [{transform_indices = @transform_0, window_bounds = array<i64: 2, 3200>}, {transform_indices = @transform_1, window_bounds = array<i64: 1, 3200, 512>}, {transform_indices = @transform_2, window_bounds = array<i64: 1, 1, 512>}, {transform_indices = @transform_3, window_bounds = array<i64: 1, 512, 128>}, {transform_indices = @transform_4, window_bounds = array<i64: 1, 1, 128>}, {transform_indices = @transform_5, window_bounds = array<i64: 1, 2, 128>}]} {
    %c0 = arith.constant 0 : index
    %c0_0 = arith.constant 0 : index
    %0 = vector.load %arg2[%c0, %c0_0] : memref<2x3200xbf16, #tpu.memory_space<vmem>>, vector<2x3200xbf16>
    %c0_1 = arith.constant 0 : index
    %c0_2 = arith.constant 0 : index
    %c0_3 = arith.constant 0 : index
    %1 = vector.load %arg3[%c0_1, %c0_2, %c0_3] : memref<1x3200x512xbf16, #tpu.memory_space<vmem>>, vector<1x3200x512xbf16>
    %2 = vector.shape_cast %1 : vector<1x3200x512xbf16> to vector<3200x512xbf16>
    %cst = arith.constant dense<0.000000e+00> : vector<2x512xf32>
    %3 = tpu.matmul %0, %2, %cst {dimension_numbers = #tpu.dot_dimension_numbers<[1], [0], [0], [1], [0, 0, 1, 1], [], []>} : vector<2x3200xbf16>, vector<3200x512xbf16>, vector<2x512xf32> -> vector<2x512xf32>
    %c0_4 = arith.constant 0 : index
    %c0_5 = arith.constant 0 : index
    %c0_6 = arith.constant 0 : index
    %4 = vector.load %arg4[%c0_4, %c0_5, %c0_6] : memref<1x1x512xf32, #tpu.memory_space<vmem>>, vector<1x1x512xf32>
    %5 = vector.shape_cast %4 : vector<1x1x512xf32> to vector<1x512xf32>
    %6 = vector.broadcast %5 : vector<1x512xf32> to vector<2x512xf32>
    %7 = arith.addf %3, %6 : vector<2x512xf32>
    %cst_7 = arith.constant 0.000000e+00 : f32
    %8 = vector.broadcast %cst_7 : f32 to vector<2x512xf32>
    %9 = arith.maximumf %7, %8 : vector<2x512xf32>
    %10 = arith.truncf %9 : vector<2x512xf32> to vector<2x512xbf16>
    %c0_8 = arith.constant 0 : index
    %c0_9 = arith.constant 0 : index
    %c0_10 = arith.constant 0 : index
    %11 = vector.load %arg5[%c0_8, %c0_9, %c0_10] : memref<1x512x128xbf16, #tpu.memory_space<vmem>>, vector<1x512x128xbf16>
    %12 = vector.shape_cast %11 : vector<1x512x128xbf16> to vector<512x128xbf16>
    %cst_11 = arith.constant dense<0.000000e+00> : vector<2x128xf32>
    %13 = tpu.matmul %10, %12, %cst_11 {dimension_numbers = #tpu.dot_dimension_numbers<[1], [0], [0], [1], [0, 0, 1, 1], [], []>} : vector<2x512xbf16>, vector<512x128xbf16>, vector<2x128xf32> -> vector<2x128xf32>
    %c0_12 = arith.constant 0 : index
    %c0_13 = arith.constant 0 : index
    %c0_14 = arith.constant 0 : index
    %14 = vector.load %arg6[%c0_12, %c0_13, %c0_14] : memref<1x1x128xf32, #tpu.memory_space<vmem>>, vector<1x1x128xf32>
    %15 = vector.shape_cast %14 : vector<1x1x128xf32> to vector<1x128xf32>
    %16 = vector.broadcast %15 : vector<1x128xf32> to vector<2x128xf32>
    %17 = arith.addf %13, %16 : vector<2x128xf32>
    %c0_15 = arith.constant 0 : index
    %c0_16 = arith.constant 0 : index
    %c0_17 = arith.constant 0 : index
    %18 = vector.load %arg7[%c0_15, %c0_16, %c0_17] : memref<1x2x128xf32, #tpu.memory_space<vmem>>, vector<1x2x128xf32>
    %19 = vector.shape_cast %18 : vector<1x2x128xf32> to vector<2x128xf32>
    %20 = vector.shape_cast %17 : vector<2x128xf32> to vector<1x2x128xf32>
    tpu.vector_store %arg7[%c0_15, %c0_16, %c0_17], %20 {strides = array<i32>} : memref<1x2x128xf32, #tpu.memory_space<vmem>>, vector<1x2x128xf32>,
    return
  }
  func.func @transform_0(%arg0: i32, %arg1: i32) -> (i32, i32) {
    %c0_i32 = arith.constant 0 : i32
    %c0_i32_0 = arith.constant 0 : i32
    return %arg1, %c0_i32 : i32, i32
  }
  func.func @transform_1(%arg0: i32, %arg1: i32) -> (i32, i32, i32) {
    %c0_i32 = arith.constant 0 : i32
    %c0_i32_0 = arith.constant 0 : i32
    %c0_i32_1 = arith.constant 0 : i32
    return %arg0, %c0_i32, %c0_i32_0 : i32, i32, i32
  }
  func.func @transform_2(%arg0: i32, %arg1: i32) -> (i32, i32, i32) {
    %c0_i32 = arith.constant 0 : i32
    %c0_i32_0 = arith.constant 0 : i32
    %c0_i32_1 = arith.constant 0 : i32
    return %arg0, %c0_i32, %c0_i32_0 : i32, i32, i32
  }
  func.func @transform_3(%arg0: i32, %arg1: i32) -> (i32, i32, i32) {
    %c0_i32 = arith.constant 0 : i32
    %c0_i32_0 = arith.constant 0 : i32
    %c0_i32_1 = arith.constant 0 : i32
    return %arg0, %c0_i32, %c0_i32_0 : i32, i32, i32
  }
  func.func @transform_4(%arg0: i32, %arg1: i32) -> (i32, i32, i32) {
    %c0_i32 = arith.constant 0 : i32
    %c0_i32_0 = arith.constant 0 : i32
    %c0_i32_1 = arith.constant 0 : i32
    return %arg0, %c0_i32, %c0_i32_0 : i32, i32, i32
  }
  func.func @transform_5(%arg0: i32, %arg1: i32) -> (i32, i32, i32) {
    %c0_i32 = arith.constant 0 : i32
    %c0_i32_0 = arith.constant 0 : i32
    return %arg0, %arg1, %c0_i32 : i32, i32, i32
  }
}

</mosaic_0001>

<llo_original>
// kernel: atari_forward.4
$region0: #{atari_forward.4}
  #allocation0 [shape = 'u32[]', space=smem, size = 0x4, offset = 0x4, fixed_abs, tag = 'smem constant byte address 0x4 - core index']
  #allocation1 [shape = 'u32[72,128]{1,0:T(1,128)}', space=vmem, size = 0x9000, scoped, tag = 'internal scratch']
  %s0 = inlined_call_operand.vmem [shape: bf16[800,256], index: 0, kind: input, shape index: {}]
  %s1 = inlined_call_operand.vmem [shape: bf16[256,32], index: 1, kind: input, shape index: {}]
  %s2 = inlined_call_operand.vmem [shape: f32[1,32], index: 2, kind: input, shape index: {}]
  %s3 = inlined_call_operand.vmem [shape: bf16[800,32], index: 3, kind: output, shape index: {}]
  %s4 = sld [smem:[#allocation0]]
  $region45: #{atari_forward.4} parent=0
    _
  %s6 = ssub.s32 1, %s4
  %s7 = scalar_select 0, %s6, %s4
  loop: start=0, step=1, limit=4
  $region2: #{atari_forward.4} parent=0 // loop_pre_header
    _
  $region3: #{atari_forward.4} parent=0 // loop_header
    %s9 = sphi 0, %s13
    %p10 = scmp.ge.s32.totalorder %s9, 4
    %s19 = sphi 0, %s21
    %s22 = sphi 0, %s19
    %s23 = sphi 0, %s22
    %s39 = sphi 0, %s23
    %s43 = sphi 0, %s43
    %s45 = sphi 0, %s43
    %s46 = sphi 0, %s45
    %s60 = sphi 0, %s46
    %s64 = sphi 0, %s64
    %s66 = sphi 0, %s64
    %s67 = sphi 0, %s66
    %s81 = sphi 0, %s67
    %s87 = sphi 0, %s89
    %s90 = sphi 0, %s87
    %s91 = sphi 0, %s90
    %s107 = sphi 0, %s91
  $region4: #{atari_forward.4} parent=0 // loop_header_branch
    %12 = sbr.rel (%p10) target = $region8
  $region5: #{atari_forward.4} parent=0 // loop_body
    %s14 = ssub.s32 %s9, 1
    %s15 = ssub.s32 %s9, 2
    %s16 = sadd.s32 %s9, 1
    %s17 = ssub.s32 %s9, %s16
    %p18 = scmp.eq.s32.totalorder %s17, 0
    %s20 = sadd.s32 %s19, 1
    %s21 = scalar_select %p18, %s19, %s20
    %p24 = pneg %p18
    %p25 = scmp.eq.s32.totalorder %s9, 1
    %p26 = por %p24, %p25
    %p27 = scmp.ne.s32.totalorder %s19, %s22
    %p28 = scmp.eq.s32.totalorder %s9, 0
    %p29 = por %p27, %p28
    %p30 = scmp.ne.s32.totalorder %s19, %s22
    %p31 = scmp.eq.s32.totalorder %s14, 1
    %p32 = por %p30, %p31
    %p33 = scmp.ne.s32.totalorder %s22, %s23
    %p34 = scmp.eq.s32.totalorder %s14, 0
    %p35 = por %p33, %p34
    %p36 = scmp.ne.s32.totalorder %s22, %s23
    %p37 = scmp.eq.s32.totalorder %s15, 1
    %p38 = por %p36, %p37
    %p40 = scmp.ne.s32.totalorder %s23, %s39
    %p41 = scmp.eq.s32.totalorder %s15, 0
    %p42 = por %p40, %p41
    %s44 = sadd.s32 %s43, 1
    %p47 = scmp.eq.s32.totalorder %s9, 1
    %p48 = scmp.ne.s32.totalorder %s43, %s45
    %p49 = scmp.eq.s32.totalorder %s9, 0
    %p50 = por %p48, %p49
    %p51 = scmp.ne.s32.totalorder %s43, %s45
    %p52 = scmp.eq.s32.totalorder %s14, 1
    %p53 = por %p51, %p52
    %p54 = scmp.ne.s32.totalorder %s45, %s46
    %p55 = scmp.eq.s32.totalorder %s14, 0
    %p56 = por %p54, %p55
    %p57 = scmp.ne.s32.totalorder %s45, %s46
    %p58 = scmp.eq.s32.totalorder %s15, 1
    %p59 = por %p57, %p58
    %p61 = scmp.ne.s32.totalorder %s46, %s60
    %p62 = scmp.eq.s32.totalorder %s15, 0
    %p63 = por %p61, %p62
    %s65 = sadd.s32 %s64, 1
    %p68 = scmp.eq.s32.totalorder %s9, 1
    %p69 = scmp.ne.s32.totalorder %s64, %s66
    %p70 = scmp.eq.s32.totalorder %s9, 0
    %p71 = por %p69, %p70
    %p72 = scmp.ne.s32.totalorder %s64, %s66
    %p73 = scmp.eq.s32.totalorder %s14, 1
    %p74 = por %p72, %p73
    %p75 = scmp.ne.s32.totalorder %s66, %s67
    %p76 = scmp.eq.s32.totalorder %s14, 0
    %p77 = por %p75, %p76
    %p78 = scmp.ne.s32.totalorder %s66, %s67
    %p79 = scmp.eq.s32.totalorder %s15, 1
    %p80 = por %p78, %p79
    %p82 = scmp.ne.s32.totalorder %s67, %s81
    %p83 = scmp.eq.s32.totalorder %s15, 0
    %p84 = por %p82, %p83
    %s85 = ssub.s32 %s9, %s16
    %p86 = scmp.eq.s32.totalorder %s85, 0
    %s88 = sadd.s32 %s87, 1
    %s89 = scalar_select %p86, %s87, %s88
    %p92 = pneg %p86
    %p93 = scmp.eq.s32.totalorder %s9, 1
    %p94 = por %p92, %p93
    %p95 = scmp.ne.s32.totalorder %s87, %s90
    %p96 = scmp.eq.s32.totalorder %s9, 0
    %p97 = por %p95, %p96
    %p98 = scmp.ne.s32.totalorder %s87, %s90
    %p99 = scmp.eq.s32.totalorder %s14, 1
    %p100 = por %p98, %p99
    %p101 = scmp.ne.s32.totalorder %s90, %s91
    %p102 = scmp.eq.s32.totalorder %s14, 0
    %p103 = por %p101, %p102
    %p104 = scmp.ne.s32.totalorder %s90, %s91
    %p105 = scmp.eq.s32.totalorder %s15, 1
    %p106 = por %p104, %p105
    %p108 = scmp.ne.s32.totalorder %s91, %s107
    %p109 = scmp.eq.s32.totalorder %s15, 0
    %p110 = por %p108, %p109
    %p111 = scmp.le.s32.totalorder 1, %s9
    %p112 = scmp.lt.s32.totalorder %s9, 3
    %p113 = pnand %p111, %p112
    %p114 = pneg %p113
    // Predicated region
    $region9: #{atari_forward.4} parent=5 // pred_check
      _
    $region10: #{atari_forward.4} parent=5 // pred_check_branch
      %116 = sbr.rel (%p113) target = $region12
    $region11: #{atari_forward.4} parent=5 // pred_region
      %s117 = ssub.s32 %s9, 1
      // Predicated region
      $region13: #{atari_forward.4} parent=11 // pred_check
        %p118 = pneg %p56
      $region14: #{atari_forward.4} parent=11 // pred_check_branch
        %120 = sbr.rel (%p118) target = $region16
      $region15: #{atari_forward.4} parent=11 // pred_region
        _
      $region16: #{atari_forward.4} parent=11 // pred_fallthru
        _
      // Predicated region
      $region17: #{atari_forward.4} parent=11 // pred_check
        %p121 = pneg %p77
      $region18: #{atari_forward.4} parent=11 // pred_check_branch
        %123 = sbr.rel (%p121) target = $region20
      $region19: #{atari_forward.4} parent=11 // pred_region
        _
      $region20: #{atari_forward.4} parent=11 // pred_fallthru
        _
    $region12: #{atari_forward.4} parent=5 // pred_fallthru
      _
    %p124 = scmp.lt.s32.totalorder %s9, 2
    // Predicated region
    $region21: #{atari_forward.4} parent=5 // pred_check
      %p125 = pneg %p124
    $region22: #{atari_forward.4} parent=5 // pred_check_branch
      %127 = sbr.rel (%p125) target = $region24
    $region23: #{atari_forward.4} parent=5 // pred_region
      // Predicated region
      $region25: #{atari_forward.4} parent=23 // pred_check
        %p128 = pneg %p29
      $region26: #{atari_forward.4} parent=23 // pred_check_branch
        %130 = sbr.rel (%p128) target = $region28
      $region27: #{atari_forward.4} parent=23 // pred_region
        %s131 = smul.u32 50, %s9
        %p132 = scmp.lt.s32.totalorder %s131, 99
        %s133 = scalar_select %p132, %s131, 99
        %s134 = smul.addr %s133, 2
        %s135 = smul.addr %s134, 4
        %s136 = scalar_lea.vmem %s0, %s135
        %s137 = smul.u32 50, %s9
      $region28: #{atari_forward.4} parent=23 // pred_fallthru
        _
    $region24: #{atari_forward.4} parent=5 // pred_fallthru
      _
    %p138 = scmp.le.s32.totalorder 1, %s9
    %p139 = scmp.lt.s32.totalorder %s9, 3
    %p140 = pnand %p138, %p139
    %p141 = pneg %p140
    // Predicated region
    $region29: #{atari_forward.4} parent=5 // pred_check
      _
    $region30: #{atari_forward.4} parent=5 // pred_check_branch
      %143 = sbr.rel (%p140) target = $region32
    $region31: #{atari_forward.4} parent=5 // pred_region
      %s144 = ssub.s32 %s9, 1
      %s145 = smul.u32 50, %s14
      %p146 = scmp.lt.s32.totalorder %s145, 99
      %s147 = scalar_select %p146, %s145, 99
      %s148 = smul.addr %s147, 2
      %s149 = smul.addr %s148, 4
      %s150 = scalar_lea.vmem %s0, %s149
      %p151 = pneg %p35
      %p152 = pneg %p32
      %p153 = pneg %p56
      %p154 = pneg %p53
      %p155 = pneg %p77
      %p156 = pneg %p74
      %p157 = pneg %p103
      %p158 = pneg %p100
      %s159 = smul.u32 50, %s14
      %p160 = scmp.lt.s32.totalorder %s159, 99
      %s161 = scalar_select %p160, %s159, 99
      %s162 = smul.addr %s161, 4
      %s163 = scalar_lea.vmem %s3, %s162
      %s164 = smul.u32 50, %s14
      %p165 = scmp.lt.s32.totalorder %s164, 99
      %s166 = scalar_select %p165, %s164, 99
      %s167 = smul.addr %s166, 2
      %s168 = smul.addr %s167, 4
      %s169 = scalar_lea.vmem %s0, %s168
      %s170 = smul.u32 50, %s14
      %s171 = smul.u32 50, %s14
      %p172 = scmp.lt.s32.totalorder %s171, 99
      %s173 = scalar_select %p172, %s171, 99
      %s174 = smul.addr %s173, 4
      %s175 = scalar_lea.vmem %s3, %s174
      %s176 = smul.u32 50, %s14
      %v177 = vld [vmem:[%s169] sm:$0xff]
      %v178 = vld [vmem:[%s169 + $0x8] sm:$0xff]
      %v179 = vld [vmem:[%s169 + $0x10] sm:$0xff]
      %v180 = vld [vmem:[%s169 + $0x18] sm:$0xff]
      %v181 = vld [vmem:[%s169 + $0x20] sm:$0xff]
      %v182 = vld [vmem:[%s169 + $0x28] sm:$0xff]
      %v183 = vld [vmem:[%s169 + $0x30] sm:$0xff]
      %v184 = vld [vmem:[%s169 + $0x38] sm:$0xff]
      %v185 = vld [vmem:[%s169 + $0x40] sm:$0xff]
      %v186 = vld [vmem:[%s169 + $0x48] sm:$0xff]
      %v187 = vld [vmem:[%s169 + $0x50] sm:$0xff]
      %v188 = vld [vmem:[%s169 + $0x58] sm:$0xff]
      %v189 = vld [vmem:[%s169 + $0x60] sm:$0xff]
      %v190 = vld [vmem:[%s169 + $0x68] sm:$0xff]
      %v191 = vld [vmem:[%s169 + $0x70] sm:$0xff]
      %v192 = vld [vmem:[%s169 + $0x78] sm:$0xff]
      %v193 = vld [vmem:[%s169 + $0x80] sm:$0xff]
      %v194 = vld [vmem:[%s169 + $0x88] sm:$0xff]
      %v195 = vld [vmem:[%s169 + $0x90] sm:$0xff]
      %v196 = vld [vmem:[%s169 + $0x98] sm:$0xff]
      %v197 = vld [vmem:[%s169 + $0xa0] sm:$0xff]
      %v198 = vld [vmem:[%s169 + $0xa8] sm:$0xff]
      %v199 = vld [vmem:[%s169 + $0xb0] sm:$0xff]
      %v200 = vld [vmem:[%s169 + $0xb8] sm:$0xff]
      %v201 = vld [vmem:[%s169 + $0xc0] sm:$0xff]
      %v202 = vld [vmem:[%s169 + $0xc8] sm:$0xff]
      %v203 = vld [vmem:[%s169 + $0xd0] sm:$0xff]
      %v204 = vld [vmem:[%s169 + $0xd8] sm:$0xff]
      %v205 = vld [vmem:[%s169 + $0xe0] sm:$0xff]
      %v206 = vld [vmem:[%s169 + $0xe8] sm:$0xff]
      %v207 = vld [vmem:[%s169 + $0xf0] sm:$0xff]
      %v208 = vld [vmem:[%s169 + $0xf8] sm:$0xff]
      %v209 = vld [vmem:[%s169 + $0x100] sm:$0xff]
      %v210 = vld [vmem:[%s169 + $0x108] sm:$0xff]
      %v211 = vld [vmem:[%s169 + $0x110] sm:$0xff]
      %v212 = vld [vmem:[%s169 + $0x118] sm:$0xff]
      %v213 = vld [vmem:[%s169 + $0x120] sm:$0xff]
      %v214 = vld [vmem:[%s169 + $0x128] sm:$0xff]
      %v215 = vld [vmem:[%s169 + $0x130] sm:$0xff]
      %v216 = vld [vmem:[%s169 + $0x138] sm:$0xff]
      %v217 = vld [vmem:[%s169 + $0x140] sm:$0xff]
      %v218 = vld [vmem:[%s169 + $0x148] sm:$0xff]
      %v219 = vld [vmem:[%s169 + $0x150] sm:$0xff]
      %v220 = vld [vmem:[%s169 + $0x158] sm:$0xff]
      %v221 = vld [vmem:[%s169 + $0x160] sm:$0xff]
      %v222 = vld [vmem:[%s169 + $0x168] sm:$0xff]
      %v223 = vld [vmem:[%s169 + $0x170] sm:$0xff]
      %v224 = vld [vmem:[%s169 + $0x178] sm:$0xff]
      %v225 = vld [vmem:[%s169 + $0x180] sm:$0xff]
      %v226 = vld [vmem:[%s169 + $0x188] sm:$0xff]
      %v227 = vld [vmem:[%s1] sm:$0xf]
      %v228 = vld [vmem:[%s1 + $0x4] sm:$0xf]
      %v229 = vld [vmem:[%s1 + $0x8] sm:$0xf]
      %v230 = vld [vmem:[%s1 + $0xc] sm:$0xf]
      %v231 = vld [vmem:[%s1 + $0x10] sm:$0xf]
      %v232 = vld [vmem:[%s1 + $0x14] sm:$0xf]
      %v233 = vld [vmem:[%s1 + $0x18] sm:$0xf]
      %v234 = vld [vmem:[%s1 + $0x1c] sm:$0xf]
      %v235 = vld [vmem:[%s1 + $0x20] sm:$0xf]
      %v236 = vld [vmem:[%s1 + $0x24] sm:$0xf]
      %v237 = vld [vmem:[%s1 + $0x28] sm:$0xf]
      %v238 = vld [vmem:[%s1 + $0x2c] sm:$0xf]
      %v239 = vld [vmem:[%s1 + $0x30] sm:$0xf]
      %v240 = vld [vmem:[%s1 + $0x34] sm:$0xf]
      %v241 = vld [vmem:[%s1 + $0x38] sm:$0xf]
      %v242 = vld [vmem:[%s1 + $0x3c] sm:$0xf]
      %v243 = vld [vmem:[%s1 + $0x40] sm:$0xf]
      %v244 = vld [vmem:[%s1 + $0x44] sm:$0xf]
      %v245 = vld [vmem:[%s1 + $0x48] sm:$0xf]
      %v246 = vld [vmem:[%s1 + $0x4c] sm:$0xf]
      %v247 = vld [vmem:[%s1 + $0x50] sm:$0xf]
      %v248 = vld [vmem:[%s1 + $0x54] sm:$0xf]
      %v249 = vld [vmem:[%s1 + $0x58] sm:$0xf]
      %v250 = vld [vmem:[%s1 + $0x5c] sm:$0xf]
      %v251 = vld [vmem:[%s1 + $0x60] sm:$0xf]
      %v252 = vld [vmem:[%s1 + $0x64] sm:$0xf]
      %v253 = vld [vmem:[%s1 + $0x68] sm:$0xf]
      %v254 = vld [vmem:[%s1 + $0x6c] sm:$0xf]
      %v255 = vld [vmem:[%s1 + $0x70] sm:$0xf]
      %v256 = vld [vmem:[%s1 + $0x74] sm:$0xf]
      %v257 = vld [vmem:[%s1 + $0x78] sm:$0xf]
      %v258 = vld [vmem:[%s1 + $0x7c] sm:$0xf]
      %v309 = vunpack.c.l.b16 %v177
      %v310 = vunpack.c.h.b16 %v177
      %v311 = vunpack.c.l.b16 %v178
      %v312 = vunpack.c.h.b16 %v178
      %v313 = vunpack.c.l.b16 %v179
      %v314 = vunpack.c.h.b16 %v179
      %v315 = vunpack.c.l.b16 %v180
      %v316 = vunpack.c.h.b16 %v180
      %v317 = vunpack.c.l.b16 %v181
      %v318 = vunpack.c.h.b16 %v181
      %v319 = vunpack.c.l.b16 %v182
      %v320 = vunpack.c.h.b16 %v182
      %v321 = vunpack.c.l.b16 %v183
      %v322 = vunpack.c.h.b16 %v183
      %v323 = vunpack.c.l.b16 %v184
      %v324 = vunpack.c.h.b16 %v184
      %v325 = vunpack.c.l.b16 %v185
      %v326 = vunpack.c.h.b16 %v185
      %v327 = vunpack.c.l.b16 %v186
      %v328 = vunpack.c.h.b16 %v186
      %v329 = vunpack.c.l.b16 %v187
      %v330 = vunpack.c.h.b16 %v187
      %v331 = vunpack.c.l.b16 %v188
      %v332 = vunpack.c.h.b16 %v188
      %v333 = vunpack.c.l.b16 %v189
      %v334 = vunpack.c.h.b16 %v189
      %v335 = vunpack.c.l.b16 %v190
      %v336 = vunpack.c.h.b16 %v190
      %v337 = vunpack.c.l.b16 %v191
      %v338 = vunpack.c.h.b16 %v191
      %v339 = vunpack.c.l.b16 %v192
      %v340 = vunpack.c.h.b16 %v192
      %v341 = vunpack.c.l.b16 %v193
      %v342 = vunpack.c.h.b16 %v193
      %v343 = vunpack.c.l.b16 %v194
      %v344 = vunpack.c.h.b16 %v194
      %v345 = vunpack.c.l.b16 %v195
      %v346 = vunpack.c.h.b16 %v195
      %v347 = vunpack.c.l.b16 %v196
      %v348 = vunpack.c.h.b16 %v196
      %v349 = vunpack.c.l.b16 %v197
      %v350 = vunpack.c.h.b16 %v197
      %v351 = vunpack.c.l.b16 %v198
      %v352 = vunpack.c.h.b16 %v198
      %v353 = vunpack.c.l.b16 %v199
      %v354 = vunpack.c.h.b16 %v199
      %v355 = vunpack.c.l.b16 %v200
      %v356 = vunpack.c.h.b16 %v200
      %v357 = vunpack.c.l.b16 %v201
      %v358 = vunpack.c.h.b16 %v201
      %v359 = vunpack.c.l.b16 %v202
      %v360 = vunpack.c.h.b16 %v202
      %v361 = vunpack.c.l.b16 %v203
      %v362 = vunpack.c.h.b16 %v203
      %v363 = vunpack.c.l.b16 %v204
      %v364 = vunpack.c.h.b16 %v204
      %v365 = vunpack.c.l.b16 %v205
      %v366 = vunpack.c.h.b16 %v205
      %v367 = vunpack.c.l.b16 %v206
      %v368 = vunpack.c.h.b16 %v206
      %v369 = vunpack.c.l.b16 %v207
      %v370 = vunpack.c.h.b16 %v207
      %v371 = vunpack.c.l.b16 %v208
      %v372 = vunpack.c.h.b16 %v208
      %v373 = vunpack.c.l.b16 %v209
      %v374 = vunpack.c.h.b16 %v209
      %v375 = vunpack.c.l.b16 %v210
      %v376 = vunpack.c.h.b16 %v210
      %v377 = vunpack.c.l.b16 %v211
      %v378 = vunpack.c.h.b16 %v211
      %v379 = vunpack.c.l.b16 %v212
      %v380 = vunpack.c.h.b16 %v212
      %v381 = vunpack.c.l.b16 %v213
      %v382 = vunpack.c.h.b16 %v213
      %v383 = vunpack.c.l.b16 %v214
      %v384 = vunpack.c.h.b16 %v214
      %v385 = vunpack.c.l.b16 %v215
      %v386 = vunpack.c.h.b16 %v215
      %v387 = vunpack.c.l.b16 %v216
      %v388 = vunpack.c.h.b16 %v216
      %v389 = vunpack.c.l.b16 %v217
      %v390 = vunpack.c.h.b16 %v217
      %v391 = vunpack.c.l.b16 %v218
      %v392 = vunpack.c.h.b16 %v218
      %v393 = vunpack.c.l.b16 %v219
      %v394 = vunpack.c.h.b16 %v219
      %v395 = vunpack.c.l.b16 %v220
      %v396 = vunpack.c.h.b16 %v220
      %v397 = vunpack.c.l.b16 %v221
      %v398 = vunpack.c.h.b16 %v221
      %v399 = vunpack.c.l.b16 %v222
      %v400 = vunpack.c.h.b16 %v222
      %v401 = vunpack.c.l.b16 %v223
      %v402 = vunpack.c.h.b16 %v223
      %v403 = vunpack.c.l.b16 %v224
      %v404 = vunpack.c.h.b16 %v224
      %v405 = vunpack.c.l.b16 %v225
      %v406 = vunpack.c.h.b16 %v225
      %v407 = vunpack.c.l.b16 %v226
      %v408 = vunpack.c.h.b16 %v226
      %v409 = vpack.c.b16 %v311, %v309
      %v410 = vpack.c.b16 %v312, %v310
      %v411 = vpack.c.b16 %v315, %v313
      %v412 = vpack.c.b16 %v316, %v314
      %v413 = vpack.c.b16 %v319, %v317
      %v414 = vpack.c.b16 %v320, %v318
      %v415 = vpack.c.b16 %v323, %v321
      %v416 = vpack.c.b16 %v324, %v322
      %v417 = vpack.c.b16 %v327, %v325
      %v418 = vpack.c.b16 %v328, %v326
      %v419 = vpack.c.b16 %v331, %v329
      %v420 = vpack.c.b16 %v332, %v330
      %v421 = vpack.c.b16 %v335, %v333
      %v422 = vpack.c.b16 %v336, %v334
      %v423 = vpack.c.b16 %v339, %v337
      %v424 = vpack.c.b16 %v340, %v338
      %v425 = vpack.c.b16 %v343, %v341
      %v426 = vpack.c.b16 %v344, %v342
      %v427 = vpack.c.b16 %v347, %v345
      %v428 = vpack.c.b16 %v348, %v346
      %v429 = vpack.c.b16 %v351, %v349
      %v430 = vpack.c.b16 %v352, %v350
      %v431 = vpack.c.b16 %v355, %v353
      %v432 = vpack.c.b16 %v356, %v354
      %v433 = vpack.c.b16 %v359, %v357
      %v434 = vpack.c.b16 %v360, %v358
      %v435 = vpack.c.b16 %v363, %v361
      %v436 = vpack.c.b16 %v364, %v362
      %v437 = vpack.c.b16 %v367, %v365
      %v438 = vpack.c.b16 %v368, %v366
      %v439 = vpack.c.b16 %v371, %v369
      %v440 = vpack.c.b16 %v372, %v370
      %v441 = vpack.c.b16 %v375, %v373
      %v442 = vpack.c.b16 %v376, %v374
      %v443 = vpack.c.b16 %v379, %v377
      %v444 = vpack.c.b16 %v380, %v378
      %v445 = vpack.c.b16 %v383, %v381
      %v446 = vpack.c.b16 %v384, %v382
      %v447 = vpack.c.b16 %v387, %v385
      %v448 = vpack.c.b16 %v388, %v386
      %v449 = vpack.c.b16 %v391, %v389
      %v450 = vpack.c.b16 %v392, %v390
      %v451 = vpack.c.b16 %v395, %v393
      %v452 = vpack.c.b16 %v396, %v394
      %v453 = vpack.c.b16 %v399, %v397
      %v454 = vpack.c.b16 %v400, %v398
      %v455 = vpack.c.b16 %v403, %v401
      %v456 = vpack.c.b16 %v404, %v402
      %v457 = vpack.c.b16 %v407, %v405
      %v458 = vpack.c.b16 %v408, %v406
      %v541 = vunpack.c.l.b16 %v227
      %v542 = vunpack.c.l.b16 %v228
      %v543 = vunpack.c.l.b16 %v229
      %v544 = vunpack.c.l.b16 %v230
      %v545 = vunpack.c.l.b16 %v231
      %v546 = vunpack.c.l.b16 %v232
      %v547 = vunpack.c.l.b16 %v233
      %v548 = vunpack.c.l.b16 %v234
      %v549 = vunpack.c.l.b16 %v235
      %v550 = vunpack.c.l.b16 %v236
      %v551 = vunpack.c.l.b16 %v237
      %v552 = vunpack.c.l.b16 %v238
      %v553 = vunpack.c.l.b16 %v239
      %v554 = vunpack.c.l.b16 %v240
      %v555 = vunpack.c.l.b16 %v241
      %v556 = vunpack.c.l.b16 %v242
      %v557 = vunpack.c.l.b16 %v243
      %v558 = vunpack.c.l.b16 %v244
      %v559 = vunpack.c.l.b16 %v245
      %v560 = vunpack.c.l.b16 %v246
      %v561 = vunpack.c.l.b16 %v247
      %v562 = vunpack.c.l.b16 %v248
      %v563 = vunpack.c.l.b16 %v249
      %v564 = vunpack.c.l.b16 %v250
      %v565 = vunpack.c.l.b16 %v251
      %v566 = vunpack.c.l.b16 %v252
      %v567 = vunpack.c.l.b16 %v253
      %v568 = vunpack.c.l.b16 %v254
      %v569 = vunpack.c.l.b16 %v255
      %v570 = vunpack.c.l.b16 %v256
      %v571 = vunpack.c.l.b16 %v257
      %v572 = vunpack.c.l.b16 %v258
      %v573 = vpack.c.b16 %v542, %v541
      %v574 = vpack.c.b16 %v544, %v543
      %v575 = vpack.c.b16 %v546, %v545
      %v576 = vpack.c.b16 %v548, %v547
      %v577 = vpack.c.b16 %v550, %v549
      %v578 = vpack.c.b16 %v552, %v551
      %v579 = vpack.c.b16 %v554, %v553
      %v580 = vpack.c.b16 %v556, %v555
      %v581 = vpack.c.b16 %v558, %v557
      %v582 = vpack.c.b16 %v560, %v559
      %v583 = vpack.c.b16 %v562, %v561
      %v584 = vpack.c.b16 %v564, %v563
      %v585 = vpack.c.b16 %v566, %v565
      %v586 = vpack.c.b16 %v568, %v567
      %v587 = vpack.c.b16 %v570, %v569
      %v588 = vpack.c.b16 %v572, %v571
      %605 = vmatpush.bf16.msra.mxu0 %v580
      %606 = vmatpush.bf16.msra.mxu0 %v579
      %607 = vmatpush.bf16.msra.mxu0 %v578
      %608 = vmatpush.bf16.msra.mxu0 %v577
      %609 = vmatpush.bf16.msra.mxu0 %v576
      %610 = vmatpush.bf16.msra.mxu0 %v575
      %611 = vmatpush.bf16.msra.mxu0 %v574
      %612 = vmatpush.bf16.msra.mxu0 %v573
      %613 = vmatmul.bf16.gmra.mxu0 %v409
      %v614 = vpop.f32.mrf.mxu0
      %v615 = vadd.f32 0.0, %v614
      %v616 = vpop.f32.mrf.mxu0
      %v617 = vadd.f32 0.0, %v616
      %618 = vmatmul.bf16.gmra.mxu0 %v411
      %v619 = vpop.f32.mrf.mxu0
      %v620 = vadd.f32 0.0, %v619
      %v621 = vpop.f32.mrf.mxu0
      %v622 = vadd.f32 0.0, %v621
      %623 = vmatmul.bf16.gmra.mxu0 %v413
      %v624 = vpop.f32.mrf.mxu0
      %v625 = vadd.f32 0.0, %v624
      %v626 = vpop.f32.mrf.mxu0
      %v627 = vadd.f32 0.0, %v626
      %628 = vmatmul.bf16.gmra.mxu0 %v415
      %v629 = vpop.f32.mrf.mxu0
      %v630 = vadd.f32 0.0, %v629
      %v631 = vpop.f32.mrf.mxu0
      %v632 = vadd.f32 0.0, %v631
      %633 = vmatmul.bf16.gmra.mxu0 %v417
      %v634 = vpop.f32.mrf.mxu0
      %v635 = vadd.f32 0.0, %v634
      %v636 = vpop.f32.mrf.mxu0
      %v637 = vadd.f32 0.0, %v636
      %638 = vmatmul.bf16.gmra.mxu0 %v419
      %v639 = vpop.f32.mrf.mxu0
      %v640 = vadd.f32 0.0, %v639
      %v641 = vpop.f32.mrf.mxu0
      %v642 = vadd.f32 0.0, %v641
      %643 = vmatmul.bf16.gmra.mxu0 %v421
      %v644 = vpop.f32.mrf.mxu0
      %v645 = vadd.f32 0.0, %v644
      %v646 = vpop.f32.mrf.mxu0
      %v647 = vadd.f32 0.0, %v646
      %648 = vmatmul.bf16.gmra.mxu0 %v423
      %v649 = vpop.f32.mrf.mxu0
      %v650 = vadd.f32 0.0, %v649
      %v651 = vpop.f32.mrf.mxu0
      %v652 = vadd.f32 0.0, %v651
      %653 = vmatmul.bf16.gmra.mxu0 %v425
      %v654 = vpop.f32.mrf.mxu0
      %v655 = vadd.f32 0.0, %v654
      %v656 = vpop.f32.mrf.mxu0
      %v657 = vadd.f32 0.0, %v656
      %658 = vmatmul.bf16.gmra.mxu0 %v427
      %v659 = vpop.f32.mrf.mxu0
      %v660 = vadd.f32 0.0, %v659
      %v661 = vpop.f32.mrf.mxu0
      %v662 = vadd.f32 0.0, %v661
      %663 = vmatmul.bf16.gmra.mxu0 %v429
      %v664 = vpop.f32.mrf.mxu0
      %v665 = vadd.f32 0.0, %v664
      %v666 = vpop.f32.mrf.mxu0
      %v667 = vadd.f32 0.0, %v666
      %668 = vmatmul.bf16.gmra.mxu0 %v431
      %v669 = vpop.f32.mrf.mxu0
      %v670 = vadd.f32 0.0, %v669
      %v671 = vpop.f32.mrf.mxu0
      %v672 = vadd.f32 0.0, %v671
      %673 = vmatmul.bf16.gmra.mxu0 %v433
      %v674 = vpop.f32.mrf.mxu0
      %v675 = vadd.f32 0.0, %v674
      %v676 = vpop.f32.mrf.mxu0
      %v677 = vadd.f32 0.0, %v676
      %678 = vmatmul.bf16.gmra.mxu0 %v435
      %v679 = vpop.f32.mrf.mxu0
      %v680 = vadd.f32 0.0, %v679
      %v681 = vpop.f32.mrf.mxu0
      %v682 = vadd.f32 0.0, %v681
      %683 = vmatmul.bf16.gmra.mxu0 %v437
      %v684 = vpop.f32.mrf.mxu0
      %v685 = vadd.f32 0.0, %v684
      %v686 = vpop.f32.mrf.mxu0
      %v687 = vadd.f32 0.0, %v686
      %688 = vmatmul.bf16.gmra.mxu0 %v439
      %v689 = vpop.f32.mrf.mxu0
      %v690 = vadd.f32 0.0, %v689
      %v691 = vpop.f32.mrf.mxu0
      %v692 = vadd.f32 0.0, %v691
      %693 = vmatmul.bf16.gmra.mxu0 %v441
      %v694 = vpop.f32.mrf.mxu0
      %v695 = vadd.f32 0.0, %v694
      %v696 = vpop.f32.mrf.mxu0
      %v697 = vadd.f32 0.0, %v696
      %698 = vmatmul.bf16.gmra.mxu0 %v443
      %v699 = vpop.f32.mrf.mxu0
      %v700 = vadd.f32 0.0, %v699
      %v701 = vpop.f32.mrf.mxu0
      %v702 = vadd.f32 0.0, %v701
      %703 = vmatmul.bf16.gmra.mxu0 %v445
      %v704 = vpop.f32.mrf.mxu0
      %v705 = vadd.f32 0.0, %v704
      %v706 = vpop.f32.mrf.mxu0
      %v707 = vadd.f32 0.0, %v706
      %708 = vmatmul.bf16.gmra.mxu0 %v447
      %v709 = vpop.f32.mrf.mxu0
      %v710 = vadd.f32 0.0, %v709
      %v711 = vpop.f32.mrf.mxu0
      %v712 = vadd.f32 0.0, %v711
      %713 = vmatmul.bf16.gmra.mxu0 %v449
      %v714 = vpop.f32.mrf.mxu0
      %v715 = vadd.f32 0.0, %v714
      %v716 = vpop.f32.mrf.mxu0
      %v717 = vadd.f32 0.0, %v716
      %718 = vmatmul.bf16.gmra.mxu0 %v451
      %v719 = vpop.f32.mrf.mxu0
      %v720 = vadd.f32 0.0, %v719
      %v721 = vpop.f32.mrf.mxu0
      %v722 = vadd.f32 0.0, %v721
      %723 = vmatmul.bf16.gmra.mxu0 %v453
      %v724 = vpop.f32.mrf.mxu0
      %v725 = vadd.f32 0.0, %v724
      %v726 = vpop.f32.mrf.mxu0
      %v727 = vadd.f32 0.0, %v726
      %728 = vmatmul.bf16.gmra.mxu0 %v455
      %v729 = vpop.f32.mrf.mxu0
      %v730 = vadd.f32 0.0, %v729
      %v731 = vpop.f32.mrf.mxu0
      %v732 = vadd.f32 0.0, %v731
      %733 = vmatmul.bf16.gmra.mxu0 %v457
      %v734 = vpop.f32.mrf.mxu0
      %v735 = vadd.f32 0.0, %v734
      %v736 = vpop.f32.mrf.mxu0
      %v737 = vadd.f32 0.0, %v736
      %738 = vdwg.mxu0
      %739 = vmatpush.bf16.msra.mxu0 %v588
      %740 = vmatpush.bf16.msra.mxu0 %v587
      %741 = vmatpush.bf16.msra.mxu0 %v586
      %742 = vmatpush.bf16.msra.mxu0 %v585
      %743 = vmatpush.bf16.msra.mxu0 %v584
      %744 = vmatpush.bf16.msra.mxu0 %v583
      %745 = vmatpush.bf16.msra.mxu0 %v582
      %746 = vmatpush.bf16.msra.mxu0 %v581
      %747 = vmatmul.bf16.gmra.mxu0 %v410
      %v748 = vpop.f32.mrf.mxu0
      %v749 = vadd.f32 %v615, %v748
      %v750 = vpop.f32.mrf.mxu0
      %v751 = vadd.f32 %v617, %v750
      %752 = vmatmul.bf16.gmra.mxu0 %v412
      %v753 = vpop.f32.mrf.mxu0
      %v754 = vadd.f32 %v620, %v753
      %v755 = vpop.f32.mrf.mxu0
      %v756 = vadd.f32 %v622, %v755
      %757 = vmatmul.bf16.gmra.mxu0 %v414
      %v758 = vpop.f32.mrf.mxu0
      %v759 = vadd.f32 %v625, %v758
      %v760 = vpop.f32.mrf.mxu0
      %v761 = vadd.f32 %v627, %v760
      %762 = vmatmul.bf16.gmra.mxu0 %v416
      %v763 = vpop.f32.mrf.mxu0
      %v764 = vadd.f32 %v630, %v763
      %v765 = vpop.f32.mrf.mxu0
      %v766 = vadd.f32 %v632, %v765
      %767 = vmatmul.bf16.gmra.mxu0 %v418
      %v768 = vpop.f32.mrf.mxu0
      %v769 = vadd.f32 %v635, %v768
      %v770 = vpop.f32.mrf.mxu0
      %v771 = vadd.f32 %v637, %v770
      %772 = vmatmul.bf16.gmra.mxu0 %v420
      %v773 = vpop.f32.mrf.mxu0
      %v774 = vadd.f32 %v640, %v773
      %v775 = vpop.f32.mrf.mxu0
      %v776 = vadd.f32 %v642, %v775
      %777 = vmatmul.bf16.gmra.mxu0 %v422
      %v778 = vpop.f32.mrf.mxu0
      %v779 = vadd.f32 %v645, %v778
      %v780 = vpop.f32.mrf.mxu0
      %v781 = vadd.f32 %v647, %v780
      %782 = vmatmul.bf16.gmra.mxu0 %v424
      %v783 = vpop.f32.mrf.mxu0
      %v784 = vadd.f32 %v650, %v783
      %v785 = vpop.f32.mrf.mxu0
      %v786 = vadd.f32 %v652, %v785
      %787 = vmatmul.bf16.gmra.mxu0 %v426
      %v788 = vpop.f32.mrf.mxu0
      %v789 = vadd.f32 %v655, %v788
      %v790 = vpop.f32.mrf.mxu0
      %v791 = vadd.f32 %v657, %v790
      %792 = vmatmul.bf16.gmra.mxu0 %v428
      %v793 = vpop.f32.mrf.mxu0
      %v794 = vadd.f32 %v660, %v793
      %v795 = vpop.f32.mrf.mxu0
      %v796 = vadd.f32 %v662, %v795
      %797 = vmatmul.bf16.gmra.mxu0 %v430
      %v798 = vpop.f32.mrf.mxu0
      %v799 = vadd.f32 %v665, %v798
      %v800 = vpop.f32.mrf.mxu0
      %v801 = vadd.f32 %v667, %v800
      %802 = vmatmul.bf16.gmra.mxu0 %v432
      %v803 = vpop.f32.mrf.mxu0
      %v804 = vadd.f32 %v670, %v803
      %v805 = vpop.f32.mrf.mxu0
      %v806 = vadd.f32 %v672, %v805
      %807 = vmatmul.bf16.gmra.mxu0 %v434
      %v808 = vpop.f32.mrf.mxu0
      %v809 = vadd.f32 %v675, %v808
      %v810 = vpop.f32.mrf.mxu0
      %v811 = vadd.f32 %v677, %v810
      %812 = vmatmul.bf16.gmra.mxu0 %v436
      %v813 = vpop.f32.mrf.mxu0
      %v814 = vadd.f32 %v680, %v813
      %v815 = vpop.f32.mrf.mxu0
      %v816 = vadd.f32 %v682, %v815
      %817 = vmatmul.bf16.gmra.mxu0 %v438
      %v818 = vpop.f32.mrf.mxu0
      %v819 = vadd.f32 %v685, %v818
      %v820 = vpop.f32.mrf.mxu0
      %v821 = vadd.f32 %v687, %v820
      %822 = vmatmul.bf16.gmra.mxu0 %v440
      %v823 = vpop.f32.mrf.mxu0
      %v824 = vadd.f32 %v690, %v823
      %v825 = vpop.f32.mrf.mxu0
      %v826 = vadd.f32 %v692, %v825
      %827 = vmatmul.bf16.gmra.mxu0 %v442
      %v828 = vpop.f32.mrf.mxu0
      %v829 = vadd.f32 %v695, %v828
      %v830 = vpop.f32.mrf.mxu0
      %v831 = vadd.f32 %v697, %v830
      %832 = vmatmul.bf16.gmra.mxu0 %v444
      %v833 = vpop.f32.mrf.mxu0
      %v834 = vadd.f32 %v700, %v833
      %v835 = vpop.f32.mrf.mxu0
      %v836 = vadd.f32 %v702, %v835
      %837 = vmatmul.bf16.gmra.mxu0 %v446
      %v838 = vpop.f32.mrf.mxu0
      %v839 = vadd.f32 %v705, %v838
      %v840 = vpop.f32.mrf.mxu0
      %v841 = vadd.f32 %v707, %v840
      %842 = vmatmul.bf16.gmra.mxu0 %v448
      %v843 = vpop.f32.mrf.mxu0
      %v844 = vadd.f32 %v710, %v843
      %v845 = vpop.f32.mrf.mxu0
      %v846 = vadd.f32 %v712, %v845
      %847 = vmatmul.bf16.gmra.mxu0 %v450
      %v848 = vpop.f32.mrf.mxu0
      %v849 = vadd.f32 %v715, %v848
      %v850 = vpop.f32.mrf.mxu0
      %v851 = vadd.f32 %v717, %v850
      %852 = vmatmul.bf16.gmra.mxu0 %v452
      %v853 = vpop.f32.mrf.mxu0
      %v854 = vadd.f32 %v720, %v853
      %v855 = vpop.f32.mrf.mxu0
      %v856 = vadd.f32 %v722, %v855
      %857 = vmatmul.bf16.gmra.mxu0 %v454
      %v858 = vpop.f32.mrf.mxu0
      %v859 = vadd.f32 %v725, %v858
      %v860 = vpop.f32.mrf.mxu0
      %v861 = vadd.f32 %v727, %v860
      %862 = vmatmul.bf16.gmra.mxu0 %v456
      %v863 = vpop.f32.mrf.mxu0
      %v864 = vadd.f32 %v730, %v863
      %v865 = vpop.f32.mrf.mxu0
      %v866 = vadd.f32 %v732, %v865
      %867 = vmatmul.bf16.gmra.mxu0 %v458
      %v868 = vpop.f32.mrf.mxu0
      %v869 = vadd.f32 %v735, %v868
      %v870 = vpop.f32.mrf.mxu0
      %v871 = vadd.f32 %v737, %v870
      %872 = vdwg.mxu0
      %v873 = vmul.f32 %v749, 0.003921569
      %v874 = vmul.f32 %v751, 0.003921569
      %v875 = vmul.f32 %v754, 0.003921569
      %v876 = vmul.f32 %v756, 0.003921569
      %v877 = vmul.f32 %v759, 0.003921569
      %v878 = vmul.f32 %v761, 0.003921569
      %v879 = vmul.f32 %v764, 0.003921569
      %v880 = vmul.f32 %v766, 0.003921569
      %v881 = vmul.f32 %v769, 0.003921569
      %v882 = vmul.f32 %v771, 0.003921569
      %v883 = vmul.f32 %v774, 0.003921569
      %v884 = vmul.f32 %v776, 0.003921569
      %v885 = vmul.f32 %v779, 0.003921569
      %v886 = vmul.f32 %v781, 0.003921569
      %v887 = vmul.f32 %v784, 0.003921569
      %v888 = vmul.f32 %v786, 0.003921569
      %v889 = vmul.f32 %v789, 0.003921569
      %v890 = vmul.f32 %v791, 0.003921569
      %v891 = vmul.f32 %v794, 0.003921569
      %v892 = vmul.f32 %v796, 0.003921569
      %v893 = vmul.f32 %v799, 0.003921569
      %v894 = vmul.f32 %v801, 0.003921569
      %v895 = vmul.f32 %v804, 0.003921569
      %v896 = vmul.f32 %v806, 0.003921569
      %v897 = vmul.f32 %v809, 0.003921569
      %v898 = vmul.f32 %v811, 0.003921569
      %v899 = vmul.f32 %v814, 0.003921569
      %v900 = vmul.f32 %v816, 0.003921569
      %v901 = vmul.f32 %v819, 0.003921569
      %v902 = vmul.f32 %v821, 0.003921569
      %v903 = vmul.f32 %v824, 0.003921569
      %v904 = vmul.f32 %v826, 0.003921569
      %v905 = vmul.f32 %v829, 0.003921569
      %v906 = vmul.f32 %v831, 0.003921569
      %v907 = vmul.f32 %v834, 0.003921569
      %v908 = vmul.f32 %v836, 0.003921569
      %v909 = vmul.f32 %v839, 0.003921569
      %v910 = vmul.f32 %v841, 0.003921569
      %v911 = vmul.f32 %v844, 0.003921569
      %v912 = vmul.f32 %v846, 0.003921569
      %v913 = vmul.f32 %v849, 0.003921569
      %v914 = vmul.f32 %v851, 0.003921569
      %v915 = vmul.f32 %v854, 0.003921569
      %v916 = vmul.f32 %v856, 0.003921569
      %v917 = vmul.f32 %v859, 0.003921569
      %v918 = vmul.f32 %v861, 0.003921569
      %v919 = vmul.f32 %v864, 0.003921569
      %v920 = vmul.f32 %v866, 0.003921569
      %v921 = vmul.f32 %v869, 0.003921569
      %v922 = vmul.f32 %v871, 0.003921569
      %v923 = vld [vmem:[%s2] sm:$0x1]
      %v925 = vperm.slane %v923, 0
      %v927 = vadd.f32 %v873, %v925
      %v928 = vadd.f32 %v874, %v925
      %v929 = vadd.f32 %v875, %v925
      %v930 = vadd.f32 %v876, %v925
      %v931 = vadd.f32 %v877, %v925
      %v932 = vadd.f32 %v878, %v925
      %v933 = vadd.f32 %v879, %v925
      %v934 = vadd.f32 %v880, %v925
      %v935 = vadd.f32 %v881, %v925
      %v936 = vadd.f32 %v882, %v925
      %v937 = vadd.f32 %v883, %v925
      %v938 = vadd.f32 %v884, %v925
      %v939 = vadd.f32 %v885, %v925
      %v940 = vadd.f32 %v886, %v925
      %v941 = vadd.f32 %v887, %v925
      %v942 = vadd.f32 %v888, %v925
      %v943 = vadd.f32 %v889, %v925
      %v944 = vadd.f32 %v890, %v925
      %v945 = vadd.f32 %v891, %v925
      %v946 = vadd.f32 %v892, %v925
      %v947 = vadd.f32 %v893, %v925
      %v948 = vadd.f32 %v894, %v925
      %v949 = vadd.f32 %v895, %v925
      %v950 = vadd.f32 %v896, %v925
      %v951 = vadd.f32 %v897, %v925
      %v952 = vadd.f32 %v898, %v925
      %v953 = vadd.f32 %v899, %v925
      %v954 = vadd.f32 %v900, %v925
      %v955 = vadd.f32 %v901, %v925
      %v956 = vadd.f32 %v902, %v925
      %v957 = vadd.f32 %v903, %v925
      %v958 = vadd.f32 %v904, %v925
      %v959 = vadd.f32 %v905, %v925
      %v960 = vadd.f32 %v906, %v925
      %v961 = vadd.f32 %v907, %v925
      %v962 = vadd.f32 %v908, %v925
      %v963 = vadd.f32 %v909, %v925
      %v964 = vadd.f32 %v910, %v925
      %v965 = vadd.f32 %v911, %v925
      %v966 = vadd.f32 %v912, %v925
      %v967 = vadd.f32 %v913, %v925
      %v968 = vadd.f32 %v914, %v925
      %v969 = vadd.f32 %v915, %v925
      %v970 = vadd.f32 %v916, %v925
      %v971 = vadd.f32 %v917, %v925
      %v972 = vadd.f32 %v918, %v925
      %v973 = vadd.f32 %v919, %v925
      %v974 = vadd.f32 %v920, %v925
      %v975 = vadd.f32 %v921, %v925
      %v976 = vadd.f32 %v922, %v925
      %v977 = vmax.f32 %v927, 0.0
      %v978 = vmax.f32 %v928, 0.0
      %v979 = vmax.f32 %v929, 0.0
      %v980 = vmax.f32 %v930, 0.0
      %v981 = vmax.f32 %v931, 0.0
      %v982 = vmax.f32 %v932, 0.0
      %v983 = vmax.f32 %v933, 0.0
      %v984 = vmax.f32 %v934, 0.0
      %v985 = vmax.f32 %v935, 0.0
      %v986 = vmax.f32 %v936, 0.0
      %v987 = vmax.f32 %v937, 0.0
      %v988 = vmax.f32 %v938, 0.0
      %v989 = vmax.f32 %v939, 0.0
      %v990 = vmax.f32 %v940, 0.0
      %v991 = vmax.f32 %v941, 0.0
      %v992 = vmax.f32 %v942, 0.0
      %v993 = vmax.f32 %v943, 0.0
      %v994 = vmax.f32 %v944, 0.0
      %v995 = vmax.f32 %v945, 0.0
      %v996 = vmax.f32 %v946, 0.0
      %v997 = vmax.f32 %v947, 0.0
      %v998 = vmax.f32 %v948, 0.0
      %v999 = vmax.f32 %v949, 0.0
      %v1000 = vmax.f32 %v950, 0.0
      %v1001 = vmax.f32 %v951, 0.0
      %v1002 = vmax.f32 %v952, 0.0
      %v1003 = vmax.f32 %v953, 0.0
      %v1004 = vmax.f32 %v954, 0.0
      %v1005 = vmax.f32 %v955, 0.0
      %v1006 = vmax.f32 %v956, 0.0
      %v1007 = vmax.f32 %v957, 0.0
      %v1008 = vmax.f32 %v958, 0.0
      %v1009 = vmax.f32 %v959, 0.0
      %v1010 = vmax.f32 %v960, 0.0
      %v1011 = vmax.f32 %v961, 0.0
      %v1012 = vmax.f32 %v962, 0.0
      %v1013 = vmax.f32 %v963, 0.0
      %v1014 = vmax.f32 %v964, 0.0
      %v1015 = vmax.f32 %v965, 0.0
      %v1016 = vmax.f32 %v966, 0.0
      %v1017 = vmax.f32 %v967, 0.0
      %v1018 = vmax.f32 %v968, 0.0
      %v1019 = vmax.f32 %v969, 0.0
      %v1020 = vmax.f32 %v970, 0.0
      %v1021 = vmax.f32 %v971, 0.0
      %v1022 = vmax.f32 %v972, 0.0
      %v1023 = vmax.f32 %v973, 0.0
      %v1024 = vmax.f32 %v974, 0.0
      %v1025 = vmax.f32 %v975, 0.0
      %v1026 = vmax.f32 %v976, 0.0
      %v1027 = vpack.c.bf16 %v977, %v977
      %v1028 = vpack.c.bf16 %v978, %v978
      %v1029 = vpack.c.bf16 %v979, %v979
      %v1030 = vpack.c.bf16 %v980, %v980
      %v1031 = vpack.c.bf16 %v981, %v981
      %v1032 = vpack.c.bf16 %v982, %v982
      %v1033 = vpack.c.bf16 %v983, %v983
      %v1034 = vpack.c.bf16 %v984, %v984
      %v1035 = vpack.c.bf16 %v985, %v985
      %v1036 = vpack.c.bf16 %v986, %v986
      %v1037 = vpack.c.bf16 %v987, %v987
      %v1038 = vpack.c.bf16 %v988, %v988
      %v1039 = vpack.c.bf16 %v989, %v989
      %v1040 = vpack.c.bf16 %v990, %v990
      %v1041 = vpack.c.bf16 %v991, %v991
      %v1042 = vpack.c.bf16 %v992, %v992
      %v1043 = vpack.c.bf16 %v993, %v993
      %v1044 = vpack.c.bf16 %v994, %v994
      %v1045 = vpack.c.bf16 %v995, %v995
      %v1046 = vpack.c.bf16 %v996, %v996
      %v1047 = vpack.c.bf16 %v997, %v997
      %v1048 = vpack.c.bf16 %v998, %v998
      %v1049 = vpack.c.bf16 %v999, %v999
      %v1050 = vpack.c.bf16 %v1000, %v1000
      %v1051 = vpack.c.bf16 %v1001, %v1001
      %v1052 = vpack.c.bf16 %v1002, %v1002
      %v1053 = vpack.c.bf16 %v1003, %v1003
      %v1054 = vpack.c.bf16 %v1004, %v1004
      %v1055 = vpack.c.bf16 %v1005, %v1005
      %v1056 = vpack.c.bf16 %v1006, %v1006
      %v1057 = vpack.c.bf16 %v1007, %v1007
      %v1058 = vpack.c.bf16 %v1008, %v1008
      %v1059 = vpack.c.bf16 %v1009, %v1009
      %v1060 = vpack.c.bf16 %v1010, %v1010
      %v1061 = vpack.c.bf16 %v1011, %v1011
      %v1062 = vpack.c.bf16 %v1012, %v1012
      %v1063 = vpack.c.bf16 %v1013, %v1013
      %v1064 = vpack.c.bf16 %v1014, %v1014
      %v1065 = vpack.c.bf16 %v1015, %v1015
      %v1066 = vpack.c.bf16 %v1016, %v1016
      %v1067 = vpack.c.bf16 %v1017, %v1017
      %v1068 = vpack.c.bf16 %v1018, %v1018
      %v1069 = vpack.c.bf16 %v1019, %v1019
      %v1070 = vpack.c.bf16 %v1020, %v1020
      %v1071 = vpack.c.bf16 %v1021, %v1021
      %v1072 = vpack.c.bf16 %v1022, %v1022
      %v1073 = vpack.c.bf16 %v1023, %v1023
      %v1074 = vpack.c.bf16 %v1024, %v1024
      %v1075 = vpack.c.bf16 %v1025, %v1025
      %v1076 = vpack.c.bf16 %v1026, %v1026
      %vm1077 = vcmask 257024
      %1078 = vst.msk [vmem:[%s175] sm:$0xf] %vm1077, %v1027
      %1079 = vst.msk [vmem:[%s175 + $0x4] sm:$0xf] %vm1077, %v1028
      %1080 = vst.msk [vmem:[%s175 + $0x8] sm:$0xf] %vm1077, %v1029
      %1081 = vst.msk [vmem:[%s175 + $0xc] sm:$0xf] %vm1077, %v1030
      %1082 = vst.msk [vmem:[%s175 + $0x10] sm:$0xf] %vm1077, %v1031
      %1083 = vst.msk [vmem:[%s175 + $0x14] sm:$0xf] %vm1077, %v1032
      %1084 = vst.msk [vmem:[%s175 + $0x18] sm:$0xf] %vm1077, %v1033
      %1085 = vst.msk [vmem:[%s175 + $0x1c] sm:$0xf] %vm1077, %v1034
      %1086 = vst.msk [vmem:[%s175 + $0x20] sm:$0xf] %vm1077, %v1035
      %1087 = vst.msk [vmem:[%s175 + $0x24] sm:$0xf] %vm1077, %v1036
      %1088 = vst.msk [vmem:[%s175 + $0x28] sm:$0xf] %vm1077, %v1037
      %1089 = vst.msk [vmem:[%s175 + $0x2c] sm:$0xf] %vm1077, %v1038
      %1090 = vst.msk [vmem:[%s175 + $0x30] sm:$0xf] %vm1077, %v1039
      %1091 = vst.msk [vmem:[%s175 + $0x34] sm:$0xf] %vm1077, %v1040
      %1092 = vst.msk [vmem:[%s175 + $0x38] sm:$0xf] %vm1077, %v1041
      %1093 = vst.msk [vmem:[%s175 + $0x3c] sm:$0xf] %vm1077, %v1042
      %1094 = vst.msk [vmem:[%s175 + $0x40] sm:$0xf] %vm1077, %v1043
      %1095 = vst.msk [vmem:[%s175 + $0x44] sm:$0xf] %vm1077, %v1044
      %1096 = vst.msk [vmem:[%s175 + $0x48] sm:$0xf] %vm1077, %v1045
      %1097 = vst.msk [vmem:[%s175 + $0x4c] sm:$0xf] %vm1077, %v1046
      %1098 = vst.msk [vmem:[%s175 + $0x50] sm:$0xf] %vm1077, %v1047
      %1099 = vst.msk [vmem:[%s175 + $0x54] sm:$0xf] %vm1077, %v1048
      %1100 = vst.msk [vmem:[%s175 + $0x58] sm:$0xf] %vm1077, %v1049
      %1101 = vst.msk [vmem:[%s175 + $0x5c] sm:$0xf] %vm1077, %v1050
      %1102 = vst.msk [vmem:[%s175 + $0x60] sm:$0xf] %vm1077, %v1051
      %1103 = vst.msk [vmem:[%s175 + $0x64] sm:$0xf] %vm1077, %v1052
      %1104 = vst.msk [vmem:[%s175 + $0x68] sm:$0xf] %vm1077, %v1053
      %1105 = vst.msk [vmem:[%s175 + $0x6c] sm:$0xf] %vm1077, %v1054
      %1106 = vst.msk [vmem:[%s175 + $0x70] sm:$0xf] %vm1077, %v1055
      %1107 = vst.msk [vmem:[%s175 + $0x74] sm:$0xf] %vm1077, %v1056
      %1108 = vst.msk [vmem:[%s175 + $0x78] sm:$0xf] %vm1077, %v1057
      %1109 = vst.msk [vmem:[%s175 + $0x7c] sm:$0xf] %vm1077, %v1058
      %1110 = vst.msk [vmem:[%s175 + $0x80] sm:$0xf] %vm1077, %v1059
      %1111 = vst.msk [vmem:[%s175 + $0x84] sm:$0xf] %vm1077, %v1060
      %1112 = vst.msk [vmem:[%s175 + $0x88] sm:$0xf] %vm1077, %v1061
      %1113 = vst.msk [vmem:[%s175 + $0x8c] sm:$0xf] %vm1077, %v1062
      %1114 = vst.msk [vmem:[%s175 + $0x90] sm:$0xf] %vm1077, %v1063
      %1115 = vst.msk [vmem:[%s175 + $0x94] sm:$0xf] %vm1077, %v1064
      %1116 = vst.msk [vmem:[%s175 + $0x98] sm:$0xf] %vm1077, %v1065
      %1117 = vst.msk [vmem:[%s175 + $0x9c] sm:$0xf] %vm1077, %v1066
      %1118 = vst.msk [vmem:[%s175 + $0xa0] sm:$0xf] %vm1077, %v1067
      %1119 = vst.msk [vmem:[%s175 + $0xa4] sm:$0xf] %vm1077, %v1068
      %1120 = vst.msk [vmem:[%s175 + $0xa8] sm:$0xf] %vm1077, %v1069
      %1121 = vst.msk [vmem:[%s175 + $0xac] sm:$0xf] %vm1077, %v1070
      %1122 = vst.msk [vmem:[%s175 + $0xb0] sm:$0xf] %vm1077, %v1071
      %1123 = vst.msk [vmem:[%s175 + $0xb4] sm:$0xf] %vm1077, %v1072
      %1124 = vst.msk [vmem:[%s175 + $0xb8] sm:$0xf] %vm1077, %v1073
      %1125 = vst.msk [vmem:[%s175 + $0xbc] sm:$0xf] %vm1077, %v1074
      %1126 = vst.msk [vmem:[%s175 + $0xc0] sm:$0xf] %vm1077, %v1075
      %1127 = vst.msk [vmem:[%s175 + $0xc4] sm:$0xf] %vm1077, %v1076
      %s1128 = smul.u32 50, %s14
      %p1129 = scmp.lt.s32.totalorder %s1128, 99
      %s1130 = scalar_select %p1129, %s1128, 99
      %s1131 = smul.addr %s1130, 4
      %s1132 = scalar_lea.vmem %s3, %s1131
      // Predicated region
      $region33: #{atari_forward.4} parent=31 // pred_check
        %p1133 = pneg %p100
      $region34: #{atari_forward.4} parent=31 // pred_check_branch
        %1135 = sbr.rel (%p1133) target = $region36
      $region35: #{atari_forward.4} parent=31 // pred_region
        %s1136 = smul.u32 50, %s14
      $region36: #{atari_forward.4} parent=31 // pred_fallthru
        _
    $region32: #{atari_forward.4} parent=5 // pred_fallthru
      _
    %p1137 = scmp.le.s32.totalorder 2, %s9
    // Predicated region
    $region37: #{atari_forward.4} parent=5 // pred_check
      %p1138 = pneg %p1137
    $region38: #{atari_forward.4} parent=5 // pred_check_branch
      %1140 = sbr.rel (%p1138) target = $region40
    $region39: #{atari_forward.4} parent=5 // pred_region
      %s1141 = ssub.s32 %s9, 2
      // Predicated region
      $region41: #{atari_forward.4} parent=39 // pred_check
        %p1142 = pneg %p106
      $region42: #{atari_forward.4} parent=39 // pred_check_branch
        %1144 = sbr.rel (%p1142) target = $region44
      $region43: #{atari_forward.4} parent=39 // pred_region
        %s1145 = smul.u32 50, %s15
        %p1146 = scmp.lt.s32.totalorder %s1145, 99
        %s1147 = scalar_select %p1146, %s1145, 99
        %s1148 = smul.addr %s1147, 4
        %s1149 = scalar_lea.vmem %s3, %s1148
      $region44: #{atari_forward.4} parent=39 // pred_fallthru
        _
    $region40: #{atari_forward.4} parent=5 // pred_fallthru
      _
  $region6: #{atari_forward.4} parent=0 // loop_footer
    %s13 = sadd.s32 1, %s9
  $region7: #{atari_forward.4} parent=0 // loop_footer_branch
    %8 = sbr.rel target = $region3
  $region8: #{atari_forward.4} parent=0 // loop_exit
    _

// kernel: atari_forward.5
$region0: #{atari_forward.5}
  #allocation0 [shape = 'u32[]', space=smem, size = 0x4, offset = 0x4, fixed_abs, tag = 'smem constant byte address 0x4 - core index']
  #allocation1 [shape = 'u32[72,128]{1,0:T(1,128)}', space=vmem, size = 0x9000, scoped, tag = 'internal scratch']
  %s0 = inlined_call_operand.vmem [shape: bf16[162,512], index: 0, kind: input, shape index: {}]
  %s1 = inlined_call_operand.vmem [shape: bf16[512,64], index: 1, kind: input, shape index: {}]
  %s2 = inlined_call_operand.vmem [shape: f32[1,64], index: 2, kind: input, shape index: {}]
  %s3 = inlined_call_operand.vmem [shape: bf16[162,64], index: 3, kind: output, shape index: {}]
  %s4 = sld [smem:[#allocation0]]
  $region89: #{atari_forward.5} parent=0
    _
  %s6 = ssub.s32 1, %s4
  %s7 = scalar_select 0, %s6, %s4
  $region1: #{atari_forward.5} parent=0
    #allocation2 [shape = 'u8[45056]{0}', space=vmem, size = 0xb000, scoped, tag = 'output window, operand 0']
    loop: start=0, step=1, limit=4
    $region2: #{atari_forward.5} parent=1 // loop_pre_header
      _
    $region3: #{atari_forward.5} parent=1 // loop_header
      %s9 = sphi 0, %s13
      %p10 = scmp.ge.s32.totalorder %s9, 4
      %s19 = sphi 0, %s21
      %s22 = sphi 0, %s19
      %s23 = sphi 0, %s22
      %s39 = sphi 0, %s23
      %s43 = sphi 0, %s43
      %s45 = sphi 0, %s43
      %s46 = sphi 0, %s45
      %s60 = sphi 0, %s46
      %s64 = sphi 0, %s64
      %s66 = sphi 0, %s64
      %s67 = sphi 0, %s66
      %s81 = sphi 0, %s67
      %s87 = sphi 0, %s89
      %s90 = sphi 0, %s87
      %s91 = sphi 0, %s90
      %s107 = sphi 0, %s91
    $region4: #{atari_forward.5} parent=1 // loop_header_branch
      %12 = sbr.rel (%p10) target = $region8
    $region5: #{atari_forward.5} parent=1 // loop_body
      %s14 = ssub.s32 %s9, 1
      %s15 = ssub.s32 %s9, 2
      %s16 = sadd.s32 %s9, 1
      %s17 = ssub.s32 %s9, %s16
      %p18 = scmp.eq.s32.totalorder %s17, 0
      %s20 = sadd.s32 %s19, 1
      %s21 = scalar_select %p18, %s19, %s20
      %p24 = pneg %p18
      %p25 = scmp.eq.s32.totalorder %s9, 1
      %p26 = por %p24, %p25
      %p27 = scmp.ne.s32.totalorder %s19, %s22
      %p28 = scmp.eq.s32.totalorder %s9, 0
      %p29 = por %p27, %p28
      %p30 = scmp.ne.s32.totalorder %s19, %s22
      %p31 = scmp.eq.s32.totalorder %s14, 1
      %p32 = por %p30, %p31
      %p33 = scmp.ne.s32.totalorder %s22, %s23
      %p34 = scmp.eq.s32.totalorder %s14, 0
      %p35 = por %p33, %p34
      %p36 = scmp.ne.s32.totalorder %s22, %s23
      %p37 = scmp.eq.s32.totalorder %s15, 1
      %p38 = por %p36, %p37
      %p40 = scmp.ne.s32.totalorder %s23, %s39
      %p41 = scmp.eq.s32.totalorder %s15, 0
      %p42 = por %p40, %p41
      %s44 = sadd.s32 %s43, 1
      %p47 = scmp.eq.s32.totalorder %s9, 1
      %p48 = scmp.ne.s32.totalorder %s43, %s45
      %p49 = scmp.eq.s32.totalorder %s9, 0
      %p50 = por %p48, %p49
      %p51 = scmp.ne.s32.totalorder %s43, %s45
      %p52 = scmp.eq.s32.totalorder %s14, 1
      %p53 = por %p51, %p52
      %p54 = scmp.ne.s32.totalorder %s45, %s46
      %p55 = scmp.eq.s32.totalorder %s14, 0
      %p56 = por %p54, %p55
      %p57 = scmp.ne.s32.totalorder %s45, %s46
      %p58 = scmp.eq.s32.totalorder %s15, 1
      %p59 = por %p57, %p58
      %p61 = scmp.ne.s32.totalorder %s46, %s60
      %p62 = scmp.eq.s32.totalorder %s15, 0
      %p63 = por %p61, %p62
      %s65 = sadd.s32 %s64, 1
      %p68 = scmp.eq.s32.totalorder %s9, 1
      %p69 = scmp.ne.s32.totalorder %s64, %s66
      %p70 = scmp.eq.s32.totalorder %s9, 0
      %p71 = por %p69, %p70
      %p72 = scmp.ne.s32.totalorder %s64, %s66
      %p73 = scmp.eq.s32.totalorder %s14, 1
      %p74 = por %p72, %p73
      %p75 = scmp.ne.s32.totalorder %s66, %s67
      %p76 = scmp.eq.s32.totalorder %s14, 0
      %p77 = por %p75, %p76
      %p78 = scmp.ne.s32.totalorder %s66, %s67
      %p79 = scmp.eq.s32.totalorder %s15, 1
      %p80 = por %p78, %p79
      %p82 = scmp.ne.s32.totalorder %s67, %s81
      %p83 = scmp.eq.s32.totalorder %s15, 0
      %p84 = por %p82, %p83
      %s85 = ssub.s32 %s9, %s16
      %p86 = scmp.eq.s32.totalorder %s85, 0
      %s88 = sadd.s32 %s87, 1
      %s89 = scalar_select %p86, %s87, %s88
      %p92 = pneg %p86
      %p93 = scmp.eq.s32.totalorder %s9, 1
      %p94 = por %p92, %p93
      %p95 = scmp.ne.s32.totalorder %s87, %s90
      %p96 = scmp.eq.s32.totalorder %s9, 0
      %p97 = por %p95, %p96
      %p98 = scmp.ne.s32.totalorder %s87, %s90
      %p99 = scmp.eq.s32.totalorder %s14, 1
      %p100 = por %p98, %p99
      %p101 = scmp.ne.s32.totalorder %s90, %s91
      %p102 = scmp.eq.s32.totalorder %s14, 0
      %p103 = por %p101, %p102
      %p104 = scmp.ne.s32.totalorder %s90, %s91
      %p105 = scmp.eq.s32.totalorder %s15, 1
      %p106 = por %p104, %p105
      %p108 = scmp.ne.s32.totalorder %s91, %s107
      %p109 = scmp.eq.s32.totalorder %s15, 0
      %p110 = por %p108, %p109
      %p111 = scmp.le.s32.totalorder 1, %s9
      %p112 = scmp.lt.s32.totalorder %s9, 3
      %p113 = pnand %p111, %p112
      %p114 = pneg %p113
      // Predicated region
      $region9: #{atari_forward.5} parent=5 // pred_check
        _
      $region10: #{atari_forward.5} parent=5 // pred_check_branch
        %116 = sbr.rel (%p113) target = $region12
      $region11: #{atari_forward.5} parent=5 // pred_region
        %s117 = ssub.s32 %s9, 1
        // Predicated region
        $region13: #{atari_forward.5} parent=11 // pred_check
          %p118 = pneg %p56
        $region14: #{atari_forward.5} parent=11 // pred_check_branch
          %120 = sbr.rel (%p118) target = $region16
        $region15: #{atari_forward.5} parent=11 // pred_region
          _
        $region16: #{atari_forward.5} parent=11 // pred_fallthru
          _
        // Predicated region
        $region17: #{atari_forward.5} parent=11 // pred_check
          %p121 = pneg %p77
        $region18: #{atari_forward.5} parent=11 // pred_check_branch
          %123 = sbr.rel (%p121) target = $region20
        $region19: #{atari_forward.5} parent=11 // pred_region
          _
        $region20: #{atari_forward.5} parent=11 // pred_fallthru
          _
      $region12: #{atari_forward.5} parent=5 // pred_fallthru
        _
      %p124 = scmp.lt.s32.totalorder %s9, 2
      // Predicated region
      $region21: #{atari_forward.5} parent=5 // pred_check
        %p125 = pneg %p124
      $region22: #{atari_forward.5} parent=5 // pred_check_branch
        %127 = sbr.rel (%p125) target = $region24
      $region23: #{atari_forward.5} parent=5 // pred_region
        // Predicated region
        $region25: #{atari_forward.5} parent=23 // pred_check
          %p128 = pneg %p29
        $region26: #{atari_forward.5} parent=23 // pred_check_branch
          %130 = sbr.rel (%p128) target = $region28
        $region27: #{atari_forward.5} parent=23 // pred_region
          %s131 = smul.u32 11, %s9
          %s132 = ssub.s32 21, %s131
          %p133 = scmp.lt.s32.totalorder %s132, 11
          %s134 = scalar_select %p133, %s132, 11
          %s135 = smul.u32 4, %s134
          %s136 = smul.u32 %s135, 4
          %p137 = scmp.lt.s32.totalorder %s131, 20
          %s138 = scalar_select %p137, %s131, 20
          %s139 = smul.addr %s138, 4
          %s140 = smul.addr %s139, 4
          %s141 = scalar_lea.vmem %s0, %s140
          %s142 = smul.u32 11, %s9
          %s143 = ssub.s32 21, %s142
          %p144 = scmp.lt.s32.totalorder %s143, 11
          %s145 = scalar_select %p144, %s143, 11
          %s146 = smul.u32 4, %s145
          %s147 = smul.u32 %s146, 4
        $region28: #{atari_forward.5} parent=23 // pred_fallthru
          _
      $region24: #{atari_forward.5} parent=5 // pred_fallthru
        _
      %p148 = scmp.le.s32.totalorder 1, %s9
      %p149 = scmp.lt.s32.totalorder %s9, 3
      %p150 = pnand %p148, %p149
      %p151 = pneg %p150
      // Predicated region
      $region29: #{atari_forward.5} parent=5 // pred_check
        _
      $region30: #{atari_forward.5} parent=5 // pred_check_branch
        %153 = sbr.rel (%p150) target = $region32
      $region31: #{atari_forward.5} parent=5 // pred_region
        %s154 = ssub.s32 %s9, 1
        %s155 = smul.u32 11, %s14
        %s156 = ssub.s32 21, %s155
        %p157 = scmp.lt.s32.totalorder %s156, 11
        %s158 = scalar_select %p157, %s156, 11
        %s159 = smul.u32 4, %s158
        %s160 = smul.u32 %s159, 4
        %p161 = scmp.lt.s32.totalorder %s155, 20
        %s162 = scalar_select %p161, %s155, 20
        %s163 = smul.addr %s162, 4
        %s164 = smul.addr %s163, 4
        %s165 = scalar_lea.vmem %s0, %s164
        %p166 = pneg %p35
        %p167 = pneg %p32
        %p168 = pneg %p56
        %p169 = pneg %p53
        %p170 = pneg %p77
        %p171 = pneg %p74
        %p172 = pneg %p103
        %p173 = pneg %p100
        %s174 = sand.u32 %s90, 1
        %s175 = sand.u32 %s90, 1
        %s176 = smul.addr %s175, 44
        %s177 = scalar_lea.vmem [#allocation2], %s176
        %s178 = smul.u32 11, %s14
        %s179 = ssub.s32 21, %s178
        %p180 = scmp.lt.s32.totalorder %s179, 11
        %s181 = scalar_select %p180, %s179, 11
        %s182 = smul.u32 4, %s181
        %s183 = smul.u32 %s182, 4
        %p184 = scmp.lt.s32.totalorder %s178, 20
        %s185 = scalar_select %p184, %s178, 20
        %s186 = smul.addr %s185, 4
        %s187 = smul.addr %s186, 4
        %s188 = scalar_lea.vmem %s0, %s187
        %s189 = smul.u32 11, %s14
        %s190 = ssub.s32 21, %s189
        %p191 = scmp.lt.s32.totalorder %s190, 11
        %s192 = scalar_select %p191, %s190, 11
        %s193 = smul.u32 4, %s192
        %s194 = smul.u32 %s193, 4
        %s195 = smul.u32 11, %s14
        %s196 = ssub.s32 21, %s195
        %p197 = scmp.lt.s32.totalorder %s196, 11
        %s198 = scalar_select %p197, %s196, 11
        %s199 = smul.u32 4, %s198
        %v200 = vld [vmem:[%s188] sm:$0xff]
        %v201 = vld [vmem:[%s188 + $0x8] sm:$0xff]
        %v202 = vld [vmem:[%s188 + $0x10] sm:$0xff]
        %v203 = vld [vmem:[%s188 + $0x18] sm:$0xff]
        %v204 = vld [vmem:[%s188 + $0x20] sm:$0xff]
        %v205 = vld [vmem:[%s188 + $0x28] sm:$0xff]
        %v206 = vld [vmem:[%s188 + $0x30] sm:$0xff]
        %v207 = vld [vmem:[%s188 + $0x38] sm:$0xff]
        %v208 = vld [vmem:[%s188 + $0x40] sm:$0xff]
        %v209 = vld [vmem:[%s188 + $0x48] sm:$0xff]
        %v210 = vld [vmem:[%s188 + $0x50] sm:$0xff]
        %v211 = vld [vmem:[%s188 + $0x58] sm:$0xff]
        %v212 = vld [vmem:[%s188 + $0x60] sm:$0xff]
        %v213 = vld [vmem:[%s188 + $0x68] sm:$0xff]
        %v214 = vld [vmem:[%s188 + $0x70] sm:$0xff]
        %v215 = vld [vmem:[%s188 + $0x78] sm:$0xff]
        %v216 = vld [vmem:[%s188 + $0x80] sm:$0xff]
        %v217 = vld [vmem:[%s188 + $0x88] sm:$0xff]
        %v218 = vld [vmem:[%s188 + $0x90] sm:$0xff]
        %v219 = vld [vmem:[%s188 + $0x98] sm:$0xff]
        %v220 = vld [vmem:[%s188 + $0xa0] sm:$0xff]
        %v221 = vld [vmem:[%s188 + $0xa8] sm:$0xff]
        %v222 = vld [vmem:[%s1] sm:$0xf]
        %v223 = vld [vmem:[%s1 + $0x4] sm:$0xf]
        %v224 = vld [vmem:[%s1 + $0x8] sm:$0xf]
        %v225 = vld [vmem:[%s1 + $0xc] sm:$0xf]
        %v226 = vld [vmem:[%s1 + $0x10] sm:$0xf]
        %v227 = vld [vmem:[%s1 + $0x14] sm:$0xf]
        %v228 = vld [vmem:[%s1 + $0x18] sm:$0xf]
        %v229 = vld [vmem:[%s1 + $0x1c] sm:$0xf]
        %v230 = vld [vmem:[%s1 + $0x20] sm:$0xf]
        %v231 = vld [vmem:[%s1 + $0x24] sm:$0xf]
        %v232 = vld [vmem:[%s1 + $0x28] sm:$0xf]
        %v233 = vld [vmem:[%s1 + $0x2c] sm:$0xf]
        %v234 = vld [vmem:[%s1 + $0x30] sm:$0xf]
        %v235 = vld [vmem:[%s1 + $0x34] sm:$0xf]
        %v236 = vld [vmem:[%s1 + $0x38] sm:$0xf]
        %v237 = vld [vmem:[%s1 + $0x3c] sm:$0xf]
        %v238 = vld [vmem:[%s1 + $0x40] sm:$0xf]
        %v239 = vld [vmem:[%s1 + $0x44] sm:$0xf]
        %v240 = vld [vmem:[%s1 + $0x48] sm:$0xf]
        %v241 = vld [vmem:[%s1 + $0x4c] sm:$0xf]
        %v242 = vld [vmem:[%s1 + $0x50] sm:$0xf]
        %v243 = vld [vmem:[%s1 + $0x54] sm:$0xf]
        %v244 = vld [vmem:[%s1 + $0x58] sm:$0xf]
        %v245 = vld [vmem:[%s1 + $0x5c] sm:$0xf]
        %v246 = vld [vmem:[%s1 + $0x60] sm:$0xf]
        %v247 = vld [vmem:[%s1 + $0x64] sm:$0xf]
        %v248 = vld [vmem:[%s1 + $0x68] sm:$0xf]
        %v249 = vld [vmem:[%s1 + $0x6c] sm:$0xf]
        %v250 = vld [vmem:[%s1 + $0x70] sm:$0xf]
        %v251 = vld [vmem:[%s1 + $0x74] sm:$0xf]
        %v252 = vld [vmem:[%s1 + $0x78] sm:$0xf]
        %v253 = vld [vmem:[%s1 + $0x7c] sm:$0xf]
        %v254 = vld [vmem:[%s1 + $0x80] sm:$0xf]
        %v255 = vld [vmem:[%s1 + $0x84] sm:$0xf]
        %v256 = vld [vmem:[%s1 + $0x88] sm:$0xf]
        %v257 = vld [vmem:[%s1 + $0x8c] sm:$0xf]
        %v258 = vld [vmem:[%s1 + $0x90] sm:$0xf]
        %v259 = vld [vmem:[%s1 + $0x94] sm:$0xf]
        %v260 = vld [vmem:[%s1 + $0x98] sm:$0xf]
        %v261 = vld [vmem:[%s1 + $0x9c] sm:$0xf]
        %v262 = vld [vmem:[%s1 + $0xa0] sm:$0xf]
        %v263 = vld [vmem:[%s1 + $0xa4] sm:$0xf]
        %v264 = vld [vmem:[%s1 + $0xa8] sm:$0xf]
        %v265 = vld [vmem:[%s1 + $0xac] sm:$0xf]
        %v266 = vld [vmem:[%s1 + $0xb0] sm:$0xf]
        %v267 = vld [vmem:[%s1 + $0xb4] sm:$0xf]
        %v268 = vld [vmem:[%s1 + $0xb8] sm:$0xf]
        %v269 = vld [vmem:[%s1 + $0xbc] sm:$0xf]
        %v270 = vld [vmem:[%s1 + $0xc0] sm:$0xf]
        %v271 = vld [vmem:[%s1 + $0xc4] sm:$0xf]
        %v272 = vld [vmem:[%s1 + $0xc8] sm:$0xf]
        %v273 = vld [vmem:[%s1 + $0xcc] sm:$0xf]
        %v274 = vld [vmem:[%s1 + $0xd0] sm:$0xf]
        %v275 = vld [vmem:[%s1 + $0xd4] sm:$0xf]
        %v276 = vld [vmem:[%s1 + $0xd8] sm:$0xf]
        %v277 = vld [vmem:[%s1 + $0xdc] sm:$0xf]
        %v278 = vld [vmem:[%s1 + $0xe0] sm:$0xf]
        %v279 = vld [vmem:[%s1 + $0xe4] sm:$0xf]
        %v280 = vld [vmem:[%s1 + $0xe8] sm:$0xf]
        %v281 = vld [vmem:[%s1 + $0xec] sm:$0xf]
        %v282 = vld [vmem:[%s1 + $0xf0] sm:$0xf]
        %v283 = vld [vmem:[%s1 + $0xf4] sm:$0xf]
        %v284 = vld [vmem:[%s1 + $0xf8] sm:$0xf]
        %v285 = vld [vmem:[%s1 + $0xfc] sm:$0xf]
        %v286 = vld [vmem:[%s2] sm:$0x1]
        %v288 = vperm.slane %v286, 0
        %v312 = vunpack.c.l.b16 %v200
        %v313 = vunpack.c.h.b16 %v200
        %v314 = vunpack.c.l.b16 %v201
        %v315 = vunpack.c.h.b16 %v201
        %v316 = vunpack.c.l.b16 %v202
        %v317 = vunpack.c.h.b16 %v202
        %v318 = vunpack.c.l.b16 %v203
        %v319 = vunpack.c.h.b16 %v203
        %v320 = vunpack.c.l.b16 %v204
        %v321 = vunpack.c.h.b16 %v204
        %v322 = vunpack.c.l.b16 %v205
        %v323 = vunpack.c.h.b16 %v205
        %v324 = vunpack.c.l.b16 %v206
        %v325 = vunpack.c.h.b16 %v206
        %v326 = vunpack.c.l.b16 %v207
        %v327 = vunpack.c.h.b16 %v207
        %v328 = vunpack.c.l.b16 %v208
        %v329 = vunpack.c.h.b16 %v208
        %v330 = vunpack.c.l.b16 %v209
        %v331 = vunpack.c.h.b16 %v209
        %v332 = vunpack.c.l.b16 %v210
        %v333 = vunpack.c.h.b16 %v210
        %v334 = vunpack.c.l.b16 %v211
        %v335 = vunpack.c.h.b16 %v211
        %v336 = vunpack.c.l.b16 %v212
        %v337 = vunpack.c.h.b16 %v212
        %v338 = vunpack.c.l.b16 %v213
        %v339 = vunpack.c.h.b16 %v213
        %v340 = vunpack.c.l.b16 %v214
        %v341 = vunpack.c.h.b16 %v214
        %v342 = vunpack.c.l.b16 %v215
        %v343 = vunpack.c.h.b16 %v215
        %v344 = vunpack.c.l.b16 %v216
        %v345 = vunpack.c.h.b16 %v216
        %v346 = vunpack.c.l.b16 %v217
        %v347 = vunpack.c.h.b16 %v217
        %v348 = vunpack.c.l.b16 %v218
        %v349 = vunpack.c.h.b16 %v218
        %v350 = vunpack.c.l.b16 %v219
        %v351 = vunpack.c.h.b16 %v219
        %v352 = vunpack.c.l.b16 %v220
        %v353 = vunpack.c.h.b16 %v220
        %v354 = vunpack.c.l.b16 %v221
        %v355 = vunpack.c.h.b16 %v221
        %v356 = vpack.c.b16 %v316, %v312
        %v357 = vpack.c.b16 %v317, %v313
        %v358 = vpack.c.b16 %v318, %v314
        %v359 = vpack.c.b16 %v319, %v315
        %v360 = vpack.c.b16 %v324, %v320
        %v361 = vpack.c.b16 %v325, %v321
        %v362 = vpack.c.b16 %v326, %v322
        %v363 = vpack.c.b16 %v327, %v323
        %v364 = vpack.c.b16 %v332, %v328
        %v365 = vpack.c.b16 %v333, %v329
        %v366 = vpack.c.b16 %v334, %v330
        %v367 = vpack.c.b16 %v335, %v331
        %v368 = vpack.c.b16 %v340, %v336
        %v369 = vpack.c.b16 %v341, %v337
        %v370 = vpack.c.b16 %v342, %v338
        %v371 = vpack.c.b16 %v343, %v339
        %v372 = vpack.c.b16 %v348, %v344
        %v373 = vpack.c.b16 %v349, %v345
        %v374 = vpack.c.b16 %v350, %v346
        %v375 = vpack.c.b16 %v351, %v347
        %v376 = vpack.c.b16 %v352, %v352
        %v377 = vpack.c.b16 %v353, %v353
        %v378 = vpack.c.b16 %v354, %v354
        %v379 = vpack.c.b16 %v355, %v355
        %v468 = vunpack.c.l.b16 %v222
        %v469 = vunpack.c.l.b16 %v223
        %v470 = vunpack.c.l.b16 %v224
        %v471 = vunpack.c.l.b16 %v225
        %v472 = vunpack.c.l.b16 %v226
        %v473 = vunpack.c.l.b16 %v227
        %v474 = vunpack.c.l.b16 %v228
        %v475 = vunpack.c.l.b16 %v229
        %v476 = vunpack.c.l.b16 %v230
        %v477 = vunpack.c.l.b16 %v231
        %v478 = vunpack.c.l.b16 %v232
        %v479 = vunpack.c.l.b16 %v233
        %v480 = vunpack.c.l.b16 %v234
        %v481 = vunpack.c.l.b16 %v235
        %v482 = vunpack.c.l.b16 %v236
        %v483 = vunpack.c.l.b16 %v237
        %v484 = vunpack.c.l.b16 %v238
        %v485 = vunpack.c.l.b16 %v239
        %v486 = vunpack.c.l.b16 %v240
        %v487 = vunpack.c.l.b16 %v241
        %v488 = vunpack.c.l.b16 %v242
        %v489 = vunpack.c.l.b16 %v243
        %v490 = vunpack.c.l.b16 %v244
        %v491 = vunpack.c.l.b16 %v245
        %v492 = vunpack.c.l.b16 %v246
        %v493 = vunpack.c.l.b16 %v247
        %v494 = vunpack.c.l.b16 %v248
        %v495 = vunpack.c.l.b16 %v249
        %v496 = vunpack.c.l.b16 %v250
        %v497 = vunpack.c.l.b16 %v251
        %v498 = vunpack.c.l.b16 %v252
        %v499 = vunpack.c.l.b16 %v253
        %v500 = vunpack.c.l.b16 %v254
        %v501 = vunpack.c.l.b16 %v255
        %v502 = vunpack.c.l.b16 %v256
        %v503 = vunpack.c.l.b16 %v257
        %v504 = vunpack.c.l.b16 %v258
        %v505 = vunpack.c.l.b16 %v259
        %v506 = vunpack.c.l.b16 %v260
        %v507 = vunpack.c.l.b16 %v261
        %v508 = vunpack.c.l.b16 %v262
        %v509 = vunpack.c.l.b16 %v263
        %v510 = vunpack.c.l.b16 %v264
        %v511 = vunpack.c.l.b16 %v265
        %v512 = vunpack.c.l.b16 %v266
        %v513 = vunpack.c.l.b16 %v267
        %v514 = vunpack.c.l.b16 %v268
        %v515 = vunpack.c.l.b16 %v269
        %v516 = vunpack.c.l.b16 %v270
        %v517 = vunpack.c.l.b16 %v271
        %v518 = vunpack.c.l.b16 %v272
        %v519 = vunpack.c.l.b16 %v273
        %v520 = vunpack.c.l.b16 %v274
        %v521 = vunpack.c.l.b16 %v275
        %v522 = vunpack.c.l.b16 %v276
        %v523 = vunpack.c.l.b16 %v277
        %v524 = vunpack.c.l.b16 %v278
        %v525 = vunpack.c.l.b16 %v279
        %v526 = vunpack.c.l.b16 %v280
        %v527 = vunpack.c.l.b16 %v281
        %v528 = vunpack.c.l.b16 %v282
        %v529 = vunpack.c.l.b16 %v283
        %v530 = vunpack.c.l.b16 %v284
        %v531 = vunpack.c.l.b16 %v285
        %v532 = vpack.c.b16 %v469, %v468
        %v533 = vpack.c.b16 %v471, %v470
        %v534 = vpack.c.b16 %v473, %v472
        %v535 = vpack.c.b16 %v475, %v474
        %v536 = vpack.c.b16 %v477, %v476
        %v537 = vpack.c.b16 %v479, %v478
        %v538 = vpack.c.b16 %v481, %v480
        %v539 = vpack.c.b16 %v483, %v482
        %v540 = vpack.c.b16 %v485, %v484
        %v541 = vpack.c.b16 %v487, %v486
        %v542 = vpack.c.b16 %v489, %v488
        %v543 = vpack.c.b16 %v491, %v490
        %v544 = vpack.c.b16 %v493, %v492
        %v545 = vpack.c.b16 %v495, %v494
        %v546 = vpack.c.b16 %v497, %v496
        %v547 = vpack.c.b16 %v499, %v498
        %v548 = vpack.c.b16 %v501, %v500
        %v549 = vpack.c.b16 %v503, %v502
        %v550 = vpack.c.b16 %v505, %v504
        %v551 = vpack.c.b16 %v507, %v506
        %v552 = vpack.c.b16 %v509, %v508
        %v553 = vpack.c.b16 %v511, %v510
        %v554 = vpack.c.b16 %v513, %v512
        %v555 = vpack.c.b16 %v515, %v514
        %v556 = vpack.c.b16 %v517, %v516
        %v557 = vpack.c.b16 %v519, %v518
        %v558 = vpack.c.b16 %v521, %v520
        %v559 = vpack.c.b16 %v523, %v522
        %v560 = vpack.c.b16 %v525, %v524
        %v561 = vpack.c.b16 %v527, %v526
        %v562 = vpack.c.b16 %v529, %v528
        %v563 = vpack.c.b16 %v531, %v530
        %596 = vmatpush.bf16.msra.mxu0 %v539
        %597 = vmatpush.bf16.msra.mxu0 %v538
        %598 = vmatpush.bf16.msra.mxu0 %v537
        %599 = vmatpush.bf16.msra.mxu0 %v536
        %600 = vmatpush.bf16.msra.mxu0 %v535
        %601 = vmatpush.bf16.msra.mxu0 %v534
        %602 = vmatpush.bf16.msra.mxu0 %v533
        %603 = vmatpush.bf16.msra.mxu0 %v532
        %604 = vmatmul.bf16.gmra.mxu0 %v356
        %v605 = vpop.f32.mrf.mxu0
        %v606 = vadd.f32 %v288, %v605
        %v607 = vpop.f32.mrf.mxu0
        %v608 = vadd.f32 %v288, %v607
        %609 = vmatmul.bf16.gmra.mxu0 %v360
        %v610 = vpop.f32.mrf.mxu0
        %v611 = vadd.f32 %v288, %v610
        %v612 = vpop.f32.mrf.mxu0
        %v613 = vadd.f32 %v288, %v612
        %614 = vmatmul.bf16.gmra.mxu0 %v364
        %v615 = vpop.f32.mrf.mxu0
        %v616 = vadd.f32 %v288, %v615
        %v617 = vpop.f32.mrf.mxu0
        %v618 = vadd.f32 %v288, %v617
        %619 = vmatmul.bf16.gmra.mxu0 %v368
        %v620 = vpop.f32.mrf.mxu0
        %v621 = vadd.f32 %v288, %v620
        %v622 = vpop.f32.mrf.mxu0
        %v623 = vadd.f32 %v288, %v622
        %624 = vmatmul.bf16.gmra.mxu0 %v372
        %v625 = vpop.f32.mrf.mxu0
        %v626 = vadd.f32 %v288, %v625
        %v627 = vpop.f32.mrf.mxu0
        %v628 = vadd.f32 %v288, %v627
        %629 = vmatmul.bf16.gmra.mxu0 %v376
        %v630 = vpop.f32.mrf.mxu0
        %v631 = vadd.f32 %v288, %v630
        %v632 = vpop.f32.mrf.mxu0
        %633 = vdwg.mxu0
        %634 = vmatpush.bf16.msra.mxu0 %v547
        %635 = vmatpush.bf16.msra.mxu0 %v546
        %636 = vmatpush.bf16.msra.mxu0 %v545
        %637 = vmatpush.bf16.msra.mxu0 %v544
        %638 = vmatpush.bf16.msra.mxu0 %v543
        %639 = vmatpush.bf16.msra.mxu0 %v542
        %640 = vmatpush.bf16.msra.mxu0 %v541
        %641 = vmatpush.bf16.msra.mxu0 %v540
        %642 = vmatmul.bf16.gmra.mxu0 %v357
        %v643 = vpop.f32.mrf.mxu0
        %v644 = vadd.f32 %v606, %v643
        %v645 = vpop.f32.mrf.mxu0
        %v646 = vadd.f32 %v608, %v645
        %647 = vmatmul.bf16.gmra.mxu0 %v361
        %v648 = vpop.f32.mrf.mxu0
        %v649 = vadd.f32 %v611, %v648
        %v650 = vpop.f32.mrf.mxu0
        %v651 = vadd.f32 %v613, %v650
        %652 = vmatmul.bf16.gmra.mxu0 %v365
        %v653 = vpop.f32.mrf.mxu0
        %v654 = vadd.f32 %v616, %v653
        %v655 = vpop.f32.mrf.mxu0
        %v656 = vadd.f32 %v618, %v655
        %657 = vmatmul.bf16.gmra.mxu0 %v369
        %v658 = vpop.f32.mrf.mxu0
        %v659 = vadd.f32 %v621, %v658
        %v660 = vpop.f32.mrf.mxu0
        %v661 = vadd.f32 %v623, %v660
        %662 = vmatmul.bf16.gmra.mxu0 %v373
        %v663 = vpop.f32.mrf.mxu0
        %v664 = vadd.f32 %v626, %v663
        %v665 = vpop.f32.mrf.mxu0
        %v666 = vadd.f32 %v628, %v665
        %667 = vmatmul.bf16.gmra.mxu0 %v377
        %v668 = vpop.f32.mrf.mxu0
        %v669 = vadd.f32 %v631, %v668
        %v670 = vpop.f32.mrf.mxu0
        %671 = vdwg.mxu0
        %672 = vmatpush.bf16.msra.mxu0 %v555
        %673 = vmatpush.bf16.msra.mxu0 %v554
        %674 = vmatpush.bf16.msra.mxu0 %v553
        %675 = vmatpush.bf16.msra.mxu0 %v552
        %676 = vmatpush.bf16.msra.mxu0 %v551
        %677 = vmatpush.bf16.msra.mxu0 %v550
        %678 = vmatpush.bf16.msra.mxu0 %v549
        %679 = vmatpush.bf16.msra.mxu0 %v548
        %680 = vmatmul.bf16.gmra.mxu0 %v358
        %v681 = vpop.f32.mrf.mxu0
        %v682 = vadd.f32 %v644, %v681
        %v683 = vpop.f32.mrf.mxu0
        %v684 = vadd.f32 %v646, %v683
        %685 = vmatmul.bf16.gmra.mxu0 %v362
        %v686 = vpop.f32.mrf.mxu0
        %v687 = vadd.f32 %v649, %v686
        %v688 = vpop.f32.mrf.mxu0
        %v689 = vadd.f32 %v651, %v688
        %690 = vmatmul.bf16.gmra.mxu0 %v366
        %v691 = vpop.f32.mrf.mxu0
        %v692 = vadd.f32 %v654, %v691
        %v693 = vpop.f32.mrf.mxu0
        %v694 = vadd.f32 %v656, %v693
        %695 = vmatmul.bf16.gmra.mxu0 %v370
        %v696 = vpop.f32.mrf.mxu0
        %v697 = vadd.f32 %v659, %v696
        %v698 = vpop.f32.mrf.mxu0
        %v699 = vadd.f32 %v661, %v698
        %700 = vmatmul.bf16.gmra.mxu0 %v374
        %v701 = vpop.f32.mrf.mxu0
        %v702 = vadd.f32 %v664, %v701
        %v703 = vpop.f32.mrf.mxu0
        %v704 = vadd.f32 %v666, %v703
        %705 = vmatmul.bf16.gmra.mxu0 %v378
        %v706 = vpop.f32.mrf.mxu0
        %v707 = vadd.f32 %v669, %v706
        %v708 = vpop.f32.mrf.mxu0
        %709 = vdwg.mxu0
        %710 = vmatpush.bf16.msra.mxu0 %v563
        %711 = vmatpush.bf16.msra.mxu0 %v562
        %712 = vmatpush.bf16.msra.mxu0 %v561
        %713 = vmatpush.bf16.msra.mxu0 %v560
        %714 = vmatpush.bf16.msra.mxu0 %v559
        %715 = vmatpush.bf16.msra.mxu0 %v558
        %716 = vmatpush.bf16.msra.mxu0 %v557
        %717 = vmatpush.bf16.msra.mxu0 %v556
        %718 = vmatmul.bf16.gmra.mxu0 %v359
        %v719 = vpop.f32.mrf.mxu0
        %v720 = vadd.f32 %v682, %v719
        %v721 = vpop.f32.mrf.mxu0
        %v722 = vadd.f32 %v684, %v721
        %723 = vmatmul.bf16.gmra.mxu0 %v363
        %v724 = vpop.f32.mrf.mxu0
        %v725 = vadd.f32 %v687, %v724
        %v726 = vpop.f32.mrf.mxu0
        %v727 = vadd.f32 %v689, %v726
        %728 = vmatmul.bf16.gmra.mxu0 %v367
        %v729 = vpop.f32.mrf.mxu0
        %v730 = vadd.f32 %v692, %v729
        %v731 = vpop.f32.mrf.mxu0
        %v732 = vadd.f32 %v694, %v731
        %733 = vmatmul.bf16.gmra.mxu0 %v371
        %v734 = vpop.f32.mrf.mxu0
        %v735 = vadd.f32 %v697, %v734
        %v736 = vpop.f32.mrf.mxu0
        %v737 = vadd.f32 %v699, %v736
        %738 = vmatmul.bf16.gmra.mxu0 %v375
        %v739 = vpop.f32.mrf.mxu0
        %v740 = vadd.f32 %v702, %v739
        %v741 = vpop.f32.mrf.mxu0
        %v742 = vadd.f32 %v704, %v741
        %743 = vmatmul.bf16.gmra.mxu0 %v379
        %v744 = vpop.f32.mrf.mxu0
        %v745 = vadd.f32 %v707, %v744
        %v746 = vpop.f32.mrf.mxu0
        %747 = vdwg.mxu0
        %v748 = vmax.f32 %v720, 0.0
        %v749 = vmax.f32 %v722, 0.0
        %v750 = vmax.f32 %v725, 0.0
        %v751 = vmax.f32 %v727, 0.0
        %v752 = vmax.f32 %v730, 0.0
        %v753 = vmax.f32 %v732, 0.0
        %v754 = vmax.f32 %v735, 0.0
        %v755 = vmax.f32 %v737, 0.0
        %v756 = vmax.f32 %v740, 0.0
        %v757 = vmax.f32 %v742, 0.0
        %v758 = vmax.f32 %v745, 0.0
        %v759 = vpack.c.bf16 %v748, %v748
        %v760 = vpack.c.bf16 %v749, %v749
        %v761 = vpack.c.bf16 %v750, %v750
        %v762 = vpack.c.bf16 %v751, %v751
        %v763 = vpack.c.bf16 %v752, %v752
        %v764 = vpack.c.bf16 %v753, %v753
        %v765 = vpack.c.bf16 %v754, %v754
        %v766 = vpack.c.bf16 %v755, %v755
        %v767 = vpack.c.bf16 %v756, %v756
        %v768 = vpack.c.bf16 %v757, %v757
        %v769 = vpack.c.bf16 %v758, %v758
        %vm770 = vcmask 519168
        %771 = vst.msk [vmem:[%s177] sm:$0xf] %vm770, %v759
        %772 = vst.msk [vmem:[%s177 + $0x4] sm:$0xf] %vm770, %v760
        %773 = vst.msk [vmem:[%s177 + $0x8] sm:$0xf] %vm770, %v761
        %774 = vst.msk [vmem:[%s177 + $0xc] sm:$0xf] %vm770, %v762
        %775 = vst.msk [vmem:[%s177 + $0x10] sm:$0xf] %vm770, %v763
        %776 = vst.msk [vmem:[%s177 + $0x14] sm:$0xf] %vm770, %v764
        %777 = vst.msk [vmem:[%s177 + $0x18] sm:$0xf] %vm770, %v765
        %778 = vst.msk [vmem:[%s177 + $0x1c] sm:$0xf] %vm770, %v766
        %779 = vst.msk [vmem:[%s177 + $0x20] sm:$0xf] %vm770, %v767
        %780 = vst.msk [vmem:[%s177 + $0x24] sm:$0xf] %vm770, %v768
        %781 = vst.msk [vmem:[%s177 + $0x28] sm:$0xf] %vm770, %v769
        %s782 = sand.u32 %s90, 1
        %s783 = sand.u32 %s90, 1
        %s784 = smul.addr %s783, 44
        %s785 = scalar_lea.vmem [#allocation2], %s784
        // Predicated region
        $region33: #{atari_forward.5} parent=31 // pred_check
          %p786 = pneg %p100
        $region34: #{atari_forward.5} parent=31 // pred_check_branch
          %788 = sbr.rel (%p786) target = $region36
        $region35: #{atari_forward.5} parent=31 // pred_region
          %s789 = smul.u32 11, %s14
          %s790 = ssub.s32 21, %s789
          %p791 = scmp.lt.s32.totalorder %s790, 11
          %s792 = scalar_select %p791, %s790, 11
          %s793 = smul.u32 4, %s792
          %p794 = scmp.ne.s32.totalorder 0, %s793
          %s795 = smul.addr %s789, 4
          %s796 = scalar_lea.vmem %s3, %s795
          // Predicated region
          $region37: #{atari_forward.5} parent=35 // pred_check
            %p797 = pneg %p794
          $region38: #{atari_forward.5} parent=35 // pred_check_branch
            %799 = sbr.rel (%p797) target = $region40
          $region39: #{atari_forward.5} parent=35 // pred_region
            // Predicated region
            $region41: #{atari_forward.5} parent=39 // pred_check
              _
            $region42: #{atari_forward.5} parent=39 // pred_check_branch
              %801 = sbr.rel target = $region44
            $region43: #{atari_forward.5} parent=39 // pred_region
              // Predicated region
              $region63: #{atari_forward.5} parent=43 // pred_check
                _
              $region64: #{atari_forward.5} parent=43 // pred_check_branch
                %872 = sbr.rel (0) target = $region66
              $region65: #{atari_forward.5} parent=43 // pred_region
                %s874 = ssub.s32 16, 1
                %s875 = sdiv.u32.pop %s792, 11
                %s876 = srem.u32.pop %s792, 11
                // While loop
                $region67: #{atari_forward.5} parent=65 // loop_pre_header
                  _
                $region68: #{atari_forward.5} parent=65 // loop_header
                  %s878 = sphi 0, %s880
                  %p879 = scmp.ge.s32.totalorder %s878, %s875
                  %s883 = sphi 0, %s910
                  %s884 = sphi %s785, %s913
                  %s885 = sphi %s796, %s914
                $region69: #{atari_forward.5} parent=65 // loop_header_branch
                  %882 = sbr.rel (%p879) target = $region73
                $region70: #{atari_forward.5} parent=65 // loop_body
                  %v886 = vld [vmem:[%s884] sm:%s874]
                  %887 = vst [vmem:[%s885] sm:%s874] %v886
                  %v888 = vld [vmem:[%s884 + $0x4] sm:%s874]
                  %889 = vst [vmem:[%s885 + $0x4] sm:%s874] %v888
                  %v890 = vld [vmem:[%s884 + $0x8] sm:%s874]
                  %891 = vst [vmem:[%s885 + $0x8] sm:%s874] %v890
                  %v892 = vld [vmem:[%s884 + $0xc] sm:%s874]
                  %893 = vst [vmem:[%s885 + $0xc] sm:%s874] %v892
                  %v894 = vld [vmem:[%s884 + $0x10] sm:%s874]
                  %895 = vst [vmem:[%s885 + $0x10] sm:%s874] %v894
                  %v896 = vld [vmem:[%s884 + $0x14] sm:%s874]
                  %897 = vst [vmem:[%s885 + $0x14] sm:%s874] %v896
                  %v898 = vld [vmem:[%s884 + $0x18] sm:%s874]
                  %899 = vst [vmem:[%s885 + $0x18] sm:%s874] %v898
                  %v900 = vld [vmem:[%s884 + $0x1c] sm:%s874]
                  %901 = vst [vmem:[%s885 + $0x1c] sm:%s874] %v900
                  %v902 = vld [vmem:[%s884 + $0x20] sm:%s874]
                  %903 = vst [vmem:[%s885 + $0x20] sm:%s874] %v902
                  %v904 = vld [vmem:[%s884 + $0x24] sm:%s874]
                  %905 = vst [vmem:[%s885 + $0x24] sm:%s874] %v904
                  %v906 = vld [vmem:[%s884 + $0x28] sm:%s874]
                  %907 = vst [vmem:[%s885 + $0x28] sm:%s874] %v906
                  %s908 = sadd.s32 1, %s883
                  %p909 = scmp.ge.s32.totalorder %s908, %s875
                  %s910 = scalar_select %p909, 0, %s908
                  %s911 = smul.u32 %s910, 44
                  %s912 = smul.u32 %s910, 44
                  %s913 = scalar_lea.vmem %s785, %s911 [#allocation2]
                  %s914 = scalar_lea.vmem %s796, %s912
                $region71: #{atari_forward.5} parent=65 // loop_footer
                  %s880 = sadd.s32 %s878, 1
                $region72: #{atari_forward.5} parent=65 // loop_footer_branch
                  %877 = sbr.rel target = $region68
                $region73: #{atari_forward.5} parent=65 // loop_exit
                  _
                %s915 = sdiv.u32.pop %s792, 11
                %s916 = srem.u32.pop %s792, 11
                %s917 = smul.u32 %s915, 11
                %s918 = smul.u32 4, %s917
                %s919 = scalar_lea.vmem %s785, %s918 [#allocation2]
                %s920 = smul.u32 4, %s917
                %s921 = scalar_lea.vmem %s796, %s920
                // While loop
                $region74: #{atari_forward.5} parent=65 // loop_pre_header
                  _
                $region75: #{atari_forward.5} parent=65 // loop_header
                  %s923 = sphi 0, %s925
                  %p924 = scmp.ge.s32.totalorder %s923, %s916
                  %s928 = sphi 0, %s935
                  %s929 = sphi %s919, %s938
                  %s930 = sphi %s921, %s939
                $region76: #{atari_forward.5} parent=65 // loop_header_branch
                  %927 = sbr.rel (%p924) target = $region80
                $region77: #{atari_forward.5} parent=65 // loop_body
                  %v931 = vld [vmem:[%s929] sm:%s874]
                  %932 = vst [vmem:[%s930] sm:%s874] %v931
                  %s933 = sadd.s32 1, %s928
                  %p934 = scmp.ge.s32.totalorder %s933, %s916
                  %s935 = scalar_select %p934, 0, %s933
                  %s936 = smul.u32 %s935, 4
                  %s937 = smul.u32 %s935, 4
                  %s938 = scalar_lea.vmem %s919, %s936 [#allocation2]
                  %s939 = scalar_lea.vmem %s921, %s937
                $region78: #{atari_forward.5} parent=65 // loop_footer
                  %s925 = sadd.s32 %s923, 1
                $region79: #{atari_forward.5} parent=65 // loop_footer_branch
                  %922 = sbr.rel target = $region75
                $region80: #{atari_forward.5} parent=65 // loop_exit
                  _
              $region66: #{atari_forward.5} parent=43 // pred_fallthru
                _
            $region44: #{atari_forward.5} parent=39 // pred_fallthru
              _
            // Predicated region
            $region45: #{atari_forward.5} parent=39 // pred_check
              _
            $region46: #{atari_forward.5} parent=39 // pred_check_branch
              %803 = sbr.rel (0) target = $region48
            $region47: #{atari_forward.5} parent=39 // pred_region
              %s805 = ssub.s32 16, 1
              %s806 = sdiv.u32.pop %s792, 11
              %s807 = srem.u32.pop %s792, 11
              // While loop
              $region49: #{atari_forward.5} parent=47 // loop_pre_header
                _
              $region50: #{atari_forward.5} parent=47 // loop_header
                %s809 = sphi 0, %s811
                %p810 = scmp.ge.s32.totalorder %s809, %s806
                %s814 = sphi 0, %s841
                %s815 = sphi %s785, %s844
                %s816 = sphi %s796, %s845
              $region51: #{atari_forward.5} parent=47 // loop_header_branch
                %813 = sbr.rel (%p810) target = $region55
              $region52: #{atari_forward.5} parent=47 // loop_body
                %v817 = vld [vmem:[%s815] sm:%s805]
                %818 = vst [vmem:[%s816] sm:%s805] %v817
                %v819 = vld [vmem:[%s815 + $0x4] sm:%s805]
                %820 = vst [vmem:[%s816 + $0x4] sm:%s805] %v819
                %v821 = vld [vmem:[%s815 + $0x8] sm:%s805]
                %822 = vst [vmem:[%s816 + $0x8] sm:%s805] %v821
                %v823 = vld [vmem:[%s815 + $0xc] sm:%s805]
                %824 = vst [vmem:[%s816 + $0xc] sm:%s805] %v823
                %v825 = vld [vmem:[%s815 + $0x10] sm:%s805]
                %826 = vst [vmem:[%s816 + $0x10] sm:%s805] %v825
                %v827 = vld [vmem:[%s815 + $0x14] sm:%s805]
                %828 = vst [vmem:[%s816 + $0x14] sm:%s805] %v827
                %v829 = vld [vmem:[%s815 + $0x18] sm:%s805]
                %830 = vst [vmem:[%s816 + $0x18] sm:%s805] %v829
                %v831 = vld [vmem:[%s815 + $0x1c] sm:%s805]
                %832 = vst [vmem:[%s816 + $0x1c] sm:%s805] %v831
                %v833 = vld [vmem:[%s815 + $0x20] sm:%s805]
                %834 = vst [vmem:[%s816 + $0x20] sm:%s805] %v833
                %v835 = vld [vmem:[%s815 + $0x24] sm:%s805]
                %836 = vst [vmem:[%s816 + $0x24] sm:%s805] %v835
                %v837 = vld [vmem:[%s815 + $0x28] sm:%s805]
                %838 = vst [vmem:[%s816 + $0x28] sm:%s805] %v837
                %s839 = sadd.s32 1, %s814
                %p840 = scmp.ge.s32.totalorder %s839, %s806
                %s841 = scalar_select %p840, 0, %s839
                %s842 = smul.u32 %s841, 44
                %s843 = smul.u32 %s841, 44
                %s844 = scalar_lea.vmem %s785, %s842 [#allocation2]
                %s845 = scalar_lea.vmem %s796, %s843
              $region53: #{atari_forward.5} parent=47 // loop_footer
                %s811 = sadd.s32 %s809, 1
              $region54: #{atari_forward.5} parent=47 // loop_footer_branch
                %808 = sbr.rel target = $region50
              $region55: #{atari_forward.5} parent=47 // loop_exit
                _
              %s846 = sdiv.u32.pop %s792, 11
              %s847 = srem.u32.pop %s792, 11
              %s848 = smul.u32 %s846, 11
              %s849 = smul.u32 4, %s848
              %s850 = scalar_lea.vmem %s785, %s849 [#allocation2]
              %s851 = smul.u32 4, %s848
              %s852 = scalar_lea.vmem %s796, %s851
              // While loop
              $region56: #{atari_forward.5} parent=47 // loop_pre_header
                _
              $region57: #{atari_forward.5} parent=47 // loop_header
                %s854 = sphi 0, %s856
                %p855 = scmp.ge.s32.totalorder %s854, %s847
                %s859 = sphi 0, %s866
                %s860 = sphi %s850, %s869
                %s861 = sphi %s852, %s870
              $region58: #{atari_forward.5} parent=47 // loop_header_branch
                %858 = sbr.rel (%p855) target = $region62
              $region59: #{atari_forward.5} parent=47 // loop_body
                %v862 = vld [vmem:[%s860] sm:%s805]
                %863 = vst [vmem:[%s861] sm:%s805] %v862
                %s864 = sadd.s32 1, %s859
                %p865 = scmp.ge.s32.totalorder %s864, %s847
                %s866 = scalar_select %p865, 0, %s864
                %s867 = smul.u32 %s866, 4
                %s868 = smul.u32 %s866, 4
                %s869 = scalar_lea.vmem %s850, %s867 [#allocation2]
                %s870 = scalar_lea.vmem %s852, %s868
              $region60: #{atari_forward.5} parent=47 // loop_footer
                %s856 = sadd.s32 %s854, 1
              $region61: #{atari_forward.5} parent=47 // loop_footer_branch
                %853 = sbr.rel target = $region57
              $region62: #{atari_forward.5} parent=47 // loop_exit
                _
            $region48: #{atari_forward.5} parent=39 // pred_fallthru
              _
          $region40: #{atari_forward.5} parent=35 // pred_fallthru
            _
          %940 = vnop
        $region36: #{atari_forward.5} parent=31 // pred_fallthru
          _
      $region32: #{atari_forward.5} parent=5 // pred_fallthru
        _
      %p941 = scmp.le.s32.totalorder 2, %s9
      // Predicated region
      $region81: #{atari_forward.5} parent=5 // pred_check
        %p942 = pneg %p941
      $region82: #{atari_forward.5} parent=5 // pred_check_branch
        %944 = sbr.rel (%p942) target = $region84
      $region83: #{atari_forward.5} parent=5 // pred_region
        %s945 = ssub.s32 %s9, 2
        // Predicated region
        $region85: #{atari_forward.5} parent=83 // pred_check
          %p946 = pneg %p106
        $region86: #{atari_forward.5} parent=83 // pred_check_branch
          %948 = sbr.rel (%p946) target = $region88
        $region87: #{atari_forward.5} parent=83 // pred_region
          %s949 = sand.u32 %s91, 1
          %s950 = sand.u32 %s91, 1
          %s951 = smul.addr %s950, 44
          %s952 = scalar_lea.vmem [#allocation2], %s951
        $region88: #{atari_forward.5} parent=83 // pred_fallthru
          _
      $region84: #{atari_forward.5} parent=5 // pred_fallthru
        _
    $region6: #{atari_forward.5} parent=1 // loop_footer
      %s13 = sadd.s32 1, %s9
    $region7: #{atari_forward.5} parent=1 // loop_footer_branch
      %8 = sbr.rel target = $region3
    $region8: #{atari_forward.5} parent=1 // loop_exit
      _

// kernel: atari_forward.6
$region0: #{atari_forward.6}
  #allocation0 [shape = 'u32[]', space=smem, size = 0x4, offset = 0x4, fixed_abs, tag = 'smem constant byte address 0x4 - core index']
  #allocation1 [shape = 'u32[72,128]{1,0:T(1,128)}', space=vmem, size = 0x9000, scoped, tag = 'internal scratch']
  %s0 = inlined_call_operand.vmem [shape: bf16[98,640], index: 0, kind: input, shape index: {}]
  %s1 = inlined_call_operand.vmem [shape: bf16[640,64], index: 1, kind: input, shape index: {}]
  %s2 = inlined_call_operand.vmem [shape: f32[1,64], index: 2, kind: input, shape index: {}]
  %s3 = inlined_call_operand.vmem [shape: bf16[98,64], index: 3, kind: output, shape index: {}]
  %s4 = sld [smem:[#allocation0]]
  $region89: #{atari_forward.6} parent=0
    _
  %s6 = ssub.s32 1, %s4
  %s7 = scalar_select 0, %s6, %s4
  $region1: #{atari_forward.6} parent=0
    #allocation2 [shape = 'u8[28672]{0}', space=vmem, size = 0x7000, scoped, tag = 'output window, operand 0']
    loop: start=0, step=1, limit=4
    $region2: #{atari_forward.6} parent=1 // loop_pre_header
      _
    $region3: #{atari_forward.6} parent=1 // loop_header
      %s9 = sphi 0, %s13
      %p10 = scmp.ge.s32.totalorder %s9, 4
      %s19 = sphi 0, %s21
      %s22 = sphi 0, %s19
      %s23 = sphi 0, %s22
      %s39 = sphi 0, %s23
      %s43 = sphi 0, %s43
      %s45 = sphi 0, %s43
      %s46 = sphi 0, %s45
      %s60 = sphi 0, %s46
      %s64 = sphi 0, %s64
      %s66 = sphi 0, %s64
      %s67 = sphi 0, %s66
      %s81 = sphi 0, %s67
      %s87 = sphi 0, %s89
      %s90 = sphi 0, %s87
      %s91 = sphi 0, %s90
      %s107 = sphi 0, %s91
    $region4: #{atari_forward.6} parent=1 // loop_header_branch
      %12 = sbr.rel (%p10) target = $region8
    $region5: #{atari_forward.6} parent=1 // loop_body
      %s14 = ssub.s32 %s9, 1
      %s15 = ssub.s32 %s9, 2
      %s16 = sadd.s32 %s9, 1
      %s17 = ssub.s32 %s9, %s16
      %p18 = scmp.eq.s32.totalorder %s17, 0
      %s20 = sadd.s32 %s19, 1
      %s21 = scalar_select %p18, %s19, %s20
      %p24 = pneg %p18
      %p25 = scmp.eq.s32.totalorder %s9, 1
      %p26 = por %p24, %p25
      %p27 = scmp.ne.s32.totalorder %s19, %s22
      %p28 = scmp.eq.s32.totalorder %s9, 0
      %p29 = por %p27, %p28
      %p30 = scmp.ne.s32.totalorder %s19, %s22
      %p31 = scmp.eq.s32.totalorder %s14, 1
      %p32 = por %p30, %p31
      %p33 = scmp.ne.s32.totalorder %s22, %s23
      %p34 = scmp.eq.s32.totalorder %s14, 0
      %p35 = por %p33, %p34
      %p36 = scmp.ne.s32.totalorder %s22, %s23
      %p37 = scmp.eq.s32.totalorder %s15, 1
      %p38 = por %p36, %p37
      %p40 = scmp.ne.s32.totalorder %s23, %s39
      %p41 = scmp.eq.s32.totalorder %s15, 0
      %p42 = por %p40, %p41
      %s44 = sadd.s32 %s43, 1
      %p47 = scmp.eq.s32.totalorder %s9, 1
      %p48 = scmp.ne.s32.totalorder %s43, %s45
      %p49 = scmp.eq.s32.totalorder %s9, 0
      %p50 = por %p48, %p49
      %p51 = scmp.ne.s32.totalorder %s43, %s45
      %p52 = scmp.eq.s32.totalorder %s14, 1
      %p53 = por %p51, %p52
      %p54 = scmp.ne.s32.totalorder %s45, %s46
      %p55 = scmp.eq.s32.totalorder %s14, 0
      %p56 = por %p54, %p55
      %p57 = scmp.ne.s32.totalorder %s45, %s46
      %p58 = scmp.eq.s32.totalorder %s15, 1
      %p59 = por %p57, %p58
      %p61 = scmp.ne.s32.totalorder %s46, %s60
      %p62 = scmp.eq.s32.totalorder %s15, 0
      %p63 = por %p61, %p62
      %s65 = sadd.s32 %s64, 1
      %p68 = scmp.eq.s32.totalorder %s9, 1
      %p69 = scmp.ne.s32.totalorder %s64, %s66
      %p70 = scmp.eq.s32.totalorder %s9, 0
      %p71 = por %p69, %p70
      %p72 = scmp.ne.s32.totalorder %s64, %s66
      %p73 = scmp.eq.s32.totalorder %s14, 1
      %p74 = por %p72, %p73
      %p75 = scmp.ne.s32.totalorder %s66, %s67
      %p76 = scmp.eq.s32.totalorder %s14, 0
      %p77 = por %p75, %p76
      %p78 = scmp.ne.s32.totalorder %s66, %s67
      %p79 = scmp.eq.s32.totalorder %s15, 1
      %p80 = por %p78, %p79
      %p82 = scmp.ne.s32.totalorder %s67, %s81
      %p83 = scmp.eq.s32.totalorder %s15, 0
      %p84 = por %p82, %p83
      %s85 = ssub.s32 %s9, %s16
      %p86 = scmp.eq.s32.totalorder %s85, 0
      %s88 = sadd.s32 %s87, 1
      %s89 = scalar_select %p86, %s87, %s88
      %p92 = pneg %p86
      %p93 = scmp.eq.s32.totalorder %s9, 1
      %p94 = por %p92, %p93
      %p95 = scmp.ne.s32.totalorder %s87, %s90
      %p96 = scmp.eq.s32.totalorder %s9, 0
      %p97 = por %p95, %p96
      %p98 = scmp.ne.s32.totalorder %s87, %s90
      %p99 = scmp.eq.s32.totalorder %s14, 1
      %p100 = por %p98, %p99
      %p101 = scmp.ne.s32.totalorder %s90, %s91
      %p102 = scmp.eq.s32.totalorder %s14, 0
      %p103 = por %p101, %p102
      %p104 = scmp.ne.s32.totalorder %s90, %s91
      %p105 = scmp.eq.s32.totalorder %s15, 1
      %p106 = por %p104, %p105
      %p108 = scmp.ne.s32.totalorder %s91, %s107
      %p109 = scmp.eq.s32.totalorder %s15, 0
      %p110 = por %p108, %p109
      %p111 = scmp.le.s32.totalorder 1, %s9
      %p112 = scmp.lt.s32.totalorder %s9, 3
      %p113 = pnand %p111, %p112
      %p114 = pneg %p113
      // Predicated region
      $region9: #{atari_forward.6} parent=5 // pred_check
        _
      $region10: #{atari_forward.6} parent=5 // pred_check_branch
        %116 = sbr.rel (%p113) target = $region12
      $region11: #{atari_forward.6} parent=5 // pred_region
        %s117 = ssub.s32 %s9, 1
        // Predicated region
        $region13: #{atari_forward.6} parent=11 // pred_check
          %p118 = pneg %p56
        $region14: #{atari_forward.6} parent=11 // pred_check_branch
          %120 = sbr.rel (%p118) target = $region16
        $region15: #{atari_forward.6} parent=11 // pred_region
          _
        $region16: #{atari_forward.6} parent=11 // pred_fallthru
          _
        // Predicated region
        $region17: #{atari_forward.6} parent=11 // pred_check
          %p121 = pneg %p77
        $region18: #{atari_forward.6} parent=11 // pred_check_branch
          %123 = sbr.rel (%p121) target = $region20
        $region19: #{atari_forward.6} parent=11 // pred_region
          _
        $region20: #{atari_forward.6} parent=11 // pred_fallthru
          _
      $region12: #{atari_forward.6} parent=5 // pred_fallthru
        _
      %p124 = scmp.lt.s32.totalorder %s9, 2
      // Predicated region
      $region21: #{atari_forward.6} parent=5 // pred_check
        %p125 = pneg %p124
      $region22: #{atari_forward.6} parent=5 // pred_check_branch
        %127 = sbr.rel (%p125) target = $region24
      $region23: #{atari_forward.6} parent=5 // pred_region
        // Predicated region
        $region25: #{atari_forward.6} parent=23 // pred_check
          %p128 = pneg %p29
        $region26: #{atari_forward.6} parent=23 // pred_check_branch
          %130 = sbr.rel (%p128) target = $region28
        $region27: #{atari_forward.6} parent=23 // pred_region
          %s131 = smul.u32 7, %s9
          %s132 = ssub.s32 13, %s131
          %p133 = scmp.lt.s32.totalorder %s132, 7
          %s134 = scalar_select %p133, %s132, 7
          %s135 = smul.u32 4, %s134
          %s136 = smul.u32 %s135, 5
          %p137 = scmp.lt.s32.totalorder %s131, 12
          %s138 = scalar_select %p137, %s131, 12
          %s139 = smul.addr %s138, 5
          %s140 = smul.addr %s139, 4
          %s141 = scalar_lea.vmem %s0, %s140
          %s142 = smul.u32 7, %s9
          %s143 = ssub.s32 13, %s142
          %p144 = scmp.lt.s32.totalorder %s143, 7
          %s145 = scalar_select %p144, %s143, 7
          %s146 = smul.u32 4, %s145
          %s147 = smul.u32 %s146, 5
        $region28: #{atari_forward.6} parent=23 // pred_fallthru
          _
      $region24: #{atari_forward.6} parent=5 // pred_fallthru
        _
      %p148 = scmp.le.s32.totalorder 1, %s9
      %p149 = scmp.lt.s32.totalorder %s9, 3
      %p150 = pnand %p148, %p149
      %p151 = pneg %p150
      // Predicated region
      $region29: #{atari_forward.6} parent=5 // pred_check
        _
      $region30: #{atari_forward.6} parent=5 // pred_check_branch
        %153 = sbr.rel (%p150) target = $region32
      $region31: #{atari_forward.6} parent=5 // pred_region
        %s154 = ssub.s32 %s9, 1
        %s155 = smul.u32 7, %s14
        %s156 = ssub.s32 13, %s155
        %p157 = scmp.lt.s32.totalorder %s156, 7
        %s158 = scalar_select %p157, %s156, 7
        %s159 = smul.u32 4, %s158
        %s160 = smul.u32 %s159, 5
        %p161 = scmp.lt.s32.totalorder %s155, 12
        %s162 = scalar_select %p161, %s155, 12
        %s163 = smul.addr %s162, 5
        %s164 = smul.addr %s163, 4
        %s165 = scalar_lea.vmem %s0, %s164
        %p166 = pneg %p35
        %p167 = pneg %p32
        %p168 = pneg %p56
        %p169 = pneg %p53
        %p170 = pneg %p77
        %p171 = pneg %p74
        %p172 = pneg %p103
        %p173 = pneg %p100
        %s174 = sand.u32 %s90, 1
        %s175 = sand.u32 %s90, 1
        %s176 = smul.addr %s175, 28
        %s177 = scalar_lea.vmem [#allocation2], %s176
        %s178 = smul.u32 7, %s14
        %s179 = ssub.s32 13, %s178
        %p180 = scmp.lt.s32.totalorder %s179, 7
        %s181 = scalar_select %p180, %s179, 7
        %s182 = smul.u32 4, %s181
        %s183 = smul.u32 %s182, 5
        %p184 = scmp.lt.s32.totalorder %s178, 12
        %s185 = scalar_select %p184, %s178, 12
        %s186 = smul.addr %s185, 5
        %s187 = smul.addr %s186, 4
        %s188 = scalar_lea.vmem %s0, %s187
        %s189 = smul.u32 7, %s14
        %s190 = ssub.s32 13, %s189
        %p191 = scmp.lt.s32.totalorder %s190, 7
        %s192 = scalar_select %p191, %s190, 7
        %s193 = smul.u32 4, %s192
        %s194 = smul.u32 %s193, 5
        %s195 = smul.u32 7, %s14
        %s196 = ssub.s32 13, %s195
        %p197 = scmp.lt.s32.totalorder %s196, 7
        %s198 = scalar_select %p197, %s196, 7
        %s199 = smul.u32 4, %s198
        %v200 = vld [vmem:[%s188] sm:$0xff]
        %v201 = vld [vmem:[%s188 + $0x8] sm:$0xff]
        %v202 = vld [vmem:[%s188 + $0x10] sm:$0xf]
        %v203 = vld [vmem:[%s188 + $0x14] sm:$0xff]
        %v204 = vld [vmem:[%s188 + $0x1c] sm:$0xff]
        %v205 = vld [vmem:[%s188 + $0x24] sm:$0xf]
        %v206 = vld [vmem:[%s188 + $0x28] sm:$0xff]
        %v207 = vld [vmem:[%s188 + $0x30] sm:$0xff]
        %v208 = vld [vmem:[%s188 + $0x38] sm:$0xf]
        %v209 = vld [vmem:[%s188 + $0x3c] sm:$0xff]
        %v210 = vld [vmem:[%s188 + $0x44] sm:$0xff]
        %v211 = vld [vmem:[%s188 + $0x4c] sm:$0xf]
        %v212 = vld [vmem:[%s188 + $0x50] sm:$0xff]
        %v213 = vld [vmem:[%s188 + $0x58] sm:$0xff]
        %v214 = vld [vmem:[%s188 + $0x60] sm:$0xf]
        %v215 = vld [vmem:[%s188 + $0x64] sm:$0xff]
        %v216 = vld [vmem:[%s188 + $0x6c] sm:$0xff]
        %v217 = vld [vmem:[%s188 + $0x74] sm:$0xf]
        %v218 = vld [vmem:[%s188 + $0x78] sm:$0xff]
        %v219 = vld [vmem:[%s188 + $0x80] sm:$0xff]
        %v220 = vld [vmem:[%s188 + $0x88] sm:$0xf]
        %v221 = vld [vmem:[%s1] sm:$0xf]
        %v222 = vld [vmem:[%s1 + $0x4] sm:$0xf]
        %v223 = vld [vmem:[%s1 + $0x8] sm:$0xf]
        %v224 = vld [vmem:[%s1 + $0xc] sm:$0xf]
        %v225 = vld [vmem:[%s1 + $0x10] sm:$0xf]
        %v226 = vld [vmem:[%s1 + $0x14] sm:$0xf]
        %v227 = vld [vmem:[%s1 + $0x18] sm:$0xf]
        %v228 = vld [vmem:[%s1 + $0x1c] sm:$0xf]
        %v229 = vld [vmem:[%s1 + $0x20] sm:$0xf]
        %v230 = vld [vmem:[%s1 + $0x24] sm:$0xf]
        %v231 = vld [vmem:[%s1 + $0x28] sm:$0xf]
        %v232 = vld [vmem:[%s1 + $0x2c] sm:$0xf]
        %v233 = vld [vmem:[%s1 + $0x30] sm:$0xf]
        %v234 = vld [vmem:[%s1 + $0x34] sm:$0xf]
        %v235 = vld [vmem:[%s1 + $0x38] sm:$0xf]
        %v236 = vld [vmem:[%s1 + $0x3c] sm:$0xf]
        %v237 = vld [vmem:[%s1 + $0x40] sm:$0xf]
        %v238 = vld [vmem:[%s1 + $0x44] sm:$0xf]
        %v239 = vld [vmem:[%s1 + $0x48] sm:$0xf]
        %v240 = vld [vmem:[%s1 + $0x4c] sm:$0xf]
        %v241 = vld [vmem:[%s1 + $0x50] sm:$0xf]
        %v242 = vld [vmem:[%s1 + $0x54] sm:$0xf]
        %v243 = vld [vmem:[%s1 + $0x58] sm:$0xf]
        %v244 = vld [vmem:[%s1 + $0x5c] sm:$0xf]
        %v245 = vld [vmem:[%s1 + $0x60] sm:$0xf]
        %v246 = vld [vmem:[%s1 + $0x64] sm:$0xf]
        %v247 = vld [vmem:[%s1 + $0x68] sm:$0xf]
        %v248 = vld [vmem:[%s1 + $0x6c] sm:$0xf]
        %v249 = vld [vmem:[%s1 + $0x70] sm:$0xf]
        %v250 = vld [vmem:[%s1 + $0x74] sm:$0xf]
        %v251 = vld [vmem:[%s1 + $0x78] sm:$0xf]
        %v252 = vld [vmem:[%s1 + $0x7c] sm:$0xf]
        %v253 = vld [vmem:[%s1 + $0x80] sm:$0xf]
        %v254 = vld [vmem:[%s1 + $0x84] sm:$0xf]
        %v255 = vld [vmem:[%s1 + $0x88] sm:$0xf]
        %v256 = vld [vmem:[%s1 + $0x8c] sm:$0xf]
        %v257 = vld [vmem:[%s1 + $0x90] sm:$0xf]
        %v258 = vld [vmem:[%s1 + $0x94] sm:$0xf]
        %v259 = vld [vmem:[%s1 + $0x98] sm:$0xf]
        %v260 = vld [vmem:[%s1 + $0x9c] sm:$0xf]
        %v261 = vld [vmem:[%s1 + $0xa0] sm:$0xf]
        %v262 = vld [vmem:[%s1 + $0xa4] sm:$0xf]
        %v263 = vld [vmem:[%s1 + $0xa8] sm:$0xf]
        %v264 = vld [vmem:[%s1 + $0xac] sm:$0xf]
        %v265 = vld [vmem:[%s1 + $0xb0] sm:$0xf]
        %v266 = vld [vmem:[%s1 + $0xb4] sm:$0xf]
        %v267 = vld [vmem:[%s1 + $0xb8] sm:$0xf]
        %v268 = vld [vmem:[%s1 + $0xbc] sm:$0xf]
        %v269 = vld [vmem:[%s1 + $0xc0] sm:$0xf]
        %v270 = vld [vmem:[%s1 + $0xc4] sm:$0xf]
        %v271 = vld [vmem:[%s1 + $0xc8] sm:$0xf]
        %v272 = vld [vmem:[%s1 + $0xcc] sm:$0xf]
        %v273 = vld [vmem:[%s1 + $0xd0] sm:$0xf]
        %v274 = vld [vmem:[%s1 + $0xd4] sm:$0xf]
        %v275 = vld [vmem:[%s1 + $0xd8] sm:$0xf]
        %v276 = vld [vmem:[%s1 + $0xdc] sm:$0xf]
        %v277 = vld [vmem:[%s1 + $0xe0] sm:$0xf]
        %v278 = vld [vmem:[%s1 + $0xe4] sm:$0xf]
        %v279 = vld [vmem:[%s1 + $0xe8] sm:$0xf]
        %v280 = vld [vmem:[%s1 + $0xec] sm:$0xf]
        %v281 = vld [vmem:[%s1 + $0xf0] sm:$0xf]
        %v282 = vld [vmem:[%s1 + $0xf4] sm:$0xf]
        %v283 = vld [vmem:[%s1 + $0xf8] sm:$0xf]
        %v284 = vld [vmem:[%s1 + $0xfc] sm:$0xf]
        %v285 = vld [vmem:[%s1 + $0x100] sm:$0xf]
        %v286 = vld [vmem:[%s1 + $0x104] sm:$0xf]
        %v287 = vld [vmem:[%s1 + $0x108] sm:$0xf]
        %v288 = vld [vmem:[%s1 + $0x10c] sm:$0xf]
        %v289 = vld [vmem:[%s1 + $0x110] sm:$0xf]
        %v290 = vld [vmem:[%s1 + $0x114] sm:$0xf]
        %v291 = vld [vmem:[%s1 + $0x118] sm:$0xf]
        %v292 = vld [vmem:[%s1 + $0x11c] sm:$0xf]
        %v293 = vld [vmem:[%s1 + $0x120] sm:$0xf]
        %v294 = vld [vmem:[%s1 + $0x124] sm:$0xf]
        %v295 = vld [vmem:[%s1 + $0x128] sm:$0xf]
        %v296 = vld [vmem:[%s1 + $0x12c] sm:$0xf]
        %v297 = vld [vmem:[%s1 + $0x130] sm:$0xf]
        %v298 = vld [vmem:[%s1 + $0x134] sm:$0xf]
        %v299 = vld [vmem:[%s1 + $0x138] sm:$0xf]
        %v300 = vld [vmem:[%s1 + $0x13c] sm:$0xf]
        %v301 = vld [vmem:[%s2] sm:$0x1]
        %v303 = vperm.slane %v301, 0
        %v326 = vunpack.c.l.b16 %v200
        %v327 = vunpack.c.h.b16 %v200
        %v328 = vunpack.c.l.b16 %v201
        %v329 = vunpack.c.h.b16 %v201
        %v330 = vunpack.c.l.b16 %v202
        %v331 = vunpack.c.l.b16 %v203
        %v332 = vunpack.c.h.b16 %v203
        %v333 = vunpack.c.l.b16 %v204
        %v334 = vunpack.c.h.b16 %v204
        %v335 = vunpack.c.l.b16 %v205
        %v336 = vunpack.c.l.b16 %v206
        %v337 = vunpack.c.h.b16 %v206
        %v338 = vunpack.c.l.b16 %v207
        %v339 = vunpack.c.h.b16 %v207
        %v340 = vunpack.c.l.b16 %v208
        %v341 = vunpack.c.l.b16 %v209
        %v342 = vunpack.c.h.b16 %v209
        %v343 = vunpack.c.l.b16 %v210
        %v344 = vunpack.c.h.b16 %v210
        %v345 = vunpack.c.l.b16 %v211
        %v346 = vunpack.c.l.b16 %v212
        %v347 = vunpack.c.h.b16 %v212
        %v348 = vunpack.c.l.b16 %v213
        %v349 = vunpack.c.h.b16 %v213
        %v350 = vunpack.c.l.b16 %v214
        %v351 = vunpack.c.l.b16 %v215
        %v352 = vunpack.c.h.b16 %v215
        %v353 = vunpack.c.l.b16 %v216
        %v354 = vunpack.c.h.b16 %v216
        %v355 = vunpack.c.l.b16 %v217
        %v356 = vunpack.c.l.b16 %v218
        %v357 = vunpack.c.h.b16 %v218
        %v358 = vunpack.c.l.b16 %v219
        %v359 = vunpack.c.h.b16 %v219
        %v360 = vunpack.c.l.b16 %v220
        %v361 = vpack.c.b16 %v331, %v326
        %v362 = vpack.c.b16 %v332, %v327
        %v363 = vpack.c.b16 %v333, %v328
        %v364 = vpack.c.b16 %v334, %v329
        %v365 = vpack.c.b16 %v335, %v330
        %v366 = vpack.c.b16 %v341, %v336
        %v367 = vpack.c.b16 %v342, %v337
        %v368 = vpack.c.b16 %v343, %v338
        %v369 = vpack.c.b16 %v344, %v339
        %v370 = vpack.c.b16 %v345, %v340
        %v371 = vpack.c.b16 %v351, %v346
        %v372 = vpack.c.b16 %v352, %v347
        %v373 = vpack.c.b16 %v353, %v348
        %v374 = vpack.c.b16 %v354, %v349
        %v375 = vpack.c.b16 %v355, %v350
        %v376 = vpack.c.b16 %v356, %v356
        %v377 = vpack.c.b16 %v357, %v357
        %v378 = vpack.c.b16 %v358, %v358
        %v379 = vpack.c.b16 %v359, %v359
        %v380 = vpack.c.b16 %v360, %v360
        %v481 = vunpack.c.l.b16 %v221
        %v482 = vunpack.c.l.b16 %v222
        %v483 = vunpack.c.l.b16 %v223
        %v484 = vunpack.c.l.b16 %v224
        %v485 = vunpack.c.l.b16 %v225
        %v486 = vunpack.c.l.b16 %v226
        %v487 = vunpack.c.l.b16 %v227
        %v488 = vunpack.c.l.b16 %v228
        %v489 = vunpack.c.l.b16 %v229
        %v490 = vunpack.c.l.b16 %v230
        %v491 = vunpack.c.l.b16 %v231
        %v492 = vunpack.c.l.b16 %v232
        %v493 = vunpack.c.l.b16 %v233
        %v494 = vunpack.c.l.b16 %v234
        %v495 = vunpack.c.l.b16 %v235
        %v496 = vunpack.c.l.b16 %v236
        %v497 = vunpack.c.l.b16 %v237
        %v498 = vunpack.c.l.b16 %v238
        %v499 = vunpack.c.l.b16 %v239
        %v500 = vunpack.c.l.b16 %v240
        %v501 = vunpack.c.l.b16 %v241
        %v502 = vunpack.c.l.b16 %v242
        %v503 = vunpack.c.l.b16 %v243
        %v504 = vunpack.c.l.b16 %v244
        %v505 = vunpack.c.l.b16 %v245
        %v506 = vunpack.c.l.b16 %v246
        %v507 = vunpack.c.l.b16 %v247
        %v508 = vunpack.c.l.b16 %v248
        %v509 = vunpack.c.l.b16 %v249
        %v510 = vunpack.c.l.b16 %v250
        %v511 = vunpack.c.l.b16 %v251
        %v512 = vunpack.c.l.b16 %v252
        %v513 = vunpack.c.l.b16 %v253
        %v514 = vunpack.c.l.b16 %v254
        %v515 = vunpack.c.l.b16 %v255
        %v516 = vunpack.c.l.b16 %v256
        %v517 = vunpack.c.l.b16 %v257
        %v518 = vunpack.c.l.b16 %v258
        %v519 = vunpack.c.l.b16 %v259
        %v520 = vunpack.c.l.b16 %v260
        %v521 = vunpack.c.l.b16 %v261
        %v522 = vunpack.c.l.b16 %v262
        %v523 = vunpack.c.l.b16 %v263
        %v524 = vunpack.c.l.b16 %v264
        %v525 = vunpack.c.l.b16 %v265
        %v526 = vunpack.c.l.b16 %v266
        %v527 = vunpack.c.l.b16 %v267
        %v528 = vunpack.c.l.b16 %v268
        %v529 = vunpack.c.l.b16 %v269
        %v530 = vunpack.c.l.b16 %v270
        %v531 = vunpack.c.l.b16 %v271
        %v532 = vunpack.c.l.b16 %v272
        %v533 = vunpack.c.l.b16 %v273
        %v534 = vunpack.c.l.b16 %v274
        %v535 = vunpack.c.l.b16 %v275
        %v536 = vunpack.c.l.b16 %v276
        %v537 = vunpack.c.l.b16 %v277
        %v538 = vunpack.c.l.b16 %v278
        %v539 = vunpack.c.l.b16 %v279
        %v540 = vunpack.c.l.b16 %v280
        %v541 = vunpack.c.l.b16 %v281
        %v542 = vunpack.c.l.b16 %v282
        %v543 = vunpack.c.l.b16 %v283
        %v544 = vunpack.c.l.b16 %v284
        %v545 = vunpack.c.l.b16 %v285
        %v546 = vunpack.c.l.b16 %v286
        %v547 = vunpack.c.l.b16 %v287
        %v548 = vunpack.c.l.b16 %v288
        %v549 = vunpack.c.l.b16 %v289
        %v550 = vunpack.c.l.b16 %v290
        %v551 = vunpack.c.l.b16 %v291
        %v552 = vunpack.c.l.b16 %v292
        %v553 = vunpack.c.l.b16 %v293
        %v554 = vunpack.c.l.b16 %v294
        %v555 = vunpack.c.l.b16 %v295
        %v556 = vunpack.c.l.b16 %v296
        %v557 = vunpack.c.l.b16 %v297
        %v558 = vunpack.c.l.b16 %v298
        %v559 = vunpack.c.l.b16 %v299
        %v560 = vunpack.c.l.b16 %v300
        %v561 = vpack.c.b16 %v482, %v481
        %v562 = vpack.c.b16 %v484, %v483
        %v563 = vpack.c.b16 %v486, %v485
        %v564 = vpack.c.b16 %v488, %v487
        %v565 = vpack.c.b16 %v490, %v489
        %v566 = vpack.c.b16 %v492, %v491
        %v567 = vpack.c.b16 %v494, %v493
        %v568 = vpack.c.b16 %v496, %v495
        %v569 = vpack.c.b16 %v498, %v497
        %v570 = vpack.c.b16 %v500, %v499
        %v571 = vpack.c.b16 %v502, %v501
        %v572 = vpack.c.b16 %v504, %v503
        %v573 = vpack.c.b16 %v506, %v505
        %v574 = vpack.c.b16 %v508, %v507
        %v575 = vpack.c.b16 %v510, %v509
        %v576 = vpack.c.b16 %v512, %v511
        %v577 = vpack.c.b16 %v514, %v513
        %v578 = vpack.c.b16 %v516, %v515
        %v579 = vpack.c.b16 %v518, %v517
        %v580 = vpack.c.b16 %v520, %v519
        %v581 = vpack.c.b16 %v522, %v521
        %v582 = vpack.c.b16 %v524, %v523
        %v583 = vpack.c.b16 %v526, %v525
        %v584 = vpack.c.b16 %v528, %v527
        %v585 = vpack.c.b16 %v530, %v529
        %v586 = vpack.c.b16 %v532, %v531
        %v587 = vpack.c.b16 %v534, %v533
        %v588 = vpack.c.b16 %v536, %v535
        %v589 = vpack.c.b16 %v538, %v537
        %v590 = vpack.c.b16 %v540, %v539
        %v591 = vpack.c.b16 %v542, %v541
        %v592 = vpack.c.b16 %v544, %v543
        %v593 = vpack.c.b16 %v546, %v545
        %v594 = vpack.c.b16 %v548, %v547
        %v595 = vpack.c.b16 %v550, %v549
        %v596 = vpack.c.b16 %v552, %v551
        %v597 = vpack.c.b16 %v554, %v553
        %v598 = vpack.c.b16 %v556, %v555
        %v599 = vpack.c.b16 %v558, %v557
        %v600 = vpack.c.b16 %v560, %v559
        %641 = vmatpush.bf16.msra.mxu0 %v568
        %642 = vmatpush.bf16.msra.mxu0 %v567
        %643 = vmatpush.bf16.msra.mxu0 %v566
        %644 = vmatpush.bf16.msra.mxu0 %v565
        %645 = vmatpush.bf16.msra.mxu0 %v564
        %646 = vmatpush.bf16.msra.mxu0 %v563
        %647 = vmatpush.bf16.msra.mxu0 %v562
        %648 = vmatpush.bf16.msra.mxu0 %v561
        %649 = vmatmul.bf16.gmra.mxu0 %v361
        %v650 = vpop.f32.mrf.mxu0
        %v651 = vadd.f32 %v303, %v650
        %v652 = vpop.f32.mrf.mxu0
        %v653 = vadd.f32 %v303, %v652
        %654 = vmatmul.bf16.gmra.mxu0 %v366
        %v655 = vpop.f32.mrf.mxu0
        %v656 = vadd.f32 %v303, %v655
        %v657 = vpop.f32.mrf.mxu0
        %v658 = vadd.f32 %v303, %v657
        %659 = vmatmul.bf16.gmra.mxu0 %v371
        %v660 = vpop.f32.mrf.mxu0
        %v661 = vadd.f32 %v303, %v660
        %v662 = vpop.f32.mrf.mxu0
        %v663 = vadd.f32 %v303, %v662
        %664 = vmatmul.bf16.gmra.mxu0 %v376
        %v665 = vpop.f32.mrf.mxu0
        %v666 = vadd.f32 %v303, %v665
        %v667 = vpop.f32.mrf.mxu0
        %668 = vdwg.mxu0
        %669 = vmatpush.bf16.msra.mxu0 %v576
        %670 = vmatpush.bf16.msra.mxu0 %v575
        %671 = vmatpush.bf16.msra.mxu0 %v574
        %672 = vmatpush.bf16.msra.mxu0 %v573
        %673 = vmatpush.bf16.msra.mxu0 %v572
        %674 = vmatpush.bf16.msra.mxu0 %v571
        %675 = vmatpush.bf16.msra.mxu0 %v570
        %676 = vmatpush.bf16.msra.mxu0 %v569
        %677 = vmatmul.bf16.gmra.mxu0 %v362
        %v678 = vpop.f32.mrf.mxu0
        %v679 = vadd.f32 %v651, %v678
        %v680 = vpop.f32.mrf.mxu0
        %v681 = vadd.f32 %v653, %v680
        %682 = vmatmul.bf16.gmra.mxu0 %v367
        %v683 = vpop.f32.mrf.mxu0
        %v684 = vadd.f32 %v656, %v683
        %v685 = vpop.f32.mrf.mxu0
        %v686 = vadd.f32 %v658, %v685
        %687 = vmatmul.bf16.gmra.mxu0 %v372
        %v688 = vpop.f32.mrf.mxu0
        %v689 = vadd.f32 %v661, %v688
        %v690 = vpop.f32.mrf.mxu0
        %v691 = vadd.f32 %v663, %v690
        %692 = vmatmul.bf16.gmra.mxu0 %v377
        %v693 = vpop.f32.mrf.mxu0
        %v694 = vadd.f32 %v666, %v693
        %v695 = vpop.f32.mrf.mxu0
        %696 = vdwg.mxu0
        %697 = vmatpush.bf16.msra.mxu0 %v584
        %698 = vmatpush.bf16.msra.mxu0 %v583
        %699 = vmatpush.bf16.msra.mxu0 %v582
        %700 = vmatpush.bf16.msra.mxu0 %v581
        %701 = vmatpush.bf16.msra.mxu0 %v580
        %702 = vmatpush.bf16.msra.mxu0 %v579
        %703 = vmatpush.bf16.msra.mxu0 %v578
        %704 = vmatpush.bf16.msra.mxu0 %v577
        %705 = vmatmul.bf16.gmra.mxu0 %v363
        %v706 = vpop.f32.mrf.mxu0
        %v707 = vadd.f32 %v679, %v706
        %v708 = vpop.f32.mrf.mxu0
        %v709 = vadd.f32 %v681, %v708
        %710 = vmatmul.bf16.gmra.mxu0 %v368
        %v711 = vpop.f32.mrf.mxu0
        %v712 = vadd.f32 %v684, %v711
        %v713 = vpop.f32.mrf.mxu0
        %v714 = vadd.f32 %v686, %v713
        %715 = vmatmul.bf16.gmra.mxu0 %v373
        %v716 = vpop.f32.mrf.mxu0
        %v717 = vadd.f32 %v689, %v716
        %v718 = vpop.f32.mrf.mxu0
        %v719 = vadd.f32 %v691, %v718
        %720 = vmatmul.bf16.gmra.mxu0 %v378
        %v721 = vpop.f32.mrf.mxu0
        %v722 = vadd.f32 %v694, %v721
        %v723 = vpop.f32.mrf.mxu0
        %724 = vdwg.mxu0
        %725 = vmatpush.bf16.msra.mxu0 %v592
        %726 = vmatpush.bf16.msra.mxu0 %v591
        %727 = vmatpush.bf16.msra.mxu0 %v590
        %728 = vmatpush.bf16.msra.mxu0 %v589
        %729 = vmatpush.bf16.msra.mxu0 %v588
        %730 = vmatpush.bf16.msra.mxu0 %v587
        %731 = vmatpush.bf16.msra.mxu0 %v586
        %732 = vmatpush.bf16.msra.mxu0 %v585
        %733 = vmatmul.bf16.gmra.mxu0 %v364
        %v734 = vpop.f32.mrf.mxu0
        %v735 = vadd.f32 %v707, %v734
        %v736 = vpop.f32.mrf.mxu0
        %v737 = vadd.f32 %v709, %v736
        %738 = vmatmul.bf16.gmra.mxu0 %v369
        %v739 = vpop.f32.mrf.mxu0
        %v740 = vadd.f32 %v712, %v739
        %v741 = vpop.f32.mrf.mxu0
        %v742 = vadd.f32 %v714, %v741
        %743 = vmatmul.bf16.gmra.mxu0 %v374
        %v744 = vpop.f32.mrf.mxu0
        %v745 = vadd.f32 %v717, %v744
        %v746 = vpop.f32.mrf.mxu0
        %v747 = vadd.f32 %v719, %v746
        %748 = vmatmul.bf16.gmra.mxu0 %v379
        %v749 = vpop.f32.mrf.mxu0
        %v750 = vadd.f32 %v722, %v749
        %v751 = vpop.f32.mrf.mxu0
        %752 = vdwg.mxu0
        %753 = vmatpush.bf16.msra.mxu0 %v600
        %754 = vmatpush.bf16.msra.mxu0 %v599
        %755 = vmatpush.bf16.msra.mxu0 %v598
        %756 = vmatpush.bf16.msra.mxu0 %v597
        %757 = vmatpush.bf16.msra.mxu0 %v596
        %758 = vmatpush.bf16.msra.mxu0 %v595
        %759 = vmatpush.bf16.msra.mxu0 %v594
        %760 = vmatpush.bf16.msra.mxu0 %v593
        %761 = vmatmul.bf16.gmra.mxu0 %v365
        %v762 = vpop.f32.mrf.mxu0
        %v763 = vadd.f32 %v735, %v762
        %v764 = vpop.f32.mrf.mxu0
        %v765 = vadd.f32 %v737, %v764
        %766 = vmatmul.bf16.gmra.mxu0 %v370
        %v767 = vpop.f32.mrf.mxu0
        %v768 = vadd.f32 %v740, %v767
        %v769 = vpop.f32.mrf.mxu0
        %v770 = vadd.f32 %v742, %v769
        %771 = vmatmul.bf16.gmra.mxu0 %v375
        %v772 = vpop.f32.mrf.mxu0
        %v773 = vadd.f32 %v745, %v772
        %v774 = vpop.f32.mrf.mxu0
        %v775 = vadd.f32 %v747, %v774
        %776 = vmatmul.bf16.gmra.mxu0 %v380
        %v777 = vpop.f32.mrf.mxu0
        %v778 = vadd.f32 %v750, %v777
        %v779 = vpop.f32.mrf.mxu0
        %780 = vdwg.mxu0
        %v781 = vmax.f32 %v763, 0.0
        %v782 = vmax.f32 %v765, 0.0
        %v783 = vmax.f32 %v768, 0.0
        %v784 = vmax.f32 %v770, 0.0
        %v785 = vmax.f32 %v773, 0.0
        %v786 = vmax.f32 %v775, 0.0
        %v787 = vmax.f32 %v778, 0.0
        %v788 = vpack.c.bf16 %v781, %v781
        %v789 = vpack.c.bf16 %v782, %v782
        %v790 = vpack.c.bf16 %v783, %v783
        %v791 = vpack.c.bf16 %v784, %v784
        %v792 = vpack.c.bf16 %v785, %v785
        %v793 = vpack.c.bf16 %v786, %v786
        %v794 = vpack.c.bf16 %v787, %v787
        %vm795 = vcmask 519168
        %796 = vst.msk [vmem:[%s177] sm:$0xf] %vm795, %v788
        %797 = vst.msk [vmem:[%s177 + $0x4] sm:$0xf] %vm795, %v789
        %798 = vst.msk [vmem:[%s177 + $0x8] sm:$0xf] %vm795, %v790
        %799 = vst.msk [vmem:[%s177 + $0xc] sm:$0xf] %vm795, %v791
        %800 = vst.msk [vmem:[%s177 + $0x10] sm:$0xf] %vm795, %v792
        %801 = vst.msk [vmem:[%s177 + $0x14] sm:$0xf] %vm795, %v793
        %802 = vst.msk [vmem:[%s177 + $0x18] sm:$0xf] %vm795, %v794
        %s803 = sand.u32 %s90, 1
        %s804 = sand.u32 %s90, 1
        %s805 = smul.addr %s804, 28
        %s806 = scalar_lea.vmem [#allocation2], %s805
        // Predicated region
        $region33: #{atari_forward.6} parent=31 // pred_check
          %p807 = pneg %p100
        $region34: #{atari_forward.6} parent=31 // pred_check_branch
          %809 = sbr.rel (%p807) target = $region36
        $region35: #{atari_forward.6} parent=31 // pred_region
          %s810 = smul.u32 7, %s14
          %s811 = ssub.s32 13, %s810
          %p812 = scmp.lt.s32.totalorder %s811, 7
          %s813 = scalar_select %p812, %s811, 7
          %s814 = smul.u32 4, %s813
          %p815 = scmp.ne.s32.totalorder 0, %s814
          %s816 = smul.addr %s810, 4
          %s817 = scalar_lea.vmem %s3, %s816
          // Predicated region
          $region37: #{atari_forward.6} parent=35 // pred_check
            %p818 = pneg %p815
          $region38: #{atari_forward.6} parent=35 // pred_check_branch
            %820 = sbr.rel (%p818) target = $region40
          $region39: #{atari_forward.6} parent=35 // pred_region
            // Predicated region
            $region41: #{atari_forward.6} parent=39 // pred_check
              _
            $region42: #{atari_forward.6} parent=39 // pred_check_branch
              %822 = sbr.rel target = $region44
            $region43: #{atari_forward.6} parent=39 // pred_region
              // Predicated region
              $region63: #{atari_forward.6} parent=43 // pred_check
                _
              $region64: #{atari_forward.6} parent=43 // pred_check_branch
                %885 = sbr.rel (0) target = $region66
              $region65: #{atari_forward.6} parent=43 // pred_region
                %s887 = ssub.s32 16, 1
                %s888 = sdiv.u32.pop %s813, 7
                %s889 = srem.u32.pop %s813, 7
                // While loop
                $region67: #{atari_forward.6} parent=65 // loop_pre_header
                  _
                $region68: #{atari_forward.6} parent=65 // loop_header
                  %s891 = sphi 0, %s893
                  %p892 = scmp.ge.s32.totalorder %s891, %s888
                  %s896 = sphi 0, %s915
                  %s897 = sphi %s806, %s918
                  %s898 = sphi %s817, %s919
                $region69: #{atari_forward.6} parent=65 // loop_header_branch
                  %895 = sbr.rel (%p892) target = $region73
                $region70: #{atari_forward.6} parent=65 // loop_body
                  %v899 = vld [vmem:[%s897] sm:%s887]
                  %900 = vst [vmem:[%s898] sm:%s887] %v899
                  %v901 = vld [vmem:[%s897 + $0x4] sm:%s887]
                  %902 = vst [vmem:[%s898 + $0x4] sm:%s887] %v901
                  %v903 = vld [vmem:[%s897 + $0x8] sm:%s887]
                  %904 = vst [vmem:[%s898 + $0x8] sm:%s887] %v903
                  %v905 = vld [vmem:[%s897 + $0xc] sm:%s887]
                  %906 = vst [vmem:[%s898 + $0xc] sm:%s887] %v905
                  %v907 = vld [vmem:[%s897 + $0x10] sm:%s887]
                  %908 = vst [vmem:[%s898 + $0x10] sm:%s887] %v907
                  %v909 = vld [vmem:[%s897 + $0x14] sm:%s887]
                  %910 = vst [vmem:[%s898 + $0x14] sm:%s887] %v909
                  %v911 = vld [vmem:[%s897 + $0x18] sm:%s887]
                  %912 = vst [vmem:[%s898 + $0x18] sm:%s887] %v911
                  %s913 = sadd.s32 1, %s896
                  %p914 = scmp.ge.s32.totalorder %s913, %s888
                  %s915 = scalar_select %p914, 0, %s913
                  %s916 = smul.u32 %s915, 28
                  %s917 = smul.u32 %s915, 28
                  %s918 = scalar_lea.vmem %s806, %s916 [#allocation2]
                  %s919 = scalar_lea.vmem %s817, %s917
                $region71: #{atari_forward.6} parent=65 // loop_footer
                  %s893 = sadd.s32 %s891, 1
                $region72: #{atari_forward.6} parent=65 // loop_footer_branch
                  %890 = sbr.rel target = $region68
                $region73: #{atari_forward.6} parent=65 // loop_exit
                  _
                %s920 = sdiv.u32.pop %s813, 7
                %s921 = srem.u32.pop %s813, 7
                %s922 = smul.u32 %s920, 7
                %s923 = smul.u32 4, %s922
                %s924 = scalar_lea.vmem %s806, %s923 [#allocation2]
                %s925 = smul.u32 4, %s922
                %s926 = scalar_lea.vmem %s817, %s925
                // While loop
                $region74: #{atari_forward.6} parent=65 // loop_pre_header
                  _
                $region75: #{atari_forward.6} parent=65 // loop_header
                  %s928 = sphi 0, %s930
                  %p929 = scmp.ge.s32.totalorder %s928, %s921
                  %s933 = sphi 0, %s940
                  %s934 = sphi %s924, %s943
                  %s935 = sphi %s926, %s944
                $region76: #{atari_forward.6} parent=65 // loop_header_branch
                  %932 = sbr.rel (%p929) target = $region80
                $region77: #{atari_forward.6} parent=65 // loop_body
                  %v936 = vld [vmem:[%s934] sm:%s887]
                  %937 = vst [vmem:[%s935] sm:%s887] %v936
                  %s938 = sadd.s32 1, %s933
                  %p939 = scmp.ge.s32.totalorder %s938, %s921
                  %s940 = scalar_select %p939, 0, %s938
                  %s941 = smul.u32 %s940, 4
                  %s942 = smul.u32 %s940, 4
                  %s943 = scalar_lea.vmem %s924, %s941 [#allocation2]
                  %s944 = scalar_lea.vmem %s926, %s942
                $region78: #{atari_forward.6} parent=65 // loop_footer
                  %s930 = sadd.s32 %s928, 1
                $region79: #{atari_forward.6} parent=65 // loop_footer_branch
                  %927 = sbr.rel target = $region75
                $region80: #{atari_forward.6} parent=65 // loop_exit
                  _
              $region66: #{atari_forward.6} parent=43 // pred_fallthru
                _
            $region44: #{atari_forward.6} parent=39 // pred_fallthru
              _
            // Predicated region
            $region45: #{atari_forward.6} parent=39 // pred_check
              _
            $region46: #{atari_forward.6} parent=39 // pred_check_branch
              %824 = sbr.rel (0) target = $region48
            $region47: #{atari_forward.6} parent=39 // pred_region
              %s826 = ssub.s32 16, 1
              %s827 = sdiv.u32.pop %s813, 7
              %s828 = srem.u32.pop %s813, 7
              // While loop
              $region49: #{atari_forward.6} parent=47 // loop_pre_header
                _
              $region50: #{atari_forward.6} parent=47 // loop_header
                %s830 = sphi 0, %s832
                %p831 = scmp.ge.s32.totalorder %s830, %s827
                %s835 = sphi 0, %s854
                %s836 = sphi %s806, %s857
                %s837 = sphi %s817, %s858
              $region51: #{atari_forward.6} parent=47 // loop_header_branch
                %834 = sbr.rel (%p831) target = $region55
              $region52: #{atari_forward.6} parent=47 // loop_body
                %v838 = vld [vmem:[%s836] sm:%s826]
                %839 = vst [vmem:[%s837] sm:%s826] %v838
                %v840 = vld [vmem:[%s836 + $0x4] sm:%s826]
                %841 = vst [vmem:[%s837 + $0x4] sm:%s826] %v840
                %v842 = vld [vmem:[%s836 + $0x8] sm:%s826]
                %843 = vst [vmem:[%s837 + $0x8] sm:%s826] %v842
                %v844 = vld [vmem:[%s836 + $0xc] sm:%s826]
                %845 = vst [vmem:[%s837 + $0xc] sm:%s826] %v844
                %v846 = vld [vmem:[%s836 + $0x10] sm:%s826]
                %847 = vst [vmem:[%s837 + $0x10] sm:%s826] %v846
                %v848 = vld [vmem:[%s836 + $0x14] sm:%s826]
                %849 = vst [vmem:[%s837 + $0x14] sm:%s826] %v848
                %v850 = vld [vmem:[%s836 + $0x18] sm:%s826]
                %851 = vst [vmem:[%s837 + $0x18] sm:%s826] %v850
                %s852 = sadd.s32 1, %s835
                %p853 = scmp.ge.s32.totalorder %s852, %s827
                %s854 = scalar_select %p853, 0, %s852
                %s855 = smul.u32 %s854, 28
                %s856 = smul.u32 %s854, 28
                %s857 = scalar_lea.vmem %s806, %s855 [#allocation2]
                %s858 = scalar_lea.vmem %s817, %s856
              $region53: #{atari_forward.6} parent=47 // loop_footer
                %s832 = sadd.s32 %s830, 1
              $region54: #{atari_forward.6} parent=47 // loop_footer_branch
                %829 = sbr.rel target = $region50
              $region55: #{atari_forward.6} parent=47 // loop_exit
                _
              %s859 = sdiv.u32.pop %s813, 7
              %s860 = srem.u32.pop %s813, 7
              %s861 = smul.u32 %s859, 7
              %s862 = smul.u32 4, %s861
              %s863 = scalar_lea.vmem %s806, %s862 [#allocation2]
              %s864 = smul.u32 4, %s861
              %s865 = scalar_lea.vmem %s817, %s864
              // While loop
              $region56: #{atari_forward.6} parent=47 // loop_pre_header
                _
              $region57: #{atari_forward.6} parent=47 // loop_header
                %s867 = sphi 0, %s869
                %p868 = scmp.ge.s32.totalorder %s867, %s860
                %s872 = sphi 0, %s879
                %s873 = sphi %s863, %s882
                %s874 = sphi %s865, %s883
              $region58: #{atari_forward.6} parent=47 // loop_header_branch
                %871 = sbr.rel (%p868) target = $region62
              $region59: #{atari_forward.6} parent=47 // loop_body
                %v875 = vld [vmem:[%s873] sm:%s826]
                %876 = vst [vmem:[%s874] sm:%s826] %v875
                %s877 = sadd.s32 1, %s872
                %p878 = scmp.ge.s32.totalorder %s877, %s860
                %s879 = scalar_select %p878, 0, %s877
                %s880 = smul.u32 %s879, 4
                %s881 = smul.u32 %s879, 4
                %s882 = scalar_lea.vmem %s863, %s880 [#allocation2]
                %s883 = scalar_lea.vmem %s865, %s881
              $region60: #{atari_forward.6} parent=47 // loop_footer
                %s869 = sadd.s32 %s867, 1
              $region61: #{atari_forward.6} parent=47 // loop_footer_branch
                %866 = sbr.rel target = $region57
              $region62: #{atari_forward.6} parent=47 // loop_exit
                _
            $region48: #{atari_forward.6} parent=39 // pred_fallthru
              _
          $region40: #{atari_forward.6} parent=35 // pred_fallthru
            _
          %945 = vnop
        $region36: #{atari_forward.6} parent=31 // pred_fallthru
          _
      $region32: #{atari_forward.6} parent=5 // pred_fallthru
        _
      %p946 = scmp.le.s32.totalorder 2, %s9
      // Predicated region
      $region81: #{atari_forward.6} parent=5 // pred_check
        %p947 = pneg %p946
      $region82: #{atari_forward.6} parent=5 // pred_check_branch
        %949 = sbr.rel (%p947) target = $region84
      $region83: #{atari_forward.6} parent=5 // pred_region
        %s950 = ssub.s32 %s9, 2
        // Predicated region
        $region85: #{atari_forward.6} parent=83 // pred_check
          %p951 = pneg %p106
        $region86: #{atari_forward.6} parent=83 // pred_check_branch
          %953 = sbr.rel (%p951) target = $region88
        $region87: #{atari_forward.6} parent=83 // pred_region
          %s954 = sand.u32 %s91, 1
          %s955 = sand.u32 %s91, 1
          %s956 = smul.addr %s955, 28
          %s957 = scalar_lea.vmem [#allocation2], %s956
        $region88: #{atari_forward.6} parent=83 // pred_fallthru
          _
      $region84: #{atari_forward.6} parent=5 // pred_fallthru
        _
    $region6: #{atari_forward.6} parent=1 // loop_footer
      %s13 = sadd.s32 1, %s9
    $region7: #{atari_forward.6} parent=1 // loop_footer_branch
      %8 = sbr.rel target = $region3
    $region8: #{atari_forward.6} parent=1 // loop_exit
      _

// kernel: atari_forward.7
$region0: #{atari_forward.7}
  #allocation0 [shape = 'u32[]', space=smem, size = 0x4, offset = 0x4, fixed_abs, tag = 'smem constant byte address 0x4 - core index']
  #allocation1 [shape = 'u32[72,128]{1,0:T(1,128)}', space=vmem, size = 0x9000, scoped, tag = 'internal scratch']
  %s0 = inlined_call_operand.vmem [shape: bf16[2,3200], index: 0, kind: input, shape index: {}]
  %s1 = inlined_call_operand.vmem [shape: bf16[2,3200,512], index: 1, kind: input, shape index: {}]
  %s2 = inlined_call_operand.vmem [shape: f32[2,1,512], index: 2, kind: input, shape index: {}]
  %s3 = inlined_call_operand.vmem [shape: bf16[2,512,128], index: 3, kind: input, shape index: {}]
  %s4 = inlined_call_operand.vmem [shape: f32[2,1,128], index: 4, kind: input, shape index: {}]
  %s5 = inlined_call_operand.vmem [shape: f32[2,2,128], index: 5, kind: output, shape index: {}]
  %s6 = sld [smem:[#allocation0]]
  $region53: #{atari_forward.7} parent=0
    _
  %s8 = ssub.s32 1, %s6
  %s9 = scalar_select 0, %s8, %s6
  loop: start=0, step=1, limit=4
  $region2: #{atari_forward.7} parent=0 // loop_pre_header
    _
  $region3: #{atari_forward.7} parent=0 // loop_header
    %s11 = sphi 0, %s15
    %p12 = scmp.ge.s32.totalorder %s11, 4
    %s18 = sphi 0, %s30
    %s19 = sphi 0, %s26
    %s20 = sphi 0, %s18
    %s21 = sphi 0, %s19
    %s22 = sphi 0, %s20
    %s23 = sphi 0, %s21
    %s33 = sphi 0, %s35
    %s36 = sphi 0, %s33
    %s37 = sphi 0, %s36
    %s53 = sphi 0, %s37
    %s59 = sphi 0, %s61
    %s62 = sphi 0, %s59
    %s63 = sphi 0, %s62
    %s79 = sphi 0, %s63
    %s85 = sphi 0, %s87
    %s88 = sphi 0, %s85
    %s89 = sphi 0, %s88
    %s105 = sphi 0, %s89
    %s111 = sphi 0, %s113
    %s114 = sphi 0, %s111
    %s115 = sphi 0, %s114
    %s131 = sphi 0, %s115
    %s137 = sphi 0, %s139
    %s140 = sphi 0, %s137
    %s141 = sphi 0, %s140
    %s157 = sphi 0, %s141
    %s165 = sphi 0, %s167
    %s168 = sphi 0, %s165
    %s169 = sphi 0, %s168
    %s185 = sphi 0, %s169
  $region4: #{atari_forward.7} parent=0 // loop_header_branch
    %14 = sbr.rel (%p12) target = $region8
  $region5: #{atari_forward.7} parent=0 // loop_body
    %s16 = ssub.s32 %s11, 1
    %s17 = ssub.s32 %s11, 2
    %s24 = sadd.s32 1, %s19
    %p25 = scmp.ge.s32.totalorder %s24, 1
    %s26 = scalar_select %p25, 0, %s24
    %s27 = sadd.s32 1, %s18
    %s28 = scalar_select %p25, %s27, %s18
    %p29 = scmp.ge.s32.totalorder %s28, 2
    %s30 = scalar_select %p29, 0, %s28
    %s31 = ssub.s32 %s19, %s26
    %p32 = scmp.eq.s32.totalorder %s31, 0
    %s34 = sadd.s32 %s33, 1
    %s35 = scalar_select %p32, %s33, %s34
    %p38 = pneg %p32
    %p39 = scmp.eq.s32.totalorder %s11, 1
    %p40 = por %p38, %p39
    %p41 = scmp.ne.s32.totalorder %s33, %s36
    %p42 = scmp.eq.s32.totalorder %s11, 0
    %p43 = por %p41, %p42
    %p44 = scmp.ne.s32.totalorder %s33, %s36
    %p45 = scmp.eq.s32.totalorder %s16, 1
    %p46 = por %p44, %p45
    %p47 = scmp.ne.s32.totalorder %s36, %s37
    %p48 = scmp.eq.s32.totalorder %s16, 0
    %p49 = por %p47, %p48
    %p50 = scmp.ne.s32.totalorder %s36, %s37
    %p51 = scmp.eq.s32.totalorder %s17, 1
    %p52 = por %p50, %p51
    %p54 = scmp.ne.s32.totalorder %s37, %s53
    %p55 = scmp.eq.s32.totalorder %s17, 0
    %p56 = por %p54, %p55
    %s57 = ssub.s32 %s18, %s30
    %p58 = scmp.eq.s32.totalorder %s57, 0
    %s60 = sadd.s32 %s59, 1
    %s61 = scalar_select %p58, %s59, %s60
    %p64 = pneg %p58
    %p65 = scmp.eq.s32.totalorder %s11, 1
    %p66 = por %p64, %p65
    %p67 = scmp.ne.s32.totalorder %s59, %s62
    %p68 = scmp.eq.s32.totalorder %s11, 0
    %p69 = por %p67, %p68
    %p70 = scmp.ne.s32.totalorder %s59, %s62
    %p71 = scmp.eq.s32.totalorder %s16, 1
    %p72 = por %p70, %p71
    %p73 = scmp.ne.s32.totalorder %s62, %s63
    %p74 = scmp.eq.s32.totalorder %s16, 0
    %p75 = por %p73, %p74
    %p76 = scmp.ne.s32.totalorder %s62, %s63
    %p77 = scmp.eq.s32.totalorder %s17, 1
    %p78 = por %p76, %p77
    %p80 = scmp.ne.s32.totalorder %s63, %s79
    %p81 = scmp.eq.s32.totalorder %s17, 0
    %p82 = por %p80, %p81
    %s83 = ssub.s32 %s18, %s30
    %p84 = scmp.eq.s32.totalorder %s83, 0
    %s86 = sadd.s32 %s85, 1
    %s87 = scalar_select %p84, %s85, %s86
    %p90 = pneg %p84
    %p91 = scmp.eq.s32.totalorder %s11, 1
    %p92 = por %p90, %p91
    %p93 = scmp.ne.s32.totalorder %s85, %s88
    %p94 = scmp.eq.s32.totalorder %s11, 0
    %p95 = por %p93, %p94
    %p96 = scmp.ne.s32.totalorder %s85, %s88
    %p97 = scmp.eq.s32.totalorder %s16, 1
    %p98 = por %p96, %p97
    %p99 = scmp.ne.s32.totalorder %s88, %s89
    %p100 = scmp.eq.s32.totalorder %s16, 0
    %p101 = por %p99, %p100
    %p102 = scmp.ne.s32.totalorder %s88, %s89
    %p103 = scmp.eq.s32.totalorder %s17, 1
    %p104 = por %p102, %p103
    %p106 = scmp.ne.s32.totalorder %s89, %s105
    %p107 = scmp.eq.s32.totalorder %s17, 0
    %p108 = por %p106, %p107
    %s109 = ssub.s32 %s18, %s30
    %p110 = scmp.eq.s32.totalorder %s109, 0
    %s112 = sadd.s32 %s111, 1
    %s113 = scalar_select %p110, %s111, %s112
    %p116 = pneg %p110
    %p117 = scmp.eq.s32.totalorder %s11, 1
    %p118 = por %p116, %p117
    %p119 = scmp.ne.s32.totalorder %s111, %s114
    %p120 = scmp.eq.s32.totalorder %s11, 0
    %p121 = por %p119, %p120
    %p122 = scmp.ne.s32.totalorder %s111, %s114
    %p123 = scmp.eq.s32.totalorder %s16, 1
    %p124 = por %p122, %p123
    %p125 = scmp.ne.s32.totalorder %s114, %s115
    %p126 = scmp.eq.s32.totalorder %s16, 0
    %p127 = por %p125, %p126
    %p128 = scmp.ne.s32.totalorder %s114, %s115
    %p129 = scmp.eq.s32.totalorder %s17, 1
    %p130 = por %p128, %p129
    %p132 = scmp.ne.s32.totalorder %s115, %s131
    %p133 = scmp.eq.s32.totalorder %s17, 0
    %p134 = por %p132, %p133
    %s135 = ssub.s32 %s18, %s30
    %p136 = scmp.eq.s32.totalorder %s135, 0
    %s138 = sadd.s32 %s137, 1
    %s139 = scalar_select %p136, %s137, %s138
    %p142 = pneg %p136
    %p143 = scmp.eq.s32.totalorder %s11, 1
    %p144 = por %p142, %p143
    %p145 = scmp.ne.s32.totalorder %s137, %s140
    %p146 = scmp.eq.s32.totalorder %s11, 0
    %p147 = por %p145, %p146
    %p148 = scmp.ne.s32.totalorder %s137, %s140
    %p149 = scmp.eq.s32.totalorder %s16, 1
    %p150 = por %p148, %p149
    %p151 = scmp.ne.s32.totalorder %s140, %s141
    %p152 = scmp.eq.s32.totalorder %s16, 0
    %p153 = por %p151, %p152
    %p154 = scmp.ne.s32.totalorder %s140, %s141
    %p155 = scmp.eq.s32.totalorder %s17, 1
    %p156 = por %p154, %p155
    %p158 = scmp.ne.s32.totalorder %s141, %s157
    %p159 = scmp.eq.s32.totalorder %s17, 0
    %p160 = por %p158, %p159
    %s161 = ssub.s32 %s18, %s30
    %s162 = ssub.s32 %s19, %s26
    %s163 = sor.u32 %s161, %s162
    %p164 = scmp.eq.s32.totalorder %s163, 0
    %s166 = sadd.s32 %s165, 1
    %s167 = scalar_select %p164, %s165, %s166
    %p170 = pneg %p164
    %p171 = scmp.eq.s32.totalorder %s11, 1
    %p172 = por %p170, %p171
    %p173 = scmp.ne.s32.totalorder %s165, %s168
    %p174 = scmp.eq.s32.totalorder %s11, 0
    %p175 = por %p173, %p174
    %p176 = scmp.ne.s32.totalorder %s165, %s168
    %p177 = scmp.eq.s32.totalorder %s16, 1
    %p178 = por %p176, %p177
    %p179 = scmp.ne.s32.totalorder %s168, %s169
    %p180 = scmp.eq.s32.totalorder %s16, 0
    %p181 = por %p179, %p180
    %p182 = scmp.ne.s32.totalorder %s168, %s169
    %p183 = scmp.eq.s32.totalorder %s17, 1
    %p184 = por %p182, %p183
    %p186 = scmp.ne.s32.totalorder %s169, %s185
    %p187 = scmp.eq.s32.totalorder %s17, 0
    %p188 = por %p186, %p187
    %p189 = scmp.le.s32.totalorder 1, %s11
    %p190 = scmp.lt.s32.totalorder %s11, 3
    %p191 = pnand %p189, %p190
    %p192 = pneg %p191
    // Predicated region
    $region9: #{atari_forward.7} parent=5 // pred_check
      _
    $region10: #{atari_forward.7} parent=5 // pred_check_branch
      %194 = sbr.rel (%p191) target = $region12
    $region11: #{atari_forward.7} parent=5 // pred_region
      %s195 = ssub.s32 %s11, 1
      // Predicated region
      $region13: #{atari_forward.7} parent=11 // pred_check
        %p196 = pneg %p49
      $region14: #{atari_forward.7} parent=11 // pred_check_branch
        %198 = sbr.rel (%p196) target = $region16
      $region15: #{atari_forward.7} parent=11 // pred_region
        %p199 = scmp.lt.s32.totalorder %s21, 0
        %s200 = scalar_select %p199, %s21, 0
        %s201 = smul.addr %s200, 25
        %s202 = scalar_lea.vmem %s0, %s201
      $region16: #{atari_forward.7} parent=11 // pred_fallthru
        _
    $region12: #{atari_forward.7} parent=5 // pred_fallthru
      _
    %p203 = scmp.lt.s32.totalorder %s11, 2
    // Predicated region
    $region17: #{atari_forward.7} parent=5 // pred_check
      %p204 = pneg %p203
    $region18: #{atari_forward.7} parent=5 // pred_check_branch
      %206 = sbr.rel (%p204) target = $region20
    $region19: #{atari_forward.7} parent=5 // pred_region
      // Predicated region
      $region21: #{atari_forward.7} parent=19 // pred_check
        %p207 = pneg %p69
      $region22: #{atari_forward.7} parent=19 // pred_check_branch
        %209 = sbr.rel (%p207) target = $region24
      $region23: #{atari_forward.7} parent=19 // pred_region
        %p210 = scmp.lt.s32.totalorder %s18, 1
        %s211 = scalar_select %p210, %s18, 1
        %s212 = smul.addr %s211, 1600
        %s213 = smul.addr %s212, 4
        %s214 = scalar_lea.vmem %s1, %s213
      $region24: #{atari_forward.7} parent=19 // pred_fallthru
        _
      // Predicated region
      $region25: #{atari_forward.7} parent=19 // pred_check
        %p215 = pneg %p95
      $region26: #{atari_forward.7} parent=19 // pred_check_branch
        %217 = sbr.rel (%p215) target = $region28
      $region27: #{atari_forward.7} parent=19 // pred_region
        %p218 = scmp.lt.s32.totalorder %s18, 1
        %s219 = scalar_select %p218, %s18, 1
        %s220 = smul.addr %s219, 4
        %s221 = scalar_lea.vmem %s2, %s220
      $region28: #{atari_forward.7} parent=19 // pred_fallthru
        _
      // Predicated region
      $region29: #{atari_forward.7} parent=19 // pred_check
        %p222 = pneg %p121
      $region30: #{atari_forward.7} parent=19 // pred_check_branch
        %224 = sbr.rel (%p222) target = $region32
      $region31: #{atari_forward.7} parent=19 // pred_region
        %p225 = scmp.lt.s32.totalorder %s18, 1
        %s226 = scalar_select %p225, %s18, 1
        %s227 = smul.addr %s226, 64
        %s228 = smul.addr %s227, 4
        %s229 = scalar_lea.vmem %s3, %s228
      $region32: #{atari_forward.7} parent=19 // pred_fallthru
        _
      // Predicated region
      $region33: #{atari_forward.7} parent=19 // pred_check
        %p230 = pneg %p147
      $region34: #{atari_forward.7} parent=19 // pred_check_branch
        %232 = sbr.rel (%p230) target = $region36
      $region35: #{atari_forward.7} parent=19 // pred_region
        %p233 = scmp.lt.s32.totalorder %s18, 1
        %s234 = scalar_select %p233, %s18, 1
        %s235 = scalar_lea.vmem %s4, %s234
      $region36: #{atari_forward.7} parent=19 // pred_fallthru
        _
    $region20: #{atari_forward.7} parent=5 // pred_fallthru
      _
    %p236 = scmp.le.s32.totalorder 1, %s11
    %p237 = scmp.lt.s32.totalorder %s11, 3
    %p238 = pnand %p236, %p237
    %p239 = pneg %p238
    // Predicated region
    $region37: #{atari_forward.7} parent=5 // pred_check
      _
    $region38: #{atari_forward.7} parent=5 // pred_check_branch
      %241 = sbr.rel (%p238) target = $region40
    $region39: #{atari_forward.7} parent=5 // pred_region
      %s242 = ssub.s32 %s11, 1
      %p243 = scmp.lt.s32.totalorder %s21, 0
      %s244 = scalar_select %p243, %s21, 0
      %s245 = smul.addr %s244, 25
      %s246 = scalar_lea.vmem %s0, %s245
      %p247 = pneg %p49
      %p248 = pneg %p46
      %p249 = scmp.lt.s32.totalorder %s20, 1
      %s250 = scalar_select %p249, %s20, 1
      %s251 = smul.addr %s250, 1600
      %s252 = smul.addr %s251, 4
      %s253 = scalar_lea.vmem %s1, %s252
      %p254 = pneg %p75
      %p255 = pneg %p72
      %p256 = scmp.lt.s32.totalorder %s20, 1
      %s257 = scalar_select %p256, %s20, 1
      %s258 = smul.addr %s257, 4
      %s259 = scalar_lea.vmem %s2, %s258
      %p260 = pneg %p101
      %p261 = pneg %p98
      %p262 = scmp.lt.s32.totalorder %s20, 1
      %s263 = scalar_select %p262, %s20, 1
      %s264 = smul.addr %s263, 64
      %s265 = smul.addr %s264, 4
      %s266 = scalar_lea.vmem %s3, %s265
      %p267 = pneg %p127
      %p268 = pneg %p124
      %p269 = scmp.lt.s32.totalorder %s20, 1
      %s270 = scalar_select %p269, %s20, 1
      %s271 = scalar_lea.vmem %s4, %s270
      %p272 = pneg %p153
      %p273 = pneg %p150
      %p274 = pneg %p181
      %p275 = pneg %p178
      %p276 = scmp.lt.s32.totalorder %s20, 1
      %s277 = scalar_select %p276, %s20, 1
      %p278 = scmp.lt.s32.totalorder %s21, 0
      %s279 = scalar_select %p278, %s21, 0
      %s280 = sadd.s32 %s279, %s277
      %s281 = smul.addr %s280, 2
      %s282 = scalar_lea.vmem %s5, %s281
      %p283 = scmp.lt.s32.totalorder %s21, 0
      %s284 = scalar_select %p283, %s21, 0
      %s285 = smul.addr %s284, 25
      %s286 = scalar_lea.vmem %s0, %s285
      %p287 = scmp.lt.s32.totalorder %s20, 1
      %s288 = scalar_select %p287, %s20, 1
      %s289 = smul.addr %s288, 1600
      %s290 = smul.addr %s289, 4
      %s291 = scalar_lea.vmem %s1, %s290
      %p292 = scmp.lt.s32.totalorder %s20, 1
      %s293 = scalar_select %p292, %s20, 1
      %s294 = smul.addr %s293, 4
      %s295 = scalar_lea.vmem %s2, %s294
      %p296 = scmp.lt.s32.totalorder %s20, 1
      %s297 = scalar_select %p296, %s20, 1
      %s298 = smul.addr %s297, 64
      %s299 = smul.addr %s298, 4
      %s300 = scalar_lea.vmem %s3, %s299
      %p301 = scmp.lt.s32.totalorder %s20, 1
      %s302 = scalar_select %p301, %s20, 1
      %s303 = scalar_lea.vmem %s4, %s302
      %p304 = scmp.lt.s32.totalorder %s20, 1
      %s305 = scalar_select %p304, %s20, 1
      %p306 = scmp.lt.s32.totalorder %s21, 0
      %s307 = scalar_select %p306, %s21, 0
      %s308 = sadd.s32 %s307, %s305
      %s309 = smul.addr %s308, 2
      %s310 = scalar_lea.vmem %s5, %s309
      %v311 = vld [vmem:[%s286] sm:$0xff]
      %v312 = vld [vmem:[%s286 + $0x8] sm:$0xff]
      %v313 = vld [vmem:[%s286 + $0x10] sm:$0xff]
      %v314 = vld [vmem:[%s286 + $0x18] sm:$0x1]
      %v315 = vld [vmem:[%s291] sm:$0xff]
      %v316 = vld [vmem:[%s291 + $0x8] sm:$0xff]
      %v317 = vld [vmem:[%s291 + $0x10] sm:$0xff]
      %v318 = vld [vmem:[%s291 + $0x18] sm:$0xff]
      %v319 = vld [vmem:[%s291 + $0x20] sm:$0xff]
      %v320 = vld [vmem:[%s291 + $0x28] sm:$0xff]
      %v321 = vld [vmem:[%s291 + $0x30] sm:$0xff]
      %v322 = vld [vmem:[%s291 + $0x38] sm:$0xff]
      %v323 = vld [vmem:[%s291 + $0x40] sm:$0xff]
      %v324 = vld [vmem:[%s291 + $0x48] sm:$0xff]
      %v325 = vld [vmem:[%s291 + $0x50] sm:$0xff]
      %v326 = vld [vmem:[%s291 + $0x58] sm:$0xff]
      %v327 = vld [vmem:[%s291 + $0x60] sm:$0xff]
      %v328 = vld [vmem:[%s291 + $0x68] sm:$0xff]
      %v329 = vld [vmem:[%s291 + $0x70] sm:$0xff]
      %v330 = vld [vmem:[%s291 + $0x78] sm:$0xff]
      %v331 = vld [vmem:[%s291 + $0x80] sm:$0xff]
      %v332 = vld [vmem:[%s291 + $0x88] sm:$0xff]
      %v333 = vld [vmem:[%s291 + $0x90] sm:$0xff]
      %v334 = vld [vmem:[%s291 + $0x98] sm:$0xff]
      %v335 = vld [vmem:[%s291 + $0xa0] sm:$0xff]
      %v336 = vld [vmem:[%s291 + $0xa8] sm:$0xff]
      %v337 = vld [vmem:[%s291 + $0xb0] sm:$0xff]
      %v338 = vld [vmem:[%s291 + $0xb8] sm:$0xff]
      %v339 = vld [vmem:[%s291 + $0xc0] sm:$0xff]
      %v340 = vld [vmem:[%s291 + $0xc8] sm:$0xff]
      %v341 = vld [vmem:[%s291 + $0xd0] sm:$0xff]
      %v342 = vld [vmem:[%s291 + $0xd8] sm:$0xff]
      %v343 = vld [vmem:[%s291 + $0xe0] sm:$0xff]
      %v344 = vld [vmem:[%s291 + $0xe8] sm:$0xff]
      %v345 = vld [vmem:[%s291 + $0xf0] sm:$0xff]
      %v346 = vld [vmem:[%s291 + $0xf8] sm:$0xff]
      %v347 = vld [vmem:[%s291 + $0x100] sm:$0xff]
      %v348 = vld [vmem:[%s291 + $0x108] sm:$0xff]
      %v349 = vld [vmem:[%s291 + $0x110] sm:$0xff]
      %v350 = vld [vmem:[%s291 + $0x118] sm:$0xff]
      %v351 = vld [vmem:[%s291 + $0x120] sm:$0xff]
      %v352 = vld [vmem:[%s291 + $0x128] sm:$0xff]
      %v353 = vld [vmem:[%s291 + $0x130] sm:$0xff]
      %v354 = vld [vmem:[%s291 + $0x138] sm:$0xff]
      %v355 = vld [vmem:[%s291 + $0x140] sm:$0xff]
      %v356 = vld [vmem:[%s291 + $0x148] sm:$0xff]
      %v357 = vld [vmem:[%s291 + $0x150] sm:$0xff]
      %v358 = vld [vmem:[%s291 + $0x158] sm:$0xff]
      %v359 = vld [vmem:[%s291 + $0x160] sm:$0xff]
      %v360 = vld [vmem:[%s291 + $0x168] sm:$0xff]
      %v361 = vld [vmem:[%s291 + $0x170] sm:$0xff]
      %v362 = vld [vmem:[%s291 + $0x178] sm:$0xff]
      %v363 = vld [vmem:[%s291 + $0x180] sm:$0xff]
      %v364 = vld [vmem:[%s291 + $0x188] sm:$0xff]
      %v365 = vld [vmem:[%s291 + $0x190] sm:$0xff]
      %v366 = vld [vmem:[%s291 + $0x198] sm:$0xff]
      %v367 = vld [vmem:[%s291 + $0x1a0] sm:$0xff]
      %v368 = vld [vmem:[%s291 + $0x1a8] sm:$0xff]
      %v369 = vld [vmem:[%s291 + $0x1b0] sm:$0xff]
      %v370 = vld [vmem:[%s291 + $0x1b8] sm:$0xff]
      %v371 = vld [vmem:[%s291 + $0x1c0] sm:$0xff]
      %v372 = vld [vmem:[%s291 + $0x1c8] sm:$0xff]
      %v373 = vld [vmem:[%s291 + $0x1d0] sm:$0xff]
      %v374 = vld [vmem:[%s291 + $0x1d8] sm:$0xff]
      %v375 = vld [vmem:[%s291 + $0x1e0] sm:$0xff]
      %v376 = vld [vmem:[%s291 + $0x1e8] sm:$0xff]
      %v377 = vld [vmem:[%s291 + $0x1f0] sm:$0xff]
      %v378 = vld [vmem:[%s291 + $0x1f8] sm:$0xff]
      %v379 = vld [vmem:[%s291 + $0x200] sm:$0xff]
      %v380 = vld [vmem:[%s291 + $0x208] sm:$0xff]
      %v381 = vld [vmem:[%s291 + $0x210] sm:$0xff]
      %v382 = vld [vmem:[%s291 + $0x218] sm:$0xff]
      %v383 = vld [vmem:[%s291 + $0x220] sm:$0xff]
      %v384 = vld [vmem:[%s291 + $0x228] sm:$0xff]
      %v385 = vld [vmem:[%s291 + $0x230] sm:$0xff]
      %v386 = vld [vmem:[%s291 + $0x238] sm:$0xff]
      %v387 = vld [vmem:[%s291 + $0x240] sm:$0xff]
      %v388 = vld [vmem:[%s291 + $0x248] sm:$0xff]
      %v389 = vld [vmem:[%s291 + $0x250] sm:$0xff]
      %v390 = vld [vmem:[%s291 + $0x258] sm:$0xff]
      %v391 = vld [vmem:[%s291 + $0x260] sm:$0xff]
      %v392 = vld [vmem:[%s291 + $0x268] sm:$0xff]
      %v393 = vld [vmem:[%s291 + $0x270] sm:$0xff]
      %v394 = vld [vmem:[%s291 + $0x278] sm:$0xff]
      %v395 = vld [vmem:[%s291 + $0x280] sm:$0xff]
      %v396 = vld [vmem:[%s291 + $0x288] sm:$0xff]
      %v397 = vld [vmem:[%s291 + $0x290] sm:$0xff]
      %v398 = vld [vmem:[%s291 + $0x298] sm:$0xff]
      %v399 = vld [vmem:[%s291 + $0x2a0] sm:$0xff]
      %v400 = vld [vmem:[%s291 + $0x2a8] sm:$0xff]
      %v401 = vld [vmem:[%s291 + $0x2b0] sm:$0xff]
      %v402 = vld [vmem:[%s291 + $0x2b8] sm:$0xff]
      %v403 = vld [vmem:[%s291 + $0x2c0] sm:$0xff]
      %v404 = vld [vmem:[%s291 + $0x2c8] sm:$0xff]
      %v405 = vld [vmem:[%s291 + $0x2d0] sm:$0xff]
      %v406 = vld [vmem:[%s291 + $0x2d8] sm:$0xff]
      %v407 = vld [vmem:[%s291 + $0x2e0] sm:$0xff]
      %v408 = vld [vmem:[%s291 + $0x2e8] sm:$0xff]
      %v409 = vld [vmem:[%s291 + $0x2f0] sm:$0xff]
      %v410 = vld [vmem:[%s291 + $0x2f8] sm:$0xff]
      %v411 = vld [vmem:[%s291 + $0x300] sm:$0xff]
      %v412 = vld [vmem:[%s291 + $0x308] sm:$0xff]
      %v413 = vld [vmem:[%s291 + $0x310] sm:$0xff]
      %v414 = vld [vmem:[%s291 + $0x318] sm:$0xff]
      %v415 = vld [vmem:[%s291 + $0x320] sm:$0xff]
      %v416 = vld [vmem:[%s291 + $0x328] sm:$0xff]
      %v417 = vld [vmem:[%s291 + $0x330] sm:$0xff]
      %v418 = vld [vmem:[%s291 + $0x338] sm:$0xff]
      %v419 = vld [vmem:[%s291 + $0x340] sm:$0xff]
      %v420 = vld [vmem:[%s291 + $0x348] sm:$0xff]
      %v421 = vld [vmem:[%s291 + $0x350] sm:$0xff]
      %v422 = vld [vmem:[%s291 + $0x358] sm:$0xff]
      %v423 = vld [vmem:[%s291 + $0x360] sm:$0xff]
      %v424 = vld [vmem:[%s291 + $0x368] sm:$0xff]
      %v425 = vld [vmem:[%s291 + $0x370] sm:$0xff]
      %v426 = vld [vmem:[%s291 + $0x378] sm:$0xff]
      %v427 = vld [vmem:[%s291 + $0x380] sm:$0xff]
      %v428 = vld [vmem:[%s291 + $0x388] sm:$0xff]
      %v429 = vld [vmem:[%s291 + $0x390] sm:$0xff]
      %v430 = vld [vmem:[%s291 + $0x398] sm:$0xff]
      %v431 = vld [vmem:[%s291 + $0x3a0] sm:$0xff]
      %v432 = vld [vmem:[%s291 + $0x3a8] sm:$0xff]
      %v433 = vld [vmem:[%s291 + $0x3b0] sm:$0xff]
      %v434 = vld [vmem:[%s291 + $0x3b8] sm:$0xff]
      %v435 = vld [vmem:[%s291 + $0x3c0] sm:$0xff]
      %v436 = vld [vmem:[%s291 + $0x3c8] sm:$0xff]
      %v437 = vld [vmem:[%s291 + $0x3d0] sm:$0xff]
      %v438 = vld [vmem:[%s291 + $0x3d8] sm:$0xff]
      %v439 = vld [vmem:[%s291 + $0x3e0] sm:$0xff]
      %v440 = vld [vmem:[%s291 + $0x3e8] sm:$0xff]
      %v441 = vld [vmem:[%s291 + $0x3f0] sm:$0xff]
      %v442 = vld [vmem:[%s291 + $0x3f8] sm:$0xff]
      %v443 = vld [vmem:[%s291 + $0x400] sm:$0xff]
      %v444 = vld [vmem:[%s291 + $0x408] sm:$0xff]
      %v445 = vld [vmem:[%s291 + $0x410] sm:$0xff]
      %v446 = vld [vmem:[%s291 + $0x418] sm:$0xff]
      %v447 = vld [vmem:[%s291 + $0x420] sm:$0xff]
      %v448 = vld [vmem:[%s291 + $0x428] sm:$0xff]
      %v449 = vld [vmem:[%s291 + $0x430] sm:$0xff]
      %v450 = vld [vmem:[%s291 + $0x438] sm:$0xff]
      %v451 = vld [vmem:[%s291 + $0x440] sm:$0xff]
      %v452 = vld [vmem:[%s291 + $0x448] sm:$0xff]
      %v453 = vld [vmem:[%s291 + $0x450] sm:$0xff]
      %v454 = vld [vmem:[%s291 + $0x458] sm:$0xff]
      %v455 = vld [vmem:[%s291 + $0x460] sm:$0xff]
      %v456 = vld [vmem:[%s291 + $0x468] sm:$0xff]
      %v457 = vld [vmem:[%s291 + $0x470] sm:$0xff]
      %v458 = vld [vmem:[%s291 + $0x478] sm:$0xff]
      %v459 = vld [vmem:[%s291 + $0x480] sm:$0xff]
      %v460 = vld [vmem:[%s291 + $0x488] sm:$0xff]
      %v461 = vld [vmem:[%s291 + $0x490] sm:$0xff]
      %v462 = vld [vmem:[%s291 + $0x498] sm:$0xff]
      %v463 = vld [vmem:[%s291 + $0x4a0] sm:$0xff]
      %v464 = vld [vmem:[%s291 + $0x4a8] sm:$0xff]
      %v465 = vld [vmem:[%s291 + $0x4b0] sm:$0xff]
      %v466 = vld [vmem:[%s291 + $0x4b8] sm:$0xff]
      %v467 = vld [vmem:[%s291 + $0x4c0] sm:$0xff]
      %v468 = vld [vmem:[%s291 + $0x4c8] sm:$0xff]
      %v469 = vld [vmem:[%s291 + $0x4d0] sm:$0xff]
      %v470 = vld [vmem:[%s291 + $0x4d8] sm:$0xff]
      %v471 = vld [vmem:[%s291 + $0x4e0] sm:$0xff]
      %v472 = vld [vmem:[%s291 + $0x4e8] sm:$0xff]
      %v473 = vld [vmem:[%s291 + $0x4f0] sm:$0xff]
      %v474 = vld [vmem:[%s291 + $0x4f8] sm:$0xff]
      %v475 = vld [vmem:[%s291 + $0x500] sm:$0xff]
      %v476 = vld [vmem:[%s291 + $0x508] sm:$0xff]
      %v477 = vld [vmem:[%s291 + $0x510] sm:$0xff]
      %v478 = vld [vmem:[%s291 + $0x518] sm:$0xff]
      %v479 = vld [vmem:[%s291 + $0x520] sm:$0xff]
      %v480 = vld [vmem:[%s291 + $0x528] sm:$0xff]
      %v481 = vld [vmem:[%s291 + $0x530] sm:$0xff]
      %v482 = vld [vmem:[%s291 + $0x538] sm:$0xff]
      %v483 = vld [vmem:[%s291 + $0x540] sm:$0xff]
      %v484 = vld [vmem:[%s291 + $0x548] sm:$0xff]
      %v485 = vld [vmem:[%s291 + $0x550] sm:$0xff]
      %v486 = vld [vmem:[%s291 + $0x558] sm:$0xff]
      %v487 = vld [vmem:[%s291 + $0x560] sm:$0xff]
      %v488 = vld [vmem:[%s291 + $0x568] sm:$0xff]
      %v489 = vld [vmem:[%s291 + $0x570] sm:$0xff]
      %v490 = vld [vmem:[%s291 + $0x578] sm:$0xff]
      %v491 = vld [vmem:[%s291 + $0x580] sm:$0xff]
      %v492 = vld [vmem:[%s291 + $0x588] sm:$0xff]
      %v493 = vld [vmem:[%s291 + $0x590] sm:$0xff]
      %v494 = vld [vmem:[%s291 + $0x598] sm:$0xff]
      %v495 = vld [vmem:[%s291 + $0x5a0] sm:$0xff]
      %v496 = vld [vmem:[%s291 + $0x5a8] sm:$0xff]
      %v497 = vld [vmem:[%s291 + $0x5b0] sm:$0xff]
      %v498 = vld [vmem:[%s291 + $0x5b8] sm:$0xff]
      %v499 = vld [vmem:[%s291 + $0x5c0] sm:$0xff]
      %v500 = vld [vmem:[%s291 + $0x5c8] sm:$0xff]
      %v501 = vld [vmem:[%s291 + $0x5d0] sm:$0xff]
      %v502 = vld [vmem:[%s291 + $0x5d8] sm:$0xff]
      %v503 = vld [vmem:[%s291 + $0x5e0] sm:$0xff]
      %v504 = vld [vmem:[%s291 + $0x5e8] sm:$0xff]
      %v505 = vld [vmem:[%s291 + $0x5f0] sm:$0xff]
      %v506 = vld [vmem:[%s291 + $0x5f8] sm:$0xff]
      %v507 = vld [vmem:[%s291 + $0x600] sm:$0xff]
      %v508 = vld [vmem:[%s291 + $0x608] sm:$0xff]
      %v509 = vld [vmem:[%s291 + $0x610] sm:$0xff]
      %v510 = vld [vmem:[%s291 + $0x618] sm:$0xff]
      %v511 = vld [vmem:[%s291 + $0x620] sm:$0xff]
      %v512 = vld [vmem:[%s291 + $0x628] sm:$0xff]
      %v513 = vld [vmem:[%s291 + $0x630] sm:$0xff]
      %v514 = vld [vmem:[%s291 + $0x638] sm:$0xff]
      %v515 = vld [vmem:[%s291 + $0x640] sm:$0xff]
      %v516 = vld [vmem:[%s291 + $0x648] sm:$0xff]
      %v517 = vld [vmem:[%s291 + $0x650] sm:$0xff]
      %v518 = vld [vmem:[%s291 + $0x658] sm:$0xff]
      %v519 = vld [vmem:[%s291 + $0x660] sm:$0xff]
      %v520 = vld [vmem:[%s291 + $0x668] sm:$0xff]
      %v521 = vld [vmem:[%s291 + $0x670] sm:$0xff]
      %v522 = vld [vmem:[%s291 + $0x678] sm:$0xff]
      %v523 = vld [vmem:[%s291 + $0x680] sm:$0xff]
      %v524 = vld [vmem:[%s291 + $0x688] sm:$0xff]
      %v525 = vld [vmem:[%s291 + $0x690] sm:$0xff]
      %v526 = vld [vmem:[%s291 + $0x698] sm:$0xff]
      %v527 = vld [vmem:[%s291 + $0x6a0] sm:$0xff]
      %v528 = vld [vmem:[%s291 + $0x6a8] sm:$0xff]
      %v529 = vld [vmem:[%s291 + $0x6b0] sm:$0xff]
      %v530 = vld [vmem:[%s291 + $0x6b8] sm:$0xff]
      %v531 = vld [vmem:[%s291 + $0x6c0] sm:$0xff]
      %v532 = vld [vmem:[%s291 + $0x6c8] sm:$0xff]
      %v533 = vld [vmem:[%s291 + $0x6d0] sm:$0xff]
      %v534 = vld [vmem:[%s291 + $0x6d8] sm:$0xff]
      %v535 = vld [vmem:[%s291 + $0x6e0] sm:$0xff]
      %v536 = vld [vmem:[%s291 + $0x6e8] sm:$0xff]
      %v537 = vld [vmem:[%s291 + $0x6f0] sm:$0xff]
      %v538 = vld [vmem:[%s291 + $0x6f8] sm:$0xff]
      %v539 = vld [vmem:[%s291 + $0x700] sm:$0xff]
      %v540 = vld [vmem:[%s291 + $0x708] sm:$0xff]
      %v541 = vld [vmem:[%s291 + $0x710] sm:$0xff]
      %v542 = vld [vmem:[%s291 + $0x718] sm:$0xff]
      %v543 = vld [vmem:[%s291 + $0x720] sm:$0xff]
      %v544 = vld [vmem:[%s291 + $0x728] sm:$0xff]
      %v545 = vld [vmem:[%s291 + $0x730] sm:$0xff]
      %v546 = vld [vmem:[%s291 + $0x738] sm:$0xff]
      %v547 = vld [vmem:[%s291 + $0x740] sm:$0xff]
      %v548 = vld [vmem:[%s291 + $0x748] sm:$0xff]
      %v549 = vld [vmem:[%s291 + $0x750] sm:$0xff]
      %v550 = vld [vmem:[%s291 + $0x758] sm:$0xff]
      %v551 = vld [vmem:[%s291 + $0x760] sm:$0xff]
      %v552 = vld [vmem:[%s291 + $0x768] sm:$0xff]
      %v553 = vld [vmem:[%s291 + $0x770] sm:$0xff]
      %v554 = vld [vmem:[%s291 + $0x778] sm:$0xff]
      %v555 = vld [vmem:[%s291 + $0x780] sm:$0xff]
      %v556 = vld [vmem:[%s291 + $0x788] sm:$0xff]
      %v557 = vld [vmem:[%s291 + $0x790] sm:$0xff]
      %v558 = vld [vmem:[%s291 + $0x798] sm:$0xff]
      %v559 = vld [vmem:[%s291 + $0x7a0] sm:$0xff]
      %v560 = vld [vmem:[%s291 + $0x7a8] sm:$0xff]
      %v561 = vld [vmem:[%s291 + $0x7b0] sm:$0xff]
      %v562 = vld [vmem:[%s291 + $0x7b8] sm:$0xff]
      %v563 = vld [vmem:[%s291 + $0x7c0] sm:$0xff]
      %v564 = vld [vmem:[%s291 + $0x7c8] sm:$0xff]
      %v565 = vld [vmem:[%s291 + $0x7d0] sm:$0xff]
      %v566 = vld [vmem:[%s291 + $0x7d8] sm:$0xff]
      %v567 = vld [vmem:[%s291 + $0x7e0] sm:$0xff]
      %v568 = vld [vmem:[%s291 + $0x7e8] sm:$0xff]
      %v569 = vld [vmem:[%s291 + $0x7f0] sm:$0xff]
      %v570 = vld [vmem:[%s291 + $0x7f8] sm:$0xff]
      %v571 = vld [vmem:[%s291 + $0x800] sm:$0xff]
      %v572 = vld [vmem:[%s291 + $0x808] sm:$0xff]
      %v573 = vld [vmem:[%s291 + $0x810] sm:$0xff]
      %v574 = vld [vmem:[%s291 + $0x818] sm:$0xff]
      %v575 = vld [vmem:[%s291 + $0x820] sm:$0xff]
      %v576 = vld [vmem:[%s291 + $0x828] sm:$0xff]
      %v577 = vld [vmem:[%s291 + $0x830] sm:$0xff]
      %v578 = vld [vmem:[%s291 + $0x838] sm:$0xff]
      %v579 = vld [vmem:[%s291 + $0x840] sm:$0xff]
      %v580 = vld [vmem:[%s291 + $0x848] sm:$0xff]
      %v581 = vld [vmem:[%s291 + $0x850] sm:$0xff]
      %v582 = vld [vmem:[%s291 + $0x858] sm:$0xff]
      %v583 = vld [vmem:[%s291 + $0x860] sm:$0xff]
      %v584 = vld [vmem:[%s291 + $0x868] sm:$0xff]
      %v585 = vld [vmem:[%s291 + $0x870] sm:$0xff]
      %v586 = vld [vmem:[%s291 + $0x878] sm:$0xff]
      %v587 = vld [vmem:[%s291 + $0x880] sm:$0xff]
      %v588 = vld [vmem:[%s291 + $0x888] sm:$0xff]
      %v589 = vld [vmem:[%s291 + $0x890] sm:$0xff]
      %v590 = vld [vmem:[%s291 + $0x898] sm:$0xff]
      %v591 = vld [vmem:[%s291 + $0x8a0] sm:$0xff]
      %v592 = vld [vmem:[%s291 + $0x8a8] sm:$0xff]
      %v593 = vld [vmem:[%s291 + $0x8b0] sm:$0xff]
      %v594 = vld [vmem:[%s291 + $0x8b8] sm:$0xff]
      %v595 = vld [vmem:[%s291 + $0x8c0] sm:$0xff]
      %v596 = vld [vmem:[%s291 + $0x8c8] sm:$0xff]
      %v597 = vld [vmem:[%s291 + $0x8d0] sm:$0xff]
      %v598 = vld [vmem:[%s291 + $0x8d8] sm:$0xff]
      %v599 = vld [vmem:[%s291 + $0x8e0] sm:$0xff]
      %v600 = vld [vmem:[%s291 + $0x8e8] sm:$0xff]
      %v601 = vld [vmem:[%s291 + $0x8f0] sm:$0xff]
      %v602 = vld [vmem:[%s291 + $0x8f8] sm:$0xff]
      %v603 = vld [vmem:[%s291 + $0x900] sm:$0xff]
      %v604 = vld [vmem:[%s291 + $0x908] sm:$0xff]
      %v605 = vld [vmem:[%s291 + $0x910] sm:$0xff]
      %v606 = vld [vmem:[%s291 + $0x918] sm:$0xff]
      %v607 = vld [vmem:[%s291 + $0x920] sm:$0xff]
      %v608 = vld [vmem:[%s291 + $0x928] sm:$0xff]
      %v609 = vld [vmem:[%s291 + $0x930] sm:$0xff]
      %v610 = vld [vmem:[%s291 + $0x938] sm:$0xff]
      %v611 = vld [vmem:[%s291 + $0x940] sm:$0xff]
      %v612 = vld [vmem:[%s291 + $0x948] sm:$0xff]
      %v613 = vld [vmem:[%s291 + $0x950] sm:$0xff]
      %v614 = vld [vmem:[%s291 + $0x958] sm:$0xff]
      %v615 = vld [vmem:[%s291 + $0x960] sm:$0xff]
      %v616 = vld [vmem:[%s291 + $0x968] sm:$0xff]
      %v617 = vld [vmem:[%s291 + $0x970] sm:$0xff]
      %v618 = vld [vmem:[%s291 + $0x978] sm:$0xff]
      %v619 = vld [vmem:[%s291 + $0x980] sm:$0xff]
      %v620 = vld [vmem:[%s291 + $0x988] sm:$0xff]
      %v621 = vld [vmem:[%s291 + $0x990] sm:$0xff]
      %v622 = vld [vmem:[%s291 + $0x998] sm:$0xff]
      %v623 = vld [vmem:[%s291 + $0x9a0] sm:$0xff]
      %v624 = vld [vmem:[%s291 + $0x9a8] sm:$0xff]
      %v625 = vld [vmem:[%s291 + $0x9b0] sm:$0xff]
      %v626 = vld [vmem:[%s291 + $0x9b8] sm:$0xff]
      %v627 = vld [vmem:[%s291 + $0x9c0] sm:$0xff]
      %v628 = vld [vmem:[%s291 + $0x9c8] sm:$0xff]
      %v629 = vld [vmem:[%s291 + $0x9d0] sm:$0xff]
      %v630 = vld [vmem:[%s291 + $0x9d8] sm:$0xff]
      %v631 = vld [vmem:[%s291 + $0x9e0] sm:$0xff]
      %v632 = vld [vmem:[%s291 + $0x9e8] sm:$0xff]
      %v633 = vld [vmem:[%s291 + $0x9f0] sm:$0xff]
      %v634 = vld [vmem:[%s291 + $0x9f8] sm:$0xff]
      %v635 = vld [vmem:[%s291 + $0xa00] sm:$0xff]
      %v636 = vld [vmem:[%s291 + $0xa08] sm:$0xff]
      %v637 = vld [vmem:[%s291 + $0xa10] sm:$0xff]
      %v638 = vld [vmem:[%s291 + $0xa18] sm:$0xff]
      %v639 = vld [vmem:[%s291 + $0xa20] sm:$0xff]
      %v640 = vld [vmem:[%s291 + $0xa28] sm:$0xff]
      %v641 = vld [vmem:[%s291 + $0xa30] sm:$0xff]
      %v642 = vld [vmem:[%s291 + $0xa38] sm:$0xff]
      %v643 = vld [vmem:[%s291 + $0xa40] sm:$0xff]
      %v644 = vld [vmem:[%s291 + $0xa48] sm:$0xff]
      %v645 = vld [vmem:[%s291 + $0xa50] sm:$0xff]
      %v646 = vld [vmem:[%s291 + $0xa58] sm:$0xff]
      %v647 = vld [vmem:[%s291 + $0xa60] sm:$0xff]
      %v648 = vld [vmem:[%s291 + $0xa68] sm:$0xff]
      %v649 = vld [vmem:[%s291 + $0xa70] sm:$0xff]
      %v650 = vld [vmem:[%s291 + $0xa78] sm:$0xff]
      %v651 = vld [vmem:[%s291 + $0xa80] sm:$0xff]
      %v652 = vld [vmem:[%s291 + $0xa88] sm:$0xff]
      %v653 = vld [vmem:[%s291 + $0xa90] sm:$0xff]
      %v654 = vld [vmem:[%s291 + $0xa98] sm:$0xff]
      %v655 = vld [vmem:[%s291 + $0xaa0] sm:$0xff]
      %v656 = vld [vmem:[%s291 + $0xaa8] sm:$0xff]
      %v657 = vld [vmem:[%s291 + $0xab0] sm:$0xff]
      %v658 = vld [vmem:[%s291 + $0xab8] sm:$0xff]
      %v659 = vld [vmem:[%s291 + $0xac0] sm:$0xff]
      %v660 = vld [vmem:[%s291 + $0xac8] sm:$0xff]
      %v661 = vld [vmem:[%s291 + $0xad0] sm:$0xff]
      %v662 = vld [vmem:[%s291 + $0xad8] sm:$0xff]
      %v663 = vld [vmem:[%s291 + $0xae0] sm:$0xff]
      %v664 = vld [vmem:[%s291 + $0xae8] sm:$0xff]
      %v665 = vld [vmem:[%s291 + $0xaf0] sm:$0xff]
      %v666 = vld [vmem:[%s291 + $0xaf8] sm:$0xff]
      %v667 = vld [vmem:[%s291 + $0xb00] sm:$0xff]
      %v668 = vld [vmem:[%s291 + $0xb08] sm:$0xff]
      %v669 = vld [vmem:[%s291 + $0xb10] sm:$0xff]
      %v670 = vld [vmem:[%s291 + $0xb18] sm:$0xff]
      %v671 = vld [vmem:[%s291 + $0xb20] sm:$0xff]
      %v672 = vld [vmem:[%s291 + $0xb28] sm:$0xff]
      %v673 = vld [vmem:[%s291 + $0xb30] sm:$0xff]
      %v674 = vld [vmem:[%s291 + $0xb38] sm:$0xff]
      %v675 = vld [vmem:[%s291 + $0xb40] sm:$0xff]
      %v676 = vld [vmem:[%s291 + $0xb48] sm:$0xff]
      %v677 = vld [vmem:[%s291 + $0xb50] sm:$0xff]
      %v678 = vld [vmem:[%s291 + $0xb58] sm:$0xff]
      %v679 = vld [vmem:[%s291 + $0xb60] sm:$0xff]
      %v680 = vld [vmem:[%s291 + $0xb68] sm:$0xff]
      %v681 = vld [vmem:[%s291 + $0xb70] sm:$0xff]
      %v682 = vld [vmem:[%s291 + $0xb78] sm:$0xff]
      %v683 = vld [vmem:[%s291 + $0xb80] sm:$0xff]
      %v684 = vld [vmem:[%s291 + $0xb88] sm:$0xff]
      %v685 = vld [vmem:[%s291 + $0xb90] sm:$0xff]
      %v686 = vld [vmem:[%s291 + $0xb98] sm:$0xff]
      %v687 = vld [vmem:[%s291 + $0xba0] sm:$0xff]
      %v688 = vld [vmem:[%s291 + $0xba8] sm:$0xff]
      %v689 = vld [vmem:[%s291 + $0xbb0] sm:$0xff]
      %v690 = vld [vmem:[%s291 + $0xbb8] sm:$0xff]
      %v691 = vld [vmem:[%s291 + $0xbc0] sm:$0xff]
      %v692 = vld [vmem:[%s291 + $0xbc8] sm:$0xff]
      %v693 = vld [vmem:[%s291 + $0xbd0] sm:$0xff]
      %v694 = vld [vmem:[%s291 + $0xbd8] sm:$0xff]
      %v695 = vld [vmem:[%s291 + $0xbe0] sm:$0xff]
      %v696 = vld [vmem:[%s291 + $0xbe8] sm:$0xff]
      %v697 = vld [vmem:[%s291 + $0xbf0] sm:$0xff]
      %v698 = vld [vmem:[%s291 + $0xbf8] sm:$0xff]
      %v699 = vld [vmem:[%s291 + $0xc00] sm:$0xff]
      %v700 = vld [vmem:[%s291 + $0xc08] sm:$0xff]
      %v701 = vld [vmem:[%s291 + $0xc10] sm:$0xff]
      %v702 = vld [vmem:[%s291 + $0xc18] sm:$0xff]
      %v703 = vld [vmem:[%s291 + $0xc20] sm:$0xff]
      %v704 = vld [vmem:[%s291 + $0xc28] sm:$0xff]
      %v705 = vld [vmem:[%s291 + $0xc30] sm:$0xff]
      %v706 = vld [vmem:[%s291 + $0xc38] sm:$0xff]
      %v707 = vld [vmem:[%s291 + $0xc40] sm:$0xff]
      %v708 = vld [vmem:[%s291 + $0xc48] sm:$0xff]
      %v709 = vld [vmem:[%s291 + $0xc50] sm:$0xff]
      %v710 = vld [vmem:[%s291 + $0xc58] sm:$0xff]
      %v711 = vld [vmem:[%s291 + $0xc60] sm:$0xff]
      %v712 = vld [vmem:[%s291 + $0xc68] sm:$0xff]
      %v713 = vld [vmem:[%s291 + $0xc70] sm:$0xff]
      %v714 = vld [vmem:[%s291 + $0xc78] sm:$0xff]
      %v715 = vld [vmem:[%s291 + $0xc80] sm:$0xff]
      %v716 = vld [vmem:[%s291 + $0xc88] sm:$0xff]
      %v717 = vld [vmem:[%s291 + $0xc90] sm:$0xff]
      %v718 = vld [vmem:[%s291 + $0xc98] sm:$0xff]
      %v719 = vld [vmem:[%s291 + $0xca0] sm:$0xff]
      %v720 = vld [vmem:[%s291 + $0xca8] sm:$0xff]
      %v721 = vld [vmem:[%s291 + $0xcb0] sm:$0xff]
      %v722 = vld [vmem:[%s291 + $0xcb8] sm:$0xff]
      %v723 = vld [vmem:[%s291 + $0xcc0] sm:$0xff]
      %v724 = vld [vmem:[%s291 + $0xcc8] sm:$0xff]
      %v725 = vld [vmem:[%s291 + $0xcd0] sm:$0xff]
      %v726 = vld [vmem:[%s291 + $0xcd8] sm:$0xff]
      %v727 = vld [vmem:[%s291 + $0xce0] sm:$0xff]
      %v728 = vld [vmem:[%s291 + $0xce8] sm:$0xff]
      %v729 = vld [vmem:[%s291 + $0xcf0] sm:$0xff]
      %v730 = vld [vmem:[%s291 + $0xcf8] sm:$0xff]
      %v731 = vld [vmem:[%s291 + $0xd00] sm:$0xff]
      %v732 = vld [vmem:[%s291 + $0xd08] sm:$0xff]
      %v733 = vld [vmem:[%s291 + $0xd10] sm:$0xff]
      %v734 = vld [vmem:[%s291 + $0xd18] sm:$0xff]
      %v735 = vld [vmem:[%s291 + $0xd20] sm:$0xff]
      %v736 = vld [vmem:[%s291 + $0xd28] sm:$0xff]
      %v737 = vld [vmem:[%s291 + $0xd30] sm:$0xff]
      %v738 = vld [vmem:[%s291 + $0xd38] sm:$0xff]
      %v739 = vld [vmem:[%s291 + $0xd40] sm:$0xff]
      %v740 = vld [vmem:[%s291 + $0xd48] sm:$0xff]
      %v741 = vld [vmem:[%s291 + $0xd50] sm:$0xff]
      %v742 = vld [vmem:[%s291 + $0xd58] sm:$0xff]
      %v743 = vld [vmem:[%s291 + $0xd60] sm:$0xff]
      %v744 = vld [vmem:[%s291 + $0xd68] sm:$0xff]
      %v745 = vld [vmem:[%s291 + $0xd70] sm:$0xff]
      %v746 = vld [vmem:[%s291 + $0xd78] sm:$0xff]
      %v747 = vld [vmem:[%s291 + $0xd80] sm:$0xff]
      %v748 = vld [vmem:[%s291 + $0xd88] sm:$0xff]
      %v749 = vld [vmem:[%s291 + $0xd90] sm:$0xff]
      %v750 = vld [vmem:[%s291 + $0xd98] sm:$0xff]
      %v751 = vld [vmem:[%s291 + $0xda0] sm:$0xff]
      %v752 = vld [vmem:[%s291 + $0xda8] sm:$0xff]
      %v753 = vld [vmem:[%s291 + $0xdb0] sm:$0xff]
      %v754 = vld [vmem:[%s291 + $0xdb8] sm:$0xff]
      %v755 = vld [vmem:[%s291 + $0xdc0] sm:$0xff]
      %v756 = vld [vmem:[%s291 + $0xdc8] sm:$0xff]
      %v757 = vld [vmem:[%s291 + $0xdd0] sm:$0xff]
      %v758 = vld [vmem:[%s291 + $0xdd8] sm:$0xff]
      %v759 = vld [vmem:[%s291 + $0xde0] sm:$0xff]
      %v760 = vld [vmem:[%s291 + $0xde8] sm:$0xff]
      %v761 = vld [vmem:[%s291 + $0xdf0] sm:$0xff]
      %v762 = vld [vmem:[%s291 + $0xdf8] sm:$0xff]
      %v763 = vld [vmem:[%s291 + $0xe00] sm:$0xff]
      %v764 = vld [vmem:[%s291 + $0xe08] sm:$0xff]
      %v765 = vld [vmem:[%s291 + $0xe10] sm:$0xff]
      %v766 = vld [vmem:[%s291 + $0xe18] sm:$0xff]
      %v767 = vld [vmem:[%s291 + $0xe20] sm:$0xff]
      %v768 = vld [vmem:[%s291 + $0xe28] sm:$0xff]
      %v769 = vld [vmem:[%s291 + $0xe30] sm:$0xff]
      %v770 = vld [vmem:[%s291 + $0xe38] sm:$0xff]
      %v771 = vld [vmem:[%s291 + $0xe40] sm:$0xff]
      %v772 = vld [vmem:[%s291 + $0xe48] sm:$0xff]
      %v773 = vld [vmem:[%s291 + $0xe50] sm:$0xff]
      %v774 = vld [vmem:[%s291 + $0xe58] sm:$0xff]
      %v775 = vld [vmem:[%s291 + $0xe60] sm:$0xff]
      %v776 = vld [vmem:[%s291 + $0xe68] sm:$0xff]
      %v777 = vld [vmem:[%s291 + $0xe70] sm:$0xff]
      %v778 = vld [vmem:[%s291 + $0xe78] sm:$0xff]
      %v779 = vld [vmem:[%s291 + $0xe80] sm:$0xff]
      %v780 = vld [vmem:[%s291 + $0xe88] sm:$0xff]
      %v781 = vld [vmem:[%s291 + $0xe90] sm:$0xff]
      %v782 = vld [vmem:[%s291 + $0xe98] sm:$0xff]
      %v783 = vld [vmem:[%s291 + $0xea0] sm:$0xff]
      %v784 = vld [vmem:[%s291 + $0xea8] sm:$0xff]
      %v785 = vld [vmem:[%s291 + $0xeb0] sm:$0xff]
      %v786 = vld [vmem:[%s291 + $0xeb8] sm:$0xff]
      %v787 = vld [vmem:[%s291 + $0xec0] sm:$0xff]
      %v788 = vld [vmem:[%s291 + $0xec8] sm:$0xff]
      %v789 = vld [vmem:[%s291 + $0xed0] sm:$0xff]
      %v790 = vld [vmem:[%s291 + $0xed8] sm:$0xff]
      %v791 = vld [vmem:[%s291 + $0xee0] sm:$0xff]
      %v792 = vld [vmem:[%s291 + $0xee8] sm:$0xff]
      %v793 = vld [vmem:[%s291 + $0xef0] sm:$0xff]
      %v794 = vld [vmem:[%s291 + $0xef8] sm:$0xff]
      %v795 = vld [vmem:[%s291 + $0xf00] sm:$0xff]
      %v796 = vld [vmem:[%s291 + $0xf08] sm:$0xff]
      %v797 = vld [vmem:[%s291 + $0xf10] sm:$0xff]
      %v798 = vld [vmem:[%s291 + $0xf18] sm:$0xff]
      %v799 = vld [vmem:[%s291 + $0xf20] sm:$0xff]
      %v800 = vld [vmem:[%s291 + $0xf28] sm:$0xff]
      %v801 = vld [vmem:[%s291 + $0xf30] sm:$0xff]
      %v802 = vld [vmem:[%s291 + $0xf38] sm:$0xff]
      %v803 = vld [vmem:[%s291 + $0xf40] sm:$0xff]
      %v804 = vld [vmem:[%s291 + $0xf48] sm:$0xff]
      %v805 = vld [vmem:[%s291 + $0xf50] sm:$0xff]
      %v806 = vld [vmem:[%s291 + $0xf58] sm:$0xff]
      %v807 = vld [vmem:[%s291 + $0xf60] sm:$0xff]
      %v808 = vld [vmem:[%s291 + $0xf68] sm:$0xff]
      %v809 = vld [vmem:[%s291 + $0xf70] sm:$0xff]
      %v810 = vld [vmem:[%s291 + $0xf78] sm:$0xff]
      %v811 = vld [vmem:[%s291 + $0xf80] sm:$0xff]
      %v812 = vld [vmem:[%s291 + $0xf88] sm:$0xff]
      %v813 = vld [vmem:[%s291 + $0xf90] sm:$0xff]
      %v814 = vld [vmem:[%s291 + $0xf98] sm:$0xff]
      %v815 = vld [vmem:[%s291 + $0xfa0] sm:$0xff]
      %v816 = vld [vmem:[%s291 + $0xfa8] sm:$0xff]
      %v817 = vld [vmem:[%s291 + $0xfb0] sm:$0xff]
      %v818 = vld [vmem:[%s291 + $0xfb8] sm:$0xff]
      %v819 = vld [vmem:[%s291 + $0xfc0] sm:$0xff]
      %v820 = vld [vmem:[%s291 + $0xfc8] sm:$0xff]
      %v821 = vld [vmem:[%s291 + $0xfd0] sm:$0xff]
      %v822 = vld [vmem:[%s291 + $0xfd8] sm:$0xff]
      %v823 = vld [vmem:[%s291 + $0xfe0] sm:$0xff]
      %v824 = vld [vmem:[%s291 + $0xfe8] sm:$0xff]
      %v825 = vld [vmem:[%s291 + $0xff0] sm:$0xff]
      %v826 = vld [vmem:[%s291 + $0xff8] sm:$0xff]
      %v827 = vld [vmem:[%s291 + $0x1000] sm:$0xff]
      %v828 = vld [vmem:[%s291 + $0x1008] sm:$0xff]
      %v829 = vld [vmem:[%s291 + $0x1010] sm:$0xff]
      %v830 = vld [vmem:[%s291 + $0x1018] sm:$0xff]
      %v831 = vld [vmem:[%s291 + $0x1020] sm:$0xff]
      %v832 = vld [vmem:[%s291 + $0x1028] sm:$0xff]
      %v833 = vld [vmem:[%s291 + $0x1030] sm:$0xff]
      %v834 = vld [vmem:[%s291 + $0x1038] sm:$0xff]
      %v835 = vld [vmem:[%s291 + $0x1040] sm:$0xff]
      %v836 = vld [vmem:[%s291 + $0x1048] sm:$0xff]
      %v837 = vld [vmem:[%s291 + $0x1050] sm:$0xff]
      %v838 = vld [vmem:[%s291 + $0x1058] sm:$0xff]
      %v839 = vld [vmem:[%s291 + $0x1060] sm:$0xff]
      %v840 = vld [vmem:[%s291 + $0x1068] sm:$0xff]
      %v841 = vld [vmem:[%s291 + $0x1070] sm:$0xff]
      %v842 = vld [vmem:[%s291 + $0x1078] sm:$0xff]
      %v843 = vld [vmem:[%s291 + $0x1080] sm:$0xff]
      %v844 = vld [vmem:[%s291 + $0x1088] sm:$0xff]
      %v845 = vld [vmem:[%s291 + $0x1090] sm:$0xff]
      %v846 = vld [vmem:[%s291 + $0x1098] sm:$0xff]
      %v847 = vld [vmem:[%s291 + $0x10a0] sm:$0xff]
      %v848 = vld [vmem:[%s291 + $0x10a8] sm:$0xff]
      %v849 = vld [vmem:[%s291 + $0x10b0] sm:$0xff]
      %v850 = vld [vmem:[%s291 + $0x10b8] sm:$0xff]
      %v851 = vld [vmem:[%s291 + $0x10c0] sm:$0xff]
      %v852 = vld [vmem:[%s291 + $0x10c8] sm:$0xff]
      %v853 = vld [vmem:[%s291 + $0x10d0] sm:$0xff]
      %v854 = vld [vmem:[%s291 + $0x10d8] sm:$0xff]
      %v855 = vld [vmem:[%s291 + $0x10e0] sm:$0xff]
      %v856 = vld [vmem:[%s291 + $0x10e8] sm:$0xff]
      %v857 = vld [vmem:[%s291 + $0x10f0] sm:$0xff]
      %v858 = vld [vmem:[%s291 + $0x10f8] sm:$0xff]
      %v859 = vld [vmem:[%s291 + $0x1100] sm:$0xff]
      %v860 = vld [vmem:[%s291 + $0x1108] sm:$0xff]
      %v861 = vld [vmem:[%s291 + $0x1110] sm:$0xff]
      %v862 = vld [vmem:[%s291 + $0x1118] sm:$0xff]
      %v863 = vld [vmem:[%s291 + $0x1120] sm:$0xff]
      %v864 = vld [vmem:[%s291 + $0x1128] sm:$0xff]
      %v865 = vld [vmem:[%s291 + $0x1130] sm:$0xff]
      %v866 = vld [vmem:[%s291 + $0x1138] sm:$0xff]
      %v867 = vld [vmem:[%s291 + $0x1140] sm:$0xff]
      %v868 = vld [vmem:[%s291 + $0x1148] sm:$0xff]
      %v869 = vld [vmem:[%s291 + $0x1150] sm:$0xff]
      %v870 = vld [vmem:[%s291 + $0x1158] sm:$0xff]
      %v871 = vld [vmem:[%s291 + $0x1160] sm:$0xff]
      %v872 = vld [vmem:[%s291 + $0x1168] sm:$0xff]
      %v873 = vld [vmem:[%s291 + $0x1170] sm:$0xff]
      %v874 = vld [vmem:[%s291 + $0x1178] sm:$0xff]
      %v875 = vld [vmem:[%s291 + $0x1180] sm:$0xff]
      %v876 = vld [vmem:[%s291 + $0x1188] sm:$0xff]
      %v877 = vld [vmem:[%s291 + $0x1190] sm:$0xff]
      %v878 = vld [vmem:[%s291 + $0x1198] sm:$0xff]
      %v879 = vld [vmem:[%s291 + $0x11a0] sm:$0xff]
      %v880 = vld [vmem:[%s291 + $0x11a8] sm:$0xff]
      %v881 = vld [vmem:[%s291 + $0x11b0] sm:$0xff]
      %v882 = vld [vmem:[%s291 + $0x11b8] sm:$0xff]
      %v883 = vld [vmem:[%s291 + $0x11c0] sm:$0xff]
      %v884 = vld [vmem:[%s291 + $0x11c8] sm:$0xff]
      %v885 = vld [vmem:[%s291 + $0x11d0] sm:$0xff]
      %v886 = vld [vmem:[%s291 + $0x11d8] sm:$0xff]
      %v887 = vld [vmem:[%s291 + $0x11e0] sm:$0xff]
      %v888 = vld [vmem:[%s291 + $0x11e8] sm:$0xff]
      %v889 = vld [vmem:[%s291 + $0x11f0] sm:$0xff]
      %v890 = vld [vmem:[%s291 + $0x11f8] sm:$0xff]
      %v891 = vld [vmem:[%s291 + $0x1200] sm:$0xff]
      %v892 = vld [vmem:[%s291 + $0x1208] sm:$0xff]
      %v893 = vld [vmem:[%s291 + $0x1210] sm:$0xff]
      %v894 = vld [vmem:[%s291 + $0x1218] sm:$0xff]
      %v895 = vld [vmem:[%s291 + $0x1220] sm:$0xff]
      %v896 = vld [vmem:[%s291 + $0x1228] sm:$0xff]
      %v897 = vld [vmem:[%s291 + $0x1230] sm:$0xff]
      %v898 = vld [vmem:[%s291 + $0x1238] sm:$0xff]
      %v899 = vld [vmem:[%s291 + $0x1240] sm:$0xff]
      %v900 = vld [vmem:[%s291 + $0x1248] sm:$0xff]
      %v901 = vld [vmem:[%s291 + $0x1250] sm:$0xff]
      %v902 = vld [vmem:[%s291 + $0x1258] sm:$0xff]
      %v903 = vld [vmem:[%s291 + $0x1260] sm:$0xff]
      %v904 = vld [vmem:[%s291 + $0x1268] sm:$0xff]
      %v905 = vld [vmem:[%s291 + $0x1270] sm:$0xff]
      %v906 = vld [vmem:[%s291 + $0x1278] sm:$0xff]
      %v907 = vld [vmem:[%s291 + $0x1280] sm:$0xff]
      %v908 = vld [vmem:[%s291 + $0x1288] sm:$0xff]
      %v909 = vld [vmem:[%s291 + $0x1290] sm:$0xff]
      %v910 = vld [vmem:[%s291 + $0x1298] sm:$0xff]
      %v911 = vld [vmem:[%s291 + $0x12a0] sm:$0xff]
      %v912 = vld [vmem:[%s291 + $0x12a8] sm:$0xff]
      %v913 = vld [vmem:[%s291 + $0x12b0] sm:$0xff]
      %v914 = vld [vmem:[%s291 + $0x12b8] sm:$0xff]
      %v915 = vld [vmem:[%s291 + $0x12c0] sm:$0xff]
      %v916 = vld [vmem:[%s291 + $0x12c8] sm:$0xff]
      %v917 = vld [vmem:[%s291 + $0x12d0] sm:$0xff]
      %v918 = vld [vmem:[%s291 + $0x12d8] sm:$0xff]
      %v919 = vld [vmem:[%s291 + $0x12e0] sm:$0xff]
      %v920 = vld [vmem:[%s291 + $0x12e8] sm:$0xff]
      %v921 = vld [vmem:[%s291 + $0x12f0] sm:$0xff]
      %v922 = vld [vmem:[%s291 + $0x12f8] sm:$0xff]
      %v923 = vld [vmem:[%s291 + $0x1300] sm:$0xff]
      %v924 = vld [vmem:[%s291 + $0x1308] sm:$0xff]
      %v925 = vld [vmem:[%s291 + $0x1310] sm:$0xff]
      %v926 = vld [vmem:[%s291 + $0x1318] sm:$0xff]
      %v927 = vld [vmem:[%s291 + $0x1320] sm:$0xff]
      %v928 = vld [vmem:[%s291 + $0x1328] sm:$0xff]
      %v929 = vld [vmem:[%s291 + $0x1330] sm:$0xff]
      %v930 = vld [vmem:[%s291 + $0x1338] sm:$0xff]
      %v931 = vld [vmem:[%s291 + $0x1340] sm:$0xff]
      %v932 = vld [vmem:[%s291 + $0x1348] sm:$0xff]
      %v933 = vld [vmem:[%s291 + $0x1350] sm:$0xff]
      %v934 = vld [vmem:[%s291 + $0x1358] sm:$0xff]
      %v935 = vld [vmem:[%s291 + $0x1360] sm:$0xff]
      %v936 = vld [vmem:[%s291 + $0x1368] sm:$0xff]
      %v937 = vld [vmem:[%s291 + $0x1370] sm:$0xff]
      %v938 = vld [vmem:[%s291 + $0x1378] sm:$0xff]
      %v939 = vld [vmem:[%s291 + $0x1380] sm:$0xff]
      %v940 = vld [vmem:[%s291 + $0x1388] sm:$0xff]
      %v941 = vld [vmem:[%s291 + $0x1390] sm:$0xff]
      %v942 = vld [vmem:[%s291 + $0x1398] sm:$0xff]
      %v943 = vld [vmem:[%s291 + $0x13a0] sm:$0xff]
      %v944 = vld [vmem:[%s291 + $0x13a8] sm:$0xff]
      %v945 = vld [vmem:[%s291 + $0x13b0] sm:$0xff]
      %v946 = vld [vmem:[%s291 + $0x13b8] sm:$0xff]
      %v947 = vld [vmem:[%s291 + $0x13c0] sm:$0xff]
      %v948 = vld [vmem:[%s291 + $0x13c8] sm:$0xff]
      %v949 = vld [vmem:[%s291 + $0x13d0] sm:$0xff]
      %v950 = vld [vmem:[%s291 + $0x13d8] sm:$0xff]
      %v951 = vld [vmem:[%s291 + $0x13e0] sm:$0xff]
      %v952 = vld [vmem:[%s291 + $0x13e8] sm:$0xff]
      %v953 = vld [vmem:[%s291 + $0x13f0] sm:$0xff]
      %v954 = vld [vmem:[%s291 + $0x13f8] sm:$0xff]
      %v955 = vld [vmem:[%s291 + $0x1400] sm:$0xff]
      %v956 = vld [vmem:[%s291 + $0x1408] sm:$0xff]
      %v957 = vld [vmem:[%s291 + $0x1410] sm:$0xff]
      %v958 = vld [vmem:[%s291 + $0x1418] sm:$0xff]
      %v959 = vld [vmem:[%s291 + $0x1420] sm:$0xff]
      %v960 = vld [vmem:[%s291 + $0x1428] sm:$0xff]
      %v961 = vld [vmem:[%s291 + $0x1430] sm:$0xff]
      %v962 = vld [vmem:[%s291 + $0x1438] sm:$0xff]
      %v963 = vld [vmem:[%s291 + $0x1440] sm:$0xff]
      %v964 = vld [vmem:[%s291 + $0x1448] sm:$0xff]
      %v965 = vld [vmem:[%s291 + $0x1450] sm:$0xff]
      %v966 = vld [vmem:[%s291 + $0x1458] sm:$0xff]
      %v967 = vld [vmem:[%s291 + $0x1460] sm:$0xff]
      %v968 = vld [vmem:[%s291 + $0x1468] sm:$0xff]
      %v969 = vld [vmem:[%s291 + $0x1470] sm:$0xff]
      %v970 = vld [vmem:[%s291 + $0x1478] sm:$0xff]
      %v971 = vld [vmem:[%s291 + $0x1480] sm:$0xff]
      %v972 = vld [vmem:[%s291 + $0x1488] sm:$0xff]
      %v973 = vld [vmem:[%s291 + $0x1490] sm:$0xff]
      %v974 = vld [vmem:[%s291 + $0x1498] sm:$0xff]
      %v975 = vld [vmem:[%s291 + $0x14a0] sm:$0xff]
      %v976 = vld [vmem:[%s291 + $0x14a8] sm:$0xff]
      %v977 = vld [vmem:[%s291 + $0x14b0] sm:$0xff]
      %v978 = vld [vmem:[%s291 + $0x14b8] sm:$0xff]
      %v979 = vld [vmem:[%s291 + $0x14c0] sm:$0xff]
      %v980 = vld [vmem:[%s291 + $0x14c8] sm:$0xff]
      %v981 = vld [vmem:[%s291 + $0x14d0] sm:$0xff]
      %v982 = vld [vmem:[%s291 + $0x14d8] sm:$0xff]
      %v983 = vld [vmem:[%s291 + $0x14e0] sm:$0xff]
      %v984 = vld [vmem:[%s291 + $0x14e8] sm:$0xff]
      %v985 = vld [vmem:[%s291 + $0x14f0] sm:$0xff]
      %v986 = vld [vmem:[%s291 + $0x14f8] sm:$0xff]
      %v987 = vld [vmem:[%s291 + $0x1500] sm:$0xff]
      %v988 = vld [vmem:[%s291 + $0x1508] sm:$0xff]
      %v989 = vld [vmem:[%s291 + $0x1510] sm:$0xff]
      %v990 = vld [vmem:[%s291 + $0x1518] sm:$0xff]
      %v991 = vld [vmem:[%s291 + $0x1520] sm:$0xff]
      %v992 = vld [vmem:[%s291 + $0x1528] sm:$0xff]
      %v993 = vld [vmem:[%s291 + $0x1530] sm:$0xff]
      %v994 = vld [vmem:[%s291 + $0x1538] sm:$0xff]
      %v995 = vld [vmem:[%s291 + $0x1540] sm:$0xff]
      %v996 = vld [vmem:[%s291 + $0x1548] sm:$0xff]
      %v997 = vld [vmem:[%s291 + $0x1550] sm:$0xff]
      %v998 = vld [vmem:[%s291 + $0x1558] sm:$0xff]
      %v999 = vld [vmem:[%s291 + $0x1560] sm:$0xff]
      %v1000 = vld [vmem:[%s291 + $0x1568] sm:$0xff]
      %v1001 = vld [vmem:[%s291 + $0x1570] sm:$0xff]
      %v1002 = vld [vmem:[%s291 + $0x1578] sm:$0xff]
      %v1003 = vld [vmem:[%s291 + $0x1580] sm:$0xff]
      %v1004 = vld [vmem:[%s291 + $0x1588] sm:$0xff]
      %v1005 = vld [vmem:[%s291 + $0x1590] sm:$0xff]
      %v1006 = vld [vmem:[%s291 + $0x1598] sm:$0xff]
      %v1007 = vld [vmem:[%s291 + $0x15a0] sm:$0xff]
      %v1008 = vld [vmem:[%s291 + $0x15a8] sm:$0xff]
      %v1009 = vld [vmem:[%s291 + $0x15b0] sm:$0xff]
      %v1010 = vld [vmem:[%s291 + $0x15b8] sm:$0xff]
      %v1011 = vld [vmem:[%s291 + $0x15c0] sm:$0xff]
      %v1012 = vld [vmem:[%s291 + $0x15c8] sm:$0xff]
      %v1013 = vld [vmem:[%s291 + $0x15d0] sm:$0xff]
      %v1014 = vld [vmem:[%s291 + $0x15d8] sm:$0xff]
      %v1015 = vld [vmem:[%s291 + $0x15e0] sm:$0xff]
      %v1016 = vld [vmem:[%s291 + $0x15e8] sm:$0xff]
      %v1017 = vld [vmem:[%s291 + $0x15f0] sm:$0xff]
      %v1018 = vld [vmem:[%s291 + $0x15f8] sm:$0xff]
      %v1019 = vld [vmem:[%s291 + $0x1600] sm:$0xff]
      %v1020 = vld [vmem:[%s291 + $0x1608] sm:$0xff]
      %v1021 = vld [vmem:[%s291 + $0x1610] sm:$0xff]
      %v1022 = vld [vmem:[%s291 + $0x1618] sm:$0xff]
      %v1023 = vld [vmem:[%s291 + $0x1620] sm:$0xff]
      %v1024 = vld [vmem:[%s291 + $0x1628] sm:$0xff]
      %v1025 = vld [vmem:[%s291 + $0x1630] sm:$0xff]
      %v1026 = vld [vmem:[%s291 + $0x1638] sm:$0xff]
      %v1027 = vld [vmem:[%s291 + $0x1640] sm:$0xff]
      %v1028 = vld [vmem:[%s291 + $0x1648] sm:$0xff]
      %v1029 = vld [vmem:[%s291 + $0x1650] sm:$0xff]
      %v1030 = vld [vmem:[%s291 + $0x1658] sm:$0xff]
      %v1031 = vld [vmem:[%s291 + $0x1660] sm:$0xff]
      %v1032 = vld [vmem:[%s291 + $0x1668] sm:$0xff]
      %v1033 = vld [vmem:[%s291 + $0x1670] sm:$0xff]
      %v1034 = vld [vmem:[%s291 + $0x1678] sm:$0xff]
      %v1035 = vld [vmem:[%s291 + $0x1680] sm:$0xff]
      %v1036 = vld [vmem:[%s291 + $0x1688] sm:$0xff]
      %v1037 = vld [vmem:[%s291 + $0x1690] sm:$0xff]
      %v1038 = vld [vmem:[%s291 + $0x1698] sm:$0xff]
      %v1039 = vld [vmem:[%s291 + $0x16a0] sm:$0xff]
      %v1040 = vld [vmem:[%s291 + $0x16a8] sm:$0xff]
      %v1041 = vld [vmem:[%s291 + $0x16b0] sm:$0xff]
      %v1042 = vld [vmem:[%s291 + $0x16b8] sm:$0xff]
      %v1043 = vld [vmem:[%s291 + $0x16c0] sm:$0xff]
      %v1044 = vld [vmem:[%s291 + $0x16c8] sm:$0xff]
      %v1045 = vld [vmem:[%s291 + $0x16d0] sm:$0xff]
      %v1046 = vld [vmem:[%s291 + $0x16d8] sm:$0xff]
      %v1047 = vld [vmem:[%s291 + $0x16e0] sm:$0xff]
      %v1048 = vld [vmem:[%s291 + $0x16e8] sm:$0xff]
      %v1049 = vld [vmem:[%s291 + $0x16f0] sm:$0xff]
      %v1050 = vld [vmem:[%s291 + $0x16f8] sm:$0xff]
      %v1051 = vld [vmem:[%s291 + $0x1700] sm:$0xff]
      %v1052 = vld [vmem:[%s291 + $0x1708] sm:$0xff]
      %v1053 = vld [vmem:[%s291 + $0x1710] sm:$0xff]
      %v1054 = vld [vmem:[%s291 + $0x1718] sm:$0xff]
      %v1055 = vld [vmem:[%s291 + $0x1720] sm:$0xff]
      %v1056 = vld [vmem:[%s291 + $0x1728] sm:$0xff]
      %v1057 = vld [vmem:[%s291 + $0x1730] sm:$0xff]
      %v1058 = vld [vmem:[%s291 + $0x1738] sm:$0xff]
      %v1059 = vld [vmem:[%s291 + $0x1740] sm:$0xff]
      %v1060 = vld [vmem:[%s291 + $0x1748] sm:$0xff]
      %v1061 = vld [vmem:[%s291 + $0x1750] sm:$0xff]
      %v1062 = vld [vmem:[%s291 + $0x1758] sm:$0xff]
      %v1063 = vld [vmem:[%s291 + $0x1760] sm:$0xff]
      %v1064 = vld [vmem:[%s291 + $0x1768] sm:$0xff]
      %v1065 = vld [vmem:[%s291 + $0x1770] sm:$0xff]
      %v1066 = vld [vmem:[%s291 + $0x1778] sm:$0xff]
      %v1067 = vld [vmem:[%s291 + $0x1780] sm:$0xff]
      %v1068 = vld [vmem:[%s291 + $0x1788] sm:$0xff]
      %v1069 = vld [vmem:[%s291 + $0x1790] sm:$0xff]
      %v1070 = vld [vmem:[%s291 + $0x1798] sm:$0xff]
      %v1071 = vld [vmem:[%s291 + $0x17a0] sm:$0xff]
      %v1072 = vld [vmem:[%s291 + $0x17a8] sm:$0xff]
      %v1073 = vld [vmem:[%s291 + $0x17b0] sm:$0xff]
      %v1074 = vld [vmem:[%s291 + $0x17b8] sm:$0xff]
      %v1075 = vld [vmem:[%s291 + $0x17c0] sm:$0xff]
      %v1076 = vld [vmem:[%s291 + $0x17c8] sm:$0xff]
      %v1077 = vld [vmem:[%s291 + $0x17d0] sm:$0xff]
      %v1078 = vld [vmem:[%s291 + $0x17d8] sm:$0xff]
      %v1079 = vld [vmem:[%s291 + $0x17e0] sm:$0xff]
      %v1080 = vld [vmem:[%s291 + $0x17e8] sm:$0xff]
      %v1081 = vld [vmem:[%s291 + $0x17f0] sm:$0xff]
      %v1082 = vld [vmem:[%s291 + $0x17f8] sm:$0xff]
      %v1083 = vld [vmem:[%s291 + $0x1800] sm:$0xff]
      %v1084 = vld [vmem:[%s291 + $0x1808] sm:$0xff]
      %v1085 = vld [vmem:[%s291 + $0x1810] sm:$0xff]
      %v1086 = vld [vmem:[%s291 + $0x1818] sm:$0xff]
      %v1087 = vld [vmem:[%s291 + $0x1820] sm:$0xff]
      %v1088 = vld [vmem:[%s291 + $0x1828] sm:$0xff]
      %v1089 = vld [vmem:[%s291 + $0x1830] sm:$0xff]
      %v1090 = vld [vmem:[%s291 + $0x1838] sm:$0xff]
      %v1091 = vld [vmem:[%s291 + $0x1840] sm:$0xff]
      %v1092 = vld [vmem:[%s291 + $0x1848] sm:$0xff]
      %v1093 = vld [vmem:[%s291 + $0x1850] sm:$0xff]
      %v1094 = vld [vmem:[%s291 + $0x1858] sm:$0xff]
      %v1095 = vld [vmem:[%s291 + $0x1860] sm:$0xff]
      %v1096 = vld [vmem:[%s291 + $0x1868] sm:$0xff]
      %v1097 = vld [vmem:[%s291 + $0x1870] sm:$0xff]
      %v1098 = vld [vmem:[%s291 + $0x1878] sm:$0xff]
      %v1099 = vld [vmem:[%s291 + $0x1880] sm:$0xff]
      %v1100 = vld [vmem:[%s291 + $0x1888] sm:$0xff]
      %v1101 = vld [vmem:[%s291 + $0x1890] sm:$0xff]
      %v1102 = vld [vmem:[%s291 + $0x1898] sm:$0xff]
      %v1103 = vld [vmem:[%s291 + $0x18a0] sm:$0xff]
      %v1104 = vld [vmem:[%s291 + $0x18a8] sm:$0xff]
      %v1105 = vld [vmem:[%s291 + $0x18b0] sm:$0xff]
      %v1106 = vld [vmem:[%s291 + $0x18b8] sm:$0xff]
      %v1107 = vld [vmem:[%s291 + $0x18c0] sm:$0xff]
      %v1108 = vld [vmem:[%s291 + $0x18c8] sm:$0xff]
      %v1109 = vld [vmem:[%s291 + $0x18d0] sm:$0xff]
      %v1110 = vld [vmem:[%s291 + $0x18d8] sm:$0xff]
      %v1111 = vld [vmem:[%s291 + $0x18e0] sm:$0xff]
      %v1112 = vld [vmem:[%s291 + $0x18e8] sm:$0xff]
      %v1113 = vld [vmem:[%s291 + $0x18f0] sm:$0xff]
      %v1114 = vld [vmem:[%s291 + $0x18f8] sm:$0xff]
      %v1115 = vld [vmem:[%s295] sm:$0xf]
      %v1117 = vperm.slane %v1115, 0
      %v1118 = vperm.slane %v1115, 1
      %v1119 = vperm.slane %v1115, 2
      %v1120 = vperm.slane %v1115, 3
      %1126 = vst [vmem:[#allocation1] ss:$9 sm:$0xff] %v311
      %v1127 = vld [vmem:[#allocation1] sm:$0xff]
      %v1128 = vld [vmem:[#allocation1 + $0x9] sm:$0xff]
      %v1129 = vld [vmem:[#allocation1 + $0x12] sm:$0xff]
      %v1130 = vld [vmem:[#allocation1 + $0x1b] sm:$0xff]
      %v1131 = vld [vmem:[#allocation1 + $0x24] sm:$0xff]
      %v1132 = vld [vmem:[#allocation1 + $0x2d] sm:$0xff]
      %v1133 = vld [vmem:[#allocation1 + $0x36] sm:$0xff]
      %v1134 = vld [vmem:[#allocation1 + $0x3f] sm:$0xff]
      %1136 = vst [vmem:[#allocation1] ss:$9 sm:$0xff] %v312
      %v1137 = vld [vmem:[#allocation1] sm:$0xff]
      %v1138 = vld [vmem:[#allocation1 + $0x9] sm:$0xff]
      %v1139 = vld [vmem:[#allocation1 + $0x12] sm:$0xff]
      %v1140 = vld [vmem:[#allocation1 + $0x1b] sm:$0xff]
      %v1141 = vld [vmem:[#allocation1 + $0x24] sm:$0xff]
      %v1142 = vld [vmem:[#allocation1 + $0x2d] sm:$0xff]
      %v1143 = vld [vmem:[#allocation1 + $0x36] sm:$0xff]
      %v1144 = vld [vmem:[#allocation1 + $0x3f] sm:$0xff]
      %1146 = vst [vmem:[#allocation1] ss:$9 sm:$0xff] %v313
      %v1147 = vld [vmem:[#allocation1] sm:$0xff]
      %v1148 = vld [vmem:[#allocation1 + $0x9] sm:$0xff]
      %v1149 = vld [vmem:[#allocation1 + $0x12] sm:$0xff]
      %v1150 = vld [vmem:[#allocation1 + $0x1b] sm:$0xff]
      %v1151 = vld [vmem:[#allocation1 + $0x24] sm:$0xff]
      %v1152 = vld [vmem:[#allocation1 + $0x2d] sm:$0xff]
      %v1153 = vld [vmem:[#allocation1 + $0x36] sm:$0xff]
      %v1154 = vld [vmem:[#allocation1 + $0x3f] sm:$0xff]
      %1156 = vst [vmem:[#allocation1] ss:$9 sm:$0xff] %v314
      %v1157 = vld [vmem:[#allocation1] sm:$0xff]
      %v1983 = vunpack.c.l.b16 %v315
      %v1984 = vunpack.c.h.b16 %v315
      %v1985 = vunpack.c.l.b16 %v316
      %v1986 = vunpack.c.h.b16 %v316
      %v1987 = vunpack.c.l.b16 %v317
      %v1988 = vunpack.c.h.b16 %v317
      %v1989 = vunpack.c.l.b16 %v318
      %v1990 = vunpack.c.h.b16 %v318
      %v1991 = vunpack.c.l.b16 %v319
      %v1992 = vunpack.c.h.b16 %v319
      %v1993 = vunpack.c.l.b16 %v320
      %v1994 = vunpack.c.h.b16 %v320
      %v1995 = vunpack.c.l.b16 %v321
      %v1996 = vunpack.c.h.b16 %v321
      %v1997 = vunpack.c.l.b16 %v322
      %v1998 = vunpack.c.h.b16 %v322
      %v1999 = vunpack.c.l.b16 %v323
      %v2000 = vunpack.c.h.b16 %v323
      %v2001 = vunpack.c.l.b16 %v324
      %v2002 = vunpack.c.h.b16 %v324
      %v2003 = vunpack.c.l.b16 %v325
      %v2004 = vunpack.c.h.b16 %v325
      %v2005 = vunpack.c.l.b16 %v326
      %v2006 = vunpack.c.h.b16 %v326
      %v2007 = vunpack.c.l.b16 %v327
      %v2008 = vunpack.c.h.b16 %v327
      %v2009 = vunpack.c.l.b16 %v328
      %v2010 = vunpack.c.h.b16 %v328
      %v2011 = vunpack.c.l.b16 %v329
      %v2012 = vunpack.c.h.b16 %v329
      %v2013 = vunpack.c.l.b16 %v330
      %v2014 = vunpack.c.h.b16 %v330
      %v2015 = vunpack.c.l.b16 %v331
      %v2016 = vunpack.c.h.b16 %v331
      %v2017 = vunpack.c.l.b16 %v332
      %v2018 = vunpack.c.h.b16 %v332
      %v2019 = vunpack.c.l.b16 %v333
      %v2020 = vunpack.c.h.b16 %v333
      %v2021 = vunpack.c.l.b16 %v334
      %v2022 = vunpack.c.h.b16 %v334
      %v2023 = vunpack.c.l.b16 %v335
      %v2024 = vunpack.c.h.b16 %v335
      %v2025 = vunpack.c.l.b16 %v336
      %v2026 = vunpack.c.h.b16 %v336
      %v2027 = vunpack.c.l.b16 %v337
      %v2028 = vunpack.c.h.b16 %v337
      %v2029 = vunpack.c.l.b16 %v338
      %v2030 = vunpack.c.h.b16 %v338
      %v2031 = vunpack.c.l.b16 %v339
      %v2032 = vunpack.c.h.b16 %v339
      %v2033 = vunpack.c.l.b16 %v340
      %v2034 = vunpack.c.h.b16 %v340
      %v2035 = vunpack.c.l.b16 %v341
      %v2036 = vunpack.c.h.b16 %v341
      %v2037 = vunpack.c.l.b16 %v342
      %v2038 = vunpack.c.h.b16 %v342
      %v2039 = vunpack.c.l.b16 %v343
      %v2040 = vunpack.c.h.b16 %v343
      %v2041 = vunpack.c.l.b16 %v344
      %v2042 = vunpack.c.h.b16 %v344
      %v2043 = vunpack.c.l.b16 %v345
      %v2044 = vunpack.c.h.b16 %v345
      %v2045 = vunpack.c.l.b16 %v346
      %v2046 = vunpack.c.h.b16 %v346
      %v2047 = vunpack.c.l.b16 %v347
      %v2048 = vunpack.c.h.b16 %v347
      %v2049 = vunpack.c.l.b16 %v348
      %v2050 = vunpack.c.h.b16 %v348
      %v2051 = vunpack.c.l.b16 %v349
      %v2052 = vunpack.c.h.b16 %v349
      %v2053 = vunpack.c.l.b16 %v350
      %v2054 = vunpack.c.h.b16 %v350
      %v2055 = vunpack.c.l.b16 %v351
      %v2056 = vunpack.c.h.b16 %v351
      %v2057 = vunpack.c.l.b16 %v352
      %v2058 = vunpack.c.h.b16 %v352
      %v2059 = vunpack.c.l.b16 %v353
      %v2060 = vunpack.c.h.b16 %v353
      %v2061 = vunpack.c.l.b16 %v354
      %v2062 = vunpack.c.h.b16 %v354
      %v2063 = vunpack.c.l.b16 %v355
      %v2064 = vunpack.c.h.b16 %v355
      %v2065 = vunpack.c.l.b16 %v356
      %v2066 = vunpack.c.h.b16 %v356
      %v2067 = vunpack.c.l.b16 %v357
      %v2068 = vunpack.c.h.b16 %v357
      %v2069 = vunpack.c.l.b16 %v358
      %v2070 = vunpack.c.h.b16 %v358
      %v2071 = vunpack.c.l.b16 %v359
      %v2072 = vunpack.c.h.b16 %v359
      %v2073 = vunpack.c.l.b16 %v360
      %v2074 = vunpack.c.h.b16 %v360
      %v2075 = vunpack.c.l.b16 %v361
      %v2076 = vunpack.c.h.b16 %v361
      %v2077 = vunpack.c.l.b16 %v362
      %v2078 = vunpack.c.h.b16 %v362
      %v2079 = vunpack.c.l.b16 %v363
      %v2080 = vunpack.c.h.b16 %v363
      %v2081 = vunpack.c.l.b16 %v364
      %v2082 = vunpack.c.h.b16 %v364
      %v2083 = vunpack.c.l.b16 %v365
      %v2084 = vunpack.c.h.b16 %v365
      %v2085 = vunpack.c.l.b16 %v366
      %v2086 = vunpack.c.h.b16 %v366
      %v2087 = vunpack.c.l.b16 %v367
      %v2088 = vunpack.c.h.b16 %v367
      %v2089 = vunpack.c.l.b16 %v368
      %v2090 = vunpack.c.h.b16 %v368
      %v2091 = vunpack.c.l.b16 %v369
      %v2092 = vunpack.c.h.b16 %v369
      %v2093 = vunpack.c.l.b16 %v370
      %v2094 = vunpack.c.h.b16 %v370
      %v2095 = vunpack.c.l.b16 %v371
      %v2096 = vunpack.c.h.b16 %v371
      %v2097 = vunpack.c.l.b16 %v372
      %v2098 = vunpack.c.h.b16 %v372
      %v2099 = vunpack.c.l.b16 %v373
      %v2100 = vunpack.c.h.b16 %v373
      %v2101 = vunpack.c.l.b16 %v374
      %v2102 = vunpack.c.h.b16 %v374
      %v2103 = vunpack.c.l.b16 %v375
      %v2104 = vunpack.c.h.b16 %v375
      %v2105 = vunpack.c.l.b16 %v376
      %v2106 = vunpack.c.h.b16 %v376
      %v2107 = vunpack.c.l.b16 %v377
      %v2108 = vunpack.c.h.b16 %v377
      %v2109 = vunpack.c.l.b16 %v378
      %v2110 = vunpack.c.h.b16 %v378
      %v2111 = vunpack.c.l.b16 %v379
      %v2112 = vunpack.c.h.b16 %v379
      %v2113 = vunpack.c.l.b16 %v380
      %v2114 = vunpack.c.h.b16 %v380
      %v2115 = vunpack.c.l.b16 %v381
      %v2116 = vunpack.c.h.b16 %v381
      %v2117 = vunpack.c.l.b16 %v382
      %v2118 = vunpack.c.h.b16 %v382
      %v2119 = vunpack.c.l.b16 %v383
      %v2120 = vunpack.c.h.b16 %v383
      %v2121 = vunpack.c.l.b16 %v384
      %v2122 = vunpack.c.h.b16 %v384
      %v2123 = vunpack.c.l.b16 %v385
      %v2124 = vunpack.c.h.b16 %v385
      %v2125 = vunpack.c.l.b16 %v386
      %v2126 = vunpack.c.h.b16 %v386
      %v2127 = vunpack.c.l.b16 %v387
      %v2128 = vunpack.c.h.b16 %v387
      %v2129 = vunpack.c.l.b16 %v388
      %v2130 = vunpack.c.h.b16 %v388
      %v2131 = vunpack.c.l.b16 %v389
      %v2132 = vunpack.c.h.b16 %v389
      %v2133 = vunpack.c.l.b16 %v390
      %v2134 = vunpack.c.h.b16 %v390
      %v2135 = vunpack.c.l.b16 %v391
      %v2136 = vunpack.c.h.b16 %v391
      %v2137 = vunpack.c.l.b16 %v392
      %v2138 = vunpack.c.h.b16 %v392
      %v2139 = vunpack.c.l.b16 %v393
      %v2140 = vunpack.c.h.b16 %v393
      %v2141 = vunpack.c.l.b16 %v394
      %v2142 = vunpack.c.h.b16 %v394
      %v2143 = vunpack.c.l.b16 %v395
      %v2144 = vunpack.c.h.b16 %v395
      %v2145 = vunpack.c.l.b16 %v396
      %v2146 = vunpack.c.h.b16 %v396
      %v2147 = vunpack.c.l.b16 %v397
      %v2148 = vunpack.c.h.b16 %v397
      %v2149 = vunpack.c.l.b16 %v398
      %v2150 = vunpack.c.h.b16 %v398
      %v2151 = vunpack.c.l.b16 %v399
      %v2152 = vunpack.c.h.b16 %v399
      %v2153 = vunpack.c.l.b16 %v400
      %v2154 = vunpack.c.h.b16 %v400
      %v2155 = vunpack.c.l.b16 %v401
      %v2156 = vunpack.c.h.b16 %v401
      %v2157 = vunpack.c.l.b16 %v402
      %v2158 = vunpack.c.h.b16 %v402
      %v2159 = vunpack.c.l.b16 %v403
      %v2160 = vunpack.c.h.b16 %v403
      %v2161 = vunpack.c.l.b16 %v404
      %v2162 = vunpack.c.h.b16 %v404
      %v2163 = vunpack.c.l.b16 %v405
      %v2164 = vunpack.c.h.b16 %v405
      %v2165 = vunpack.c.l.b16 %v406
      %v2166 = vunpack.c.h.b16 %v406
      %v2167 = vunpack.c.l.b16 %v407
      %v2168 = vunpack.c.h.b16 %v407
      %v2169 = vunpack.c.l.b16 %v408
      %v2170 = vunpack.c.h.b16 %v408
      %v2171 = vunpack.c.l.b16 %v409
      %v2172 = vunpack.c.h.b16 %v409
      %v2173 = vunpack.c.l.b16 %v410
      %v2174 = vunpack.c.h.b16 %v410
      %v2175 = vunpack.c.l.b16 %v411
      %v2176 = vunpack.c.h.b16 %v411
      %v2177 = vunpack.c.l.b16 %v412
      %v2178 = vunpack.c.h.b16 %v412
      %v2179 = vunpack.c.l.b16 %v413
      %v2180 = vunpack.c.h.b16 %v413
      %v2181 = vunpack.c.l.b16 %v414
      %v2182 = vunpack.c.h.b16 %v414
      %v2183 = vunpack.c.l.b16 %v415
      %v2184 = vunpack.c.h.b16 %v415
      %v2185 = vunpack.c.l.b16 %v416
      %v2186 = vunpack.c.h.b16 %v416
      %v2187 = vunpack.c.l.b16 %v417
      %v2188 = vunpack.c.h.b16 %v417
      %v2189 = vunpack.c.l.b16 %v418
      %v2190 = vunpack.c.h.b16 %v418
      %v2191 = vunpack.c.l.b16 %v419
      %v2192 = vunpack.c.h.b16 %v419
      %v2193 = vunpack.c.l.b16 %v420
      %v2194 = vunpack.c.h.b16 %v420
      %v2195 = vunpack.c.l.b16 %v421
      %v2196 = vunpack.c.h.b16 %v421
      %v2197 = vunpack.c.l.b16 %v422
      %v2198 = vunpack.c.h.b16 %v422
      %v2199 = vunpack.c.l.b16 %v423
      %v2200 = vunpack.c.h.b16 %v423
      %v2201 = vunpack.c.l.b16 %v424
      %v2202 = vunpack.c.h.b16 %v424
      %v2203 = vunpack.c.l.b16 %v425
      %v2204 = vunpack.c.h.b16 %v425
      %v2205 = vunpack.c.l.b16 %v426
      %v2206 = vunpack.c.h.b16 %v426
      %v2207 = vunpack.c.l.b16 %v427
      %v2208 = vunpack.c.h.b16 %v427
      %v2209 = vunpack.c.l.b16 %v428
      %v2210 = vunpack.c.h.b16 %v428
      %v2211 = vunpack.c.l.b16 %v429
      %v2212 = vunpack.c.h.b16 %v429
      %v2213 = vunpack.c.l.b16 %v430
      %v2214 = vunpack.c.h.b16 %v430
      %v2215 = vunpack.c.l.b16 %v431
      %v2216 = vunpack.c.h.b16 %v431
      %v2217 = vunpack.c.l.b16 %v432
      %v2218 = vunpack.c.h.b16 %v432
      %v2219 = vunpack.c.l.b16 %v433
      %v2220 = vunpack.c.h.b16 %v433
      %v2221 = vunpack.c.l.b16 %v434
      %v2222 = vunpack.c.h.b16 %v434
      %v2223 = vunpack.c.l.b16 %v435
      %v2224 = vunpack.c.h.b16 %v435
      %v2225 = vunpack.c.l.b16 %v436
      %v2226 = vunpack.c.h.b16 %v436
      %v2227 = vunpack.c.l.b16 %v437
      %v2228 = vunpack.c.h.b16 %v437
      %v2229 = vunpack.c.l.b16 %v438
      %v2230 = vunpack.c.h.b16 %v438
      %v2231 = vunpack.c.l.b16 %v439
      %v2232 = vunpack.c.h.b16 %v439
      %v2233 = vunpack.c.l.b16 %v440
      %v2234 = vunpack.c.h.b16 %v440
      %v2235 = vunpack.c.l.b16 %v441
      %v2236 = vunpack.c.h.b16 %v441
      %v2237 = vunpack.c.l.b16 %v442
      %v2238 = vunpack.c.h.b16 %v442
      %v2239 = vunpack.c.l.b16 %v443
      %v2240 = vunpack.c.h.b16 %v443
      %v2241 = vunpack.c.l.b16 %v444
      %v2242 = vunpack.c.h.b16 %v444
      %v2243 = vunpack.c.l.b16 %v445
      %v2244 = vunpack.c.h.b16 %v445
      %v2245 = vunpack.c.l.b16 %v446
      %v2246 = vunpack.c.h.b16 %v446
      %v2247 = vunpack.c.l.b16 %v447
      %v2248 = vunpack.c.h.b16 %v447
      %v2249 = vunpack.c.l.b16 %v448
      %v2250 = vunpack.c.h.b16 %v448
      %v2251 = vunpack.c.l.b16 %v449
      %v2252 = vunpack.c.h.b16 %v449
      %v2253 = vunpack.c.l.b16 %v450
      %v2254 = vunpack.c.h.b16 %v450
      %v2255 = vunpack.c.l.b16 %v451
      %v2256 = vunpack.c.h.b16 %v451
      %v2257 = vunpack.c.l.b16 %v452
      %v2258 = vunpack.c.h.b16 %v452
      %v2259 = vunpack.c.l.b16 %v453
      %v2260 = vunpack.c.h.b16 %v453
      %v2261 = vunpack.c.l.b16 %v454
      %v2262 = vunpack.c.h.b16 %v454
      %v2263 = vunpack.c.l.b16 %v455
      %v2264 = vunpack.c.h.b16 %v455
      %v2265 = vunpack.c.l.b16 %v456
      %v2266 = vunpack.c.h.b16 %v456
      %v2267 = vunpack.c.l.b16 %v457
      %v2268 = vunpack.c.h.b16 %v457
      %v2269 = vunpack.c.l.b16 %v458
      %v2270 = vunpack.c.h.b16 %v458
      %v2271 = vunpack.c.l.b16 %v459
      %v2272 = vunpack.c.h.b16 %v459
      %v2273 = vunpack.c.l.b16 %v460
      %v2274 = vunpack.c.h.b16 %v460
      %v2275 = vunpack.c.l.b16 %v461
      %v2276 = vunpack.c.h.b16 %v461
      %v2277 = vunpack.c.l.b16 %v462
      %v2278 = vunpack.c.h.b16 %v462
      %v2279 = vunpack.c.l.b16 %v463
      %v2280 = vunpack.c.h.b16 %v463
      %v2281 = vunpack.c.l.b16 %v464
      %v2282 = vunpack.c.h.b16 %v464
      %v2283 = vunpack.c.l.b16 %v465
      %v2284 = vunpack.c.h.b16 %v465
      %v2285 = vunpack.c.l.b16 %v466
      %v2286 = vunpack.c.h.b16 %v466
      %v2287 = vunpack.c.l.b16 %v467
      %v2288 = vunpack.c.h.b16 %v467
      %v2289 = vunpack.c.l.b16 %v468
      %v2290 = vunpack.c.h.b16 %v468
      %v2291 = vunpack.c.l.b16 %v469
      %v2292 = vunpack.c.h.b16 %v469
      %v2293 = vunpack.c.l.b16 %v470
      %v2294 = vunpack.c.h.b16 %v470
      %v2295 = vunpack.c.l.b16 %v471
      %v2296 = vunpack.c.h.b16 %v471
      %v2297 = vunpack.c.l.b16 %v472
      %v2298 = vunpack.c.h.b16 %v472
      %v2299 = vunpack.c.l.b16 %v473
      %v2300 = vunpack.c.h.b16 %v473
      %v2301 = vunpack.c.l.b16 %v474
      %v2302 = vunpack.c.h.b16 %v474
      %v2303 = vunpack.c.l.b16 %v475
      %v2304 = vunpack.c.h.b16 %v475
      %v2305 = vunpack.c.l.b16 %v476
      %v2306 = vunpack.c.h.b16 %v476
      %v2307 = vunpack.c.l.b16 %v477
      %v2308 = vunpack.c.h.b16 %v477
      %v2309 = vunpack.c.l.b16 %v478
      %v2310 = vunpack.c.h.b16 %v478
      %v2311 = vunpack.c.l.b16 %v479
      %v2312 = vunpack.c.h.b16 %v479
      %v2313 = vunpack.c.l.b16 %v480
      %v2314 = vunpack.c.h.b16 %v480
      %v2315 = vunpack.c.l.b16 %v481
      %v2316 = vunpack.c.h.b16 %v481
      %v2317 = vunpack.c.l.b16 %v482
      %v2318 = vunpack.c.h.b16 %v482
      %v2319 = vunpack.c.l.b16 %v483
      %v2320 = vunpack.c.h.b16 %v483
      %v2321 = vunpack.c.l.b16 %v484
      %v2322 = vunpack.c.h.b16 %v484
      %v2323 = vunpack.c.l.b16 %v485
      %v2324 = vunpack.c.h.b16 %v485
      %v2325 = vunpack.c.l.b16 %v486
      %v2326 = vunpack.c.h.b16 %v486
      %v2327 = vunpack.c.l.b16 %v487
      %v2328 = vunpack.c.h.b16 %v487
      %v2329 = vunpack.c.l.b16 %v488
      %v2330 = vunpack.c.h.b16 %v488
      %v2331 = vunpack.c.l.b16 %v489
      %v2332 = vunpack.c.h.b16 %v489
      %v2333 = vunpack.c.l.b16 %v490
      %v2334 = vunpack.c.h.b16 %v490
      %v2335 = vunpack.c.l.b16 %v491
      %v2336 = vunpack.c.h.b16 %v491
      %v2337 = vunpack.c.l.b16 %v492
      %v2338 = vunpack.c.h.b16 %v492
      %v2339 = vunpack.c.l.b16 %v493
      %v2340 = vunpack.c.h.b16 %v493
      %v2341 = vunpack.c.l.b16 %v494
      %v2342 = vunpack.c.h.b16 %v494
      %v2343 = vunpack.c.l.b16 %v495
      %v2344 = vunpack.c.h.b16 %v495
      %v2345 = vunpack.c.l.b16 %v496
      %v2346 = vunpack.c.h.b16 %v496
      %v2347 = vunpack.c.l.b16 %v497
      %v2348 = vunpack.c.h.b16 %v497
      %v2349 = vunpack.c.l.b16 %v498
      %v2350 = vunpack.c.h.b16 %v498
      %v2351 = vunpack.c.l.b16 %v499
      %v2352 = vunpack.c.h.b16 %v499
      %v2353 = vunpack.c.l.b16 %v500
      %v2354 = vunpack.c.h.b16 %v500
      %v2355 = vunpack.c.l.b16 %v501
      %v2356 = vunpack.c.h.b16 %v501
      %v2357 = vunpack.c.l.b16 %v502
      %v2358 = vunpack.c.h.b16 %v502
      %v2359 = vunpack.c.l.b16 %v503
      %v2360 = vunpack.c.h.b16 %v503
      %v2361 = vunpack.c.l.b16 %v504
      %v2362 = vunpack.c.h.b16 %v504
      %v2363 = vunpack.c.l.b16 %v505
      %v2364 = vunpack.c.h.b16 %v505
      %v2365 = vunpack.c.l.b16 %v506
      %v2366 = vunpack.c.h.b16 %v506
      %v2367 = vunpack.c.l.b16 %v507
      %v2368 = vunpack.c.h.b16 %v507
      %v2369 = vunpack.c.l.b16 %v508
      %v2370 = vunpack.c.h.b16 %v508
      %v2371 = vunpack.c.l.b16 %v509
      %v2372 = vunpack.c.h.b16 %v509
      %v2373 = vunpack.c.l.b16 %v510
      %v2374 = vunpack.c.h.b16 %v510
      %v2375 = vunpack.c.l.b16 %v511
      %v2376 = vunpack.c.h.b16 %v511
      %v2377 = vunpack.c.l.b16 %v512
      %v2378 = vunpack.c.h.b16 %v512
      %v2379 = vunpack.c.l.b16 %v513
      %v2380 = vunpack.c.h.b16 %v513
      %v2381 = vunpack.c.l.b16 %v514
      %v2382 = vunpack.c.h.b16 %v514
      %v2383 = vunpack.c.l.b16 %v515
      %v2384 = vunpack.c.h.b16 %v515
      %v2385 = vunpack.c.l.b16 %v516
      %v2386 = vunpack.c.h.b16 %v516
      %v2387 = vunpack.c.l.b16 %v517
      %v2388 = vunpack.c.h.b16 %v517
      %v2389 = vunpack.c.l.b16 %v518
      %v2390 = vunpack.c.h.b16 %v518
      %v2391 = vunpack.c.l.b16 %v519
      %v2392 = vunpack.c.h.b16 %v519
      %v2393 = vunpack.c.l.b16 %v520
      %v2394 = vunpack.c.h.b16 %v520
      %v2395 = vunpack.c.l.b16 %v521
      %v2396 = vunpack.c.h.b16 %v521
      %v2397 = vunpack.c.l.b16 %v522
      %v2398 = vunpack.c.h.b16 %v522
      %v2399 = vunpack.c.l.b16 %v523
      %v2400 = vunpack.c.h.b16 %v523
      %v2401 = vunpack.c.l.b16 %v524
      %v2402 = vunpack.c.h.b16 %v524
      %v2403 = vunpack.c.l.b16 %v525
      %v2404 = vunpack.c.h.b16 %v525
      %v2405 = vunpack.c.l.b16 %v526
      %v2406 = vunpack.c.h.b16 %v526
      %v2407 = vunpack.c.l.b16 %v527
      %v2408 = vunpack.c.h.b16 %v527
      %v2409 = vunpack.c.l.b16 %v528
      %v2410 = vunpack.c.h.b16 %v528
      %v2411 = vunpack.c.l.b16 %v529
      %v2412 = vunpack.c.h.b16 %v529
      %v2413 = vunpack.c.l.b16 %v530
      %v2414 = vunpack.c.h.b16 %v530
      %v2415 = vunpack.c.l.b16 %v531
      %v2416 = vunpack.c.h.b16 %v531
      %v2417 = vunpack.c.l.b16 %v532
      %v2418 = vunpack.c.h.b16 %v532
      %v2419 = vunpack.c.l.b16 %v533
      %v2420 = vunpack.c.h.b16 %v533
      %v2421 = vunpack.c.l.b16 %v534
      %v2422 = vunpack.c.h.b16 %v534
      %v2423 = vunpack.c.l.b16 %v535
      %v2424 = vunpack.c.h.b16 %v535
      %v2425 = vunpack.c.l.b16 %v536
      %v2426 = vunpack.c.h.b16 %v536
      %v2427 = vunpack.c.l.b16 %v537
      %v2428 = vunpack.c.h.b16 %v537
      %v2429 = vunpack.c.l.b16 %v538
      %v2430 = vunpack.c.h.b16 %v538
      %v2431 = vunpack.c.l.b16 %v539
      %v2432 = vunpack.c.h.b16 %v539
      %v2433 = vunpack.c.l.b16 %v540
      %v2434 = vunpack.c.h.b16 %v540
      %v2435 = vunpack.c.l.b16 %v541
      %v2436 = vunpack.c.h.b16 %v541
      %v2437 = vunpack.c.l.b16 %v542
      %v2438 = vunpack.c.h.b16 %v542
      %v2439 = vunpack.c.l.b16 %v543
      %v2440 = vunpack.c.h.b16 %v543
      %v2441 = vunpack.c.l.b16 %v544
      %v2442 = vunpack.c.h.b16 %v544
      %v2443 = vunpack.c.l.b16 %v545
      %v2444 = vunpack.c.h.b16 %v545
      %v2445 = vunpack.c.l.b16 %v546
      %v2446 = vunpack.c.h.b16 %v546
      %v2447 = vunpack.c.l.b16 %v547
      %v2448 = vunpack.c.h.b16 %v547
      %v2449 = vunpack.c.l.b16 %v548
      %v2450 = vunpack.c.h.b16 %v548
      %v2451 = vunpack.c.l.b16 %v549
      %v2452 = vunpack.c.h.b16 %v549
      %v2453 = vunpack.c.l.b16 %v550
      %v2454 = vunpack.c.h.b16 %v550
      %v2455 = vunpack.c.l.b16 %v551
      %v2456 = vunpack.c.h.b16 %v551
      %v2457 = vunpack.c.l.b16 %v552
      %v2458 = vunpack.c.h.b16 %v552
      %v2459 = vunpack.c.l.b16 %v553
      %v2460 = vunpack.c.h.b16 %v553
      %v2461 = vunpack.c.l.b16 %v554
      %v2462 = vunpack.c.h.b16 %v554
      %v2463 = vunpack.c.l.b16 %v555
      %v2464 = vunpack.c.h.b16 %v555
      %v2465 = vunpack.c.l.b16 %v556
      %v2466 = vunpack.c.h.b16 %v556
      %v2467 = vunpack.c.l.b16 %v557
      %v2468 = vunpack.c.h.b16 %v557
      %v2469 = vunpack.c.l.b16 %v558
      %v2470 = vunpack.c.h.b16 %v558
      %v2471 = vunpack.c.l.b16 %v559
      %v2472 = vunpack.c.h.b16 %v559
      %v2473 = vunpack.c.l.b16 %v560
      %v2474 = vunpack.c.h.b16 %v560
      %v2475 = vunpack.c.l.b16 %v561
      %v2476 = vunpack.c.h.b16 %v561
      %v2477 = vunpack.c.l.b16 %v562
      %v2478 = vunpack.c.h.b16 %v562
      %v2479 = vunpack.c.l.b16 %v563
      %v2480 = vunpack.c.h.b16 %v563
      %v2481 = vunpack.c.l.b16 %v564
      %v2482 = vunpack.c.h.b16 %v564
      %v2483 = vunpack.c.l.b16 %v565
      %v2484 = vunpack.c.h.b16 %v565
      %v2485 = vunpack.c.l.b16 %v566
      %v2486 = vunpack.c.h.b16 %v566
      %v2487 = vunpack.c.l.b16 %v567
      %v2488 = vunpack.c.h.b16 %v567
      %v2489 = vunpack.c.l.b16 %v568
      %v2490 = vunpack.c.h.b16 %v568
      %v2491 = vunpack.c.l.b16 %v569
      %v2492 = vunpack.c.h.b16 %v569
      %v2493 = vunpack.c.l.b16 %v570
      %v2494 = vunpack.c.h.b16 %v570
      %v2495 = vunpack.c.l.b16 %v571
      %v2496 = vunpack.c.h.b16 %v571
      %v2497 = vunpack.c.l.b16 %v572
      %v2498 = vunpack.c.h.b16 %v572
      %v2499 = vunpack.c.l.b16 %v573
      %v2500 = vunpack.c.h.b16 %v573
      %v2501 = vunpack.c.l.b16 %v574
      %v2502 = vunpack.c.h.b16 %v574
      %v2503 = vunpack.c.l.b16 %v575
      %v2504 = vunpack.c.h.b16 %v575
      %v2505 = vunpack.c.l.b16 %v576
      %v2506 = vunpack.c.h.b16 %v576
      %v2507 = vunpack.c.l.b16 %v577
      %v2508 = vunpack.c.h.b16 %v577
      %v2509 = vunpack.c.l.b16 %v578
      %v2510 = vunpack.c.h.b16 %v578
      %v2511 = vunpack.c.l.b16 %v579
      %v2512 = vunpack.c.h.b16 %v579
      %v2513 = vunpack.c.l.b16 %v580
      %v2514 = vunpack.c.h.b16 %v580
      %v2515 = vunpack.c.l.b16 %v581
      %v2516 = vunpack.c.h.b16 %v581
      %v2517 = vunpack.c.l.b16 %v582
      %v2518 = vunpack.c.h.b16 %v582
      %v2519 = vunpack.c.l.b16 %v583
      %v2520 = vunpack.c.h.b16 %v583
      %v2521 = vunpack.c.l.b16 %v584
      %v2522 = vunpack.c.h.b16 %v584
      %v2523 = vunpack.c.l.b16 %v585
      %v2524 = vunpack.c.h.b16 %v585
      %v2525 = vunpack.c.l.b16 %v586
      %v2526 = vunpack.c.h.b16 %v586
      %v2527 = vunpack.c.l.b16 %v587
      %v2528 = vunpack.c.h.b16 %v587
      %v2529 = vunpack.c.l.b16 %v588
      %v2530 = vunpack.c.h.b16 %v588
      %v2531 = vunpack.c.l.b16 %v589
      %v2532 = vunpack.c.h.b16 %v589
      %v2533 = vunpack.c.l.b16 %v590
      %v2534 = vunpack.c.h.b16 %v590
      %v2535 = vunpack.c.l.b16 %v591
      %v2536 = vunpack.c.h.b16 %v591
      %v2537 = vunpack.c.l.b16 %v592
      %v2538 = vunpack.c.h.b16 %v592
      %v2539 = vunpack.c.l.b16 %v593
      %v2540 = vunpack.c.h.b16 %v593
      %v2541 = vunpack.c.l.b16 %v594
      %v2542 = vunpack.c.h.b16 %v594
      %v2543 = vunpack.c.l.b16 %v595
      %v2544 = vunpack.c.h.b16 %v595
      %v2545 = vunpack.c.l.b16 %v596
      %v2546 = vunpack.c.h.b16 %v596
      %v2547 = vunpack.c.l.b16 %v597
      %v2548 = vunpack.c.h.b16 %v597
      %v2549 = vunpack.c.l.b16 %v598
      %v2550 = vunpack.c.h.b16 %v598
      %v2551 = vunpack.c.l.b16 %v599
      %v2552 = vunpack.c.h.b16 %v599
      %v2553 = vunpack.c.l.b16 %v600
      %v2554 = vunpack.c.h.b16 %v600
      %v2555 = vunpack.c.l.b16 %v601
      %v2556 = vunpack.c.h.b16 %v601
      %v2557 = vunpack.c.l.b16 %v602
      %v2558 = vunpack.c.h.b16 %v602
      %v2559 = vunpack.c.l.b16 %v603
      %v2560 = vunpack.c.h.b16 %v603
      %v2561 = vunpack.c.l.b16 %v604
      %v2562 = vunpack.c.h.b16 %v604
      %v2563 = vunpack.c.l.b16 %v605
      %v2564 = vunpack.c.h.b16 %v605
      %v2565 = vunpack.c.l.b16 %v606
      %v2566 = vunpack.c.h.b16 %v606
      %v2567 = vunpack.c.l.b16 %v607
      %v2568 = vunpack.c.h.b16 %v607
      %v2569 = vunpack.c.l.b16 %v608
      %v2570 = vunpack.c.h.b16 %v608
      %v2571 = vunpack.c.l.b16 %v609
      %v2572 = vunpack.c.h.b16 %v609
      %v2573 = vunpack.c.l.b16 %v610
      %v2574 = vunpack.c.h.b16 %v610
      %v2575 = vunpack.c.l.b16 %v611
      %v2576 = vunpack.c.h.b16 %v611
      %v2577 = vunpack.c.l.b16 %v612
      %v2578 = vunpack.c.h.b16 %v612
      %v2579 = vunpack.c.l.b16 %v613
      %v2580 = vunpack.c.h.b16 %v613
      %v2581 = vunpack.c.l.b16 %v614
      %v2582 = vunpack.c.h.b16 %v614
      %v2583 = vunpack.c.l.b16 %v615
      %v2584 = vunpack.c.h.b16 %v615
      %v2585 = vunpack.c.l.b16 %v616
      %v2586 = vunpack.c.h.b16 %v616
      %v2587 = vunpack.c.l.b16 %v617
      %v2588 = vunpack.c.h.b16 %v617
      %v2589 = vunpack.c.l.b16 %v618
      %v2590 = vunpack.c.h.b16 %v618
      %v2591 = vunpack.c.l.b16 %v619
      %v2592 = vunpack.c.h.b16 %v619
      %v2593 = vunpack.c.l.b16 %v620
      %v2594 = vunpack.c.h.b16 %v620
      %v2595 = vunpack.c.l.b16 %v621
      %v2596 = vunpack.c.h.b16 %v621
      %v2597 = vunpack.c.l.b16 %v622
      %v2598 = vunpack.c.h.b16 %v622
      %v2599 = vunpack.c.l.b16 %v623
      %v2600 = vunpack.c.h.b16 %v623
      %v2601 = vunpack.c.l.b16 %v624
      %v2602 = vunpack.c.h.b16 %v624
      %v2603 = vunpack.c.l.b16 %v625
      %v2604 = vunpack.c.h.b16 %v625
      %v2605 = vunpack.c.l.b16 %v626
      %v2606 = vunpack.c.h.b16 %v626
      %v2607 = vunpack.c.l.b16 %v627
      %v2608 = vunpack.c.h.b16 %v627
      %v2609 = vunpack.c.l.b16 %v628
      %v2610 = vunpack.c.h.b16 %v628
      %v2611 = vunpack.c.l.b16 %v629
      %v2612 = vunpack.c.h.b16 %v629
      %v2613 = vunpack.c.l.b16 %v630
      %v2614 = vunpack.c.h.b16 %v630
      %v2615 = vunpack.c.l.b16 %v631
      %v2616 = vunpack.c.h.b16 %v631
      %v2617 = vunpack.c.l.b16 %v632
      %v2618 = vunpack.c.h.b16 %v632
      %v2619 = vunpack.c.l.b16 %v633
      %v2620 = vunpack.c.h.b16 %v633
      %v2621 = vunpack.c.l.b16 %v634
      %v2622 = vunpack.c.h.b16 %v634
      %v2623 = vunpack.c.l.b16 %v635
      %v2624 = vunpack.c.h.b16 %v635
      %v2625 = vunpack.c.l.b16 %v636
      %v2626 = vunpack.c.h.b16 %v636
      %v2627 = vunpack.c.l.b16 %v637
      %v2628 = vunpack.c.h.b16 %v637
      %v2629 = vunpack.c.l.b16 %v638
      %v2630 = vunpack.c.h.b16 %v638
      %v2631 = vunpack.c.l.b16 %v639
      %v2632 = vunpack.c.h.b16 %v639
      %v2633 = vunpack.c.l.b16 %v640
      %v2634 = vunpack.c.h.b16 %v640
      %v2635 = vunpack.c.l.b16 %v641
      %v2636 = vunpack.c.h.b16 %v641
      %v2637 = vunpack.c.l.b16 %v642
      %v2638 = vunpack.c.h.b16 %v642
      %v2639 = vunpack.c.l.b16 %v643
      %v2640 = vunpack.c.h.b16 %v643
      %v2641 = vunpack.c.l.b16 %v644
      %v2642 = vunpack.c.h.b16 %v644
      %v2643 = vunpack.c.l.b16 %v645
      %v2644 = vunpack.c.h.b16 %v645
      %v2645 = vunpack.c.l.b16 %v646
      %v2646 = vunpack.c.h.b16 %v646
      %v2647 = vunpack.c.l.b16 %v647
      %v2648 = vunpack.c.h.b16 %v647
      %v2649 = vunpack.c.l.b16 %v648
      %v2650 = vunpack.c.h.b16 %v648
      %v2651 = vunpack.c.l.b16 %v649
      %v2652 = vunpack.c.h.b16 %v649
      %v2653 = vunpack.c.l.b16 %v650
      %v2654 = vunpack.c.h.b16 %v650
      %v2655 = vunpack.c.l.b16 %v651
      %v2656 = vunpack.c.h.b16 %v651
      %v2657 = vunpack.c.l.b16 %v652
      %v2658 = vunpack.c.h.b16 %v652
      %v2659 = vunpack.c.l.b16 %v653
      %v2660 = vunpack.c.h.b16 %v653
      %v2661 = vunpack.c.l.b16 %v654
      %v2662 = vunpack.c.h.b16 %v654
      %v2663 = vunpack.c.l.b16 %v655
      %v2664 = vunpack.c.h.b16 %v655
      %v2665 = vunpack.c.l.b16 %v656
      %v2666 = vunpack.c.h.b16 %v656
      %v2667 = vunpack.c.l.b16 %v657
      %v2668 = vunpack.c.h.b16 %v657
      %v2669 = vunpack.c.l.b16 %v658
      %v2670 = vunpack.c.h.b16 %v658
      %v2671 = vunpack.c.l.b16 %v659
      %v2672 = vunpack.c.h.b16 %v659
      %v2673 = vunpack.c.l.b16 %v660
      %v2674 = vunpack.c.h.b16 %v660
      %v2675 = vunpack.c.l.b16 %v661
      %v2676 = vunpack.c.h.b16 %v661
      %v2677 = vunpack.c.l.b16 %v662
      %v2678 = vunpack.c.h.b16 %v662
      %v2679 = vunpack.c.l.b16 %v663
      %v2680 = vunpack.c.h.b16 %v663
      %v2681 = vunpack.c.l.b16 %v664
      %v2682 = vunpack.c.h.b16 %v664
      %v2683 = vunpack.c.l.b16 %v665
      %v2684 = vunpack.c.h.b16 %v665
      %v2685 = vunpack.c.l.b16 %v666
      %v2686 = vunpack.c.h.b16 %v666
      %v2687 = vunpack.c.l.b16 %v667
      %v2688 = vunpack.c.h.b16 %v667
      %v2689 = vunpack.c.l.b16 %v668
      %v2690 = vunpack.c.h.b16 %v668
      %v2691 = vunpack.c.l.b16 %v669
      %v2692 = vunpack.c.h.b16 %v669
      %v2693 = vunpack.c.l.b16 %v670
      %v2694 = vunpack.c.h.b16 %v670
      %v2695 = vunpack.c.l.b16 %v671
      %v2696 = vunpack.c.h.b16 %v671
      %v2697 = vunpack.c.l.b16 %v672
      %v2698 = vunpack.c.h.b16 %v672
      %v2699 = vunpack.c.l.b16 %v673
      %v2700 = vunpack.c.h.b16 %v673
      %v2701 = vunpack.c.l.b16 %v674
      %v2702 = vunpack.c.h.b16 %v674
      %v2703 = vunpack.c.l.b16 %v675
      %v2704 = vunpack.c.h.b16 %v675
      %v2705 = vunpack.c.l.b16 %v676
      %v2706 = vunpack.c.h.b16 %v676
      %v2707 = vunpack.c.l.b16 %v677
      %v2708 = vunpack.c.h.b16 %v677
      %v2709 = vunpack.c.l.b16 %v678
      %v2710 = vunpack.c.h.b16 %v678
      %v2711 = vunpack.c.l.b16 %v679
      %v2712 = vunpack.c.h.b16 %v679
      %v2713 = vunpack.c.l.b16 %v680
      %v2714 = vunpack.c.h.b16 %v680
      %v2715 = vunpack.c.l.b16 %v681
      %v2716 = vunpack.c.h.b16 %v681
      %v2717 = vunpack.c.l.b16 %v682
      %v2718 = vunpack.c.h.b16 %v682
      %v2719 = vunpack.c.l.b16 %v683
      %v2720 = vunpack.c.h.b16 %v683
      %v2721 = vunpack.c.l.b16 %v684
      %v2722 = vunpack.c.h.b16 %v684
      %v2723 = vunpack.c.l.b16 %v685
      %v2724 = vunpack.c.h.b16 %v685
      %v2725 = vunpack.c.l.b16 %v686
      %v2726 = vunpack.c.h.b16 %v686
      %v2727 = vunpack.c.l.b16 %v687
      %v2728 = vunpack.c.h.b16 %v687
      %v2729 = vunpack.c.l.b16 %v688
      %v2730 = vunpack.c.h.b16 %v688
      %v2731 = vunpack.c.l.b16 %v689
      %v2732 = vunpack.c.h.b16 %v689
      %v2733 = vunpack.c.l.b16 %v690
      %v2734 = vunpack.c.h.b16 %v690
      %v2735 = vunpack.c.l.b16 %v691
      %v2736 = vunpack.c.h.b16 %v691
      %v2737 = vunpack.c.l.b16 %v692
      %v2738 = vunpack.c.h.b16 %v692
      %v2739 = vunpack.c.l.b16 %v693
      %v2740 = vunpack.c.h.b16 %v693
      %v2741 = vunpack.c.l.b16 %v694
      %v2742 = vunpack.c.h.b16 %v694
      %v2743 = vunpack.c.l.b16 %v695
      %v2744 = vunpack.c.h.b16 %v695
      %v2745 = vunpack.c.l.b16 %v696
      %v2746 = vunpack.c.h.b16 %v696
      %v2747 = vunpack.c.l.b16 %v697
      %v2748 = vunpack.c.h.b16 %v697
      %v2749 = vunpack.c.l.b16 %v698
      %v2750 = vunpack.c.h.b16 %v698
      %v2751 = vunpack.c.l.b16 %v699
      %v2752 = vunpack.c.h.b16 %v699
      %v2753 = vunpack.c.l.b16 %v700
      %v2754 = vunpack.c.h.b16 %v700
      %v2755 = vunpack.c.l.b16 %v701
      %v2756 = vunpack.c.h.b16 %v701
      %v2757 = vunpack.c.l.b16 %v702
      %v2758 = vunpack.c.h.b16 %v702
      %v2759 = vunpack.c.l.b16 %v703
      %v2760 = vunpack.c.h.b16 %v703
      %v2761 = vunpack.c.l.b16 %v704
      %v2762 = vunpack.c.h.b16 %v704
      %v2763 = vunpack.c.l.b16 %v705
      %v2764 = vunpack.c.h.b16 %v705
      %v2765 = vunpack.c.l.b16 %v706
      %v2766 = vunpack.c.h.b16 %v706
      %v2767 = vunpack.c.l.b16 %v707
      %v2768 = vunpack.c.h.b16 %v707
      %v2769 = vunpack.c.l.b16 %v708
      %v2770 = vunpack.c.h.b16 %v708
      %v2771 = vunpack.c.l.b16 %v709
      %v2772 = vunpack.c.h.b16 %v709
      %v2773 = vunpack.c.l.b16 %v710
      %v2774 = vunpack.c.h.b16 %v710
      %v2775 = vunpack.c.l.b16 %v711
      %v2776 = vunpack.c.h.b16 %v711
      %v2777 = vunpack.c.l.b16 %v712
      %v2778 = vunpack.c.h.b16 %v712
      %v2779 = vunpack.c.l.b16 %v713
      %v2780 = vunpack.c.h.b16 %v713
      %v2781 = vunpack.c.l.b16 %v714
      %v2782 = vunpack.c.h.b16 %v714
      %v2783 = vunpack.c.l.b16 %v715
      %v2784 = vunpack.c.h.b16 %v715
      %v2785 = vunpack.c.l.b16 %v716
      %v2786 = vunpack.c.h.b16 %v716
      %v2787 = vunpack.c.l.b16 %v717
      %v2788 = vunpack.c.h.b16 %v717
      %v2789 = vunpack.c.l.b16 %v718
      %v2790 = vunpack.c.h.b16 %v718
      %v2791 = vunpack.c.l.b16 %v719
      %v2792 = vunpack.c.h.b16 %v719
      %v2793 = vunpack.c.l.b16 %v720
      %v2794 = vunpack.c.h.b16 %v720
      %v2795 = vunpack.c.l.b16 %v721
      %v2796 = vunpack.c.h.b16 %v721
      %v2797 = vunpack.c.l.b16 %v722
      %v2798 = vunpack.c.h.b16 %v722
      %v2799 = vunpack.c.l.b16 %v723
      %v2800 = vunpack.c.h.b16 %v723
      %v2801 = vunpack.c.l.b16 %v724
      %v2802 = vunpack.c.h.b16 %v724
      %v2803 = vunpack.c.l.b16 %v725
      %v2804 = vunpack.c.h.b16 %v725
      %v2805 = vunpack.c.l.b16 %v726
      %v2806 = vunpack.c.h.b16 %v726
      %v2807 = vunpack.c.l.b16 %v727
      %v2808 = vunpack.c.h.b16 %v727
      %v2809 = vunpack.c.l.b16 %v728
      %v2810 = vunpack.c.h.b16 %v728
      %v2811 = vunpack.c.l.b16 %v729
      %v2812 = vunpack.c.h.b16 %v729
      %v2813 = vunpack.c.l.b16 %v730
      %v2814 = vunpack.c.h.b16 %v730
      %v2815 = vunpack.c.l.b16 %v731
      %v2816 = vunpack.c.h.b16 %v731
      %v2817 = vunpack.c.l.b16 %v732
      %v2818 = vunpack.c.h.b16 %v732
      %v2819 = vunpack.c.l.b16 %v733
      %v2820 = vunpack.c.h.b16 %v733
      %v2821 = vunpack.c.l.b16 %v734
      %v2822 = vunpack.c.h.b16 %v734
      %v2823 = vunpack.c.l.b16 %v735
      %v2824 = vunpack.c.h.b16 %v735
      %v2825 = vunpack.c.l.b16 %v736
      %v2826 = vunpack.c.h.b16 %v736
      %v2827 = vunpack.c.l.b16 %v737
      %v2828 = vunpack.c.h.b16 %v737
      %v2829 = vunpack.c.l.b16 %v738
      %v2830 = vunpack.c.h.b16 %v738
      %v2831 = vunpack.c.l.b16 %v739
      %v2832 = vunpack.c.h.b16 %v739
      %v2833 = vunpack.c.l.b16 %v740
      %v2834 = vunpack.c.h.b16 %v740
      %v2835 = vunpack.c.l.b16 %v741
      %v2836 = vunpack.c.h.b16 %v741
      %v2837 = vunpack.c.l.b16 %v742
      %v2838 = vunpack.c.h.b16 %v742
      %v2839 = vunpack.c.l.b16 %v743
      %v2840 = vunpack.c.h.b16 %v743
      %v2841 = vunpack.c.l.b16 %v744
      %v2842 = vunpack.c.h.b16 %v744
      %v2843 = vunpack.c.l.b16 %v745
      %v2844 = vunpack.c.h.b16 %v745
      %v2845 = vunpack.c.l.b16 %v746
      %v2846 = vunpack.c.h.b16 %v746
      %v2847 = vunpack.c.l.b16 %v747
      %v2848 = vunpack.c.h.b16 %v747
      %v2849 = vunpack.c.l.b16 %v748
      %v2850 = vunpack.c.h.b16 %v748
      %v2851 = vunpack.c.l.b16 %v749
      %v2852 = vunpack.c.h.b16 %v749
      %v2853 = vunpack.c.l.b16 %v750
      %v2854 = vunpack.c.h.b16 %v750
      %v2855 = vunpack.c.l.b16 %v751
      %v2856 = vunpack.c.h.b16 %v751
      %v2857 = vunpack.c.l.b16 %v752
      %v2858 = vunpack.c.h.b16 %v752
      %v2859 = vunpack.c.l.b16 %v753
      %v2860 = vunpack.c.h.b16 %v753
      %v2861 = vunpack.c.l.b16 %v754
      %v2862 = vunpack.c.h.b16 %v754
      %v2863 = vunpack.c.l.b16 %v755
      %v2864 = vunpack.c.h.b16 %v755
      %v2865 = vunpack.c.l.b16 %v756
      %v2866 = vunpack.c.h.b16 %v756
      %v2867 = vunpack.c.l.b16 %v757
      %v2868 = vunpack.c.h.b16 %v757
      %v2869 = vunpack.c.l.b16 %v758
      %v2870 = vunpack.c.h.b16 %v758
      %v2871 = vunpack.c.l.b16 %v759
      %v2872 = vunpack.c.h.b16 %v759
      %v2873 = vunpack.c.l.b16 %v760
      %v2874 = vunpack.c.h.b16 %v760
      %v2875 = vunpack.c.l.b16 %v761
      %v2876 = vunpack.c.h.b16 %v761
      %v2877 = vunpack.c.l.b16 %v762
      %v2878 = vunpack.c.h.b16 %v762
      %v2879 = vunpack.c.l.b16 %v763
      %v2880 = vunpack.c.h.b16 %v763
      %v2881 = vunpack.c.l.b16 %v764
      %v2882 = vunpack.c.h.b16 %v764
      %v2883 = vunpack.c.l.b16 %v765
      %v2884 = vunpack.c.h.b16 %v765
      %v2885 = vunpack.c.l.b16 %v766
      %v2886 = vunpack.c.h.b16 %v766
      %v2887 = vunpack.c.l.b16 %v767
      %v2888 = vunpack.c.h.b16 %v767
      %v2889 = vunpack.c.l.b16 %v768
      %v2890 = vunpack.c.h.b16 %v768
      %v2891 = vunpack.c.l.b16 %v769
      %v2892 = vunpack.c.h.b16 %v769
      %v2893 = vunpack.c.l.b16 %v770
      %v2894 = vunpack.c.h.b16 %v770
      %v2895 = vunpack.c.l.b16 %v771
      %v2896 = vunpack.c.h.b16 %v771
      %v2897 = vunpack.c.l.b16 %v772
      %v2898 = vunpack.c.h.b16 %v772
      %v2899 = vunpack.c.l.b16 %v773
      %v2900 = vunpack.c.h.b16 %v773
      %v2901 = vunpack.c.l.b16 %v774
      %v2902 = vunpack.c.h.b16 %v774
      %v2903 = vunpack.c.l.b16 %v775
      %v2904 = vunpack.c.h.b16 %v775
      %v2905 = vunpack.c.l.b16 %v776
      %v2906 = vunpack.c.h.b16 %v776
      %v2907 = vunpack.c.l.b16 %v777
      %v2908 = vunpack.c.h.b16 %v777
      %v2909 = vunpack.c.l.b16 %v778
      %v2910 = vunpack.c.h.b16 %v778
      %v2911 = vunpack.c.l.b16 %v779
      %v2912 = vunpack.c.h.b16 %v779
      %v2913 = vunpack.c.l.b16 %v780
      %v2914 = vunpack.c.h.b16 %v780
      %v2915 = vunpack.c.l.b16 %v781
      %v2916 = vunpack.c.h.b16 %v781
      %v2917 = vunpack.c.l.b16 %v782
      %v2918 = vunpack.c.h.b16 %v782
      %v2919 = vunpack.c.l.b16 %v783
      %v2920 = vunpack.c.h.b16 %v783
      %v2921 = vunpack.c.l.b16 %v784
      %v2922 = vunpack.c.h.b16 %v784
      %v2923 = vunpack.c.l.b16 %v785
      %v2924 = vunpack.c.h.b16 %v785
      %v2925 = vunpack.c.l.b16 %v786
      %v2926 = vunpack.c.h.b16 %v786
      %v2927 = vunpack.c.l.b16 %v787
      %v2928 = vunpack.c.h.b16 %v787
      %v2929 = vunpack.c.l.b16 %v788
      %v2930 = vunpack.c.h.b16 %v788
      %v2931 = vunpack.c.l.b16 %v789
      %v2932 = vunpack.c.h.b16 %v789
      %v2933 = vunpack.c.l.b16 %v790
      %v2934 = vunpack.c.h.b16 %v790
      %v2935 = vunpack.c.l.b16 %v791
      %v2936 = vunpack.c.h.b16 %v791
      %v2937 = vunpack.c.l.b16 %v792
      %v2938 = vunpack.c.h.b16 %v792
      %v2939 = vunpack.c.l.b16 %v793
      %v2940 = vunpack.c.h.b16 %v793
      %v2941 = vunpack.c.l.b16 %v794
      %v2942 = vunpack.c.h.b16 %v794
      %v2943 = vunpack.c.l.b16 %v795
      %v2944 = vunpack.c.h.b16 %v795
      %v2945 = vunpack.c.l.b16 %v796
      %v2946 = vunpack.c.h.b16 %v796
      %v2947 = vunpack.c.l.b16 %v797
      %v2948 = vunpack.c.h.b16 %v797
      %v2949 = vunpack.c.l.b16 %v798
      %v2950 = vunpack.c.h.b16 %v798
      %v2951 = vunpack.c.l.b16 %v799
      %v2952 = vunpack.c.h.b16 %v799
      %v2953 = vunpack.c.l.b16 %v800
      %v2954 = vunpack.c.h.b16 %v800
      %v2955 = vunpack.c.l.b16 %v801
      %v2956 = vunpack.c.h.b16 %v801
      %v2957 = vunpack.c.l.b16 %v802
      %v2958 = vunpack.c.h.b16 %v802
      %v2959 = vunpack.c.l.b16 %v803
      %v2960 = vunpack.c.h.b16 %v803
      %v2961 = vunpack.c.l.b16 %v804
      %v2962 = vunpack.c.h.b16 %v804
      %v2963 = vunpack.c.l.b16 %v805
      %v2964 = vunpack.c.h.b16 %v805
      %v2965 = vunpack.c.l.b16 %v806
      %v2966 = vunpack.c.h.b16 %v806
      %v2967 = vunpack.c.l.b16 %v807
      %v2968 = vunpack.c.h.b16 %v807
      %v2969 = vunpack.c.l.b16 %v808
      %v2970 = vunpack.c.h.b16 %v808
      %v2971 = vunpack.c.l.b16 %v809
      %v2972 = vunpack.c.h.b16 %v809
      %v2973 = vunpack.c.l.b16 %v810
      %v2974 = vunpack.c.h.b16 %v810
      %v2975 = vunpack.c.l.b16 %v811
      %v2976 = vunpack.c.h.b16 %v811
      %v2977 = vunpack.c.l.b16 %v812
      %v2978 = vunpack.c.h.b16 %v812
      %v2979 = vunpack.c.l.b16 %v813
      %v2980 = vunpack.c.h.b16 %v813
      %v2981 = vunpack.c.l.b16 %v814
      %v2982 = vunpack.c.h.b16 %v814
      %v2983 = vunpack.c.l.b16 %v815
      %v2984 = vunpack.c.h.b16 %v815
      %v2985 = vunpack.c.l.b16 %v816
      %v2986 = vunpack.c.h.b16 %v816
      %v2987 = vunpack.c.l.b16 %v817
      %v2988 = vunpack.c.h.b16 %v817
      %v2989 = vunpack.c.l.b16 %v818
      %v2990 = vunpack.c.h.b16 %v818
      %v2991 = vunpack.c.l.b16 %v819
      %v2992 = vunpack.c.h.b16 %v819
      %v2993 = vunpack.c.l.b16 %v820
      %v2994 = vunpack.c.h.b16 %v820
      %v2995 = vunpack.c.l.b16 %v821
      %v2996 = vunpack.c.h.b16 %v821
      %v2997 = vunpack.c.l.b16 %v822
      %v2998 = vunpack.c.h.b16 %v822
      %v2999 = vunpack.c.l.b16 %v823
      %v3000 = vunpack.c.h.b16 %v823
      %v3001 = vunpack.c.l.b16 %v824
      %v3002 = vunpack.c.h.b16 %v824
      %v3003 = vunpack.c.l.b16 %v825
      %v3004 = vunpack.c.h.b16 %v825
      %v3005 = vunpack.c.l.b16 %v826
      %v3006 = vunpack.c.h.b16 %v826
      %v3007 = vunpack.c.l.b16 %v827
      %v3008 = vunpack.c.h.b16 %v827
      %v3009 = vunpack.c.l.b16 %v828
      %v3010 = vunpack.c.h.b16 %v828
      %v3011 = vunpack.c.l.b16 %v829
      %v3012 = vunpack.c.h.b16 %v829
      %v3013 = vunpack.c.l.b16 %v830
      %v3014 = vunpack.c.h.b16 %v830
      %v3015 = vunpack.c.l.b16 %v831
      %v3016 = vunpack.c.h.b16 %v831
      %v3017 = vunpack.c.l.b16 %v832
      %v3018 = vunpack.c.h.b16 %v832
      %v3019 = vunpack.c.l.b16 %v833
      %v3020 = vunpack.c.h.b16 %v833
      %v3021 = vunpack.c.l.b16 %v834
      %v3022 = vunpack.c.h.b16 %v834
      %v3023 = vunpack.c.l.b16 %v835
      %v3024 = vunpack.c.h.b16 %v835
      %v3025 = vunpack.c.l.b16 %v836
      %v3026 = vunpack.c.h.b16 %v836
      %v3027 = vunpack.c.l.b16 %v837
      %v3028 = vunpack.c.h.b16 %v837
      %v3029 = vunpack.c.l.b16 %v838
      %v3030 = vunpack.c.h.b16 %v838
      %v3031 = vunpack.c.l.b16 %v839
      %v3032 = vunpack.c.h.b16 %v839
      %v3033 = vunpack.c.l.b16 %v840
      %v3034 = vunpack.c.h.b16 %v840
      %v3035 = vunpack.c.l.b16 %v841
      %v3036 = vunpack.c.h.b16 %v841
      %v3037 = vunpack.c.l.b16 %v842
      %v3038 = vunpack.c.h.b16 %v842
      %v3039 = vunpack.c.l.b16 %v843
      %v3040 = vunpack.c.h.b16 %v843
      %v3041 = vunpack.c.l.b16 %v844
      %v3042 = vunpack.c.h.b16 %v844
      %v3043 = vunpack.c.l.b16 %v845
      %v3044 = vunpack.c.h.b16 %v845
      %v3045 = vunpack.c.l.b16 %v846
      %v3046 = vunpack.c.h.b16 %v846
      %v3047 = vunpack.c.l.b16 %v847
      %v3048 = vunpack.c.h.b16 %v847
      %v3049 = vunpack.c.l.b16 %v848
      %v3050 = vunpack.c.h.b16 %v848
      %v3051 = vunpack.c.l.b16 %v849
      %v3052 = vunpack.c.h.b16 %v849
      %v3053 = vunpack.c.l.b16 %v850
      %v3054 = vunpack.c.h.b16 %v850
      %v3055 = vunpack.c.l.b16 %v851
      %v3056 = vunpack.c.h.b16 %v851
      %v3057 = vunpack.c.l.b16 %v852
      %v3058 = vunpack.c.h.b16 %v852
      %v3059 = vunpack.c.l.b16 %v853
      %v3060 = vunpack.c.h.b16 %v853
      %v3061 = vunpack.c.l.b16 %v854
      %v3062 = vunpack.c.h.b16 %v854
      %v3063 = vunpack.c.l.b16 %v855
      %v3064 = vunpack.c.h.b16 %v855
      %v3065 = vunpack.c.l.b16 %v856
      %v3066 = vunpack.c.h.b16 %v856
      %v3067 = vunpack.c.l.b16 %v857
      %v3068 = vunpack.c.h.b16 %v857
      %v3069 = vunpack.c.l.b16 %v858
      %v3070 = vunpack.c.h.b16 %v858
      %v3071 = vunpack.c.l.b16 %v859
      %v3072 = vunpack.c.h.b16 %v859
      %v3073 = vunpack.c.l.b16 %v860
      %v3074 = vunpack.c.h.b16 %v860
      %v3075 = vunpack.c.l.b16 %v861
      %v3076 = vunpack.c.h.b16 %v861
      %v3077 = vunpack.c.l.b16 %v862
      %v3078 = vunpack.c.h.b16 %v862
      %v3079 = vunpack.c.l.b16 %v863
      %v3080 = vunpack.c.h.b16 %v863
      %v3081 = vunpack.c.l.b16 %v864
      %v3082 = vunpack.c.h.b16 %v864
      %v3083 = vunpack.c.l.b16 %v865
      %v3084 = vunpack.c.h.b16 %v865
      %v3085 = vunpack.c.l.b16 %v866
      %v3086 = vunpack.c.h.b16 %v866
      %v3087 = vunpack.c.l.b16 %v867
      %v3088 = vunpack.c.h.b16 %v867
      %v3089 = vunpack.c.l.b16 %v868
      %v3090 = vunpack.c.h.b16 %v868
      %v3091 = vunpack.c.l.b16 %v869
      %v3092 = vunpack.c.h.b16 %v869
      %v3093 = vunpack.c.l.b16 %v870
      %v3094 = vunpack.c.h.b16 %v870
      %v3095 = vunpack.c.l.b16 %v871
      %v3096 = vunpack.c.h.b16 %v871
      %v3097 = vunpack.c.l.b16 %v872
      %v3098 = vunpack.c.h.b16 %v872
      %v3099 = vunpack.c.l.b16 %v873
      %v3100 = vunpack.c.h.b16 %v873
      %v3101 = vunpack.c.l.b16 %v874
      %v3102 = vunpack.c.h.b16 %v874
      %v3103 = vunpack.c.l.b16 %v875
      %v3104 = vunpack.c.h.b16 %v875
      %v3105 = vunpack.c.l.b16 %v876
      %v3106 = vunpack.c.h.b16 %v876
      %v3107 = vunpack.c.l.b16 %v877
      %v3108 = vunpack.c.h.b16 %v877
      %v3109 = vunpack.c.l.b16 %v878
      %v3110 = vunpack.c.h.b16 %v878
      %v3111 = vunpack.c.l.b16 %v879
      %v3112 = vunpack.c.h.b16 %v879
      %v3113 = vunpack.c.l.b16 %v880
      %v3114 = vunpack.c.h.b16 %v880
      %v3115 = vunpack.c.l.b16 %v881
      %v3116 = vunpack.c.h.b16 %v881
      %v3117 = vunpack.c.l.b16 %v882
      %v3118 = vunpack.c.h.b16 %v882
      %v3119 = vunpack.c.l.b16 %v883
      %v3120 = vunpack.c.h.b16 %v883
      %v3121 = vunpack.c.l.b16 %v884
      %v3122 = vunpack.c.h.b16 %v884
      %v3123 = vunpack.c.l.b16 %v885
      %v3124 = vunpack.c.h.b16 %v885
      %v3125 = vunpack.c.l.b16 %v886
      %v3126 = vunpack.c.h.b16 %v886
      %v3127 = vunpack.c.l.b16 %v887
      %v3128 = vunpack.c.h.b16 %v887
      %v3129 = vunpack.c.l.b16 %v888
      %v3130 = vunpack.c.h.b16 %v888
      %v3131 = vunpack.c.l.b16 %v889
      %v3132 = vunpack.c.h.b16 %v889
      %v3133 = vunpack.c.l.b16 %v890
      %v3134 = vunpack.c.h.b16 %v890
      %v3135 = vunpack.c.l.b16 %v891
      %v3136 = vunpack.c.h.b16 %v891
      %v3137 = vunpack.c.l.b16 %v892
      %v3138 = vunpack.c.h.b16 %v892
      %v3139 = vunpack.c.l.b16 %v893
      %v3140 = vunpack.c.h.b16 %v893
      %v3141 = vunpack.c.l.b16 %v894
      %v3142 = vunpack.c.h.b16 %v894
      %v3143 = vunpack.c.l.b16 %v895
      %v3144 = vunpack.c.h.b16 %v895
      %v3145 = vunpack.c.l.b16 %v896
      %v3146 = vunpack.c.h.b16 %v896
      %v3147 = vunpack.c.l.b16 %v897
      %v3148 = vunpack.c.h.b16 %v897
      %v3149 = vunpack.c.l.b16 %v898
      %v3150 = vunpack.c.h.b16 %v898
      %v3151 = vunpack.c.l.b16 %v899
      %v3152 = vunpack.c.h.b16 %v899
      %v3153 = vunpack.c.l.b16 %v900
      %v3154 = vunpack.c.h.b16 %v900
      %v3155 = vunpack.c.l.b16 %v901
      %v3156 = vunpack.c.h.b16 %v901
      %v3157 = vunpack.c.l.b16 %v902
      %v3158 = vunpack.c.h.b16 %v902
      %v3159 = vunpack.c.l.b16 %v903
      %v3160 = vunpack.c.h.b16 %v903
      %v3161 = vunpack.c.l.b16 %v904
      %v3162 = vunpack.c.h.b16 %v904
      %v3163 = vunpack.c.l.b16 %v905
      %v3164 = vunpack.c.h.b16 %v905
      %v3165 = vunpack.c.l.b16 %v906
      %v3166 = vunpack.c.h.b16 %v906
      %v3167 = vunpack.c.l.b16 %v907
      %v3168 = vunpack.c.h.b16 %v907
      %v3169 = vunpack.c.l.b16 %v908
      %v3170 = vunpack.c.h.b16 %v908
      %v3171 = vunpack.c.l.b16 %v909
      %v3172 = vunpack.c.h.b16 %v909
      %v3173 = vunpack.c.l.b16 %v910
      %v3174 = vunpack.c.h.b16 %v910
      %v3175 = vunpack.c.l.b16 %v911
      %v3176 = vunpack.c.h.b16 %v911
      %v3177 = vunpack.c.l.b16 %v912
      %v3178 = vunpack.c.h.b16 %v912
      %v3179 = vunpack.c.l.b16 %v913
      %v3180 = vunpack.c.h.b16 %v913
      %v3181 = vunpack.c.l.b16 %v914
      %v3182 = vunpack.c.h.b16 %v914
      %v3183 = vunpack.c.l.b16 %v915
      %v3184 = vunpack.c.h.b16 %v915
      %v3185 = vunpack.c.l.b16 %v916
      %v3186 = vunpack.c.h.b16 %v916
      %v3187 = vunpack.c.l.b16 %v917
      %v3188 = vunpack.c.h.b16 %v917
      %v3189 = vunpack.c.l.b16 %v918
      %v3190 = vunpack.c.h.b16 %v918
      %v3191 = vunpack.c.l.b16 %v919
      %v3192 = vunpack.c.h.b16 %v919
      %v3193 = vunpack.c.l.b16 %v920
      %v3194 = vunpack.c.h.b16 %v920
      %v3195 = vunpack.c.l.b16 %v921
      %v3196 = vunpack.c.h.b16 %v921
      %v3197 = vunpack.c.l.b16 %v922
      %v3198 = vunpack.c.h.b16 %v922
      %v3199 = vunpack.c.l.b16 %v923
      %v3200 = vunpack.c.h.b16 %v923
      %v3201 = vunpack.c.l.b16 %v924
      %v3202 = vunpack.c.h.b16 %v924
      %v3203 = vunpack.c.l.b16 %v925
      %v3204 = vunpack.c.h.b16 %v925
      %v3205 = vunpack.c.l.b16 %v926
      %v3206 = vunpack.c.h.b16 %v926
      %v3207 = vunpack.c.l.b16 %v927
      %v3208 = vunpack.c.h.b16 %v927
      %v3209 = vunpack.c.l.b16 %v928
      %v3210 = vunpack.c.h.b16 %v928
      %v3211 = vunpack.c.l.b16 %v929
      %v3212 = vunpack.c.h.b16 %v929
      %v3213 = vunpack.c.l.b16 %v930
      %v3214 = vunpack.c.h.b16 %v930
      %v3215 = vunpack.c.l.b16 %v931
      %v3216 = vunpack.c.h.b16 %v931
      %v3217 = vunpack.c.l.b16 %v932
      %v3218 = vunpack.c.h.b16 %v932
      %v3219 = vunpack.c.l.b16 %v933
      %v3220 = vunpack.c.h.b16 %v933
      %v3221 = vunpack.c.l.b16 %v934
      %v3222 = vunpack.c.h.b16 %v934
      %v3223 = vunpack.c.l.b16 %v935
      %v3224 = vunpack.c.h.b16 %v935
      %v3225 = vunpack.c.l.b16 %v936
      %v3226 = vunpack.c.h.b16 %v936
      %v3227 = vunpack.c.l.b16 %v937
      %v3228 = vunpack.c.h.b16 %v937
      %v3229 = vunpack.c.l.b16 %v938
      %v3230 = vunpack.c.h.b16 %v938
      %v3231 = vunpack.c.l.b16 %v939
      %v3232 = vunpack.c.h.b16 %v939
      %v3233 = vunpack.c.l.b16 %v940
      %v3234 = vunpack.c.h.b16 %v940
      %v3235 = vunpack.c.l.b16 %v941
      %v3236 = vunpack.c.h.b16 %v941
      %v3237 = vunpack.c.l.b16 %v942
      %v3238 = vunpack.c.h.b16 %v942
      %v3239 = vunpack.c.l.b16 %v943
      %v3240 = vunpack.c.h.b16 %v943
      %v3241 = vunpack.c.l.b16 %v944
      %v3242 = vunpack.c.h.b16 %v944
      %v3243 = vunpack.c.l.b16 %v945
      %v3244 = vunpack.c.h.b16 %v945
      %v3245 = vunpack.c.l.b16 %v946
      %v3246 = vunpack.c.h.b16 %v946
      %v3247 = vunpack.c.l.b16 %v947
      %v3248 = vunpack.c.h.b16 %v947
      %v3249 = vunpack.c.l.b16 %v948
      %v3250 = vunpack.c.h.b16 %v948
      %v3251 = vunpack.c.l.b16 %v949
      %v3252 = vunpack.c.h.b16 %v949
      %v3253 = vunpack.c.l.b16 %v950
      %v3254 = vunpack.c.h.b16 %v950
      %v3255 = vunpack.c.l.b16 %v951
      %v3256 = vunpack.c.h.b16 %v951
      %v3257 = vunpack.c.l.b16 %v952
      %v3258 = vunpack.c.h.b16 %v952
      %v3259 = vunpack.c.l.b16 %v953
      %v3260 = vunpack.c.h.b16 %v953
      %v3261 = vunpack.c.l.b16 %v954
      %v3262 = vunpack.c.h.b16 %v954
      %v3263 = vunpack.c.l.b16 %v955
      %v3264 = vunpack.c.h.b16 %v955
      %v3265 = vunpack.c.l.b16 %v956
      %v3266 = vunpack.c.h.b16 %v956
      %v3267 = vunpack.c.l.b16 %v957
      %v3268 = vunpack.c.h.b16 %v957
      %v3269 = vunpack.c.l.b16 %v958
      %v3270 = vunpack.c.h.b16 %v958
      %v3271 = vunpack.c.l.b16 %v959
      %v3272 = vunpack.c.h.b16 %v959
      %v3273 = vunpack.c.l.b16 %v960
      %v3274 = vunpack.c.h.b16 %v960
      %v3275 = vunpack.c.l.b16 %v961
      %v3276 = vunpack.c.h.b16 %v961
      %v3277 = vunpack.c.l.b16 %v962
      %v3278 = vunpack.c.h.b16 %v962
      %v3279 = vunpack.c.l.b16 %v963
      %v3280 = vunpack.c.h.b16 %v963
      %v3281 = vunpack.c.l.b16 %v964
      %v3282 = vunpack.c.h.b16 %v964
      %v3283 = vunpack.c.l.b16 %v965
      %v3284 = vunpack.c.h.b16 %v965
      %v3285 = vunpack.c.l.b16 %v966
      %v3286 = vunpack.c.h.b16 %v966
      %v3287 = vunpack.c.l.b16 %v967
      %v3288 = vunpack.c.h.b16 %v967
      %v3289 = vunpack.c.l.b16 %v968
      %v3290 = vunpack.c.h.b16 %v968
      %v3291 = vunpack.c.l.b16 %v969
      %v3292 = vunpack.c.h.b16 %v969
      %v3293 = vunpack.c.l.b16 %v970
      %v3294 = vunpack.c.h.b16 %v970
      %v3295 = vunpack.c.l.b16 %v971
      %v3296 = vunpack.c.h.b16 %v971
      %v3297 = vunpack.c.l.b16 %v972
      %v3298 = vunpack.c.h.b16 %v972
      %v3299 = vunpack.c.l.b16 %v973
      %v3300 = vunpack.c.h.b16 %v973
      %v3301 = vunpack.c.l.b16 %v974
      %v3302 = vunpack.c.h.b16 %v974
      %v3303 = vunpack.c.l.b16 %v975
      %v3304 = vunpack.c.h.b16 %v975
      %v3305 = vunpack.c.l.b16 %v976
      %v3306 = vunpack.c.h.b16 %v976
      %v3307 = vunpack.c.l.b16 %v977
      %v3308 = vunpack.c.h.b16 %v977
      %v3309 = vunpack.c.l.b16 %v978
      %v3310 = vunpack.c.h.b16 %v978
      %v3311 = vunpack.c.l.b16 %v979
      %v3312 = vunpack.c.h.b16 %v979
      %v3313 = vunpack.c.l.b16 %v980
      %v3314 = vunpack.c.h.b16 %v980
      %v3315 = vunpack.c.l.b16 %v981
      %v3316 = vunpack.c.h.b16 %v981
      %v3317 = vunpack.c.l.b16 %v982
      %v3318 = vunpack.c.h.b16 %v982
      %v3319 = vunpack.c.l.b16 %v983
      %v3320 = vunpack.c.h.b16 %v983
      %v3321 = vunpack.c.l.b16 %v984
      %v3322 = vunpack.c.h.b16 %v984
      %v3323 = vunpack.c.l.b16 %v985
      %v3324 = vunpack.c.h.b16 %v985
      %v3325 = vunpack.c.l.b16 %v986
      %v3326 = vunpack.c.h.b16 %v986
      %v3327 = vunpack.c.l.b16 %v987
      %v3328 = vunpack.c.h.b16 %v987
      %v3329 = vunpack.c.l.b16 %v988
      %v3330 = vunpack.c.h.b16 %v988
      %v3331 = vunpack.c.l.b16 %v989
      %v3332 = vunpack.c.h.b16 %v989
      %v3333 = vunpack.c.l.b16 %v990
      %v3334 = vunpack.c.h.b16 %v990
      %v3335 = vunpack.c.l.b16 %v991
      %v3336 = vunpack.c.h.b16 %v991
      %v3337 = vunpack.c.l.b16 %v992
      %v3338 = vunpack.c.h.b16 %v992
      %v3339 = vunpack.c.l.b16 %v993
      %v3340 = vunpack.c.h.b16 %v993
      %v3341 = vunpack.c.l.b16 %v994
      %v3342 = vunpack.c.h.b16 %v994
      %v3343 = vunpack.c.l.b16 %v995
      %v3344 = vunpack.c.h.b16 %v995
      %v3345 = vunpack.c.l.b16 %v996
      %v3346 = vunpack.c.h.b16 %v996
      %v3347 = vunpack.c.l.b16 %v997
      %v3348 = vunpack.c.h.b16 %v997
      %v3349 = vunpack.c.l.b16 %v998
      %v3350 = vunpack.c.h.b16 %v998
      %v3351 = vunpack.c.l.b16 %v999
      %v3352 = vunpack.c.h.b16 %v999
      %v3353 = vunpack.c.l.b16 %v1000
      %v3354 = vunpack.c.h.b16 %v1000
      %v3355 = vunpack.c.l.b16 %v1001
      %v3356 = vunpack.c.h.b16 %v1001
      %v3357 = vunpack.c.l.b16 %v1002
      %v3358 = vunpack.c.h.b16 %v1002
      %v3359 = vunpack.c.l.b16 %v1003
      %v3360 = vunpack.c.h.b16 %v1003
      %v3361 = vunpack.c.l.b16 %v1004
      %v3362 = vunpack.c.h.b16 %v1004
      %v3363 = vunpack.c.l.b16 %v1005
      %v3364 = vunpack.c.h.b16 %v1005
      %v3365 = vunpack.c.l.b16 %v1006
      %v3366 = vunpack.c.h.b16 %v1006
      %v3367 = vunpack.c.l.b16 %v1007
      %v3368 = vunpack.c.h.b16 %v1007
      %v3369 = vunpack.c.l.b16 %v1008
      %v3370 = vunpack.c.h.b16 %v1008
      %v3371 = vunpack.c.l.b16 %v1009
      %v3372 = vunpack.c.h.b16 %v1009
      %v3373 = vunpack.c.l.b16 %v1010
      %v3374 = vunpack.c.h.b16 %v1010
      %v3375 = vunpack.c.l.b16 %v1011
      %v3376 = vunpack.c.h.b16 %v1011
      %v3377 = vunpack.c.l.b16 %v1012
      %v3378 = vunpack.c.h.b16 %v1012
      %v3379 = vunpack.c.l.b16 %v1013
      %v3380 = vunpack.c.h.b16 %v1013
      %v3381 = vunpack.c.l.b16 %v1014
      %v3382 = vunpack.c.h.b16 %v1014
      %v3383 = vunpack.c.l.b16 %v1015
      %v3384 = vunpack.c.h.b16 %v1015
      %v3385 = vunpack.c.l.b16 %v1016
      %v3386 = vunpack.c.h.b16 %v1016
      %v3387 = vunpack.c.l.b16 %v1017
      %v3388 = vunpack.c.h.b16 %v1017
      %v3389 = vunpack.c.l.b16 %v1018
      %v3390 = vunpack.c.h.b16 %v1018
      %v3391 = vunpack.c.l.b16 %v1019
      %v3392 = vunpack.c.h.b16 %v1019
      %v3393 = vunpack.c.l.b16 %v1020
      %v3394 = vunpack.c.h.b16 %v1020
      %v3395 = vunpack.c.l.b16 %v1021
      %v3396 = vunpack.c.h.b16 %v1021
      %v3397 = vunpack.c.l.b16 %v1022
      %v3398 = vunpack.c.h.b16 %v1022
      %v3399 = vunpack.c.l.b16 %v1023
      %v3400 = vunpack.c.h.b16 %v1023
      %v3401 = vunpack.c.l.b16 %v1024
      %v3402 = vunpack.c.h.b16 %v1024
      %v3403 = vunpack.c.l.b16 %v1025
      %v3404 = vunpack.c.h.b16 %v1025
      %v3405 = vunpack.c.l.b16 %v1026
      %v3406 = vunpack.c.h.b16 %v1026
      %v3407 = vunpack.c.l.b16 %v1027
      %v3408 = vunpack.c.h.b16 %v1027
      %v3409 = vunpack.c.l.b16 %v1028
      %v3410 = vunpack.c.h.b16 %v1028
      %v3411 = vunpack.c.l.b16 %v1029
      %v3412 = vunpack.c.h.b16 %v1029
      %v3413 = vunpack.c.l.b16 %v1030
      %v3414 = vunpack.c.h.b16 %v1030
      %v3415 = vunpack.c.l.b16 %v1031
      %v3416 = vunpack.c.h.b16 %v1031
      %v3417 = vunpack.c.l.b16 %v1032
      %v3418 = vunpack.c.h.b16 %v1032
      %v3419 = vunpack.c.l.b16 %v1033
      %v3420 = vunpack.c.h.b16 %v1033
      %v3421 = vunpack.c.l.b16 %v1034
      %v3422 = vunpack.c.h.b16 %v1034
      %v3423 = vunpack.c.l.b16 %v1035
      %v3424 = vunpack.c.h.b16 %v1035
      %v3425 = vunpack.c.l.b16 %v1036
      %v3426 = vunpack.c.h.b16 %v1036
      %v3427 = vunpack.c.l.b16 %v1037
      %v3428 = vunpack.c.h.b16 %v1037
      %v3429 = vunpack.c.l.b16 %v1038
      %v3430 = vunpack.c.h.b16 %v1038
      %v3431 = vunpack.c.l.b16 %v1039
      %v3432 = vunpack.c.h.b16 %v1039
      %v3433 = vunpack.c.l.b16 %v1040
      %v3434 = vunpack.c.h.b16 %v1040
      %v3435 = vunpack.c.l.b16 %v1041
      %v3436 = vunpack.c.h.b16 %v1041
      %v3437 = vunpack.c.l.b16 %v1042
      %v3438 = vunpack.c.h.b16 %v1042
      %v3439 = vunpack.c.l.b16 %v1043
      %v3440 = vunpack.c.h.b16 %v1043
      %v3441 = vunpack.c.l.b16 %v1044
      %v3442 = vunpack.c.h.b16 %v1044
      %v3443 = vunpack.c.l.b16 %v1045
      %v3444 = vunpack.c.h.b16 %v1045
      %v3445 = vunpack.c.l.b16 %v1046
      %v3446 = vunpack.c.h.b16 %v1046
      %v3447 = vunpack.c.l.b16 %v1047
      %v3448 = vunpack.c.h.b16 %v1047
      %v3449 = vunpack.c.l.b16 %v1048
      %v3450 = vunpack.c.h.b16 %v1048
      %v3451 = vunpack.c.l.b16 %v1049
      %v3452 = vunpack.c.h.b16 %v1049
      %v3453 = vunpack.c.l.b16 %v1050
      %v3454 = vunpack.c.h.b16 %v1050
      %v3455 = vunpack.c.l.b16 %v1051
      %v3456 = vunpack.c.h.b16 %v1051
      %v3457 = vunpack.c.l.b16 %v1052
      %v3458 = vunpack.c.h.b16 %v1052
      %v3459 = vunpack.c.l.b16 %v1053
      %v3460 = vunpack.c.h.b16 %v1053
      %v3461 = vunpack.c.l.b16 %v1054
      %v3462 = vunpack.c.h.b16 %v1054
      %v3463 = vunpack.c.l.b16 %v1055
      %v3464 = vunpack.c.h.b16 %v1055
      %v3465 = vunpack.c.l.b16 %v1056
      %v3466 = vunpack.c.h.b16 %v1056
      %v3467 = vunpack.c.l.b16 %v1057
      %v3468 = vunpack.c.h.b16 %v1057
      %v3469 = vunpack.c.l.b16 %v1058
      %v3470 = vunpack.c.h.b16 %v1058
      %v3471 = vunpack.c.l.b16 %v1059
      %v3472 = vunpack.c.h.b16 %v1059
      %v3473 = vunpack.c.l.b16 %v1060
      %v3474 = vunpack.c.h.b16 %v1060
      %v3475 = vunpack.c.l.b16 %v1061
      %v3476 = vunpack.c.h.b16 %v1061
      %v3477 = vunpack.c.l.b16 %v1062
      %v3478 = vunpack.c.h.b16 %v1062
      %v3479 = vunpack.c.l.b16 %v1063
      %v3480 = vunpack.c.h.b16 %v1063
      %v3481 = vunpack.c.l.b16 %v1064
      %v3482 = vunpack.c.h.b16 %v1064
      %v3483 = vunpack.c.l.b16 %v1065
      %v3484 = vunpack.c.h.b16 %v1065
      %v3485 = vunpack.c.l.b16 %v1066
      %v3486 = vunpack.c.h.b16 %v1066
      %v3487 = vunpack.c.l.b16 %v1067
      %v3488 = vunpack.c.h.b16 %v1067
      %v3489 = vunpack.c.l.b16 %v1068
      %v3490 = vunpack.c.h.b16 %v1068
      %v3491 = vunpack.c.l.b16 %v1069
      %v3492 = vunpack.c.h.b16 %v1069
      %v3493 = vunpack.c.l.b16 %v1070
      %v3494 = vunpack.c.h.b16 %v1070
      %v3495 = vunpack.c.l.b16 %v1071
      %v3496 = vunpack.c.h.b16 %v1071
      %v3497 = vunpack.c.l.b16 %v1072
      %v3498 = vunpack.c.h.b16 %v1072
      %v3499 = vunpack.c.l.b16 %v1073
      %v3500 = vunpack.c.h.b16 %v1073
      %v3501 = vunpack.c.l.b16 %v1074
      %v3502 = vunpack.c.h.b16 %v1074
      %v3503 = vunpack.c.l.b16 %v1075
      %v3504 = vunpack.c.h.b16 %v1075
      %v3505 = vunpack.c.l.b16 %v1076
      %v3506 = vunpack.c.h.b16 %v1076
      %v3507 = vunpack.c.l.b16 %v1077
      %v3508 = vunpack.c.h.b16 %v1077
      %v3509 = vunpack.c.l.b16 %v1078
      %v3510 = vunpack.c.h.b16 %v1078
      %v3511 = vunpack.c.l.b16 %v1079
      %v3512 = vunpack.c.h.b16 %v1079
      %v3513 = vunpack.c.l.b16 %v1080
      %v3514 = vunpack.c.h.b16 %v1080
      %v3515 = vunpack.c.l.b16 %v1081
      %v3516 = vunpack.c.h.b16 %v1081
      %v3517 = vunpack.c.l.b16 %v1082
      %v3518 = vunpack.c.h.b16 %v1082
      %v3519 = vunpack.c.l.b16 %v1083
      %v3520 = vunpack.c.h.b16 %v1083
      %v3521 = vunpack.c.l.b16 %v1084
      %v3522 = vunpack.c.h.b16 %v1084
      %v3523 = vunpack.c.l.b16 %v1085
      %v3524 = vunpack.c.h.b16 %v1085
      %v3525 = vunpack.c.l.b16 %v1086
      %v3526 = vunpack.c.h.b16 %v1086
      %v3527 = vunpack.c.l.b16 %v1087
      %v3528 = vunpack.c.h.b16 %v1087
      %v3529 = vunpack.c.l.b16 %v1088
      %v3530 = vunpack.c.h.b16 %v1088
      %v3531 = vunpack.c.l.b16 %v1089
      %v3532 = vunpack.c.h.b16 %v1089
      %v3533 = vunpack.c.l.b16 %v1090
      %v3534 = vunpack.c.h.b16 %v1090
      %v3535 = vunpack.c.l.b16 %v1091
      %v3536 = vunpack.c.h.b16 %v1091
      %v3537 = vunpack.c.l.b16 %v1092
      %v3538 = vunpack.c.h.b16 %v1092
      %v3539 = vunpack.c.l.b16 %v1093
      %v3540 = vunpack.c.h.b16 %v1093
      %v3541 = vunpack.c.l.b16 %v1094
      %v3542 = vunpack.c.h.b16 %v1094
      %v3543 = vunpack.c.l.b16 %v1095
      %v3544 = vunpack.c.h.b16 %v1095
      %v3545 = vunpack.c.l.b16 %v1096
      %v3546 = vunpack.c.h.b16 %v1096
      %v3547 = vunpack.c.l.b16 %v1097
      %v3548 = vunpack.c.h.b16 %v1097
      %v3549 = vunpack.c.l.b16 %v1098
      %v3550 = vunpack.c.h.b16 %v1098
      %v3551 = vunpack.c.l.b16 %v1099
      %v3552 = vunpack.c.h.b16 %v1099
      %v3553 = vunpack.c.l.b16 %v1100
      %v3554 = vunpack.c.h.b16 %v1100
      %v3555 = vunpack.c.l.b16 %v1101
      %v3556 = vunpack.c.h.b16 %v1101
      %v3557 = vunpack.c.l.b16 %v1102
      %v3558 = vunpack.c.h.b16 %v1102
      %v3559 = vunpack.c.l.b16 %v1103
      %v3560 = vunpack.c.h.b16 %v1103
      %v3561 = vunpack.c.l.b16 %v1104
      %v3562 = vunpack.c.h.b16 %v1104
      %v3563 = vunpack.c.l.b16 %v1105
      %v3564 = vunpack.c.h.b16 %v1105
      %v3565 = vunpack.c.l.b16 %v1106
      %v3566 = vunpack.c.h.b16 %v1106
      %v3567 = vunpack.c.l.b16 %v1107
      %v3568 = vunpack.c.h.b16 %v1107
      %v3569 = vunpack.c.l.b16 %v1108
      %v3570 = vunpack.c.h.b16 %v1108
      %v3571 = vunpack.c.l.b16 %v1109
      %v3572 = vunpack.c.h.b16 %v1109
      %v3573 = vunpack.c.l.b16 %v1110
      %v3574 = vunpack.c.h.b16 %v1110
      %v3575 = vunpack.c.l.b16 %v1111
      %v3576 = vunpack.c.h.b16 %v1111
      %v3577 = vunpack.c.l.b16 %v1112
      %v3578 = vunpack.c.h.b16 %v1112
      %v3579 = vunpack.c.l.b16 %v1113
      %v3580 = vunpack.c.h.b16 %v1113
      %v3581 = vunpack.c.l.b16 %v1114
      %v3582 = vunpack.c.h.b16 %v1114
      %v3583 = vpack.c.b16 %v1987, %v1983
      %v3584 = vpack.c.b16 %v1988, %v1984
      %v3585 = vpack.c.b16 %v1989, %v1985
      %v3586 = vpack.c.b16 %v1990, %v1986
      %v3587 = vpack.c.b16 %v1995, %v1991
      %v3588 = vpack.c.b16 %v1996, %v1992
      %v3589 = vpack.c.b16 %v1997, %v1993
      %v3590 = vpack.c.b16 %v1998, %v1994
      %v3591 = vpack.c.b16 %v2003, %v1999
      %v3592 = vpack.c.b16 %v2004, %v2000
      %v3593 = vpack.c.b16 %v2005, %v2001
      %v3594 = vpack.c.b16 %v2006, %v2002
      %v3595 = vpack.c.b16 %v2011, %v2007
      %v3596 = vpack.c.b16 %v2012, %v2008
      %v3597 = vpack.c.b16 %v2013, %v2009
      %v3598 = vpack.c.b16 %v2014, %v2010
      %v3599 = vpack.c.b16 %v2019, %v2015
      %v3600 = vpack.c.b16 %v2020, %v2016
      %v3601 = vpack.c.b16 %v2021, %v2017
      %v3602 = vpack.c.b16 %v2022, %v2018
      %v3603 = vpack.c.b16 %v2027, %v2023
      %v3604 = vpack.c.b16 %v2028, %v2024
      %v3605 = vpack.c.b16 %v2029, %v2025
      %v3606 = vpack.c.b16 %v2030, %v2026
      %v3607 = vpack.c.b16 %v2035, %v2031
      %v3608 = vpack.c.b16 %v2036, %v2032
      %v3609 = vpack.c.b16 %v2037, %v2033
      %v3610 = vpack.c.b16 %v2038, %v2034
      %v3611 = vpack.c.b16 %v2043, %v2039
      %v3612 = vpack.c.b16 %v2044, %v2040
      %v3613 = vpack.c.b16 %v2045, %v2041
      %v3614 = vpack.c.b16 %v2046, %v2042
      %v3615 = vpack.c.b16 %v2051, %v2047
      %v3616 = vpack.c.b16 %v2052, %v2048
      %v3617 = vpack.c.b16 %v2053, %v2049
      %v3618 = vpack.c.b16 %v2054, %v2050
      %v3619 = vpack.c.b16 %v2059, %v2055
      %v3620 = vpack.c.b16 %v2060, %v2056
      %v3621 = vpack.c.b16 %v2061, %v2057
      %v3622 = vpack.c.b16 %v2062, %v2058
      %v3623 = vpack.c.b16 %v2067, %v2063
      %v3624 = vpack.c.b16 %v2068, %v2064
      %v3625 = vpack.c.b16 %v2069, %v2065
      %v3626 = vpack.c.b16 %v2070, %v2066
      %v3627 = vpack.c.b16 %v2075, %v2071
      %v3628 = vpack.c.b16 %v2076, %v2072
      %v3629 = vpack.c.b16 %v2077, %v2073
      %v3630 = vpack.c.b16 %v2078, %v2074
      %v3631 = vpack.c.b16 %v2083, %v2079
      %v3632 = vpack.c.b16 %v2084, %v2080
      %v3633 = vpack.c.b16 %v2085, %v2081
      %v3634 = vpack.c.b16 %v2086, %v2082
      %v3635 = vpack.c.b16 %v2091, %v2087
      %v3636 = vpack.c.b16 %v2092, %v2088
      %v3637 = vpack.c.b16 %v2093, %v2089
      %v3638 = vpack.c.b16 %v2094, %v2090
      %v3639 = vpack.c.b16 %v2099, %v2095
      %v3640 = vpack.c.b16 %v2100, %v2096
      %v3641 = vpack.c.b16 %v2101, %v2097
      %v3642 = vpack.c.b16 %v2102, %v2098
      %v3643 = vpack.c.b16 %v2107, %v2103
      %v3644 = vpack.c.b16 %v2108, %v2104
      %v3645 = vpack.c.b16 %v2109, %v2105
      %v3646 = vpack.c.b16 %v2110, %v2106
      %v3647 = vpack.c.b16 %v2115, %v2111
      %v3648 = vpack.c.b16 %v2116, %v2112
      %v3649 = vpack.c.b16 %v2117, %v2113
      %v3650 = vpack.c.b16 %v2118, %v2114
      %v3651 = vpack.c.b16 %v2123, %v2119
      %v3652 = vpack.c.b16 %v2124, %v2120
      %v3653 = vpack.c.b16 %v2125, %v2121
      %v3654 = vpack.c.b16 %v2126, %v2122
      %v3655 = vpack.c.b16 %v2131, %v2127
      %v3656 = vpack.c.b16 %v2132, %v2128
      %v3657 = vpack.c.b16 %v2133, %v2129
      %v3658 = vpack.c.b16 %v2134, %v2130
      %v3659 = vpack.c.b16 %v2139, %v2135
      %v3660 = vpack.c.b16 %v2140, %v2136
      %v3661 = vpack.c.b16 %v2141, %v2137
      %v3662 = vpack.c.b16 %v2142, %v2138
      %v3663 = vpack.c.b16 %v2147, %v2143
      %v3664 = vpack.c.b16 %v2148, %v2144
      %v3665 = vpack.c.b16 %v2149, %v2145
      %v3666 = vpack.c.b16 %v2150, %v2146
      %v3667 = vpack.c.b16 %v2155, %v2151
      %v3668 = vpack.c.b16 %v2156, %v2152
      %v3669 = vpack.c.b16 %v2157, %v2153
      %v3670 = vpack.c.b16 %v2158, %v2154
      %v3671 = vpack.c.b16 %v2163, %v2159
      %v3672 = vpack.c.b16 %v2164, %v2160
      %v3673 = vpack.c.b16 %v2165, %v2161
      %v3674 = vpack.c.b16 %v2166, %v2162
      %v3675 = vpack.c.b16 %v2171, %v2167
      %v3676 = vpack.c.b16 %v2172, %v2168
      %v3677 = vpack.c.b16 %v2173, %v2169
      %v3678 = vpack.c.b16 %v2174, %v2170
      %v3679 = vpack.c.b16 %v2179, %v2175
      %v3680 = vpack.c.b16 %v2180, %v2176
      %v3681 = vpack.c.b16 %v2181, %v2177
      %v3682 = vpack.c.b16 %v2182, %v2178
      %v3683 = vpack.c.b16 %v2187, %v2183
      %v3684 = vpack.c.b16 %v2188, %v2184
      %v3685 = vpack.c.b16 %v2189, %v2185
      %v3686 = vpack.c.b16 %v2190, %v2186
      %v3687 = vpack.c.b16 %v2195, %v2191
      %v3688 = vpack.c.b16 %v2196, %v2192
      %v3689 = vpack.c.b16 %v2197, %v2193
      %v3690 = vpack.c.b16 %v2198, %v2194
      %v3691 = vpack.c.b16 %v2203, %v2199
      %v3692 = vpack.c.b16 %v2204, %v2200
      %v3693 = vpack.c.b16 %v2205, %v2201
      %v3694 = vpack.c.b16 %v2206, %v2202
      %v3695 = vpack.c.b16 %v2211, %v2207
      %v3696 = vpack.c.b16 %v2212, %v2208
      %v3697 = vpack.c.b16 %v2213, %v2209
      %v3698 = vpack.c.b16 %v2214, %v2210
      %v3699 = vpack.c.b16 %v2219, %v2215
      %v3700 = vpack.c.b16 %v2220, %v2216
      %v3701 = vpack.c.b16 %v2221, %v2217
      %v3702 = vpack.c.b16 %v2222, %v2218
      %v3703 = vpack.c.b16 %v2227, %v2223
      %v3704 = vpack.c.b16 %v2228, %v2224
      %v3705 = vpack.c.b16 %v2229, %v2225
      %v3706 = vpack.c.b16 %v2230, %v2226
      %v3707 = vpack.c.b16 %v2235, %v2231
      %v3708 = vpack.c.b16 %v2236, %v2232
      %v3709 = vpack.c.b16 %v2237, %v2233
      %v3710 = vpack.c.b16 %v2238, %v2234
      %v3711 = vpack.c.b16 %v2243, %v2239
      %v3712 = vpack.c.b16 %v2244, %v2240
      %v3713 = vpack.c.b16 %v2245, %v2241
      %v3714 = vpack.c.b16 %v2246, %v2242
      %v3715 = vpack.c.b16 %v2251, %v2247
      %v3716 = vpack.c.b16 %v2252, %v2248
      %v3717 = vpack.c.b16 %v2253, %v2249
      %v3718 = vpack.c.b16 %v2254, %v2250
      %v3719 = vpack.c.b16 %v2259, %v2255
      %v3720 = vpack.c.b16 %v2260, %v2256
      %v3721 = vpack.c.b16 %v2261, %v2257
      %v3722 = vpack.c.b16 %v2262, %v2258
      %v3723 = vpack.c.b16 %v2267, %v2263
      %v3724 = vpack.c.b16 %v2268, %v2264
      %v3725 = vpack.c.b16 %v2269, %v2265
      %v3726 = vpack.c.b16 %v2270, %v2266
      %v3727 = vpack.c.b16 %v2275, %v2271
      %v3728 = vpack.c.b16 %v2276, %v2272
      %v3729 = vpack.c.b16 %v2277, %v2273
      %v3730 = vpack.c.b16 %v2278, %v2274
      %v3731 = vpack.c.b16 %v2283, %v2279
      %v3732 = vpack.c.b16 %v2284, %v2280
      %v3733 = vpack.c.b16 %v2285, %v2281
      %v3734 = vpack.c.b16 %v2286, %v2282
      %v3735 = vpack.c.b16 %v2291, %v2287
      %v3736 = vpack.c.b16 %v2292, %v2288
      %v3737 = vpack.c.b16 %v2293, %v2289
      %v3738 = vpack.c.b16 %v2294, %v2290
      %v3739 = vpack.c.b16 %v2299, %v2295
      %v3740 = vpack.c.b16 %v2300, %v2296
      %v3741 = vpack.c.b16 %v2301, %v2297
      %v3742 = vpack.c.b16 %v2302, %v2298
      %v3743 = vpack.c.b16 %v2307, %v2303
      %v3744 = vpack.c.b16 %v2308, %v2304
      %v3745 = vpack.c.b16 %v2309, %v2305
      %v3746 = vpack.c.b16 %v2310, %v2306
      %v3747 = vpack.c.b16 %v2315, %v2311
      %v3748 = vpack.c.b16 %v2316, %v2312
      %v3749 = vpack.c.b16 %v2317, %v2313
      %v3750 = vpack.c.b16 %v2318, %v2314
      %v3751 = vpack.c.b16 %v2323, %v2319
      %v3752 = vpack.c.b16 %v2324, %v2320
      %v3753 = vpack.c.b16 %v2325, %v2321
      %v3754 = vpack.c.b16 %v2326, %v2322
      %v3755 = vpack.c.b16 %v2331, %v2327
      %v3756 = vpack.c.b16 %v2332, %v2328
      %v3757 = vpack.c.b16 %v2333, %v2329
      %v3758 = vpack.c.b16 %v2334, %v2330
      %v3759 = vpack.c.b16 %v2339, %v2335
      %v3760 = vpack.c.b16 %v2340, %v2336
      %v3761 = vpack.c.b16 %v2341, %v2337
      %v3762 = vpack.c.b16 %v2342, %v2338
      %v3763 = vpack.c.b16 %v2347, %v2343
      %v3764 = vpack.c.b16 %v2348, %v2344
      %v3765 = vpack.c.b16 %v2349, %v2345
      %v3766 = vpack.c.b16 %v2350, %v2346
      %v3767 = vpack.c.b16 %v2355, %v2351
      %v3768 = vpack.c.b16 %v2356, %v2352
      %v3769 = vpack.c.b16 %v2357, %v2353
      %v3770 = vpack.c.b16 %v2358, %v2354
      %v3771 = vpack.c.b16 %v2363, %v2359
      %v3772 = vpack.c.b16 %v2364, %v2360
      %v3773 = vpack.c.b16 %v2365, %v2361
      %v3774 = vpack.c.b16 %v2366, %v2362
      %v3775 = vpack.c.b16 %v2371, %v2367
      %v3776 = vpack.c.b16 %v2372, %v2368
      %v3777 = vpack.c.b16 %v2373, %v2369
      %v3778 = vpack.c.b16 %v2374, %v2370
      %v3779 = vpack.c.b16 %v2379, %v2375
      %v3780 = vpack.c.b16 %v2380, %v2376
      %v3781 = vpack.c.b16 %v2381, %v2377
      %v3782 = vpack.c.b16 %v2382, %v2378
      %v3783 = vpack.c.b16 %v2387, %v2383
      %v3784 = vpack.c.b16 %v2388, %v2384
      %v3785 = vpack.c.b16 %v2389, %v2385
      %v3786 = vpack.c.b16 %v2390, %v2386
      %v3787 = vpack.c.b16 %v2395, %v2391
      %v3788 = vpack.c.b16 %v2396, %v2392
      %v3789 = vpack.c.b16 %v2397, %v2393
      %v3790 = vpack.c.b16 %v2398, %v2394
      %v3791 = vpack.c.b16 %v2403, %v2399
      %v3792 = vpack.c.b16 %v2404, %v2400
      %v3793 = vpack.c.b16 %v2405, %v2401
      %v3794 = vpack.c.b16 %v2406, %v2402
      %v3795 = vpack.c.b16 %v2411, %v2407
      %v3796 = vpack.c.b16 %v2412, %v2408
      %v3797 = vpack.c.b16 %v2413, %v2409
      %v3798 = vpack.c.b16 %v2414, %v2410
      %v3799 = vpack.c.b16 %v2419, %v2415
      %v3800 = vpack.c.b16 %v2420, %v2416
      %v3801 = vpack.c.b16 %v2421, %v2417
      %v3802 = vpack.c.b16 %v2422, %v2418
      %v3803 = vpack.c.b16 %v2427, %v2423
      %v3804 = vpack.c.b16 %v2428, %v2424
      %v3805 = vpack.c.b16 %v2429, %v2425
      %v3806 = vpack.c.b16 %v2430, %v2426
      %v3807 = vpack.c.b16 %v2435, %v2431
      %v3808 = vpack.c.b16 %v2436, %v2432
      %v3809 = vpack.c.b16 %v2437, %v2433
      %v3810 = vpack.c.b16 %v2438, %v2434
      %v3811 = vpack.c.b16 %v2443, %v2439
      %v3812 = vpack.c.b16 %v2444, %v2440
      %v3813 = vpack.c.b16 %v2445, %v2441
      %v3814 = vpack.c.b16 %v2446, %v2442
      %v3815 = vpack.c.b16 %v2451, %v2447
      %v3816 = vpack.c.b16 %v2452, %v2448
      %v3817 = vpack.c.b16 %v2453, %v2449
      %v3818 = vpack.c.b16 %v2454, %v2450
      %v3819 = vpack.c.b16 %v2459, %v2455
      %v3820 = vpack.c.b16 %v2460, %v2456
      %v3821 = vpack.c.b16 %v2461, %v2457
      %v3822 = vpack.c.b16 %v2462, %v2458
      %v3823 = vpack.c.b16 %v2467, %v2463
      %v3824 = vpack.c.b16 %v2468, %v2464
      %v3825 = vpack.c.b16 %v2469, %v2465
      %v3826 = vpack.c.b16 %v2470, %v2466
      %v3827 = vpack.c.b16 %v2475, %v2471
      %v3828 = vpack.c.b16 %v2476, %v2472
      %v3829 = vpack.c.b16 %v2477, %v2473
      %v3830 = vpack.c.b16 %v2478, %v2474
      %v3831 = vpack.c.b16 %v2483, %v2479
      %v3832 = vpack.c.b16 %v2484, %v2480
      %v3833 = vpack.c.b16 %v2485, %v2481
      %v3834 = vpack.c.b16 %v2486, %v2482
      %v3835 = vpack.c.b16 %v2491, %v2487
      %v3836 = vpack.c.b16 %v2492, %v2488
      %v3837 = vpack.c.b16 %v2493, %v2489
      %v3838 = vpack.c.b16 %v2494, %v2490
      %v3839 = vpack.c.b16 %v2499, %v2495
      %v3840 = vpack.c.b16 %v2500, %v2496
      %v3841 = vpack.c.b16 %v2501, %v2497
      %v3842 = vpack.c.b16 %v2502, %v2498
      %v3843 = vpack.c.b16 %v2507, %v2503
      %v3844 = vpack.c.b16 %v2508, %v2504
      %v3845 = vpack.c.b16 %v2509, %v2505
      %v3846 = vpack.c.b16 %v2510, %v2506
      %v3847 = vpack.c.b16 %v2515, %v2511
      %v3848 = vpack.c.b16 %v2516, %v2512
      %v3849 = vpack.c.b16 %v2517, %v2513
      %v3850 = vpack.c.b16 %v2518, %v2514
      %v3851 = vpack.c.b16 %v2523, %v2519
      %v3852 = vpack.c.b16 %v2524, %v2520
      %v3853 = vpack.c.b16 %v2525, %v2521
      %v3854 = vpack.c.b16 %v2526, %v2522
      %v3855 = vpack.c.b16 %v2531, %v2527
      %v3856 = vpack.c.b16 %v2532, %v2528
      %v3857 = vpack.c.b16 %v2533, %v2529
      %v3858 = vpack.c.b16 %v2534, %v2530
      %v3859 = vpack.c.b16 %v2539, %v2535
      %v3860 = vpack.c.b16 %v2540, %v2536
      %v3861 = vpack.c.b16 %v2541, %v2537
      %v3862 = vpack.c.b16 %v2542, %v2538
      %v3863 = vpack.c.b16 %v2547, %v2543
      %v3864 = vpack.c.b16 %v2548, %v2544
      %v3865 = vpack.c.b16 %v2549, %v2545
      %v3866 = vpack.c.b16 %v2550, %v2546
      %v3867 = vpack.c.b16 %v2555, %v2551
      %v3868 = vpack.c.b16 %v2556, %v2552
      %v3869 = vpack.c.b16 %v2557, %v2553
      %v3870 = vpack.c.b16 %v2558, %v2554
      %v3871 = vpack.c.b16 %v2563, %v2559
      %v3872 = vpack.c.b16 %v2564, %v2560
      %v3873 = vpack.c.b16 %v2565, %v2561
      %v3874 = vpack.c.b16 %v2566, %v2562
      %v3875 = vpack.c.b16 %v2571, %v2567
      %v3876 = vpack.c.b16 %v2572, %v2568
      %v3877 = vpack.c.b16 %v2573, %v2569
      %v3878 = vpack.c.b16 %v2574, %v2570
      %v3879 = vpack.c.b16 %v2579, %v2575
      %v3880 = vpack.c.b16 %v2580, %v2576
      %v3881 = vpack.c.b16 %v2581, %v2577
      %v3882 = vpack.c.b16 %v2582, %v2578
      %v3883 = vpack.c.b16 %v2587, %v2583
      %v3884 = vpack.c.b16 %v2588, %v2584
      %v3885 = vpack.c.b16 %v2589, %v2585
      %v3886 = vpack.c.b16 %v2590, %v2586
      %v3887 = vpack.c.b16 %v2595, %v2591
      %v3888 = vpack.c.b16 %v2596, %v2592
      %v3889 = vpack.c.b16 %v2597, %v2593
      %v3890 = vpack.c.b16 %v2598, %v2594
      %v3891 = vpack.c.b16 %v2603, %v2599
      %v3892 = vpack.c.b16 %v2604, %v2600
      %v3893 = vpack.c.b16 %v2605, %v2601
      %v3894 = vpack.c.b16 %v2606, %v2602
      %v3895 = vpack.c.b16 %v2611, %v2607
      %v3896 = vpack.c.b16 %v2612, %v2608
      %v3897 = vpack.c.b16 %v2613, %v2609
      %v3898 = vpack.c.b16 %v2614, %v2610
      %v3899 = vpack.c.b16 %v2619, %v2615
      %v3900 = vpack.c.b16 %v2620, %v2616
      %v3901 = vpack.c.b16 %v2621, %v2617
      %v3902 = vpack.c.b16 %v2622, %v2618
      %v3903 = vpack.c.b16 %v2627, %v2623
      %v3904 = vpack.c.b16 %v2628, %v2624
      %v3905 = vpack.c.b16 %v2629, %v2625
      %v3906 = vpack.c.b16 %v2630, %v2626
      %v3907 = vpack.c.b16 %v2635, %v2631
      %v3908 = vpack.c.b16 %v2636, %v2632
      %v3909 = vpack.c.b16 %v2637, %v2633
      %v3910 = vpack.c.b16 %v2638, %v2634
      %v3911 = vpack.c.b16 %v2643, %v2639
      %v3912 = vpack.c.b16 %v2644, %v2640
      %v3913 = vpack.c.b16 %v2645, %v2641
      %v3914 = vpack.c.b16 %v2646, %v2642
      %v3915 = vpack.c.b16 %v2651, %v2647
      %v3916 = vpack.c.b16 %v2652, %v2648
      %v3917 = vpack.c.b16 %v2653, %v2649
      %v3918 = vpack.c.b16 %v2654, %v2650
      %v3919 = vpack.c.b16 %v2659, %v2655
      %v3920 = vpack.c.b16 %v2660, %v2656
      %v3921 = vpack.c.b16 %v2661, %v2657
      %v3922 = vpack.c.b16 %v2662, %v2658
      %v3923 = vpack.c.b16 %v2667, %v2663
      %v3924 = vpack.c.b16 %v2668, %v2664
      %v3925 = vpack.c.b16 %v2669, %v2665
      %v3926 = vpack.c.b16 %v2670, %v2666
      %v3927 = vpack.c.b16 %v2675, %v2671
      %v3928 = vpack.c.b16 %v2676, %v2672
      %v3929 = vpack.c.b16 %v2677, %v2673
      %v3930 = vpack.c.b16 %v2678, %v2674
      %v3931 = vpack.c.b16 %v2683, %v2679
      %v3932 = vpack.c.b16 %v2684, %v2680
      %v3933 = vpack.c.b16 %v2685, %v2681
      %v3934 = vpack.c.b16 %v2686, %v2682
      %v3935 = vpack.c.b16 %v2691, %v2687
      %v3936 = vpack.c.b16 %v2692, %v2688
      %v3937 = vpack.c.b16 %v2693, %v2689
      %v3938 = vpack.c.b16 %v2694, %v2690
      %v3939 = vpack.c.b16 %v2699, %v2695
      %v3940 = vpack.c.b16 %v2700, %v2696
      %v3941 = vpack.c.b16 %v2701, %v2697
      %v3942 = vpack.c.b16 %v2702, %v2698
      %v3943 = vpack.c.b16 %v2707, %v2703
      %v3944 = vpack.c.b16 %v2708, %v2704
      %v3945 = vpack.c.b16 %v2709, %v2705
      %v3946 = vpack.c.b16 %v2710, %v2706
      %v3947 = vpack.c.b16 %v2715, %v2711
      %v3948 = vpack.c.b16 %v2716, %v2712
      %v3949 = vpack.c.b16 %v2717, %v2713
      %v3950 = vpack.c.b16 %v2718, %v2714
      %v3951 = vpack.c.b16 %v2723, %v2719
      %v3952 = vpack.c.b16 %v2724, %v2720
      %v3953 = vpack.c.b16 %v2725, %v2721
      %v3954 = vpack.c.b16 %v2726, %v2722
      %v3955 = vpack.c.b16 %v2731, %v2727
      %v3956 = vpack.c.b16 %v2732, %v2728
      %v3957 = vpack.c.b16 %v2733, %v2729
      %v3958 = vpack.c.b16 %v2734, %v2730
      %v3959 = vpack.c.b16 %v2739, %v2735
      %v3960 = vpack.c.b16 %v2740, %v2736
      %v3961 = vpack.c.b16 %v2741, %v2737
      %v3962 = vpack.c.b16 %v2742, %v2738
      %v3963 = vpack.c.b16 %v2747, %v2743
      %v3964 = vpack.c.b16 %v2748, %v2744
      %v3965 = vpack.c.b16 %v2749, %v2745
      %v3966 = vpack.c.b16 %v2750, %v2746
      %v3967 = vpack.c.b16 %v2755, %v2751
      %v3968 = vpack.c.b16 %v2756, %v2752
      %v3969 = vpack.c.b16 %v2757, %v2753
      %v3970 = vpack.c.b16 %v2758, %v2754
      %v3971 = vpack.c.b16 %v2763, %v2759
      %v3972 = vpack.c.b16 %v2764, %v2760
      %v3973 = vpack.c.b16 %v2765, %v2761
      %v3974 = vpack.c.b16 %v2766, %v2762
      %v3975 = vpack.c.b16 %v2771, %v2767
      %v3976 = vpack.c.b16 %v2772, %v2768
      %v3977 = vpack.c.b16 %v2773, %v2769
      %v3978 = vpack.c.b16 %v2774, %v2770
      %v3979 = vpack.c.b16 %v2779, %v2775
      %v3980 = vpack.c.b16 %v2780, %v2776
      %v3981 = vpack.c.b16 %v2781, %v2777
      %v3982 = vpack.c.b16 %v2782, %v2778
      %v3983 = vpack.c.b16 %v2787, %v2783
      %v3984 = vpack.c.b16 %v2788, %v2784
      %v3985 = vpack.c.b16 %v2789, %v2785
      %v3986 = vpack.c.b16 %v2790, %v2786
      %v3987 = vpack.c.b16 %v2795, %v2791
      %v3988 = vpack.c.b16 %v2796, %v2792
      %v3989 = vpack.c.b16 %v2797, %v2793
      %v3990 = vpack.c.b16 %v2798, %v2794
      %v3991 = vpack.c.b16 %v2803, %v2799
      %v3992 = vpack.c.b16 %v2804, %v2800
      %v3993 = vpack.c.b16 %v2805, %v2801
      %v3994 = vpack.c.b16 %v2806, %v2802
      %v3995 = vpack.c.b16 %v2811, %v2807
      %v3996 = vpack.c.b16 %v2812, %v2808
      %v3997 = vpack.c.b16 %v2813, %v2809
      %v3998 = vpack.c.b16 %v2814, %v2810
      %v3999 = vpack.c.b16 %v2819, %v2815
      %v4000 = vpack.c.b16 %v2820, %v2816
      %v4001 = vpack.c.b16 %v2821, %v2817
      %v4002 = vpack.c.b16 %v2822, %v2818
      %v4003 = vpack.c.b16 %v2827, %v2823
      %v4004 = vpack.c.b16 %v2828, %v2824
      %v4005 = vpack.c.b16 %v2829, %v2825
      %v4006 = vpack.c.b16 %v2830, %v2826
      %v4007 = vpack.c.b16 %v2835, %v2831
      %v4008 = vpack.c.b16 %v2836, %v2832
      %v4009 = vpack.c.b16 %v2837, %v2833
      %v4010 = vpack.c.b16 %v2838, %v2834
      %v4011 = vpack.c.b16 %v2843, %v2839
      %v4012 = vpack.c.b16 %v2844, %v2840
      %v4013 = vpack.c.b16 %v2845, %v2841
      %v4014 = vpack.c.b16 %v2846, %v2842
      %v4015 = vpack.c.b16 %v2851, %v2847
      %v4016 = vpack.c.b16 %v2852, %v2848
      %v4017 = vpack.c.b16 %v2853, %v2849
      %v4018 = vpack.c.b16 %v2854, %v2850
      %v4019 = vpack.c.b16 %v2859, %v2855
      %v4020 = vpack.c.b16 %v2860, %v2856
      %v4021 = vpack.c.b16 %v2861, %v2857
      %v4022 = vpack.c.b16 %v2862, %v2858
      %v4023 = vpack.c.b16 %v2867, %v2863
      %v4024 = vpack.c.b16 %v2868, %v2864
      %v4025 = vpack.c.b16 %v2869, %v2865
      %v4026 = vpack.c.b16 %v2870, %v2866
      %v4027 = vpack.c.b16 %v2875, %v2871
      %v4028 = vpack.c.b16 %v2876, %v2872
      %v4029 = vpack.c.b16 %v2877, %v2873
      %v4030 = vpack.c.b16 %v2878, %v2874
      %v4031 = vpack.c.b16 %v2883, %v2879
      %v4032 = vpack.c.b16 %v2884, %v2880
      %v4033 = vpack.c.b16 %v2885, %v2881
      %v4034 = vpack.c.b16 %v2886, %v2882
      %v4035 = vpack.c.b16 %v2891, %v2887
      %v4036 = vpack.c.b16 %v2892, %v2888
      %v4037 = vpack.c.b16 %v2893, %v2889
      %v4038 = vpack.c.b16 %v2894, %v2890
      %v4039 = vpack.c.b16 %v2899, %v2895
      %v4040 = vpack.c.b16 %v2900, %v2896
      %v4041 = vpack.c.b16 %v2901, %v2897
      %v4042 = vpack.c.b16 %v2902, %v2898
      %v4043 = vpack.c.b16 %v2907, %v2903
      %v4044 = vpack.c.b16 %v2908, %v2904
      %v4045 = vpack.c.b16 %v2909, %v2905
      %v4046 = vpack.c.b16 %v2910, %v2906
      %v4047 = vpack.c.b16 %v2915, %v2911
      %v4048 = vpack.c.b16 %v2916, %v2912
      %v4049 = vpack.c.b16 %v2917, %v2913
      %v4050 = vpack.c.b16 %v2918, %v2914
      %v4051 = vpack.c.b16 %v2923, %v2919
      %v4052 = vpack.c.b16 %v2924, %v2920
      %v4053 = vpack.c.b16 %v2925, %v2921
      %v4054 = vpack.c.b16 %v2926, %v2922
      %v4055 = vpack.c.b16 %v2931, %v2927
      %v4056 = vpack.c.b16 %v2932, %v2928
      %v4057 = vpack.c.b16 %v2933, %v2929
      %v4058 = vpack.c.b16 %v2934, %v2930
      %v4059 = vpack.c.b16 %v2939, %v2935
      %v4060 = vpack.c.b16 %v2940, %v2936
      %v4061 = vpack.c.b16 %v2941, %v2937
      %v4062 = vpack.c.b16 %v2942, %v2938
      %v4063 = vpack.c.b16 %v2947, %v2943
      %v4064 = vpack.c.b16 %v2948, %v2944
      %v4065 = vpack.c.b16 %v2949, %v2945
      %v4066 = vpack.c.b16 %v2950, %v2946
      %v4067 = vpack.c.b16 %v2955, %v2951
      %v4068 = vpack.c.b16 %v2956, %v2952
      %v4069 = vpack.c.b16 %v2957, %v2953
      %v4070 = vpack.c.b16 %v2958, %v2954
      %v4071 = vpack.c.b16 %v2963, %v2959
      %v4072 = vpack.c.b16 %v2964, %v2960
      %v4073 = vpack.c.b16 %v2965, %v2961
      %v4074 = vpack.c.b16 %v2966, %v2962
      %v4075 = vpack.c.b16 %v2971, %v2967
      %v4076 = vpack.c.b16 %v2972, %v2968
      %v4077 = vpack.c.b16 %v2973, %v2969
      %v4078 = vpack.c.b16 %v2974, %v2970
      %v4079 = vpack.c.b16 %v2979, %v2975
      %v4080 = vpack.c.b16 %v2980, %v2976
      %v4081 = vpack.c.b16 %v2981, %v2977
      %v4082 = vpack.c.b16 %v2982, %v2978
      %v4083 = vpack.c.b16 %v2987, %v2983
      %v4084 = vpack.c.b16 %v2988, %v2984
      %v4085 = vpack.c.b16 %v2989, %v2985
      %v4086 = vpack.c.b16 %v2990, %v2986
      %v4087 = vpack.c.b16 %v2995, %v2991
      %v4088 = vpack.c.b16 %v2996, %v2992
      %v4089 = vpack.c.b16 %v2997, %v2993
      %v4090 = vpack.c.b16 %v2998, %v2994
      %v4091 = vpack.c.b16 %v3003, %v2999
      %v4092 = vpack.c.b16 %v3004, %v3000
      %v4093 = vpack.c.b16 %v3005, %v3001
      %v4094 = vpack.c.b16 %v3006, %v3002
      %v4095 = vpack.c.b16 %v3011, %v3007
      %v4096 = vpack.c.b16 %v3012, %v3008
      %v4097 = vpack.c.b16 %v3013, %v3009
      %v4098 = vpack.c.b16 %v3014, %v3010
      %v4099 = vpack.c.b16 %v3019, %v3015
      %v4100 = vpack.c.b16 %v3020, %v3016
      %v4101 = vpack.c.b16 %v3021, %v3017
      %v4102 = vpack.c.b16 %v3022, %v3018
      %v4103 = vpack.c.b16 %v3027, %v3023
      %v4104 = vpack.c.b16 %v3028, %v3024
      %v4105 = vpack.c.b16 %v3029, %v3025
      %v4106 = vpack.c.b16 %v3030, %v3026
      %v4107 = vpack.c.b16 %v3035, %v3031
      %v4108 = vpack.c.b16 %v3036, %v3032
      %v4109 = vpack.c.b16 %v3037, %v3033
      %v4110 = vpack.c.b16 %v3038, %v3034
      %v4111 = vpack.c.b16 %v3043, %v3039
      %v4112 = vpack.c.b16 %v3044, %v3040
      %v4113 = vpack.c.b16 %v3045, %v3041
      %v4114 = vpack.c.b16 %v3046, %v3042
      %v4115 = vpack.c.b16 %v3051, %v3047
      %v4116 = vpack.c.b16 %v3052, %v3048
      %v4117 = vpack.c.b16 %v3053, %v3049
      %v4118 = vpack.c.b16 %v3054, %v3050
      %v4119 = vpack.c.b16 %v3059, %v3055
      %v4120 = vpack.c.b16 %v3060, %v3056
      %v4121 = vpack.c.b16 %v3061, %v3057
      %v4122 = vpack.c.b16 %v3062, %v3058
      %v4123 = vpack.c.b16 %v3067, %v3063
      %v4124 = vpack.c.b16 %v3068, %v3064
      %v4125 = vpack.c.b16 %v3069, %v3065
      %v4126 = vpack.c.b16 %v3070, %v3066
      %v4127 = vpack.c.b16 %v3075, %v3071
      %v4128 = vpack.c.b16 %v3076, %v3072
      %v4129 = vpack.c.b16 %v3077, %v3073
      %v4130 = vpack.c.b16 %v3078, %v3074
      %v4131 = vpack.c.b16 %v3083, %v3079
      %v4132 = vpack.c.b16 %v3084, %v3080
      %v4133 = vpack.c.b16 %v3085, %v3081
      %v4134 = vpack.c.b16 %v3086, %v3082
      %v4135 = vpack.c.b16 %v3091, %v3087
      %v4136 = vpack.c.b16 %v3092, %v3088
      %v4137 = vpack.c.b16 %v3093, %v3089
      %v4138 = vpack.c.b16 %v3094, %v3090
      %v4139 = vpack.c.b16 %v3099, %v3095
      %v4140 = vpack.c.b16 %v3100, %v3096
      %v4141 = vpack.c.b16 %v3101, %v3097
      %v4142 = vpack.c.b16 %v3102, %v3098
      %v4143 = vpack.c.b16 %v3107, %v3103
      %v4144 = vpack.c.b16 %v3108, %v3104
      %v4145 = vpack.c.b16 %v3109, %v3105
      %v4146 = vpack.c.b16 %v3110, %v3106
      %v4147 = vpack.c.b16 %v3115, %v3111
      %v4148 = vpack.c.b16 %v3116, %v3112
      %v4149 = vpack.c.b16 %v3117, %v3113
      %v4150 = vpack.c.b16 %v3118, %v3114
      %v4151 = vpack.c.b16 %v3123, %v3119
      %v4152 = vpack.c.b16 %v3124, %v3120
      %v4153 = vpack.c.b16 %v3125, %v3121
      %v4154 = vpack.c.b16 %v3126, %v3122
      %v4155 = vpack.c.b16 %v3131, %v3127
      %v4156 = vpack.c.b16 %v3132, %v3128
      %v4157 = vpack.c.b16 %v3133, %v3129
      %v4158 = vpack.c.b16 %v3134, %v3130
      %v4159 = vpack.c.b16 %v3139, %v3135
      %v4160 = vpack.c.b16 %v3140, %v3136
      %v4161 = vpack.c.b16 %v3141, %v3137
      %v4162 = vpack.c.b16 %v3142, %v3138
      %v4163 = vpack.c.b16 %v3147, %v3143
      %v4164 = vpack.c.b16 %v3148, %v3144
      %v4165 = vpack.c.b16 %v3149, %v3145
      %v4166 = vpack.c.b16 %v3150, %v3146
      %v4167 = vpack.c.b16 %v3155, %v3151
      %v4168 = vpack.c.b16 %v3156, %v3152
      %v4169 = vpack.c.b16 %v3157, %v3153
      %v4170 = vpack.c.b16 %v3158, %v3154
      %v4171 = vpack.c.b16 %v3163, %v3159
      %v4172 = vpack.c.b16 %v3164, %v3160
      %v4173 = vpack.c.b16 %v3165, %v3161
      %v4174 = vpack.c.b16 %v3166, %v3162
      %v4175 = vpack.c.b16 %v3171, %v3167
      %v4176 = vpack.c.b16 %v3172, %v3168
      %v4177 = vpack.c.b16 %v3173, %v3169
      %v4178 = vpack.c.b16 %v3174, %v3170
      %v4179 = vpack.c.b16 %v3179, %v3175
      %v4180 = vpack.c.b16 %v3180, %v3176
      %v4181 = vpack.c.b16 %v3181, %v3177
      %v4182 = vpack.c.b16 %v3182, %v3178
      %v4183 = vpack.c.b16 %v3187, %v3183
      %v4184 = vpack.c.b16 %v3188, %v3184
      %v4185 = vpack.c.b16 %v3189, %v3185
      %v4186 = vpack.c.b16 %v3190, %v3186
      %v4187 = vpack.c.b16 %v3195, %v3191
      %v4188 = vpack.c.b16 %v3196, %v3192
      %v4189 = vpack.c.b16 %v3197, %v3193
      %v4190 = vpack.c.b16 %v3198, %v3194
      %v4191 = vpack.c.b16 %v3203, %v3199
      %v4192 = vpack.c.b16 %v3204, %v3200
      %v4193 = vpack.c.b16 %v3205, %v3201
      %v4194 = vpack.c.b16 %v3206, %v3202
      %v4195 = vpack.c.b16 %v3211, %v3207
      %v4196 = vpack.c.b16 %v3212, %v3208
      %v4197 = vpack.c.b16 %v3213, %v3209
      %v4198 = vpack.c.b16 %v3214, %v3210
      %v4199 = vpack.c.b16 %v3219, %v3215
      %v4200 = vpack.c.b16 %v3220, %v3216
      %v4201 = vpack.c.b16 %v3221, %v3217
      %v4202 = vpack.c.b16 %v3222, %v3218
      %v4203 = vpack.c.b16 %v3227, %v3223
      %v4204 = vpack.c.b16 %v3228, %v3224
      %v4205 = vpack.c.b16 %v3229, %v3225
      %v4206 = vpack.c.b16 %v3230, %v3226
      %v4207 = vpack.c.b16 %v3235, %v3231
      %v4208 = vpack.c.b16 %v3236, %v3232
      %v4209 = vpack.c.b16 %v3237, %v3233
      %v4210 = vpack.c.b16 %v3238, %v3234
      %v4211 = vpack.c.b16 %v3243, %v3239
      %v4212 = vpack.c.b16 %v3244, %v3240
      %v4213 = vpack.c.b16 %v3245, %v3241
      %v4214 = vpack.c.b16 %v3246, %v3242
      %v4215 = vpack.c.b16 %v3251, %v3247
      %v4216 = vpack.c.b16 %v3252, %v3248
      %v4217 = vpack.c.b16 %v3253, %v3249
      %v4218 = vpack.c.b16 %v3254, %v3250
      %v4219 = vpack.c.b16 %v3259, %v3255
      %v4220 = vpack.c.b16 %v3260, %v3256
      %v4221 = vpack.c.b16 %v3261, %v3257
      %v4222 = vpack.c.b16 %v3262, %v3258
      %v4223 = vpack.c.b16 %v3267, %v3263
      %v4224 = vpack.c.b16 %v3268, %v3264
      %v4225 = vpack.c.b16 %v3269, %v3265
      %v4226 = vpack.c.b16 %v3270, %v3266
      %v4227 = vpack.c.b16 %v3275, %v3271
      %v4228 = vpack.c.b16 %v3276, %v3272
      %v4229 = vpack.c.b16 %v3277, %v3273
      %v4230 = vpack.c.b16 %v3278, %v3274
      %v4231 = vpack.c.b16 %v3283, %v3279
      %v4232 = vpack.c.b16 %v3284, %v3280
      %v4233 = vpack.c.b16 %v3285, %v3281
      %v4234 = vpack.c.b16 %v3286, %v3282
      %v4235 = vpack.c.b16 %v3291, %v3287
      %v4236 = vpack.c.b16 %v3292, %v3288
      %v4237 = vpack.c.b16 %v3293, %v3289
      %v4238 = vpack.c.b16 %v3294, %v3290
      %v4239 = vpack.c.b16 %v3299, %v3295
      %v4240 = vpack.c.b16 %v3300, %v3296
      %v4241 = vpack.c.b16 %v3301, %v3297
      %v4242 = vpack.c.b16 %v3302, %v3298
      %v4243 = vpack.c.b16 %v3307, %v3303
      %v4244 = vpack.c.b16 %v3308, %v3304
      %v4245 = vpack.c.b16 %v3309, %v3305
      %v4246 = vpack.c.b16 %v3310, %v3306
      %v4247 = vpack.c.b16 %v3315, %v3311
      %v4248 = vpack.c.b16 %v3316, %v3312
      %v4249 = vpack.c.b16 %v3317, %v3313
      %v4250 = vpack.c.b16 %v3318, %v3314
      %v4251 = vpack.c.b16 %v3323, %v3319
      %v4252 = vpack.c.b16 %v3324, %v3320
      %v4253 = vpack.c.b16 %v3325, %v3321
      %v4254 = vpack.c.b16 %v3326, %v3322
      %v4255 = vpack.c.b16 %v3331, %v3327
      %v4256 = vpack.c.b16 %v3332, %v3328
      %v4257 = vpack.c.b16 %v3333, %v3329
      %v4258 = vpack.c.b16 %v3334, %v3330
      %v4259 = vpack.c.b16 %v3339, %v3335
      %v4260 = vpack.c.b16 %v3340, %v3336
      %v4261 = vpack.c.b16 %v3341, %v3337
      %v4262 = vpack.c.b16 %v3342, %v3338
      %v4263 = vpack.c.b16 %v3347, %v3343
      %v4264 = vpack.c.b16 %v3348, %v3344
      %v4265 = vpack.c.b16 %v3349, %v3345
      %v4266 = vpack.c.b16 %v3350, %v3346
      %v4267 = vpack.c.b16 %v3355, %v3351
      %v4268 = vpack.c.b16 %v3356, %v3352
      %v4269 = vpack.c.b16 %v3357, %v3353
      %v4270 = vpack.c.b16 %v3358, %v3354
      %v4271 = vpack.c.b16 %v3363, %v3359
      %v4272 = vpack.c.b16 %v3364, %v3360
      %v4273 = vpack.c.b16 %v3365, %v3361
      %v4274 = vpack.c.b16 %v3366, %v3362
      %v4275 = vpack.c.b16 %v3371, %v3367
      %v4276 = vpack.c.b16 %v3372, %v3368
      %v4277 = vpack.c.b16 %v3373, %v3369
      %v4278 = vpack.c.b16 %v3374, %v3370
      %v4279 = vpack.c.b16 %v3379, %v3375
      %v4280 = vpack.c.b16 %v3380, %v3376
      %v4281 = vpack.c.b16 %v3381, %v3377
      %v4282 = vpack.c.b16 %v3382, %v3378
      %v4283 = vpack.c.b16 %v3387, %v3383
      %v4284 = vpack.c.b16 %v3388, %v3384
      %v4285 = vpack.c.b16 %v3389, %v3385
      %v4286 = vpack.c.b16 %v3390, %v3386
      %v4287 = vpack.c.b16 %v3395, %v3391
      %v4288 = vpack.c.b16 %v3396, %v3392
      %v4289 = vpack.c.b16 %v3397, %v3393
      %v4290 = vpack.c.b16 %v3398, %v3394
      %v4291 = vpack.c.b16 %v3403, %v3399
      %v4292 = vpack.c.b16 %v3404, %v3400
      %v4293 = vpack.c.b16 %v3405, %v3401
      %v4294 = vpack.c.b16 %v3406, %v3402
      %v4295 = vpack.c.b16 %v3411, %v3407
      %v4296 = vpack.c.b16 %v3412, %v3408
      %v4297 = vpack.c.b16 %v3413, %v3409
      %v4298 = vpack.c.b16 %v3414, %v3410
      %v4299 = vpack.c.b16 %v3419, %v3415
      %v4300 = vpack.c.b16 %v3420, %v3416
      %v4301 = vpack.c.b16 %v3421, %v3417
      %v4302 = vpack.c.b16 %v3422, %v3418
      %v4303 = vpack.c.b16 %v3427, %v3423
      %v4304 = vpack.c.b16 %v3428, %v3424
      %v4305 = vpack.c.b16 %v3429, %v3425
      %v4306 = vpack.c.b16 %v3430, %v3426
      %v4307 = vpack.c.b16 %v3435, %v3431
      %v4308 = vpack.c.b16 %v3436, %v3432
      %v4309 = vpack.c.b16 %v3437, %v3433
      %v4310 = vpack.c.b16 %v3438, %v3434
      %v4311 = vpack.c.b16 %v3443, %v3439
      %v4312 = vpack.c.b16 %v3444, %v3440
      %v4313 = vpack.c.b16 %v3445, %v3441
      %v4314 = vpack.c.b16 %v3446, %v3442
      %v4315 = vpack.c.b16 %v3451, %v3447
      %v4316 = vpack.c.b16 %v3452, %v3448
      %v4317 = vpack.c.b16 %v3453, %v3449
      %v4318 = vpack.c.b16 %v3454, %v3450
      %v4319 = vpack.c.b16 %v3459, %v3455
      %v4320 = vpack.c.b16 %v3460, %v3456
      %v4321 = vpack.c.b16 %v3461, %v3457
      %v4322 = vpack.c.b16 %v3462, %v3458
      %v4323 = vpack.c.b16 %v3467, %v3463
      %v4324 = vpack.c.b16 %v3468, %v3464
      %v4325 = vpack.c.b16 %v3469, %v3465
      %v4326 = vpack.c.b16 %v3470, %v3466
      %v4327 = vpack.c.b16 %v3475, %v3471
      %v4328 = vpack.c.b16 %v3476, %v3472
      %v4329 = vpack.c.b16 %v3477, %v3473
      %v4330 = vpack.c.b16 %v3478, %v3474
      %v4331 = vpack.c.b16 %v3483, %v3479
      %v4332 = vpack.c.b16 %v3484, %v3480
      %v4333 = vpack.c.b16 %v3485, %v3481
      %v4334 = vpack.c.b16 %v3486, %v3482
      %v4335 = vpack.c.b16 %v3491, %v3487
      %v4336 = vpack.c.b16 %v3492, %v3488
      %v4337 = vpack.c.b16 %v3493, %v3489
      %v4338 = vpack.c.b16 %v3494, %v3490
      %v4339 = vpack.c.b16 %v3499, %v3495
      %v4340 = vpack.c.b16 %v3500, %v3496
      %v4341 = vpack.c.b16 %v3501, %v3497
      %v4342 = vpack.c.b16 %v3502, %v3498
      %v4343 = vpack.c.b16 %v3507, %v3503
      %v4344 = vpack.c.b16 %v3508, %v3504
      %v4345 = vpack.c.b16 %v3509, %v3505
      %v4346 = vpack.c.b16 %v3510, %v3506
      %v4347 = vpack.c.b16 %v3515, %v3511
      %v4348 = vpack.c.b16 %v3516, %v3512
      %v4349 = vpack.c.b16 %v3517, %v3513
      %v4350 = vpack.c.b16 %v3518, %v3514
      %v4351 = vpack.c.b16 %v3523, %v3519
      %v4352 = vpack.c.b16 %v3524, %v3520
      %v4353 = vpack.c.b16 %v3525, %v3521
      %v4354 = vpack.c.b16 %v3526, %v3522
      %v4355 = vpack.c.b16 %v3531, %v3527
      %v4356 = vpack.c.b16 %v3532, %v3528
      %v4357 = vpack.c.b16 %v3533, %v3529
      %v4358 = vpack.c.b16 %v3534, %v3530
      %v4359 = vpack.c.b16 %v3539, %v3535
      %v4360 = vpack.c.b16 %v3540, %v3536
      %v4361 = vpack.c.b16 %v3541, %v3537
      %v4362 = vpack.c.b16 %v3542, %v3538
      %v4363 = vpack.c.b16 %v3547, %v3543
      %v4364 = vpack.c.b16 %v3548, %v3544
      %v4365 = vpack.c.b16 %v3549, %v3545
      %v4366 = vpack.c.b16 %v3550, %v3546
      %v4367 = vpack.c.b16 %v3555, %v3551
      %v4368 = vpack.c.b16 %v3556, %v3552
      %v4369 = vpack.c.b16 %v3557, %v3553
      %v4370 = vpack.c.b16 %v3558, %v3554
      %v4371 = vpack.c.b16 %v3563, %v3559
      %v4372 = vpack.c.b16 %v3564, %v3560
      %v4373 = vpack.c.b16 %v3565, %v3561
      %v4374 = vpack.c.b16 %v3566, %v3562
      %v4375 = vpack.c.b16 %v3571, %v3567
      %v4376 = vpack.c.b16 %v3572, %v3568
      %v4377 = vpack.c.b16 %v3573, %v3569
      %v4378 = vpack.c.b16 %v3574, %v3570
      %v4379 = vpack.c.b16 %v3579, %v3575
      %v4380 = vpack.c.b16 %v3580, %v3576
      %v4381 = vpack.c.b16 %v3581, %v3577
      %v4382 = vpack.c.b16 %v3582, %v3578
      %5183 = vmatpush.bf16.msra.mxu0 %v3611
      %5184 = vmatpush.bf16.msra.mxu0 %v3607
      %5185 = vmatpush.bf16.msra.mxu0 %v3603
      %5186 = vmatpush.bf16.msra.mxu0 %v3599
      %5187 = vmatpush.bf16.msra.mxu0 %v3595
      %5188 = vmatpush.bf16.msra.mxu0 %v3591
      %5189 = vmatpush.bf16.msra.mxu0 %v3587
      %5190 = vmatpush.bf16.msra.mxu0 %v3583
      %5191 = vmatmul.bf16.gmra.mxu0 %v1127
      %v5192 = vpop.f32.mrf.mxu0
      %v5193 = vadd.f32 %v1117, %v5192
      %v5194 = vpop.f32.mrf.mxu0
      %5195 = vdwg.mxu0
      %5196 = vmatpush.bf16.msra.mxu0 %v3643
      %5197 = vmatpush.bf16.msra.mxu0 %v3639
      %5198 = vmatpush.bf16.msra.mxu0 %v3635
      %5199 = vmatpush.bf16.msra.mxu0 %v3631
      %5200 = vmatpush.bf16.msra.mxu0 %v3627
      %5201 = vmatpush.bf16.msra.mxu0 %v3623
      %5202 = vmatpush.bf16.msra.mxu0 %v3619
      %5203 = vmatpush.bf16.msra.mxu0 %v3615
      %5204 = vmatmul.bf16.gmra.mxu0 %v1128
      %v5205 = vpop.f32.mrf.mxu0
      %v5206 = vadd.f32 %v5193, %v5205
      %v5207 = vpop.f32.mrf.mxu0
      %5208 = vdwg.mxu0
      %5209 = vmatpush.bf16.msra.mxu0 %v3675
      %5210 = vmatpush.bf16.msra.mxu0 %v3671
      %5211 = vmatpush.bf16.msra.mxu0 %v3667
      %5212 = vmatpush.bf16.msra.mxu0 %v3663
      %5213 = vmatpush.bf16.msra.mxu0 %v3659
      %5214 = vmatpush.bf16.msra.mxu0 %v3655
      %5215 = vmatpush.bf16.msra.mxu0 %v3651
      %5216 = vmatpush.bf16.msra.mxu0 %v3647
      %5217 = vmatmul.bf16.gmra.mxu0 %v1129
      %v5218 = vpop.f32.mrf.mxu0
      %v5219 = vadd.f32 %v5206, %v5218
      %v5220 = vpop.f32.mrf.mxu0
      %5221 = vdwg.mxu0
      %5222 = vmatpush.bf16.msra.mxu0 %v3707
      %5223 = vmatpush.bf16.msra.mxu0 %v3703
      %5224 = vmatpush.bf16.msra.mxu0 %v3699
      %5225 = vmatpush.bf16.msra.mxu0 %v3695
      %5226 = vmatpush.bf16.msra.mxu0 %v3691
      %5227 = vmatpush.bf16.msra.mxu0 %v3687
      %5228 = vmatpush.bf16.msra.mxu0 %v3683
      %5229 = vmatpush.bf16.msra.mxu0 %v3679
      %5230 = vmatmul.bf16.gmra.mxu0 %v1130
      %v5231 = vpop.f32.mrf.mxu0
      %v5232 = vadd.f32 %v5219, %v5231
      %v5233 = vpop.f32.mrf.mxu0
      %5234 = vdwg.mxu0
      %5235 = vmatpush.bf16.msra.mxu0 %v3739
      %5236 = vmatpush.bf16.msra.mxu0 %v3735
      %5237 = vmatpush.bf16.msra.mxu0 %v3731
      %5238 = vmatpush.bf16.msra.mxu0 %v3727
      %5239 = vmatpush.bf16.msra.mxu0 %v3723
      %5240 = vmatpush.bf16.msra.mxu0 %v3719
      %5241 = vmatpush.bf16.msra.mxu0 %v3715
      %5242 = vmatpush.bf16.msra.mxu0 %v3711
      %5243 = vmatmul.bf16.gmra.mxu0 %v1131
      %v5244 = vpop.f32.mrf.mxu0
      %v5245 = vadd.f32 %v5232, %v5244
      %v5246 = vpop.f32.mrf.mxu0
      %5247 = vdwg.mxu0
      %5248 = vmatpush.bf16.msra.mxu0 %v3771
      %5249 = vmatpush.bf16.msra.mxu0 %v3767
      %5250 = vmatpush.bf16.msra.mxu0 %v3763
      %5251 = vmatpush.bf16.msra.mxu0 %v3759
      %5252 = vmatpush.bf16.msra.mxu0 %v3755
      %5253 = vmatpush.bf16.msra.mxu0 %v3751
      %5254 = vmatpush.bf16.msra.mxu0 %v3747
      %5255 = vmatpush.bf16.msra.mxu0 %v3743
      %5256 = vmatmul.bf16.gmra.mxu0 %v1132
      %v5257 = vpop.f32.mrf.mxu0
      %v5258 = vadd.f32 %v5245, %v5257
      %v5259 = vpop.f32.mrf.mxu0
      %5260 = vdwg.mxu0
      %5261 = vmatpush.bf16.msra.mxu0 %v3803
      %5262 = vmatpush.bf16.msra.mxu0 %v3799
      %5263 = vmatpush.bf16.msra.mxu0 %v3795
      %5264 = vmatpush.bf16.msra.mxu0 %v3791
      %5265 = vmatpush.bf16.msra.mxu0 %v3787
      %5266 = vmatpush.bf16.msra.mxu0 %v3783
      %5267 = vmatpush.bf16.msra.mxu0 %v3779
      %5268 = vmatpush.bf16.msra.mxu0 %v3775
      %5269 = vmatmul.bf16.gmra.mxu0 %v1133
      %v5270 = vpop.f32.mrf.mxu0
      %v5271 = vadd.f32 %v5258, %v5270
      %v5272 = vpop.f32.mrf.mxu0
      %5273 = vdwg.mxu0
      %5274 = vmatpush.bf16.msra.mxu0 %v3835
      %5275 = vmatpush.bf16.msra.mxu0 %v3831
      %5276 = vmatpush.bf16.msra.mxu0 %v3827
      %5277 = vmatpush.bf16.msra.mxu0 %v3823
      %5278 = vmatpush.bf16.msra.mxu0 %v3819
      %5279 = vmatpush.bf16.msra.mxu0 %v3815
      %5280 = vmatpush.bf16.msra.mxu0 %v3811
      %5281 = vmatpush.bf16.msra.mxu0 %v3807
      %5282 = vmatmul.bf16.gmra.mxu0 %v1134
      %v5283 = vpop.f32.mrf.mxu0
      %v5284 = vadd.f32 %v5271, %v5283
      %v5285 = vpop.f32.mrf.mxu0
      %5286 = vdwg.mxu0
      %5287 = vmatpush.bf16.msra.mxu0 %v3867
      %5288 = vmatpush.bf16.msra.mxu0 %v3863
      %5289 = vmatpush.bf16.msra.mxu0 %v3859
      %5290 = vmatpush.bf16.msra.mxu0 %v3855
      %5291 = vmatpush.bf16.msra.mxu0 %v3851
      %5292 = vmatpush.bf16.msra.mxu0 %v3847
      %5293 = vmatpush.bf16.msra.mxu0 %v3843
      %5294 = vmatpush.bf16.msra.mxu0 %v3839
      %5295 = vmatmul.bf16.gmra.mxu0 %v1137
      %v5296 = vpop.f32.mrf.mxu0
      %v5297 = vadd.f32 %v5284, %v5296
      %v5298 = vpop.f32.mrf.mxu0
      %5299 = vdwg.mxu0
      %5300 = vmatpush.bf16.msra.mxu0 %v3899
      %5301 = vmatpush.bf16.msra.mxu0 %v3895
      %5302 = vmatpush.bf16.msra.mxu0 %v3891
      %5303 = vmatpush.bf16.msra.mxu0 %v3887
      %5304 = vmatpush.bf16.msra.mxu0 %v3883
      %5305 = vmatpush.bf16.msra.mxu0 %v3879
      %5306 = vmatpush.bf16.msra.mxu0 %v3875
      %5307 = vmatpush.bf16.msra.mxu0 %v3871
      %5308 = vmatmul.bf16.gmra.mxu0 %v1138
      %v5309 = vpop.f32.mrf.mxu0
      %v5310 = vadd.f32 %v5297, %v5309
      %v5311 = vpop.f32.mrf.mxu0
      %5312 = vdwg.mxu0
      %5313 = vmatpush.bf16.msra.mxu0 %v3931
      %5314 = vmatpush.bf16.msra.mxu0 %v3927
      %5315 = vmatpush.bf16.msra.mxu0 %v3923
      %5316 = vmatpush.bf16.msra.mxu0 %v3919
      %5317 = vmatpush.bf16.msra.mxu0 %v3915
      %5318 = vmatpush.bf16.msra.mxu0 %v3911
      %5319 = vmatpush.bf16.msra.mxu0 %v3907
      %5320 = vmatpush.bf16.msra.mxu0 %v3903
      %5321 = vmatmul.bf16.gmra.mxu0 %v1139
      %v5322 = vpop.f32.mrf.mxu0
      %v5323 = vadd.f32 %v5310, %v5322
      %v5324 = vpop.f32.mrf.mxu0
      %5325 = vdwg.mxu0
      %5326 = vmatpush.bf16.msra.mxu0 %v3963
      %5327 = vmatpush.bf16.msra.mxu0 %v3959
      %5328 = vmatpush.bf16.msra.mxu0 %v3955
      %5329 = vmatpush.bf16.msra.mxu0 %v3951
      %5330 = vmatpush.bf16.msra.mxu0 %v3947
      %5331 = vmatpush.bf16.msra.mxu0 %v3943
      %5332 = vmatpush.bf16.msra.mxu0 %v3939
      %5333 = vmatpush.bf16.msra.mxu0 %v3935
      %5334 = vmatmul.bf16.gmra.mxu0 %v1140
      %v5335 = vpop.f32.mrf.mxu0
      %v5336 = vadd.f32 %v5323, %v5335
      %v5337 = vpop.f32.mrf.mxu0
      %5338 = vdwg.mxu0
      %5339 = vmatpush.bf16.msra.mxu0 %v3995
      %5340 = vmatpush.bf16.msra.mxu0 %v3991
      %5341 = vmatpush.bf16.msra.mxu0 %v3987
      %5342 = vmatpush.bf16.msra.mxu0 %v3983
      %5343 = vmatpush.bf16.msra.mxu0 %v3979
      %5344 = vmatpush.bf16.msra.mxu0 %v3975
      %5345 = vmatpush.bf16.msra.mxu0 %v3971
      %5346 = vmatpush.bf16.msra.mxu0 %v3967
      %5347 = vmatmul.bf16.gmra.mxu0 %v1141
      %v5348 = vpop.f32.mrf.mxu0
      %v5349 = vadd.f32 %v5336, %v5348
      %v5350 = vpop.f32.mrf.mxu0
      %5351 = vdwg.mxu0
      %5352 = vmatpush.bf16.msra.mxu0 %v4027
      %5353 = vmatpush.bf16.msra.mxu0 %v4023
      %5354 = vmatpush.bf16.msra.mxu0 %v4019
      %5355 = vmatpush.bf16.msra.mxu0 %v4015
      %5356 = vmatpush.bf16.msra.mxu0 %v4011
      %5357 = vmatpush.bf16.msra.mxu0 %v4007
      %5358 = vmatpush.bf16.msra.mxu0 %v4003
      %5359 = vmatpush.bf16.msra.mxu0 %v3999
      %5360 = vmatmul.bf16.gmra.mxu0 %v1142
      %v5361 = vpop.f32.mrf.mxu0
      %v5362 = vadd.f32 %v5349, %v5361
      %v5363 = vpop.f32.mrf.mxu0
      %5364 = vdwg.mxu0
      %5365 = vmatpush.bf16.msra.mxu0 %v4059
      %5366 = vmatpush.bf16.msra.mxu0 %v4055
      %5367 = vmatpush.bf16.msra.mxu0 %v4051
      %5368 = vmatpush.bf16.msra.mxu0 %v4047
      %5369 = vmatpush.bf16.msra.mxu0 %v4043
      %5370 = vmatpush.bf16.msra.mxu0 %v4039
      %5371 = vmatpush.bf16.msra.mxu0 %v4035
      %5372 = vmatpush.bf16.msra.mxu0 %v4031
      %5373 = vmatmul.bf16.gmra.mxu0 %v1143
      %v5374 = vpop.f32.mrf.mxu0
      %v5375 = vadd.f32 %v5362, %v5374
      %v5376 = vpop.f32.mrf.mxu0
      %5377 = vdwg.mxu0
      %5378 = vmatpush.bf16.msra.mxu0 %v4091
      %5379 = vmatpush.bf16.msra.mxu0 %v4087
      %5380 = vmatpush.bf16.msra.mxu0 %v4083
      %5381 = vmatpush.bf16.msra.mxu0 %v4079
      %5382 = vmatpush.bf16.msra.mxu0 %v4075
      %5383 = vmatpush.bf16.msra.mxu0 %v4071
      %5384 = vmatpush.bf16.msra.mxu0 %v4067
      %5385 = vmatpush.bf16.msra.mxu0 %v4063
      %5386 = vmatmul.bf16.gmra.mxu0 %v1144
      %v5387 = vpop.f32.mrf.mxu0
      %v5388 = vadd.f32 %v5375, %v5387
      %v5389 = vpop.f32.mrf.mxu0
      %5390 = vdwg.mxu0
      %5391 = vmatpush.bf16.msra.mxu0 %v4123
      %5392 = vmatpush.bf16.msra.mxu0 %v4119
      %5393 = vmatpush.bf16.msra.mxu0 %v4115
      %5394 = vmatpush.bf16.msra.mxu0 %v4111
      %5395 = vmatpush.bf16.msra.mxu0 %v4107
      %5396 = vmatpush.bf16.msra.mxu0 %v4103
      %5397 = vmatpush.bf16.msra.mxu0 %v4099
      %5398 = vmatpush.bf16.msra.mxu0 %v4095
      %5399 = vmatmul.bf16.gmra.mxu0 %v1147
      %v5400 = vpop.f32.mrf.mxu0
      %v5401 = vadd.f32 %v5388, %v5400
      %v5402 = vpop.f32.mrf.mxu0
      %5403 = vdwg.mxu0
      %5404 = vmatpush.bf16.msra.mxu0 %v4155
      %5405 = vmatpush.bf16.msra.mxu0 %v4151
      %5406 = vmatpush.bf16.msra.mxu0 %v4147
      %5407 = vmatpush.bf16.msra.mxu0 %v4143
      %5408 = vmatpush.bf16.msra.mxu0 %v4139
      %5409 = vmatpush.bf16.msra.mxu0 %v4135
      %5410 = vmatpush.bf16.msra.mxu0 %v4131
      %5411 = vmatpush.bf16.msra.mxu0 %v4127
      %5412 = vmatmul.bf16.gmra.mxu0 %v1148
      %v5413 = vpop.f32.mrf.mxu0
      %v5414 = vadd.f32 %v5401, %v5413
      %v5415 = vpop.f32.mrf.mxu0
      %5416 = vdwg.mxu0
      %5417 = vmatpush.bf16.msra.mxu0 %v4187
      %5418 = vmatpush.bf16.msra.mxu0 %v4183
      %5419 = vmatpush.bf16.msra.mxu0 %v4179
      %5420 = vmatpush.bf16.msra.mxu0 %v4175
      %5421 = vmatpush.bf16.msra.mxu0 %v4171
      %5422 = vmatpush.bf16.msra.mxu0 %v4167
      %5423 = vmatpush.bf16.msra.mxu0 %v4163
      %5424 = vmatpush.bf16.msra.mxu0 %v4159
      %5425 = vmatmul.bf16.gmra.mxu0 %v1149
      %v5426 = vpop.f32.mrf.mxu0
      %v5427 = vadd.f32 %v5414, %v5426
      %v5428 = vpop.f32.mrf.mxu0
      %5429 = vdwg.mxu0
      %5430 = vmatpush.bf16.msra.mxu0 %v4219
      %5431 = vmatpush.bf16.msra.mxu0 %v4215
      %5432 = vmatpush.bf16.msra.mxu0 %v4211
      %5433 = vmatpush.bf16.msra.mxu0 %v4207
      %5434 = vmatpush.bf16.msra.mxu0 %v4203
      %5435 = vmatpush.bf16.msra.mxu0 %v4199
      %5436 = vmatpush.bf16.msra.mxu0 %v4195
      %5437 = vmatpush.bf16.msra.mxu0 %v4191
      %5438 = vmatmul.bf16.gmra.mxu0 %v1150
      %v5439 = vpop.f32.mrf.mxu0
      %v5440 = vadd.f32 %v5427, %v5439
      %v5441 = vpop.f32.mrf.mxu0
      %5442 = vdwg.mxu0
      %5443 = vmatpush.bf16.msra.mxu0 %v4251
      %5444 = vmatpush.bf16.msra.mxu0 %v4247
      %5445 = vmatpush.bf16.msra.mxu0 %v4243
      %5446 = vmatpush.bf16.msra.mxu0 %v4239
      %5447 = vmatpush.bf16.msra.mxu0 %v4235
      %5448 = vmatpush.bf16.msra.mxu0 %v4231
      %5449 = vmatpush.bf16.msra.mxu0 %v4227
      %5450 = vmatpush.bf16.msra.mxu0 %v4223
      %5451 = vmatmul.bf16.gmra.mxu0 %v1151
      %v5452 = vpop.f32.mrf.mxu0
      %v5453 = vadd.f32 %v5440, %v5452
      %v5454 = vpop.f32.mrf.mxu0
      %5455 = vdwg.mxu0
      %5456 = vmatpush.bf16.msra.mxu0 %v4283
      %5457 = vmatpush.bf16.msra.mxu0 %v4279
      %5458 = vmatpush.bf16.msra.mxu0 %v4275
      %5459 = vmatpush.bf16.msra.mxu0 %v4271
      %5460 = vmatpush.bf16.msra.mxu0 %v4267
      %5461 = vmatpush.bf16.msra.mxu0 %v4263
      %5462 = vmatpush.bf16.msra.mxu0 %v4259
      %5463 = vmatpush.bf16.msra.mxu0 %v4255
      %5464 = vmatmul.bf16.gmra.mxu0 %v1152
      %v5465 = vpop.f32.mrf.mxu0
      %v5466 = vadd.f32 %v5453, %v5465
      %v5467 = vpop.f32.mrf.mxu0
      %5468 = vdwg.mxu0
      %5469 = vmatpush.bf16.msra.mxu0 %v4315
      %5470 = vmatpush.bf16.msra.mxu0 %v4311
      %5471 = vmatpush.bf16.msra.mxu0 %v4307
      %5472 = vmatpush.bf16.msra.mxu0 %v4303
      %5473 = vmatpush.bf16.msra.mxu0 %v4299
      %5474 = vmatpush.bf16.msra.mxu0 %v4295
      %5475 = vmatpush.bf16.msra.mxu0 %v4291
      %5476 = vmatpush.bf16.msra.mxu0 %v4287
      %5477 = vmatmul.bf16.gmra.mxu0 %v1153
      %v5478 = vpop.f32.mrf.mxu0
      %v5479 = vadd.f32 %v5466, %v5478
      %v5480 = vpop.f32.mrf.mxu0
      %5481 = vdwg.mxu0
      %5482 = vmatpush.bf16.msra.mxu0 %v4347
      %5483 = vmatpush.bf16.msra.mxu0 %v4343
      %5484 = vmatpush.bf16.msra.mxu0 %v4339
      %5485 = vmatpush.bf16.msra.mxu0 %v4335
      %5486 = vmatpush.bf16.msra.mxu0 %v4331
      %5487 = vmatpush.bf16.msra.mxu0 %v4327
      %5488 = vmatpush.bf16.msra.mxu0 %v4323
      %5489 = vmatpush.bf16.msra.mxu0 %v4319
      %5490 = vmatmul.bf16.gmra.mxu0 %v1154
      %v5491 = vpop.f32.mrf.mxu0
      %v5492 = vadd.f32 %v5479, %v5491
      %v5493 = vpop.f32.mrf.mxu0
      %5494 = vdwg.mxu0
      %5495 = vmatpush.bf16.msra.mxu0 %v4379
      %5496 = vmatpush.bf16.msra.mxu0 %v4375
      %5497 = vmatpush.bf16.msra.mxu0 %v4371
      %5498 = vmatpush.bf16.msra.mxu0 %v4367
      %5499 = vmatpush.bf16.msra.mxu0 %v4363
      %5500 = vmatpush.bf16.msra.mxu0 %v4359
      %5501 = vmatpush.bf16.msra.mxu0 %v4355
      %5502 = vmatpush.bf16.msra.mxu0 %v4351
      %5503 = vmatmul.bf16.gmra.mxu0 %v1157
      %v5504 = vpop.f32.mrf.mxu0
      %v5505 = vadd.f32 %v5492, %v5504
      %v5506 = vpop.f32.mrf.mxu0
      %5507 = vdwg.mxu0
      %5508 = vmatpush.bf16.msra.mxu0 %v3612
      %5509 = vmatpush.bf16.msra.mxu0 %v3608
      %5510 = vmatpush.bf16.msra.mxu0 %v3604
      %5511 = vmatpush.bf16.msra.mxu0 %v3600
      %5512 = vmatpush.bf16.msra.mxu0 %v3596
      %5513 = vmatpush.bf16.msra.mxu0 %v3592
      %5514 = vmatpush.bf16.msra.mxu0 %v3588
      %5515 = vmatpush.bf16.msra.mxu0 %v3584
      %5516 = vmatmul.bf16.gmra.mxu0 %v1127
      %v5517 = vpop.f32.mrf.mxu0
      %v5518 = vadd.f32 %v1118, %v5517
      %v5519 = vpop.f32.mrf.mxu0
      %5520 = vdwg.mxu0
      %5521 = vmatpush.bf16.msra.mxu0 %v3644
      %5522 = vmatpush.bf16.msra.mxu0 %v3640
      %5523 = vmatpush.bf16.msra.mxu0 %v3636
      %5524 = vmatpush.bf16.msra.mxu0 %v3632
      %5525 = vmatpush.bf16.msra.mxu0 %v3628
      %5526 = vmatpush.bf16.msra.mxu0 %v3624
      %5527 = vmatpush.bf16.msra.mxu0 %v3620
      %5528 = vmatpush.bf16.msra.mxu0 %v3616
      %5529 = vmatmul.bf16.gmra.mxu0 %v1128
      %v5530 = vpop.f32.mrf.mxu0
      %v5531 = vadd.f32 %v5518, %v5530
      %v5532 = vpop.f32.mrf.mxu0
      %5533 = vdwg.mxu0
      %5534 = vmatpush.bf16.msra.mxu0 %v3676
      %5535 = vmatpush.bf16.msra.mxu0 %v3672
      %5536 = vmatpush.bf16.msra.mxu0 %v3668
      %5537 = vmatpush.bf16.msra.mxu0 %v3664
      %5538 = vmatpush.bf16.msra.mxu0 %v3660
      %5539 = vmatpush.bf16.msra.mxu0 %v3656
      %5540 = vmatpush.bf16.msra.mxu0 %v3652
      %5541 = vmatpush.bf16.msra.mxu0 %v3648
      %5542 = vmatmul.bf16.gmra.mxu0 %v1129
      %v5543 = vpop.f32.mrf.mxu0
      %v5544 = vadd.f32 %v5531, %v5543
      %v5545 = vpop.f32.mrf.mxu0
      %5546 = vdwg.mxu0
      %5547 = vmatpush.bf16.msra.mxu0 %v3708
      %5548 = vmatpush.bf16.msra.mxu0 %v3704
      %5549 = vmatpush.bf16.msra.mxu0 %v3700
      %5550 = vmatpush.bf16.msra.mxu0 %v3696
      %5551 = vmatpush.bf16.msra.mxu0 %v3692
      %5552 = vmatpush.bf16.msra.mxu0 %v3688
      %5553 = vmatpush.bf16.msra.mxu0 %v3684
      %5554 = vmatpush.bf16.msra.mxu0 %v3680
      %5555 = vmatmul.bf16.gmra.mxu0 %v1130
      %v5556 = vpop.f32.mrf.mxu0
      %v5557 = vadd.f32 %v5544, %v5556
      %v5558 = vpop.f32.mrf.mxu0
      %5559 = vdwg.mxu0
      %5560 = vmatpush.bf16.msra.mxu0 %v3740
      %5561 = vmatpush.bf16.msra.mxu0 %v3736
      %5562 = vmatpush.bf16.msra.mxu0 %v3732
      %5563 = vmatpush.bf16.msra.mxu0 %v3728
      %5564 = vmatpush.bf16.msra.mxu0 %v3724
      %5565 = vmatpush.bf16.msra.mxu0 %v3720
      %5566 = vmatpush.bf16.msra.mxu0 %v3716
      %5567 = vmatpush.bf16.msra.mxu0 %v3712
      %5568 = vmatmul.bf16.gmra.mxu0 %v1131
      %v5569 = vpop.f32.mrf.mxu0
      %v5570 = vadd.f32 %v5557, %v5569
      %v5571 = vpop.f32.mrf.mxu0
      %5572 = vdwg.mxu0
      %5573 = vmatpush.bf16.msra.mxu0 %v3772
      %5574 = vmatpush.bf16.msra.mxu0 %v3768
      %5575 = vmatpush.bf16.msra.mxu0 %v3764
      %5576 = vmatpush.bf16.msra.mxu0 %v3760
      %5577 = vmatpush.bf16.msra.mxu0 %v3756
      %5578 = vmatpush.bf16.msra.mxu0 %v3752
      %5579 = vmatpush.bf16.msra.mxu0 %v3748
      %5580 = vmatpush.bf16.msra.mxu0 %v3744
      %5581 = vmatmul.bf16.gmra.mxu0 %v1132
      %v5582 = vpop.f32.mrf.mxu0
      %v5583 = vadd.f32 %v5570, %v5582
      %v5584 = vpop.f32.mrf.mxu0
      %5585 = vdwg.mxu0
      %5586 = vmatpush.bf16.msra.mxu0 %v3804
      %5587 = vmatpush.bf16.msra.mxu0 %v3800
      %5588 = vmatpush.bf16.msra.mxu0 %v3796
      %5589 = vmatpush.bf16.msra.mxu0 %v3792
      %5590 = vmatpush.bf16.msra.mxu0 %v3788
      %5591 = vmatpush.bf16.msra.mxu0 %v3784
      %5592 = vmatpush.bf16.msra.mxu0 %v3780
      %5593 = vmatpush.bf16.msra.mxu0 %v3776
      %5594 = vmatmul.bf16.gmra.mxu0 %v1133
      %v5595 = vpop.f32.mrf.mxu0
      %v5596 = vadd.f32 %v5583, %v5595
      %v5597 = vpop.f32.mrf.mxu0
      %5598 = vdwg.mxu0
      %5599 = vmatpush.bf16.msra.mxu0 %v3836
      %5600 = vmatpush.bf16.msra.mxu0 %v3832
      %5601 = vmatpush.bf16.msra.mxu0 %v3828
      %5602 = vmatpush.bf16.msra.mxu0 %v3824
      %5603 = vmatpush.bf16.msra.mxu0 %v3820
      %5604 = vmatpush.bf16.msra.mxu0 %v3816
      %5605 = vmatpush.bf16.msra.mxu0 %v3812
      %5606 = vmatpush.bf16.msra.mxu0 %v3808
      %5607 = vmatmul.bf16.gmra.mxu0 %v1134
      %v5608 = vpop.f32.mrf.mxu0
      %v5609 = vadd.f32 %v5596, %v5608
      %v5610 = vpop.f32.mrf.mxu0
      %5611 = vdwg.mxu0
      %5612 = vmatpush.bf16.msra.mxu0 %v3868
      %5613 = vmatpush.bf16.msra.mxu0 %v3864
      %5614 = vmatpush.bf16.msra.mxu0 %v3860
      %5615 = vmatpush.bf16.msra.mxu0 %v3856
      %5616 = vmatpush.bf16.msra.mxu0 %v3852
      %5617 = vmatpush.bf16.msra.mxu0 %v3848
      %5618 = vmatpush.bf16.msra.mxu0 %v3844
      %5619 = vmatpush.bf16.msra.mxu0 %v3840
      %5620 = vmatmul.bf16.gmra.mxu0 %v1137
      %v5621 = vpop.f32.mrf.mxu0
      %v5622 = vadd.f32 %v5609, %v5621
      %v5623 = vpop.f32.mrf.mxu0
      %5624 = vdwg.mxu0
      %5625 = vmatpush.bf16.msra.mxu0 %v3900
      %5626 = vmatpush.bf16.msra.mxu0 %v3896
      %5627 = vmatpush.bf16.msra.mxu0 %v3892
      %5628 = vmatpush.bf16.msra.mxu0 %v3888
      %5629 = vmatpush.bf16.msra.mxu0 %v3884
      %5630 = vmatpush.bf16.msra.mxu0 %v3880
      %5631 = vmatpush.bf16.msra.mxu0 %v3876
      %5632 = vmatpush.bf16.msra.mxu0 %v3872
      %5633 = vmatmul.bf16.gmra.mxu0 %v1138
      %v5634 = vpop.f32.mrf.mxu0
      %v5635 = vadd.f32 %v5622, %v5634
      %v5636 = vpop.f32.mrf.mxu0
      %5637 = vdwg.mxu0
      %5638 = vmatpush.bf16.msra.mxu0 %v3932
      %5639 = vmatpush.bf16.msra.mxu0 %v3928
      %5640 = vmatpush.bf16.msra.mxu0 %v3924
      %5641 = vmatpush.bf16.msra.mxu0 %v3920
      %5642 = vmatpush.bf16.msra.mxu0 %v3916
      %5643 = vmatpush.bf16.msra.mxu0 %v3912
      %5644 = vmatpush.bf16.msra.mxu0 %v3908
      %5645 = vmatpush.bf16.msra.mxu0 %v3904
      %5646 = vmatmul.bf16.gmra.mxu0 %v1139
      %v5647 = vpop.f32.mrf.mxu0
      %v5648 = vadd.f32 %v5635, %v5647
      %v5649 = vpop.f32.mrf.mxu0
      %5650 = vdwg.mxu0
      %5651 = vmatpush.bf16.msra.mxu0 %v3964
      %5652 = vmatpush.bf16.msra.mxu0 %v3960
      %5653 = vmatpush.bf16.msra.mxu0 %v3956
      %5654 = vmatpush.bf16.msra.mxu0 %v3952
      %5655 = vmatpush.bf16.msra.mxu0 %v3948
      %5656 = vmatpush.bf16.msra.mxu0 %v3944
      %5657 = vmatpush.bf16.msra.mxu0 %v3940
      %5658 = vmatpush.bf16.msra.mxu0 %v3936
      %5659 = vmatmul.bf16.gmra.mxu0 %v1140
      %v5660 = vpop.f32.mrf.mxu0
      %v5661 = vadd.f32 %v5648, %v5660
      %v5662 = vpop.f32.mrf.mxu0
      %5663 = vdwg.mxu0
      %5664 = vmatpush.bf16.msra.mxu0 %v3996
      %5665 = vmatpush.bf16.msra.mxu0 %v3992
      %5666 = vmatpush.bf16.msra.mxu0 %v3988
      %5667 = vmatpush.bf16.msra.mxu0 %v3984
      %5668 = vmatpush.bf16.msra.mxu0 %v3980
      %5669 = vmatpush.bf16.msra.mxu0 %v3976
      %5670 = vmatpush.bf16.msra.mxu0 %v3972
      %5671 = vmatpush.bf16.msra.mxu0 %v3968
      %5672 = vmatmul.bf16.gmra.mxu0 %v1141
      %v5673 = vpop.f32.mrf.mxu0
      %v5674 = vadd.f32 %v5661, %v5673
      %v5675 = vpop.f32.mrf.mxu0
      %5676 = vdwg.mxu0
      %5677 = vmatpush.bf16.msra.mxu0 %v4028
      %5678 = vmatpush.bf16.msra.mxu0 %v4024
      %5679 = vmatpush.bf16.msra.mxu0 %v4020
      %5680 = vmatpush.bf16.msra.mxu0 %v4016
      %5681 = vmatpush.bf16.msra.mxu0 %v4012
      %5682 = vmatpush.bf16.msra.mxu0 %v4008
      %5683 = vmatpush.bf16.msra.mxu0 %v4004
      %5684 = vmatpush.bf16.msra.mxu0 %v4000
      %5685 = vmatmul.bf16.gmra.mxu0 %v1142
      %v5686 = vpop.f32.mrf.mxu0
      %v5687 = vadd.f32 %v5674, %v5686
      %v5688 = vpop.f32.mrf.mxu0
      %5689 = vdwg.mxu0
      %5690 = vmatpush.bf16.msra.mxu0 %v4060
      %5691 = vmatpush.bf16.msra.mxu0 %v4056
      %5692 = vmatpush.bf16.msra.mxu0 %v4052
      %5693 = vmatpush.bf16.msra.mxu0 %v4048
      %5694 = vmatpush.bf16.msra.mxu0 %v4044
      %5695 = vmatpush.bf16.msra.mxu0 %v4040
      %5696 = vmatpush.bf16.msra.mxu0 %v4036
      %5697 = vmatpush.bf16.msra.mxu0 %v4032
      %5698 = vmatmul.bf16.gmra.mxu0 %v1143
      %v5699 = vpop.f32.mrf.mxu0
      %v5700 = vadd.f32 %v5687, %v5699
      %v5701 = vpop.f32.mrf.mxu0
      %5702 = vdwg.mxu0
      %5703 = vmatpush.bf16.msra.mxu0 %v4092
      %5704 = vmatpush.bf16.msra.mxu0 %v4088
      %5705 = vmatpush.bf16.msra.mxu0 %v4084
      %5706 = vmatpush.bf16.msra.mxu0 %v4080
      %5707 = vmatpush.bf16.msra.mxu0 %v4076
      %5708 = vmatpush.bf16.msra.mxu0 %v4072
      %5709 = vmatpush.bf16.msra.mxu0 %v4068
      %5710 = vmatpush.bf16.msra.mxu0 %v4064
      %5711 = vmatmul.bf16.gmra.mxu0 %v1144
      %v5712 = vpop.f32.mrf.mxu0
      %v5713 = vadd.f32 %v5700, %v5712
      %v5714 = vpop.f32.mrf.mxu0
      %5715 = vdwg.mxu0
      %5716 = vmatpush.bf16.msra.mxu0 %v4124
      %5717 = vmatpush.bf16.msra.mxu0 %v4120
      %5718 = vmatpush.bf16.msra.mxu0 %v4116
      %5719 = vmatpush.bf16.msra.mxu0 %v4112
      %5720 = vmatpush.bf16.msra.mxu0 %v4108
      %5721 = vmatpush.bf16.msra.mxu0 %v4104
      %5722 = vmatpush.bf16.msra.mxu0 %v4100
      %5723 = vmatpush.bf16.msra.mxu0 %v4096
      %5724 = vmatmul.bf16.gmra.mxu0 %v1147
      %v5725 = vpop.f32.mrf.mxu0
      %v5726 = vadd.f32 %v5713, %v5725
      %v5727 = vpop.f32.mrf.mxu0
      %5728 = vdwg.mxu0
      %5729 = vmatpush.bf16.msra.mxu0 %v4156
      %5730 = vmatpush.bf16.msra.mxu0 %v4152
      %5731 = vmatpush.bf16.msra.mxu0 %v4148
      %5732 = vmatpush.bf16.msra.mxu0 %v4144
      %5733 = vmatpush.bf16.msra.mxu0 %v4140
      %5734 = vmatpush.bf16.msra.mxu0 %v4136
      %5735 = vmatpush.bf16.msra.mxu0 %v4132
      %5736 = vmatpush.bf16.msra.mxu0 %v4128
      %5737 = vmatmul.bf16.gmra.mxu0 %v1148
      %v5738 = vpop.f32.mrf.mxu0
      %v5739 = vadd.f32 %v5726, %v5738
      %v5740 = vpop.f32.mrf.mxu0
      %5741 = vdwg.mxu0
      %5742 = vmatpush.bf16.msra.mxu0 %v4188
      %5743 = vmatpush.bf16.msra.mxu0 %v4184
      %5744 = vmatpush.bf16.msra.mxu0 %v4180
      %5745 = vmatpush.bf16.msra.mxu0 %v4176
      %5746 = vmatpush.bf16.msra.mxu0 %v4172
      %5747 = vmatpush.bf16.msra.mxu0 %v4168
      %5748 = vmatpush.bf16.msra.mxu0 %v4164
      %5749 = vmatpush.bf16.msra.mxu0 %v4160
      %5750 = vmatmul.bf16.gmra.mxu0 %v1149
      %v5751 = vpop.f32.mrf.mxu0
      %v5752 = vadd.f32 %v5739, %v5751
      %v5753 = vpop.f32.mrf.mxu0
      %5754 = vdwg.mxu0
      %5755 = vmatpush.bf16.msra.mxu0 %v4220
      %5756 = vmatpush.bf16.msra.mxu0 %v4216
      %5757 = vmatpush.bf16.msra.mxu0 %v4212
      %5758 = vmatpush.bf16.msra.mxu0 %v4208
      %5759 = vmatpush.bf16.msra.mxu0 %v4204
      %5760 = vmatpush.bf16.msra.mxu0 %v4200
      %5761 = vmatpush.bf16.msra.mxu0 %v4196
      %5762 = vmatpush.bf16.msra.mxu0 %v4192
      %5763 = vmatmul.bf16.gmra.mxu0 %v1150
      %v5764 = vpop.f32.mrf.mxu0
      %v5765 = vadd.f32 %v5752, %v5764
      %v5766 = vpop.f32.mrf.mxu0
      %5767 = vdwg.mxu0
      %5768 = vmatpush.bf16.msra.mxu0 %v4252
      %5769 = vmatpush.bf16.msra.mxu0 %v4248
      %5770 = vmatpush.bf16.msra.mxu0 %v4244
      %5771 = vmatpush.bf16.msra.mxu0 %v4240
      %5772 = vmatpush.bf16.msra.mxu0 %v4236
      %5773 = vmatpush.bf16.msra.mxu0 %v4232
      %5774 = vmatpush.bf16.msra.mxu0 %v4228
      %5775 = vmatpush.bf16.msra.mxu0 %v4224
      %5776 = vmatmul.bf16.gmra.mxu0 %v1151
      %v5777 = vpop.f32.mrf.mxu0
      %v5778 = vadd.f32 %v5765, %v5777
      %v5779 = vpop.f32.mrf.mxu0
      %5780 = vdwg.mxu0
      %5781 = vmatpush.bf16.msra.mxu0 %v4284
      %5782 = vmatpush.bf16.msra.mxu0 %v4280
      %5783 = vmatpush.bf16.msra.mxu0 %v4276
      %5784 = vmatpush.bf16.msra.mxu0 %v4272
      %5785 = vmatpush.bf16.msra.mxu0 %v4268
      %5786 = vmatpush.bf16.msra.mxu0 %v4264
      %5787 = vmatpush.bf16.msra.mxu0 %v4260
      %5788 = vmatpush.bf16.msra.mxu0 %v4256
      %5789 = vmatmul.bf16.gmra.mxu0 %v1152
      %v5790 = vpop.f32.mrf.mxu0
      %v5791 = vadd.f32 %v5778, %v5790
      %v5792 = vpop.f32.mrf.mxu0
      %5793 = vdwg.mxu0
      %5794 = vmatpush.bf16.msra.mxu0 %v4316
      %5795 = vmatpush.bf16.msra.mxu0 %v4312
      %5796 = vmatpush.bf16.msra.mxu0 %v4308
      %5797 = vmatpush.bf16.msra.mxu0 %v4304
      %5798 = vmatpush.bf16.msra.mxu0 %v4300
      %5799 = vmatpush.bf16.msra.mxu0 %v4296
      %5800 = vmatpush.bf16.msra.mxu0 %v4292
      %5801 = vmatpush.bf16.msra.mxu0 %v4288
      %5802 = vmatmul.bf16.gmra.mxu0 %v1153
      %v5803 = vpop.f32.mrf.mxu0
      %v5804 = vadd.f32 %v5791, %v5803
      %v5805 = vpop.f32.mrf.mxu0
      %5806 = vdwg.mxu0
      %5807 = vmatpush.bf16.msra.mxu0 %v4348
      %5808 = vmatpush.bf16.msra.mxu0 %v4344
      %5809 = vmatpush.bf16.msra.mxu0 %v4340
      %5810 = vmatpush.bf16.msra.mxu0 %v4336
      %5811 = vmatpush.bf16.msra.mxu0 %v4332
      %5812 = vmatpush.bf16.msra.mxu0 %v4328
      %5813 = vmatpush.bf16.msra.mxu0 %v4324
      %5814 = vmatpush.bf16.msra.mxu0 %v4320
      %5815 = vmatmul.bf16.gmra.mxu0 %v1154
      %v5816 = vpop.f32.mrf.mxu0
      %v5817 = vadd.f32 %v5804, %v5816
      %v5818 = vpop.f32.mrf.mxu0
      %5819 = vdwg.mxu0
      %5820 = vmatpush.bf16.msra.mxu0 %v4380
      %5821 = vmatpush.bf16.msra.mxu0 %v4376
      %5822 = vmatpush.bf16.msra.mxu0 %v4372
      %5823 = vmatpush.bf16.msra.mxu0 %v4368
      %5824 = vmatpush.bf16.msra.mxu0 %v4364
      %5825 = vmatpush.bf16.msra.mxu0 %v4360
      %5826 = vmatpush.bf16.msra.mxu0 %v4356
      %5827 = vmatpush.bf16.msra.mxu0 %v4352
      %5828 = vmatmul.bf16.gmra.mxu0 %v1157
      %v5829 = vpop.f32.mrf.mxu0
      %v5830 = vadd.f32 %v5817, %v5829
      %v5831 = vpop.f32.mrf.mxu0
      %5832 = vdwg.mxu0
      %5833 = vmatpush.bf16.msra.mxu0 %v3613
      %5834 = vmatpush.bf16.msra.mxu0 %v3609
      %5835 = vmatpush.bf16.msra.mxu0 %v3605
      %5836 = vmatpush.bf16.msra.mxu0 %v3601
      %5837 = vmatpush.bf16.msra.mxu0 %v3597
      %5838 = vmatpush.bf16.msra.mxu0 %v3593
      %5839 = vmatpush.bf16.msra.mxu0 %v3589
      %5840 = vmatpush.bf16.msra.mxu0 %v3585
      %5841 = vmatmul.bf16.gmra.mxu0 %v1127
      %v5842 = vpop.f32.mrf.mxu0
      %v5843 = vadd.f32 %v1119, %v5842
      %v5844 = vpop.f32.mrf.mxu0
      %5845 = vdwg.mxu0
      %5846 = vmatpush.bf16.msra.mxu0 %v3645
      %5847 = vmatpush.bf16.msra.mxu0 %v3641
      %5848 = vmatpush.bf16.msra.mxu0 %v3637
      %5849 = vmatpush.bf16.msra.mxu0 %v3633
      %5850 = vmatpush.bf16.msra.mxu0 %v3629
      %5851 = vmatpush.bf16.msra.mxu0 %v3625
      %5852 = vmatpush.bf16.msra.mxu0 %v3621
      %5853 = vmatpush.bf16.msra.mxu0 %v3617
      %5854 = vmatmul.bf16.gmra.mxu0 %v1128
      %v5855 = vpop.f32.mrf.mxu0
      %v5856 = vadd.f32 %v5843, %v5855
      %v5857 = vpop.f32.mrf.mxu0
      %5858 = vdwg.mxu0
      %5859 = vmatpush.bf16.msra.mxu0 %v3677
      %5860 = vmatpush.bf16.msra.mxu0 %v3673
      %5861 = vmatpush.bf16.msra.mxu0 %v3669
      %5862 = vmatpush.bf16.msra.mxu0 %v3665
      %5863 = vmatpush.bf16.msra.mxu0 %v3661
      %5864 = vmatpush.bf16.msra.mxu0 %v3657
      %5865 = vmatpush.bf16.msra.mxu0 %v3653
      %5866 = vmatpush.bf16.msra.mxu0 %v3649
      %5867 = vmatmul.bf16.gmra.mxu0 %v1129
      %v5868 = vpop.f32.mrf.mxu0
      %v5869 = vadd.f32 %v5856, %v5868
      %v5870 = vpop.f32.mrf.mxu0
      %5871 = vdwg.mxu0
      %5872 = vmatpush.bf16.msra.mxu0 %v3709
      %5873 = vmatpush.bf16.msra.mxu0 %v3705
      %5874 = vmatpush.bf16.msra.mxu0 %v3701
      %5875 = vmatpush.bf16.msra.mxu0 %v3697
      %5876 = vmatpush.bf16.msra.mxu0 %v3693
      %5877 = vmatpush.bf16.msra.mxu0 %v3689
      %5878 = vmatpush.bf16.msra.mxu0 %v3685
      %5879 = vmatpush.bf16.msra.mxu0 %v3681
      %5880 = vmatmul.bf16.gmra.mxu0 %v1130
      %v5881 = vpop.f32.mrf.mxu0
      %v5882 = vadd.f32 %v5869, %v5881
      %v5883 = vpop.f32.mrf.mxu0
      %5884 = vdwg.mxu0
      %5885 = vmatpush.bf16.msra.mxu0 %v3741
      %5886 = vmatpush.bf16.msra.mxu0 %v3737
      %5887 = vmatpush.bf16.msra.mxu0 %v3733
      %5888 = vmatpush.bf16.msra.mxu0 %v3729
      %5889 = vmatpush.bf16.msra.mxu0 %v3725
      %5890 = vmatpush.bf16.msra.mxu0 %v3721
      %5891 = vmatpush.bf16.msra.mxu0 %v3717
      %5892 = vmatpush.bf16.msra.mxu0 %v3713
      %5893 = vmatmul.bf16.gmra.mxu0 %v1131
      %v5894 = vpop.f32.mrf.mxu0
      %v5895 = vadd.f32 %v5882, %v5894
      %v5896 = vpop.f32.mrf.mxu0
      %5897 = vdwg.mxu0
      %5898 = vmatpush.bf16.msra.mxu0 %v3773
      %5899 = vmatpush.bf16.msra.mxu0 %v3769
      %5900 = vmatpush.bf16.msra.mxu0 %v3765
      %5901 = vmatpush.bf16.msra.mxu0 %v3761
      %5902 = vmatpush.bf16.msra.mxu0 %v3757
      %5903 = vmatpush.bf16.msra.mxu0 %v3753
      %5904 = vmatpush.bf16.msra.mxu0 %v3749
      %5905 = vmatpush.bf16.msra.mxu0 %v3745
      %5906 = vmatmul.bf16.gmra.mxu0 %v1132
      %v5907 = vpop.f32.mrf.mxu0
      %v5908 = vadd.f32 %v5895, %v5907
      %v5909 = vpop.f32.mrf.mxu0
      %5910 = vdwg.mxu0
      %5911 = vmatpush.bf16.msra.mxu0 %v3805
      %5912 = vmatpush.bf16.msra.mxu0 %v3801
      %5913 = vmatpush.bf16.msra.mxu0 %v3797
      %5914 = vmatpush.bf16.msra.mxu0 %v3793
      %5915 = vmatpush.bf16.msra.mxu0 %v3789
      %5916 = vmatpush.bf16.msra.mxu0 %v3785
      %5917 = vmatpush.bf16.msra.mxu0 %v3781
      %5918 = vmatpush.bf16.msra.mxu0 %v3777
      %5919 = vmatmul.bf16.gmra.mxu0 %v1133
      %v5920 = vpop.f32.mrf.mxu0
      %v5921 = vadd.f32 %v5908, %v5920
      %v5922 = vpop.f32.mrf.mxu0
      %5923 = vdwg.mxu0
      %5924 = vmatpush.bf16.msra.mxu0 %v3837
      %5925 = vmatpush.bf16.msra.mxu0 %v3833
      %5926 = vmatpush.bf16.msra.mxu0 %v3829
      %5927 = vmatpush.bf16.msra.mxu0 %v3825
      %5928 = vmatpush.bf16.msra.mxu0 %v3821
      %5929 = vmatpush.bf16.msra.mxu0 %v3817
      %5930 = vmatpush.bf16.msra.mxu0 %v3813
      %5931 = vmatpush.bf16.msra.mxu0 %v3809
      %5932 = vmatmul.bf16.gmra.mxu0 %v1134
      %v5933 = vpop.f32.mrf.mxu0
      %v5934 = vadd.f32 %v5921, %v5933
      %v5935 = vpop.f32.mrf.mxu0
      %5936 = vdwg.mxu0
      %5937 = vmatpush.bf16.msra.mxu0 %v3869
      %5938 = vmatpush.bf16.msra.mxu0 %v3865
      %5939 = vmatpush.bf16.msra.mxu0 %v3861
      %5940 = vmatpush.bf16.msra.mxu0 %v3857
      %5941 = vmatpush.bf16.msra.mxu0 %v3853
      %5942 = vmatpush.bf16.msra.mxu0 %v3849
      %5943 = vmatpush.bf16.msra.mxu0 %v3845
      %5944 = vmatpush.bf16.msra.mxu0 %v3841
      %5945 = vmatmul.bf16.gmra.mxu0 %v1137
      %v5946 = vpop.f32.mrf.mxu0
      %v5947 = vadd.f32 %v5934, %v5946
      %v5948 = vpop.f32.mrf.mxu0
      %5949 = vdwg.mxu0
      %5950 = vmatpush.bf16.msra.mxu0 %v3901
      %5951 = vmatpush.bf16.msra.mxu0 %v3897
      %5952 = vmatpush.bf16.msra.mxu0 %v3893
      %5953 = vmatpush.bf16.msra.mxu0 %v3889
      %5954 = vmatpush.bf16.msra.mxu0 %v3885
      %5955 = vmatpush.bf16.msra.mxu0 %v3881
      %5956 = vmatpush.bf16.msra.mxu0 %v3877
      %5957 = vmatpush.bf16.msra.mxu0 %v3873
      %5958 = vmatmul.bf16.gmra.mxu0 %v1138
      %v5959 = vpop.f32.mrf.mxu0
      %v5960 = vadd.f32 %v5947, %v5959
      %v5961 = vpop.f32.mrf.mxu0
      %5962 = vdwg.mxu0
      %5963 = vmatpush.bf16.msra.mxu0 %v3933
      %5964 = vmatpush.bf16.msra.mxu0 %v3929
      %5965 = vmatpush.bf16.msra.mxu0 %v3925
      %5966 = vmatpush.bf16.msra.mxu0 %v3921
      %5967 = vmatpush.bf16.msra.mxu0 %v3917
      %5968 = vmatpush.bf16.msra.mxu0 %v3913
      %5969 = vmatpush.bf16.msra.mxu0 %v3909
      %5970 = vmatpush.bf16.msra.mxu0 %v3905
      %5971 = vmatmul.bf16.gmra.mxu0 %v1139
      %v5972 = vpop.f32.mrf.mxu0
      %v5973 = vadd.f32 %v5960, %v5972
      %v5974 = vpop.f32.mrf.mxu0
      %5975 = vdwg.mxu0
      %5976 = vmatpush.bf16.msra.mxu0 %v3965
      %5977 = vmatpush.bf16.msra.mxu0 %v3961
      %5978 = vmatpush.bf16.msra.mxu0 %v3957
      %5979 = vmatpush.bf16.msra.mxu0 %v3953
      %5980 = vmatpush.bf16.msra.mxu0 %v3949
      %5981 = vmatpush.bf16.msra.mxu0 %v3945
      %5982 = vmatpush.bf16.msra.mxu0 %v3941
      %5983 = vmatpush.bf16.msra.mxu0 %v3937
      %5984 = vmatmul.bf16.gmra.mxu0 %v1140
      %v5985 = vpop.f32.mrf.mxu0
      %v5986 = vadd.f32 %v5973, %v5985
      %v5987 = vpop.f32.mrf.mxu0
      %5988 = vdwg.mxu0
      %5989 = vmatpush.bf16.msra.mxu0 %v3997
      %5990 = vmatpush.bf16.msra.mxu0 %v3993
      %5991 = vmatpush.bf16.msra.mxu0 %v3989
      %5992 = vmatpush.bf16.msra.mxu0 %v3985
      %5993 = vmatpush.bf16.msra.mxu0 %v3981
      %5994 = vmatpush.bf16.msra.mxu0 %v3977
      %5995 = vmatpush.bf16.msra.mxu0 %v3973
      %5996 = vmatpush.bf16.msra.mxu0 %v3969
      %5997 = vmatmul.bf16.gmra.mxu0 %v1141
      %v5998 = vpop.f32.mrf.mxu0
      %v5999 = vadd.f32 %v5986, %v5998
      %v6000 = vpop.f32.mrf.mxu0
      %6001 = vdwg.mxu0
      %6002 = vmatpush.bf16.msra.mxu0 %v4029
      %6003 = vmatpush.bf16.msra.mxu0 %v4025
      %6004 = vmatpush.bf16.msra.mxu0 %v4021
      %6005 = vmatpush.bf16.msra.mxu0 %v4017
      %6006 = vmatpush.bf16.msra.mxu0 %v4013
      %6007 = vmatpush.bf16.msra.mxu0 %v4009
      %6008 = vmatpush.bf16.msra.mxu0 %v4005
      %6009 = vmatpush.bf16.msra.mxu0 %v4001
      %6010 = vmatmul.bf16.gmra.mxu0 %v1142
      %v6011 = vpop.f32.mrf.mxu0
      %v6012 = vadd.f32 %v5999, %v6011
      %v6013 = vpop.f32.mrf.mxu0
      %6014 = vdwg.mxu0
      %6015 = vmatpush.bf16.msra.mxu0 %v4061
      %6016 = vmatpush.bf16.msra.mxu0 %v4057
      %6017 = vmatpush.bf16.msra.mxu0 %v4053
      %6018 = vmatpush.bf16.msra.mxu0 %v4049
      %6019 = vmatpush.bf16.msra.mxu0 %v4045
      %6020 = vmatpush.bf16.msra.mxu0 %v4041
      %6021 = vmatpush.bf16.msra.mxu0 %v4037
      %6022 = vmatpush.bf16.msra.mxu0 %v4033
      %6023 = vmatmul.bf16.gmra.mxu0 %v1143
      %v6024 = vpop.f32.mrf.mxu0
      %v6025 = vadd.f32 %v6012, %v6024
      %v6026 = vpop.f32.mrf.mxu0
      %6027 = vdwg.mxu0
      %6028 = vmatpush.bf16.msra.mxu0 %v4093
      %6029 = vmatpush.bf16.msra.mxu0 %v4089
      %6030 = vmatpush.bf16.msra.mxu0 %v4085
      %6031 = vmatpush.bf16.msra.mxu0 %v4081
      %6032 = vmatpush.bf16.msra.mxu0 %v4077
      %6033 = vmatpush.bf16.msra.mxu0 %v4073
      %6034 = vmatpush.bf16.msra.mxu0 %v4069
      %6035 = vmatpush.bf16.msra.mxu0 %v4065
      %6036 = vmatmul.bf16.gmra.mxu0 %v1144
      %v6037 = vpop.f32.mrf.mxu0
      %v6038 = vadd.f32 %v6025, %v6037
      %v6039 = vpop.f32.mrf.mxu0
      %6040 = vdwg.mxu0
      %6041 = vmatpush.bf16.msra.mxu0 %v4125
      %6042 = vmatpush.bf16.msra.mxu0 %v4121
      %6043 = vmatpush.bf16.msra.mxu0 %v4117
      %6044 = vmatpush.bf16.msra.mxu0 %v4113
      %6045 = vmatpush.bf16.msra.mxu0 %v4109
      %6046 = vmatpush.bf16.msra.mxu0 %v4105
      %6047 = vmatpush.bf16.msra.mxu0 %v4101
      %6048 = vmatpush.bf16.msra.mxu0 %v4097
      %6049 = vmatmul.bf16.gmra.mxu0 %v1147
      %v6050 = vpop.f32.mrf.mxu0
      %v6051 = vadd.f32 %v6038, %v6050
      %v6052 = vpop.f32.mrf.mxu0
      %6053 = vdwg.mxu0
      %6054 = vmatpush.bf16.msra.mxu0 %v4157
      %6055 = vmatpush.bf16.msra.mxu0 %v4153
      %6056 = vmatpush.bf16.msra.mxu0 %v4149
      %6057 = vmatpush.bf16.msra.mxu0 %v4145
      %6058 = vmatpush.bf16.msra.mxu0 %v4141
      %6059 = vmatpush.bf16.msra.mxu0 %v4137
      %6060 = vmatpush.bf16.msra.mxu0 %v4133
      %6061 = vmatpush.bf16.msra.mxu0 %v4129
      %6062 = vmatmul.bf16.gmra.mxu0 %v1148
      %v6063 = vpop.f32.mrf.mxu0
      %v6064 = vadd.f32 %v6051, %v6063
      %v6065 = vpop.f32.mrf.mxu0
      %6066 = vdwg.mxu0
      %6067 = vmatpush.bf16.msra.mxu0 %v4189
      %6068 = vmatpush.bf16.msra.mxu0 %v4185
      %6069 = vmatpush.bf16.msra.mxu0 %v4181
      %6070 = vmatpush.bf16.msra.mxu0 %v4177
      %6071 = vmatpush.bf16.msra.mxu0 %v4173
      %6072 = vmatpush.bf16.msra.mxu0 %v4169
      %6073 = vmatpush.bf16.msra.mxu0 %v4165
      %6074 = vmatpush.bf16.msra.mxu0 %v4161
      %6075 = vmatmul.bf16.gmra.mxu0 %v1149
      %v6076 = vpop.f32.mrf.mxu0
      %v6077 = vadd.f32 %v6064, %v6076
      %v6078 = vpop.f32.mrf.mxu0
      %6079 = vdwg.mxu0
      %6080 = vmatpush.bf16.msra.mxu0 %v4221
      %6081 = vmatpush.bf16.msra.mxu0 %v4217
      %6082 = vmatpush.bf16.msra.mxu0 %v4213
      %6083 = vmatpush.bf16.msra.mxu0 %v4209
      %6084 = vmatpush.bf16.msra.mxu0 %v4205
      %6085 = vmatpush.bf16.msra.mxu0 %v4201
      %6086 = vmatpush.bf16.msra.mxu0 %v4197
      %6087 = vmatpush.bf16.msra.mxu0 %v4193
      %6088 = vmatmul.bf16.gmra.mxu0 %v1150
      %v6089 = vpop.f32.mrf.mxu0
      %v6090 = vadd.f32 %v6077, %v6089
      %v6091 = vpop.f32.mrf.mxu0
      %6092 = vdwg.mxu0
      %6093 = vmatpush.bf16.msra.mxu0 %v4253
      %6094 = vmatpush.bf16.msra.mxu0 %v4249
      %6095 = vmatpush.bf16.msra.mxu0 %v4245
      %6096 = vmatpush.bf16.msra.mxu0 %v4241
      %6097 = vmatpush.bf16.msra.mxu0 %v4237
      %6098 = vmatpush.bf16.msra.mxu0 %v4233
      %6099 = vmatpush.bf16.msra.mxu0 %v4229
      %6100 = vmatpush.bf16.msra.mxu0 %v4225
      %6101 = vmatmul.bf16.gmra.mxu0 %v1151
      %v6102 = vpop.f32.mrf.mxu0
      %v6103 = vadd.f32 %v6090, %v6102
      %v6104 = vpop.f32.mrf.mxu0
      %6105 = vdwg.mxu0
      %6106 = vmatpush.bf16.msra.mxu0 %v4285
      %6107 = vmatpush.bf16.msra.mxu0 %v4281
      %6108 = vmatpush.bf16.msra.mxu0 %v4277
      %6109 = vmatpush.bf16.msra.mxu0 %v4273
      %6110 = vmatpush.bf16.msra.mxu0 %v4269
      %6111 = vmatpush.bf16.msra.mxu0 %v4265
      %6112 = vmatpush.bf16.msra.mxu0 %v4261
      %6113 = vmatpush.bf16.msra.mxu0 %v4257
      %6114 = vmatmul.bf16.gmra.mxu0 %v1152
      %v6115 = vpop.f32.mrf.mxu0
      %v6116 = vadd.f32 %v6103, %v6115
      %v6117 = vpop.f32.mrf.mxu0
      %6118 = vdwg.mxu0
      %6119 = vmatpush.bf16.msra.mxu0 %v4317
      %6120 = vmatpush.bf16.msra.mxu0 %v4313
      %6121 = vmatpush.bf16.msra.mxu0 %v4309
      %6122 = vmatpush.bf16.msra.mxu0 %v4305
      %6123 = vmatpush.bf16.msra.mxu0 %v4301
      %6124 = vmatpush.bf16.msra.mxu0 %v4297
      %6125 = vmatpush.bf16.msra.mxu0 %v4293
      %6126 = vmatpush.bf16.msra.mxu0 %v4289
      %6127 = vmatmul.bf16.gmra.mxu0 %v1153
      %v6128 = vpop.f32.mrf.mxu0
      %v6129 = vadd.f32 %v6116, %v6128
      %v6130 = vpop.f32.mrf.mxu0
      %6131 = vdwg.mxu0
      %6132 = vmatpush.bf16.msra.mxu0 %v4349
      %6133 = vmatpush.bf16.msra.mxu0 %v4345
      %6134 = vmatpush.bf16.msra.mxu0 %v4341
      %6135 = vmatpush.bf16.msra.mxu0 %v4337
      %6136 = vmatpush.bf16.msra.mxu0 %v4333
      %6137 = vmatpush.bf16.msra.mxu0 %v4329
      %6138 = vmatpush.bf16.msra.mxu0 %v4325
      %6139 = vmatpush.bf16.msra.mxu0 %v4321
      %6140 = vmatmul.bf16.gmra.mxu0 %v1154
      %v6141 = vpop.f32.mrf.mxu0
      %v6142 = vadd.f32 %v6129, %v6141
      %v6143 = vpop.f32.mrf.mxu0
      %6144 = vdwg.mxu0
      %6145 = vmatpush.bf16.msra.mxu0 %v4381
      %6146 = vmatpush.bf16.msra.mxu0 %v4377
      %6147 = vmatpush.bf16.msra.mxu0 %v4373
      %6148 = vmatpush.bf16.msra.mxu0 %v4369
      %6149 = vmatpush.bf16.msra.mxu0 %v4365
      %6150 = vmatpush.bf16.msra.mxu0 %v4361
      %6151 = vmatpush.bf16.msra.mxu0 %v4357
      %6152 = vmatpush.bf16.msra.mxu0 %v4353
      %6153 = vmatmul.bf16.gmra.mxu0 %v1157
      %v6154 = vpop.f32.mrf.mxu0
      %v6155 = vadd.f32 %v6142, %v6154
      %v6156 = vpop.f32.mrf.mxu0
      %6157 = vdwg.mxu0
      %6158 = vmatpush.bf16.msra.mxu0 %v3614
      %6159 = vmatpush.bf16.msra.mxu0 %v3610
      %6160 = vmatpush.bf16.msra.mxu0 %v3606
      %6161 = vmatpush.bf16.msra.mxu0 %v3602
      %6162 = vmatpush.bf16.msra.mxu0 %v3598
      %6163 = vmatpush.bf16.msra.mxu0 %v3594
      %6164 = vmatpush.bf16.msra.mxu0 %v3590
      %6165 = vmatpush.bf16.msra.mxu0 %v3586
      %6166 = vmatmul.bf16.gmra.mxu0 %v1127
      %v6167 = vpop.f32.mrf.mxu0
      %v6168 = vadd.f32 %v1120, %v6167
      %v6169 = vpop.f32.mrf.mxu0
      %6170 = vdwg.mxu0
      %6171 = vmatpush.bf16.msra.mxu0 %v3646
      %6172 = vmatpush.bf16.msra.mxu0 %v3642
      %6173 = vmatpush.bf16.msra.mxu0 %v3638
      %6174 = vmatpush.bf16.msra.mxu0 %v3634
      %6175 = vmatpush.bf16.msra.mxu0 %v3630
      %6176 = vmatpush.bf16.msra.mxu0 %v3626
      %6177 = vmatpush.bf16.msra.mxu0 %v3622
      %6178 = vmatpush.bf16.msra.mxu0 %v3618
      %6179 = vmatmul.bf16.gmra.mxu0 %v1128
      %v6180 = vpop.f32.mrf.mxu0
      %v6181 = vadd.f32 %v6168, %v6180
      %v6182 = vpop.f32.mrf.mxu0
      %6183 = vdwg.mxu0
      %6184 = vmatpush.bf16.msra.mxu0 %v3678
      %6185 = vmatpush.bf16.msra.mxu0 %v3674
      %6186 = vmatpush.bf16.msra.mxu0 %v3670
      %6187 = vmatpush.bf16.msra.mxu0 %v3666
      %6188 = vmatpush.bf16.msra.mxu0 %v3662
      %6189 = vmatpush.bf16.msra.mxu0 %v3658
      %6190 = vmatpush.bf16.msra.mxu0 %v3654
      %6191 = vmatpush.bf16.msra.mxu0 %v3650
      %6192 = vmatmul.bf16.gmra.mxu0 %v1129
      %v6193 = vpop.f32.mrf.mxu0
      %v6194 = vadd.f32 %v6181, %v6193
      %v6195 = vpop.f32.mrf.mxu0
      %6196 = vdwg.mxu0
      %6197 = vmatpush.bf16.msra.mxu0 %v3710
      %6198 = vmatpush.bf16.msra.mxu0 %v3706
      %6199 = vmatpush.bf16.msra.mxu0 %v3702
      %6200 = vmatpush.bf16.msra.mxu0 %v3698
      %6201 = vmatpush.bf16.msra.mxu0 %v3694
      %6202 = vmatpush.bf16.msra.mxu0 %v3690
      %6203 = vmatpush.bf16.msra.mxu0 %v3686
      %6204 = vmatpush.bf16.msra.mxu0 %v3682
      %6205 = vmatmul.bf16.gmra.mxu0 %v1130
      %v6206 = vpop.f32.mrf.mxu0
      %v6207 = vadd.f32 %v6194, %v6206
      %v6208 = vpop.f32.mrf.mxu0
      %6209 = vdwg.mxu0
      %6210 = vmatpush.bf16.msra.mxu0 %v3742
      %6211 = vmatpush.bf16.msra.mxu0 %v3738
      %6212 = vmatpush.bf16.msra.mxu0 %v3734
      %6213 = vmatpush.bf16.msra.mxu0 %v3730
      %6214 = vmatpush.bf16.msra.mxu0 %v3726
      %6215 = vmatpush.bf16.msra.mxu0 %v3722
      %6216 = vmatpush.bf16.msra.mxu0 %v3718
      %6217 = vmatpush.bf16.msra.mxu0 %v3714
      %6218 = vmatmul.bf16.gmra.mxu0 %v1131
      %v6219 = vpop.f32.mrf.mxu0
      %v6220 = vadd.f32 %v6207, %v6219
      %v6221 = vpop.f32.mrf.mxu0
      %6222 = vdwg.mxu0
      %6223 = vmatpush.bf16.msra.mxu0 %v3774
      %6224 = vmatpush.bf16.msra.mxu0 %v3770
      %6225 = vmatpush.bf16.msra.mxu0 %v3766
      %6226 = vmatpush.bf16.msra.mxu0 %v3762
      %6227 = vmatpush.bf16.msra.mxu0 %v3758
      %6228 = vmatpush.bf16.msra.mxu0 %v3754
      %6229 = vmatpush.bf16.msra.mxu0 %v3750
      %6230 = vmatpush.bf16.msra.mxu0 %v3746
      %6231 = vmatmul.bf16.gmra.mxu0 %v1132
      %v6232 = vpop.f32.mrf.mxu0
      %v6233 = vadd.f32 %v6220, %v6232
      %v6234 = vpop.f32.mrf.mxu0
      %6235 = vdwg.mxu0
      %6236 = vmatpush.bf16.msra.mxu0 %v3806
      %6237 = vmatpush.bf16.msra.mxu0 %v3802
      %6238 = vmatpush.bf16.msra.mxu0 %v3798
      %6239 = vmatpush.bf16.msra.mxu0 %v3794
      %6240 = vmatpush.bf16.msra.mxu0 %v3790
      %6241 = vmatpush.bf16.msra.mxu0 %v3786
      %6242 = vmatpush.bf16.msra.mxu0 %v3782
      %6243 = vmatpush.bf16.msra.mxu0 %v3778
      %6244 = vmatmul.bf16.gmra.mxu0 %v1133
      %v6245 = vpop.f32.mrf.mxu0
      %v6246 = vadd.f32 %v6233, %v6245
      %v6247 = vpop.f32.mrf.mxu0
      %6248 = vdwg.mxu0
      %6249 = vmatpush.bf16.msra.mxu0 %v3838
      %6250 = vmatpush.bf16.msra.mxu0 %v3834
      %6251 = vmatpush.bf16.msra.mxu0 %v3830
      %6252 = vmatpush.bf16.msra.mxu0 %v3826
      %6253 = vmatpush.bf16.msra.mxu0 %v3822
      %6254 = vmatpush.bf16.msra.mxu0 %v3818
      %6255 = vmatpush.bf16.msra.mxu0 %v3814
      %6256 = vmatpush.bf16.msra.mxu0 %v3810
      %6257 = vmatmul.bf16.gmra.mxu0 %v1134
      %v6258 = vpop.f32.mrf.mxu0
      %v6259 = vadd.f32 %v6246, %v6258
      %v6260 = vpop.f32.mrf.mxu0
      %6261 = vdwg.mxu0
      %6262 = vmatpush.bf16.msra.mxu0 %v3870
      %6263 = vmatpush.bf16.msra.mxu0 %v3866
      %6264 = vmatpush.bf16.msra.mxu0 %v3862
      %6265 = vmatpush.bf16.msra.mxu0 %v3858
      %6266 = vmatpush.bf16.msra.mxu0 %v3854
      %6267 = vmatpush.bf16.msra.mxu0 %v3850
      %6268 = vmatpush.bf16.msra.mxu0 %v3846
      %6269 = vmatpush.bf16.msra.mxu0 %v3842
      %6270 = vmatmul.bf16.gmra.mxu0 %v1137
      %v6271 = vpop.f32.mrf.mxu0
      %v6272 = vadd.f32 %v6259, %v6271
      %v6273 = vpop.f32.mrf.mxu0
      %6274 = vdwg.mxu0
      %6275 = vmatpush.bf16.msra.mxu0 %v3902
      %6276 = vmatpush.bf16.msra.mxu0 %v3898
      %6277 = vmatpush.bf16.msra.mxu0 %v3894
      %6278 = vmatpush.bf16.msra.mxu0 %v3890
      %6279 = vmatpush.bf16.msra.mxu0 %v3886
      %6280 = vmatpush.bf16.msra.mxu0 %v3882
      %6281 = vmatpush.bf16.msra.mxu0 %v3878
      %6282 = vmatpush.bf16.msra.mxu0 %v3874
      %6283 = vmatmul.bf16.gmra.mxu0 %v1138
      %v6284 = vpop.f32.mrf.mxu0
      %v6285 = vadd.f32 %v6272, %v6284
      %v6286 = vpop.f32.mrf.mxu0
      %6287 = vdwg.mxu0
      %6288 = vmatpush.bf16.msra.mxu0 %v3934
      %6289 = vmatpush.bf16.msra.mxu0 %v3930
      %6290 = vmatpush.bf16.msra.mxu0 %v3926
      %6291 = vmatpush.bf16.msra.mxu0 %v3922
      %6292 = vmatpush.bf16.msra.mxu0 %v3918
      %6293 = vmatpush.bf16.msra.mxu0 %v3914
      %6294 = vmatpush.bf16.msra.mxu0 %v3910
      %6295 = vmatpush.bf16.msra.mxu0 %v3906
      %6296 = vmatmul.bf16.gmra.mxu0 %v1139
      %v6297 = vpop.f32.mrf.mxu0
      %v6298 = vadd.f32 %v6285, %v6297
      %v6299 = vpop.f32.mrf.mxu0
      %6300 = vdwg.mxu0
      %6301 = vmatpush.bf16.msra.mxu0 %v3966
      %6302 = vmatpush.bf16.msra.mxu0 %v3962
      %6303 = vmatpush.bf16.msra.mxu0 %v3958
      %6304 = vmatpush.bf16.msra.mxu0 %v3954
      %6305 = vmatpush.bf16.msra.mxu0 %v3950
      %6306 = vmatpush.bf16.msra.mxu0 %v3946
      %6307 = vmatpush.bf16.msra.mxu0 %v3942
      %6308 = vmatpush.bf16.msra.mxu0 %v3938
      %6309 = vmatmul.bf16.gmra.mxu0 %v1140
      %v6310 = vpop.f32.mrf.mxu0
      %v6311 = vadd.f32 %v6298, %v6310
      %v6312 = vpop.f32.mrf.mxu0
      %6313 = vdwg.mxu0
      %6314 = vmatpush.bf16.msra.mxu0 %v3998
      %6315 = vmatpush.bf16.msra.mxu0 %v3994
      %6316 = vmatpush.bf16.msra.mxu0 %v3990
      %6317 = vmatpush.bf16.msra.mxu0 %v3986
      %6318 = vmatpush.bf16.msra.mxu0 %v3982
      %6319 = vmatpush.bf16.msra.mxu0 %v3978
      %6320 = vmatpush.bf16.msra.mxu0 %v3974
      %6321 = vmatpush.bf16.msra.mxu0 %v3970
      %6322 = vmatmul.bf16.gmra.mxu0 %v1141
      %v6323 = vpop.f32.mrf.mxu0
      %v6324 = vadd.f32 %v6311, %v6323
      %v6325 = vpop.f32.mrf.mxu0
      %6326 = vdwg.mxu0
      %6327 = vmatpush.bf16.msra.mxu0 %v4030
      %6328 = vmatpush.bf16.msra.mxu0 %v4026
      %6329 = vmatpush.bf16.msra.mxu0 %v4022
      %6330 = vmatpush.bf16.msra.mxu0 %v4018
      %6331 = vmatpush.bf16.msra.mxu0 %v4014
      %6332 = vmatpush.bf16.msra.mxu0 %v4010
      %6333 = vmatpush.bf16.msra.mxu0 %v4006
      %6334 = vmatpush.bf16.msra.mxu0 %v4002
      %6335 = vmatmul.bf16.gmra.mxu0 %v1142
      %v6336 = vpop.f32.mrf.mxu0
      %v6337 = vadd.f32 %v6324, %v6336
      %v6338 = vpop.f32.mrf.mxu0
      %6339 = vdwg.mxu0
      %6340 = vmatpush.bf16.msra.mxu0 %v4062
      %6341 = vmatpush.bf16.msra.mxu0 %v4058
      %6342 = vmatpush.bf16.msra.mxu0 %v4054
      %6343 = vmatpush.bf16.msra.mxu0 %v4050
      %6344 = vmatpush.bf16.msra.mxu0 %v4046
      %6345 = vmatpush.bf16.msra.mxu0 %v4042
      %6346 = vmatpush.bf16.msra.mxu0 %v4038
      %6347 = vmatpush.bf16.msra.mxu0 %v4034
      %6348 = vmatmul.bf16.gmra.mxu0 %v1143
      %v6349 = vpop.f32.mrf.mxu0
      %v6350 = vadd.f32 %v6337, %v6349
      %v6351 = vpop.f32.mrf.mxu0
      %6352 = vdwg.mxu0
      %6353 = vmatpush.bf16.msra.mxu0 %v4094
      %6354 = vmatpush.bf16.msra.mxu0 %v4090
      %6355 = vmatpush.bf16.msra.mxu0 %v4086
      %6356 = vmatpush.bf16.msra.mxu0 %v4082
      %6357 = vmatpush.bf16.msra.mxu0 %v4078
      %6358 = vmatpush.bf16.msra.mxu0 %v4074
      %6359 = vmatpush.bf16.msra.mxu0 %v4070
      %6360 = vmatpush.bf16.msra.mxu0 %v4066
      %6361 = vmatmul.bf16.gmra.mxu0 %v1144
      %v6362 = vpop.f32.mrf.mxu0
      %v6363 = vadd.f32 %v6350, %v6362
      %v6364 = vpop.f32.mrf.mxu0
      %6365 = vdwg.mxu0
      %6366 = vmatpush.bf16.msra.mxu0 %v4126
      %6367 = vmatpush.bf16.msra.mxu0 %v4122
      %6368 = vmatpush.bf16.msra.mxu0 %v4118
      %6369 = vmatpush.bf16.msra.mxu0 %v4114
      %6370 = vmatpush.bf16.msra.mxu0 %v4110
      %6371 = vmatpush.bf16.msra.mxu0 %v4106
      %6372 = vmatpush.bf16.msra.mxu0 %v4102
      %6373 = vmatpush.bf16.msra.mxu0 %v4098
      %6374 = vmatmul.bf16.gmra.mxu0 %v1147
      %v6375 = vpop.f32.mrf.mxu0
      %v6376 = vadd.f32 %v6363, %v6375
      %v6377 = vpop.f32.mrf.mxu0
      %6378 = vdwg.mxu0
      %6379 = vmatpush.bf16.msra.mxu0 %v4158
      %6380 = vmatpush.bf16.msra.mxu0 %v4154
      %6381 = vmatpush.bf16.msra.mxu0 %v4150
      %6382 = vmatpush.bf16.msra.mxu0 %v4146
      %6383 = vmatpush.bf16.msra.mxu0 %v4142
      %6384 = vmatpush.bf16.msra.mxu0 %v4138
      %6385 = vmatpush.bf16.msra.mxu0 %v4134
      %6386 = vmatpush.bf16.msra.mxu0 %v4130
      %6387 = vmatmul.bf16.gmra.mxu0 %v1148
      %v6388 = vpop.f32.mrf.mxu0
      %v6389 = vadd.f32 %v6376, %v6388
      %v6390 = vpop.f32.mrf.mxu0
      %6391 = vdwg.mxu0
      %6392 = vmatpush.bf16.msra.mxu0 %v4190
      %6393 = vmatpush.bf16.msra.mxu0 %v4186
      %6394 = vmatpush.bf16.msra.mxu0 %v4182
      %6395 = vmatpush.bf16.msra.mxu0 %v4178
      %6396 = vmatpush.bf16.msra.mxu0 %v4174
      %6397 = vmatpush.bf16.msra.mxu0 %v4170
      %6398 = vmatpush.bf16.msra.mxu0 %v4166
      %6399 = vmatpush.bf16.msra.mxu0 %v4162
      %6400 = vmatmul.bf16.gmra.mxu0 %v1149
      %v6401 = vpop.f32.mrf.mxu0
      %v6402 = vadd.f32 %v6389, %v6401
      %v6403 = vpop.f32.mrf.mxu0
      %6404 = vdwg.mxu0
      %6405 = vmatpush.bf16.msra.mxu0 %v4222
      %6406 = vmatpush.bf16.msra.mxu0 %v4218
      %6407 = vmatpush.bf16.msra.mxu0 %v4214
      %6408 = vmatpush.bf16.msra.mxu0 %v4210
      %6409 = vmatpush.bf16.msra.mxu0 %v4206
      %6410 = vmatpush.bf16.msra.mxu0 %v4202
      %6411 = vmatpush.bf16.msra.mxu0 %v4198
      %6412 = vmatpush.bf16.msra.mxu0 %v4194
      %6413 = vmatmul.bf16.gmra.mxu0 %v1150
      %v6414 = vpop.f32.mrf.mxu0
      %v6415 = vadd.f32 %v6402, %v6414
      %v6416 = vpop.f32.mrf.mxu0
      %6417 = vdwg.mxu0
      %6418 = vmatpush.bf16.msra.mxu0 %v4254
      %6419 = vmatpush.bf16.msra.mxu0 %v4250
      %6420 = vmatpush.bf16.msra.mxu0 %v4246
      %6421 = vmatpush.bf16.msra.mxu0 %v4242
      %6422 = vmatpush.bf16.msra.mxu0 %v4238
      %6423 = vmatpush.bf16.msra.mxu0 %v4234
      %6424 = vmatpush.bf16.msra.mxu0 %v4230
      %6425 = vmatpush.bf16.msra.mxu0 %v4226
      %6426 = vmatmul.bf16.gmra.mxu0 %v1151
      %v6427 = vpop.f32.mrf.mxu0
      %v6428 = vadd.f32 %v6415, %v6427
      %v6429 = vpop.f32.mrf.mxu0
      %6430 = vdwg.mxu0
      %6431 = vmatpush.bf16.msra.mxu0 %v4286
      %6432 = vmatpush.bf16.msra.mxu0 %v4282
      %6433 = vmatpush.bf16.msra.mxu0 %v4278
      %6434 = vmatpush.bf16.msra.mxu0 %v4274
      %6435 = vmatpush.bf16.msra.mxu0 %v4270
      %6436 = vmatpush.bf16.msra.mxu0 %v4266
      %6437 = vmatpush.bf16.msra.mxu0 %v4262
      %6438 = vmatpush.bf16.msra.mxu0 %v4258
      %6439 = vmatmul.bf16.gmra.mxu0 %v1152
      %v6440 = vpop.f32.mrf.mxu0
      %v6441 = vadd.f32 %v6428, %v6440
      %v6442 = vpop.f32.mrf.mxu0
      %6443 = vdwg.mxu0
      %6444 = vmatpush.bf16.msra.mxu0 %v4318
      %6445 = vmatpush.bf16.msra.mxu0 %v4314
      %6446 = vmatpush.bf16.msra.mxu0 %v4310
      %6447 = vmatpush.bf16.msra.mxu0 %v4306
      %6448 = vmatpush.bf16.msra.mxu0 %v4302
      %6449 = vmatpush.bf16.msra.mxu0 %v4298
      %6450 = vmatpush.bf16.msra.mxu0 %v4294
      %6451 = vmatpush.bf16.msra.mxu0 %v4290
      %6452 = vmatmul.bf16.gmra.mxu0 %v1153
      %v6453 = vpop.f32.mrf.mxu0
      %v6454 = vadd.f32 %v6441, %v6453
      %v6455 = vpop.f32.mrf.mxu0
      %6456 = vdwg.mxu0
      %6457 = vmatpush.bf16.msra.mxu0 %v4350
      %6458 = vmatpush.bf16.msra.mxu0 %v4346
      %6459 = vmatpush.bf16.msra.mxu0 %v4342
      %6460 = vmatpush.bf16.msra.mxu0 %v4338
      %6461 = vmatpush.bf16.msra.mxu0 %v4334
      %6462 = vmatpush.bf16.msra.mxu0 %v4330
      %6463 = vmatpush.bf16.msra.mxu0 %v4326
      %6464 = vmatpush.bf16.msra.mxu0 %v4322
      %6465 = vmatmul.bf16.gmra.mxu0 %v1154
      %v6466 = vpop.f32.mrf.mxu0
      %v6467 = vadd.f32 %v6454, %v6466
      %v6468 = vpop.f32.mrf.mxu0
      %6469 = vdwg.mxu0
      %6470 = vmatpush.bf16.msra.mxu0 %v4382
      %6471 = vmatpush.bf16.msra.mxu0 %v4378
      %6472 = vmatpush.bf16.msra.mxu0 %v4374
      %6473 = vmatpush.bf16.msra.mxu0 %v4370
      %6474 = vmatpush.bf16.msra.mxu0 %v4366
      %6475 = vmatpush.bf16.msra.mxu0 %v4362
      %6476 = vmatpush.bf16.msra.mxu0 %v4358
      %6477 = vmatpush.bf16.msra.mxu0 %v4354
      %6478 = vmatmul.bf16.gmra.mxu0 %v1157
      %v6479 = vpop.f32.mrf.mxu0
      %v6480 = vadd.f32 %v6467, %v6479
      %v6481 = vpop.f32.mrf.mxu0
      %6482 = vdwg.mxu0
      %v6483 = vmax.f32 %v5505, 0.0
      %v6484 = vmax.f32 %v5830, 0.0
      %v6485 = vmax.f32 %v6155, 0.0
      %v6486 = vmax.f32 %v6480, 0.0
      %v6487 = vpack.c.bf16 %v6483, %v6483
      %v6488 = vpack.c.bf16 %v6484, %v6484
      %v6489 = vpack.c.bf16 %v6485, %v6485
      %v6490 = vpack.c.bf16 %v6486, %v6486
      %v6491 = vld [vmem:[%s300] sm:$0xf]
      %v6492 = vld [vmem:[%s300 + $0x4] sm:$0xf]
      %v6493 = vld [vmem:[%s300 + $0x8] sm:$0xf]
      %v6494 = vld [vmem:[%s300 + $0xc] sm:$0xf]
      %v6495 = vld [vmem:[%s300 + $0x10] sm:$0xf]
      %v6496 = vld [vmem:[%s300 + $0x14] sm:$0xf]
      %v6497 = vld [vmem:[%s300 + $0x18] sm:$0xf]
      %v6498 = vld [vmem:[%s300 + $0x1c] sm:$0xf]
      %v6499 = vld [vmem:[%s300 + $0x20] sm:$0xf]
      %v6500 = vld [vmem:[%s300 + $0x24] sm:$0xf]
      %v6501 = vld [vmem:[%s300 + $0x28] sm:$0xf]
      %v6502 = vld [vmem:[%s300 + $0x2c] sm:$0xf]
      %v6503 = vld [vmem:[%s300 + $0x30] sm:$0xf]
      %v6504 = vld [vmem:[%s300 + $0x34] sm:$0xf]
      %v6505 = vld [vmem:[%s300 + $0x38] sm:$0xf]
      %v6506 = vld [vmem:[%s300 + $0x3c] sm:$0xf]
      %v6507 = vld [vmem:[%s300 + $0x40] sm:$0xf]
      %v6508 = vld [vmem:[%s300 + $0x44] sm:$0xf]
      %v6509 = vld [vmem:[%s300 + $0x48] sm:$0xf]
      %v6510 = vld [vmem:[%s300 + $0x4c] sm:$0xf]
      %v6511 = vld [vmem:[%s300 + $0x50] sm:$0xf]
      %v6512 = vld [vmem:[%s300 + $0x54] sm:$0xf]
      %v6513 = vld [vmem:[%s300 + $0x58] sm:$0xf]
      %v6514 = vld [vmem:[%s300 + $0x5c] sm:$0xf]
      %v6515 = vld [vmem:[%s300 + $0x60] sm:$0xf]
      %v6516 = vld [vmem:[%s300 + $0x64] sm:$0xf]
      %v6517 = vld [vmem:[%s300 + $0x68] sm:$0xf]
      %v6518 = vld [vmem:[%s300 + $0x6c] sm:$0xf]
      %v6519 = vld [vmem:[%s300 + $0x70] sm:$0xf]
      %v6520 = vld [vmem:[%s300 + $0x74] sm:$0xf]
      %v6521 = vld [vmem:[%s300 + $0x78] sm:$0xf]
      %v6522 = vld [vmem:[%s300 + $0x7c] sm:$0xf]
      %v6523 = vld [vmem:[%s300 + $0x80] sm:$0xf]
      %v6524 = vld [vmem:[%s300 + $0x84] sm:$0xf]
      %v6525 = vld [vmem:[%s300 + $0x88] sm:$0xf]
      %v6526 = vld [vmem:[%s300 + $0x8c] sm:$0xf]
      %v6527 = vld [vmem:[%s300 + $0x90] sm:$0xf]
      %v6528 = vld [vmem:[%s300 + $0x94] sm:$0xf]
      %v6529 = vld [vmem:[%s300 + $0x98] sm:$0xf]
      %v6530 = vld [vmem:[%s300 + $0x9c] sm:$0xf]
      %v6531 = vld [vmem:[%s300 + $0xa0] sm:$0xf]
      %v6532 = vld [vmem:[%s300 + $0xa4] sm:$0xf]
      %v6533 = vld [vmem:[%s300 + $0xa8] sm:$0xf]
      %v6534 = vld [vmem:[%s300 + $0xac] sm:$0xf]
      %v6535 = vld [vmem:[%s300 + $0xb0] sm:$0xf]
      %v6536 = vld [vmem:[%s300 + $0xb4] sm:$0xf]
      %v6537 = vld [vmem:[%s300 + $0xb8] sm:$0xf]
      %v6538 = vld [vmem:[%s300 + $0xbc] sm:$0xf]
      %v6539 = vld [vmem:[%s300 + $0xc0] sm:$0xf]
      %v6540 = vld [vmem:[%s300 + $0xc4] sm:$0xf]
      %v6541 = vld [vmem:[%s300 + $0xc8] sm:$0xf]
      %v6542 = vld [vmem:[%s300 + $0xcc] sm:$0xf]
      %v6543 = vld [vmem:[%s300 + $0xd0] sm:$0xf]
      %v6544 = vld [vmem:[%s300 + $0xd4] sm:$0xf]
      %v6545 = vld [vmem:[%s300 + $0xd8] sm:$0xf]
      %v6546 = vld [vmem:[%s300 + $0xdc] sm:$0xf]
      %v6547 = vld [vmem:[%s300 + $0xe0] sm:$0xf]
      %v6548 = vld [vmem:[%s300 + $0xe4] sm:$0xf]
      %v6549 = vld [vmem:[%s300 + $0xe8] sm:$0xf]
      %v6550 = vld [vmem:[%s300 + $0xec] sm:$0xf]
      %v6551 = vld [vmem:[%s300 + $0xf0] sm:$0xf]
      %v6552 = vld [vmem:[%s300 + $0xf4] sm:$0xf]
      %v6553 = vld [vmem:[%s300 + $0xf8] sm:$0xf]
      %v6554 = vld [vmem:[%s300 + $0xfc] sm:$0xf]
      %v6555 = vld [vmem:[%s303] sm:$0x1]
      %v6557 = vperm.slane %v6555, 0
      %v6623 = vunpack.c.l.b16 %v6491
      %v6624 = vunpack.c.l.b16 %v6492
      %v6625 = vunpack.c.l.b16 %v6493
      %v6626 = vunpack.c.l.b16 %v6494
      %v6627 = vunpack.c.l.b16 %v6495
      %v6628 = vunpack.c.l.b16 %v6496
      %v6629 = vunpack.c.l.b16 %v6497
      %v6630 = vunpack.c.l.b16 %v6498
      %v6631 = vunpack.c.l.b16 %v6499
      %v6632 = vunpack.c.l.b16 %v6500
      %v6633 = vunpack.c.l.b16 %v6501
      %v6634 = vunpack.c.l.b16 %v6502
      %v6635 = vunpack.c.l.b16 %v6503
      %v6636 = vunpack.c.l.b16 %v6504
      %v6637 = vunpack.c.l.b16 %v6505
      %v6638 = vunpack.c.l.b16 %v6506
      %v6639 = vunpack.c.l.b16 %v6507
      %v6640 = vunpack.c.l.b16 %v6508
      %v6641 = vunpack.c.l.b16 %v6509
      %v6642 = vunpack.c.l.b16 %v6510
      %v6643 = vunpack.c.l.b16 %v6511
      %v6644 = vunpack.c.l.b16 %v6512
      %v6645 = vunpack.c.l.b16 %v6513
      %v6646 = vunpack.c.l.b16 %v6514
      %v6647 = vunpack.c.l.b16 %v6515
      %v6648 = vunpack.c.l.b16 %v6516
      %v6649 = vunpack.c.l.b16 %v6517
      %v6650 = vunpack.c.l.b16 %v6518
      %v6651 = vunpack.c.l.b16 %v6519
      %v6652 = vunpack.c.l.b16 %v6520
      %v6653 = vunpack.c.l.b16 %v6521
      %v6654 = vunpack.c.l.b16 %v6522
      %v6655 = vunpack.c.l.b16 %v6523
      %v6656 = vunpack.c.l.b16 %v6524
      %v6657 = vunpack.c.l.b16 %v6525
      %v6658 = vunpack.c.l.b16 %v6526
      %v6659 = vunpack.c.l.b16 %v6527
      %v6660 = vunpack.c.l.b16 %v6528
      %v6661 = vunpack.c.l.b16 %v6529
      %v6662 = vunpack.c.l.b16 %v6530
      %v6663 = vunpack.c.l.b16 %v6531
      %v6664 = vunpack.c.l.b16 %v6532
      %v6665 = vunpack.c.l.b16 %v6533
      %v6666 = vunpack.c.l.b16 %v6534
      %v6667 = vunpack.c.l.b16 %v6535
      %v6668 = vunpack.c.l.b16 %v6536
      %v6669 = vunpack.c.l.b16 %v6537
      %v6670 = vunpack.c.l.b16 %v6538
      %v6671 = vunpack.c.l.b16 %v6539
      %v6672 = vunpack.c.l.b16 %v6540
      %v6673 = vunpack.c.l.b16 %v6541
      %v6674 = vunpack.c.l.b16 %v6542
      %v6675 = vunpack.c.l.b16 %v6543
      %v6676 = vunpack.c.l.b16 %v6544
      %v6677 = vunpack.c.l.b16 %v6545
      %v6678 = vunpack.c.l.b16 %v6546
      %v6679 = vunpack.c.l.b16 %v6547
      %v6680 = vunpack.c.l.b16 %v6548
      %v6681 = vunpack.c.l.b16 %v6549
      %v6682 = vunpack.c.l.b16 %v6550
      %v6683 = vunpack.c.l.b16 %v6551
      %v6684 = vunpack.c.l.b16 %v6552
      %v6685 = vunpack.c.l.b16 %v6553
      %v6686 = vunpack.c.l.b16 %v6554
      %v6687 = vpack.c.b16 %v6624, %v6623
      %v6688 = vpack.c.b16 %v6626, %v6625
      %v6689 = vpack.c.b16 %v6628, %v6627
      %v6690 = vpack.c.b16 %v6630, %v6629
      %v6691 = vpack.c.b16 %v6632, %v6631
      %v6692 = vpack.c.b16 %v6634, %v6633
      %v6693 = vpack.c.b16 %v6636, %v6635
      %v6694 = vpack.c.b16 %v6638, %v6637
      %v6695 = vpack.c.b16 %v6640, %v6639
      %v6696 = vpack.c.b16 %v6642, %v6641
      %v6697 = vpack.c.b16 %v6644, %v6643
      %v6698 = vpack.c.b16 %v6646, %v6645
      %v6699 = vpack.c.b16 %v6648, %v6647
      %v6700 = vpack.c.b16 %v6650, %v6649
      %v6701 = vpack.c.b16 %v6652, %v6651
      %v6702 = vpack.c.b16 %v6654, %v6653
      %v6703 = vpack.c.b16 %v6656, %v6655
      %v6704 = vpack.c.b16 %v6658, %v6657
      %v6705 = vpack.c.b16 %v6660, %v6659
      %v6706 = vpack.c.b16 %v6662, %v6661
      %v6707 = vpack.c.b16 %v6664, %v6663
      %v6708 = vpack.c.b16 %v6666, %v6665
      %v6709 = vpack.c.b16 %v6668, %v6667
      %v6710 = vpack.c.b16 %v6670, %v6669
      %v6711 = vpack.c.b16 %v6672, %v6671
      %v6712 = vpack.c.b16 %v6674, %v6673
      %v6713 = vpack.c.b16 %v6676, %v6675
      %v6714 = vpack.c.b16 %v6678, %v6677
      %v6715 = vpack.c.b16 %v6680, %v6679
      %v6716 = vpack.c.b16 %v6682, %v6681
      %v6717 = vpack.c.b16 %v6684, %v6683
      %v6718 = vpack.c.b16 %v6686, %v6685
      %6751 = vmatpush.bf16.msra.mxu0 %v6694
      %6752 = vmatpush.bf16.msra.mxu0 %v6693
      %6753 = vmatpush.bf16.msra.mxu0 %v6692
      %6754 = vmatpush.bf16.msra.mxu0 %v6691
      %6755 = vmatpush.bf16.msra.mxu0 %v6690
      %6756 = vmatpush.bf16.msra.mxu0 %v6689
      %6757 = vmatpush.bf16.msra.mxu0 %v6688
      %6758 = vmatpush.bf16.msra.mxu0 %v6687
      %6759 = vmatmul.bf16.gmra.mxu0 %v6487
      %v6760 = vpop.f32.mrf.mxu0
      %v6761 = vadd.f32 %v6557, %v6760
      %v6762 = vpop.f32.mrf.mxu0
      %6763 = vdwg.mxu0
      %6764 = vmatpush.bf16.msra.mxu0 %v6702
      %6765 = vmatpush.bf16.msra.mxu0 %v6701
      %6766 = vmatpush.bf16.msra.mxu0 %v6700
      %6767 = vmatpush.bf16.msra.mxu0 %v6699
      %6768 = vmatpush.bf16.msra.mxu0 %v6698
      %6769 = vmatpush.bf16.msra.mxu0 %v6697
      %6770 = vmatpush.bf16.msra.mxu0 %v6696
      %6771 = vmatpush.bf16.msra.mxu0 %v6695
      %6772 = vmatmul.bf16.gmra.mxu0 %v6488
      %v6773 = vpop.f32.mrf.mxu0
      %v6774 = vadd.f32 %v6761, %v6773
      %v6775 = vpop.f32.mrf.mxu0
      %6776 = vdwg.mxu0
      %6777 = vmatpush.bf16.msra.mxu0 %v6710
      %6778 = vmatpush.bf16.msra.mxu0 %v6709
      %6779 = vmatpush.bf16.msra.mxu0 %v6708
      %6780 = vmatpush.bf16.msra.mxu0 %v6707
      %6781 = vmatpush.bf16.msra.mxu0 %v6706
      %6782 = vmatpush.bf16.msra.mxu0 %v6705
      %6783 = vmatpush.bf16.msra.mxu0 %v6704
      %6784 = vmatpush.bf16.msra.mxu0 %v6703
      %6785 = vmatmul.bf16.gmra.mxu0 %v6489
      %v6786 = vpop.f32.mrf.mxu0
      %v6787 = vadd.f32 %v6774, %v6786
      %v6788 = vpop.f32.mrf.mxu0
      %6789 = vdwg.mxu0
      %6790 = vmatpush.bf16.msra.mxu0 %v6718
      %6791 = vmatpush.bf16.msra.mxu0 %v6717
      %6792 = vmatpush.bf16.msra.mxu0 %v6716
      %6793 = vmatpush.bf16.msra.mxu0 %v6715
      %6794 = vmatpush.bf16.msra.mxu0 %v6714
      %6795 = vmatpush.bf16.msra.mxu0 %v6713
      %6796 = vmatpush.bf16.msra.mxu0 %v6712
      %6797 = vmatpush.bf16.msra.mxu0 %v6711
      %6798 = vmatmul.bf16.gmra.mxu0 %v6490
      %v6799 = vpop.f32.mrf.mxu0
      %v6800 = vadd.f32 %v6787, %v6799
      %v6801 = vpop.f32.mrf.mxu0
      %6802 = vdwg.mxu0
      %6803 = vst [vmem:[%s310] sm:$0x3] %v6800
      %p6804 = scmp.lt.s32.totalorder %s20, 1
      %s6805 = scalar_select %p6804, %s20, 1
      %p6806 = scmp.lt.s32.totalorder %s21, 0
      %s6807 = scalar_select %p6806, %s21, 0
      %s6808 = sadd.s32 %s6807, %s6805
      %s6809 = smul.addr %s6808, 2
      %s6810 = scalar_lea.vmem %s5, %s6809
      // Predicated region
      $region41: #{atari_forward.7} parent=39 // pred_check
        %p6811 = pneg %p178
      $region42: #{atari_forward.7} parent=39 // pred_check_branch
        %6813 = sbr.rel (%p6811) target = $region44
      $region43: #{atari_forward.7} parent=39 // pred_region
        _
      $region44: #{atari_forward.7} parent=39 // pred_fallthru
        _
    $region40: #{atari_forward.7} parent=5 // pred_fallthru
      _
    %p6814 = scmp.le.s32.totalorder 2, %s11
    // Predicated region
    $region45: #{atari_forward.7} parent=5 // pred_check
      %p6815 = pneg %p6814
    $region46: #{atari_forward.7} parent=5 // pred_check_branch
      %6817 = sbr.rel (%p6815) target = $region48
    $region47: #{atari_forward.7} parent=5 // pred_region
      %s6818 = ssub.s32 %s11, 2
      // Predicated region
      $region49: #{atari_forward.7} parent=47 // pred_check
        %p6819 = pneg %p184
      $region50: #{atari_forward.7} parent=47 // pred_check_branch
        %6821 = sbr.rel (%p6819) target = $region52
      $region51: #{atari_forward.7} parent=47 // pred_region
        %p6822 = scmp.lt.s32.totalorder %s22, 1
        %s6823 = scalar_select %p6822, %s22, 1
        %p6824 = scmp.lt.s32.totalorder %s23, 0
        %s6825 = scalar_select %p6824, %s23, 0
        %s6826 = sadd.s32 %s6825, %s6823
        %s6827 = smul.addr %s6826, 2
        %s6828 = scalar_lea.vmem %s5, %s6827
      $region52: #{atari_forward.7} parent=47 // pred_fallthru
        _
    $region48: #{atari_forward.7} parent=5 // pred_fallthru
      _
  $region6: #{atari_forward.7} parent=0 // loop_footer
    %s15 = sadd.s32 1, %s11
  $region7: #{atari_forward.7} parent=0 // loop_footer_branch
    %10 = sbr.rel target = $region3
  $region8: #{atari_forward.7} parent=0 // loop_exit
    _

</llo_original>
